<compile_context>
chip_gen: v7x
topology: tpu7x:2x2x1
jax: 0.10.0
libtpu: 0.0.40
codegen_flags: <defaults>
</compile_context>

<pallas_src>
import functools
import math

import jax
import jax.numpy as jnp
from jax import lax
from jax.experimental import pallas as pl
from jax.experimental.pallas import tpu as pltpu

CPAD = 128                       # lane-dense channel width for 32-channel stages
VMEM_LIMIT = 32 * 1024 * 1024    # explicit scoped-VMEM budget (safe on v5e/v6e/v7x)


# ----------------------------------------------------------------------------
# Pallas kernels
# ----------------------------------------------------------------------------
def _conv_matmul_kernel(apply_silu, has_residual, *refs):
    """Conv-as-matmul with K-reduction grid axis.

    out = silu?((sum_k x_k @ w_k) * scale + bias) [+ residual]
    grid = (M tiles, K tiles); K axis is a reduction ("arbitrary").
    Accumulation in f32 scratch; affine + SiLU (+ residual) in f32 at the last
    K step; store in the (bf16) output dtype (lane-dense 128-wide stores).
    """
    if has_residual:
        x_ref, w_ref, s_ref, b_ref, r_ref, o_ref, acc_ref = refs
    else:
        x_ref, w_ref, s_ref, b_ref, o_ref, acc_ref = refs
        r_ref = None

    k = pl.program_id(1)

    @pl.when(k == 0)
    def _():
        acc_ref[...] = jnp.zeros_like(acc_ref)

    acc_ref[...] += jnp.dot(x_ref[...], w_ref[...],
                            preferred_element_type=jnp.float32)

    @pl.when(k == pl.num_programs(1) - 1)
    def _():
        y = acc_ref[...] * s_ref[...] + b_ref[...]
        if apply_silu:
            y = y * jax.nn.sigmoid(y)
        if has_residual:
            # Residual added AFTER SiLU: torchvision FusedMBConv(expand_ratio=1).
            y = y + r_ref[...].astype(jnp.float32)
        o_ref[...] = y.astype(o_ref.dtype)


def _head_pool_fc_kernel(hw_total, x_ref, w_ref, s_ref, b_ref,
                         cw_ref, cb_ref, o_ref, acc_ref):
    """Fused head: 1x1 conv (C->1280) + BN + SiLU + global avg pool + Linear(1280,6).

    grid = (B, HW tiles).  Per-batch pooled sum lives in a [1,1280] f32 VMEM
    scratch; partial pooling is done on the MXU (ones-row matmul) so the
    VPU/XLU slots stay free.  SiLU runs in bf16 (native on v6e/v7x).  On the
    last HW tile the sum is scaled by 1/HW and pushed through the classifier
    matmul.  Dropout(p=0.4) is identity at inference -> no-op.
    """
    hw_idx = pl.program_id(1)
    thw = x_ref.shape[1]
    hw_rem = hw_total % thw          # python int at trace time

    @pl.when(hw_idx == 0)
    def _():
        acc_ref[...] = jnp.zeros_like(acc_ref)

    # 1x1 conv on the MXU, folded-BN affine in f32, SiLU in bf16.
    y = jnp.dot(x_ref[0], w_ref[...], preferred_element_type=jnp.float32)
    y = y * s_ref[...] + b_ref[...]
    yb = y.astype(jnp.bfloat16)
    yb = yb * jax.nn.sigmoid(yb)

    ones = jnp.ones((1, thw), jnp.bfloat16)

    def pool(vals):
        # Global-avg-pool partial sum as an MXU matmul (not a sublane reduce).
        acc_ref[...] += jnp.dot(ones, vals, preferred_element_type=jnp.float32)

    if hw_rem == 0:
        pool(yb)
    else:
        last = pl.num_programs(1) - 1

        @pl.when(hw_idx != last)
        def _():
            pool(yb)

        @pl.when(hw_idx == last)
        def _():
            # Row mask only on the single padded edge tile: padded rows would
            # otherwise contribute SiLU(bias) to the pool.
            row = lax.broadcasted_iota(jnp.int32, (thw, 1), 0)
            pool(jnp.where(row < hw_rem, yb, jnp.zeros_like(yb)))

    @pl.when(hw_idx == pl.num_programs(1) - 1)
    def _():
        pooled = acc_ref[...] * (1.0 / hw_total)                    # [1, 1280]
        logits = jnp.dot(pooled, cw_ref[...],
                         preferred_element_type=jnp.float32) + cb_ref[...]
        o_ref[...] = logits[None].astype(o_ref.dtype)


# ----------------------------------------------------------------------------
# pallas_call wrappers
# ----------------------------------------------------------------------------
def _bf16(a):
    return a if a.dtype == jnp.bfloat16 else a.astype(jnp.bfloat16)


def conv_matmul(x, w, scale, bias, residual=None, *,
                apply_silu=True, tm=None, tk=None, out_dtype=jnp.bfloat16):
    """x: [M, K], w: [K, N] (bf16 MXU path), scale/bias: [1, N] f32 -> [M, N]."""
    M, K = x.shape
    N = w.shape[1]
    if tm is None:
        tm = 512 if M >= 512 else max(8, pl.cdiv(M, 8) * 8)
    if tk is None:
        tk = K if K <= 2048 else 1024     # K-tiling kicks in for deep stages
    Mp = pl.cdiv(M, tm) * tm
    Kp = pl.cdiv(K, tk) * tk
    # Edge padding only fires on ragged shapes; never for the shapes used here.
    if Mp != M or Kp != K:
        x = jnp.pad(x, ((0, Mp - M), (0, Kp - K)))
    if Kp != K:
        w = jnp.pad(w, ((0, Kp - K), (0, 0)))
    if residual is not None and Mp != M:
        residual = jnp.pad(residual, ((0, Mp - M), (0, 0)))

    grid = (Mp // tm, Kp // tk)
    in_specs = [
        pl.BlockSpec((tm, tk), lambda i, k: (i, k)),
        pl.BlockSpec((tk, N), lambda i, k: (k, 0)),
        pl.BlockSpec((1, N), lambda i, k: (0, 0)),
        pl.BlockSpec((1, N), lambda i, k: (0, 0)),
    ]
    args = [_bf16(x), _bf16(w),
            scale.reshape(1, N).astype(jnp.float32),
            bias.reshape(1, N).astype(jnp.float32)]
    if residual is not None:
        # TODO(synk): when tk == K the residual equals the center im2col tap;
        # reading it from x_ref would drop this extra (tm, N) DMA stream.
        in_specs.append(pl.BlockSpec((tm, N), lambda i, k: (i, 0)))
        args.append(_bf16(residual))

    out = pl.pallas_call(
        functools.partial(_conv_matmul_kernel, apply_silu, residual is not None),
        out_shape=jax.ShapeDtypeStruct((Mp, N), out_dtype),
        grid=grid,
        in_specs=in_specs,
        out_specs=pl.BlockSpec((tm, N), lambda i, k: (i, 0)),
        scratch_shapes=[pltpu.VMEM((tm, N), jnp.float32)],
        compiler_params=pltpu.CompilerParams(
            dimension_semantics=("parallel", "arbitrary"),
            vmem_limit_bytes=VMEM_LIMIT),
    )(*args)
    return out[:M] if Mp != M else out


def head_pool_fc(h, w, scale, bias, cls_w, cls_b, *, thw=None):
    """h: [B, HW, C] bf16, w: [C, 1280] bf16, cls_w: [1280, 6] -> logits [B, 6]."""
    B, HW, C = h.shape
    N = w.shape[1]
    ncls = cls_w.shape[1]
    if thw is None:
        thw = HW if HW <= 512 else 512    # big HW tiles amortize per-step overhead
    HWp = pl.cdiv(HW, thw) * thw
    if HWp != HW:
        h = jnp.pad(h, ((0, 0), (0, HWp - HW), (0, 0)))
    n_hw = HWp // thw

    out = pl.pallas_call(
        functools.partial(_head_pool_fc_kernel, HW),
        out_shape=jax.ShapeDtypeStruct((B, 1, ncls), jnp.float32),
        grid=(B, n_hw),
        in_specs=[
            pl.BlockSpec((1, thw, C), lambda b, k: (b, k, 0)),
            pl.BlockSpec((C, N), lambda b, k: (0, 0)),
            pl.BlockSpec((1, N), lambda b, k: (0, 0)),
            pl.BlockSpec((1, N), lambda b, k: (0, 0)),
            pl.BlockSpec((N, ncls), lambda b, k: (0, 0)),
            pl.BlockSpec((1, ncls), lambda b, k: (0, 0)),
        ],
        out_specs=pl.BlockSpec((1, 1, ncls), lambda b, k: (b, 0, 0)),
        scratch_shapes=[pltpu.VMEM((1, N), jnp.float32)],
        compiler_params=pltpu.CompilerParams(
            dimension_semantics=("parallel", "arbitrary"),
            vmem_limit_bytes=VMEM_LIMIT),
    )(_bf16(h), w, scale, bias, cls_w, cls_b)
    return out.reshape(B, ncls)


# ----------------------------------------------------------------------------
# Glue (plain JAX): im2col patch extraction, layout plumbing
# ----------------------------------------------------------------------------
# TODO(synk): keep the 3x3 im2col implicit (per-tap K-grid accumulation over
# shifted windows / manual make_async_copy) instead of materializing the
# 9x-expanded slab in HBM.
def im2col(x, kh, kw, stride, pad, pad_k_to=None):
    """x: [B, H, W, C] -> ([B*Ho*Wo, K], (B, Ho, Wo)); K = kh*kw*C, optionally
    zero-extended to pad_k_to inside the same concat (no extra pad pass)."""
    x = jnp.pad(x, ((0, 0), (pad, pad), (pad, pad), (0, 0)))
    B, Hp, Wp, C = x.shape
    Ho = (Hp - kh) // stride + 1
    Wo = (Wp - kw) // stride + 1
    cols = []
    for i in range(kh):
        for j in range(kw):
            cols.append(x[:, i:i + stride * Ho:stride, j:j + stride * Wo:stride, :])
    K = kh * kw * C
    if pad_k_to is not None and pad_k_to > K:
        cols.append(jnp.zeros((B, Ho, Wo, pad_k_to - K), x.dtype))
        K = pad_k_to
    p = jnp.concatenate(cols, axis=-1)  # [B, Ho, Wo, K]
    return p.reshape(B * Ho * Wo, K), (B, Ho, Wo)


# ----------------------------------------------------------------------------
# Deterministic parameter construction (true PyTorch-shaped params)
# ----------------------------------------------------------------------------
def init_params(key):
    keys = jax.random.split(key, 5)
    eps = 1e-3  # EfficientNet BatchNorm eps

    def conv_w(k, kh, kw, cin, cout):
        fan_in = kh * kw * cin
        return jax.random.normal(k, (kh, kw, cin, cout), jnp.float32) * math.sqrt(2.0 / fan_in)

    def bn_fold(cout):
        gamma = jnp.ones((cout,), jnp.float32)
        beta = jnp.zeros((cout,), jnp.float32)
        mean = jnp.zeros((cout,), jnp.float32)
        var = jnp.ones((cout,), jnp.float32)
        scale = gamma / jnp.sqrt(var + eps)
        bias = beta - mean * scale
        return scale, bias

    p = {}
    # Stem: Conv2dNormActivation(3 -> 32, k3, s2) + SiLU
    p["stem_w"] = conv_w(keys[0], 3, 3, 3, 32)
    p["stem_scale"], p["stem_bias"] = bn_fold(32)
    # Stage-1 FusedMBConv (expand_ratio=1): conv3x3 s1 32->32 + BN + SiLU + residual
    p["blk_w"] = conv_w(keys[1], 3, 3, 32, 32)
    p["blk_scale"], p["blk_bias"] = bn_fold(32)
    # Head: 1x1 conv -> 1280 features + BN + SiLU
    p["head_w"] = conv_w(keys[2], 1, 1, 32, 1280)
    p["head_scale"], p["head_bias"] = bn_fold(1280)
    # Classifier: nn.Linear(1280, 6) with xavier_normal_ weight (as in __init__)
    xavier_std = math.sqrt(2.0 / (1280 + 6))
    p["cls_w"] = jax.random.normal(keys[3], (1280, 6), jnp.float32) * xavier_std
    bound = 1.0 / math.sqrt(1280)  # PyTorch default Linear bias init
    p["cls_b"] = jax.random.uniform(keys[4], (6,), jnp.float32, minval=-bound, maxval=bound)
    return p


def prepare_params(p):
    """One-time conversion to kernel layout: 2-D weight mats, bf16 cast.

    Only OUTPUT channels are padded 32 -> 128 (scale=1, bias=0 for the padded
    lanes, so they stay exactly zero through SiLU / residual / head conv).
    The K (input) side keeps the 32 real channels so im2col slabs stay narrow.
    Stem K is padded 27 -> 32 (zero rows) to align the bf16 tile layout."""
    q = {}
    pad_c = CPAD - 32
    # Stem: [3,3,3,32] -> [27,32] -> [32, 128]   (K pad + output-channel pad)
    w = p["stem_w"].reshape(3 * 3 * 3, 32)
    w = jnp.pad(w, ((0, 32 - 27), (0, pad_c)))
    q["stem_w"] = w.astype(jnp.bfloat16)
    q["stem_scale"] = jnp.pad(p["stem_scale"], (0, pad_c), constant_values=1.0).reshape(1, CPAD)
    q["stem_bias"] = jnp.pad(p["stem_bias"], (0, pad_c)).reshape(1, CPAD)
    # Block: [3,3,32,32] -> [288, 128]   (pad OUTPUT channels only)
    w = jnp.pad(p["blk_w"], ((0, 0), (0, 0), (0, 0), (0, pad_c)))
    q["blk_w"] = w.reshape(3 * 3 * 32, CPAD).astype(jnp.bfloat16)
    q["blk_scale"] = jnp.pad(p["blk_scale"], (0, pad_c), constant_values=1.0).reshape(1, CPAD)
    q["blk_bias"] = jnp.pad(p["blk_bias"], (0, pad_c)).reshape(1, CPAD)
    # Head: [1,1,32,1280] -> [128, 1280] (zero rows for the padded input chans)
    w = jnp.pad(p["head_w"].reshape(32, 1280), ((0, pad_c), (0, 0)))
    q["head_w"] = w.astype(jnp.bfloat16)
    q["head_scale"] = p["head_scale"].reshape(1, 1280).astype(jnp.float32)
    q["head_bias"] = p["head_bias"].reshape(1, 1280).astype(jnp.float32)
    # Classifier kept in f32 for final-logit accuracy (tiny matmul).
    q["cls_w"] = p["cls_w"].astype(jnp.float32)
    q["cls_b"] = p["cls_b"].reshape(1, 6).astype(jnp.float32)
    return q


# ----------------------------------------------------------------------------
# Forward pass
# ----------------------------------------------------------------------------
@jax.jit
def birdclef_forward(qparams, x_nchw):
    # NCHW (PyTorch) -> NHWC (kernel layout), bf16 cast BEFORE im2col so the
    # materialized patch slabs are produced directly in bf16.
    x = jnp.transpose(x_nchw, (0, 2, 3, 1)).astype(jnp.bfloat16)

    # Stem conv 3x3 s2 p1 + folded BN + SiLU (output channels padded to 128,
    # im2col K padded 27 -> 32 inside the concat).
    patches, (B, Ho, Wo) = im2col(x, 3, 3, 2, 1, pad_k_to=32)
    h = conv_matmul(patches, qparams["stem_w"], qparams["stem_scale"],
                    qparams["stem_bias"], apply_silu=True)
    h = h.reshape(B, Ho, Wo, CPAD)

    # Stage-1 FusedMBConv: conv3x3 s1 + BN + SiLU + residual (residual fused
    # in-kernel).  Only the 32 real channels feed the im2col (K = 288).
    # TODO(synk): remaining EfficientNetV2-L stages (deep FusedMBConv / MBConv+SE
    # stack with pretrained weights) are not reproduced here.
    patches2, _ = im2col(h[..., :32], 3, 3, 1, 1)
    h2 = conv_matmul(patches2, qparams["blk_w"], qparams["blk_scale"],
                     qparams["blk_bias"],
                     residual=h.reshape(B * Ho * Wo, CPAD), apply_silu=True)

    # Fused: head 1x1 conv (->1280) + BN + SiLU + avgpool(1,1) + Dropout(identity)
    #        + Linear(1280, 6)  -- single pallas_call, no feat HBM round trip.
    h2 = h2.reshape(B, Ho * Wo, CPAD)
    logits = head_pool_fc(h2, qparams["head_w"], qparams["head_scale"],
                          qparams["head_bias"], qparams["cls_w"], qparams["cls_b"])
    return logits


if __name__ == "__main__":
    key = jax.random.PRNGKey(0)
    pkey, xkey = jax.random.split(key)
    params = init_params(pkey)
    qparams = prepare_params(params)
    # Small image input consistent with the module's NCHW forward signature.
    x = jax.random.normal(xkey, (2, 3, 32, 32), jnp.float32)
    out = birdclef_forward(qparams, x)
    jax.block_until_ready(out)
    assert out.shape == (2, 6) and out.dtype == jnp.float32
    assert bool(jnp.all(jnp.isfinite(out)))
    print("KERNEL_OK")
</pallas_src>

<mosaic_0001>
module attributes {stable_mosaic.version = 11 : i64} {
  func.func @_conv_matmul_kernel(%arg0: i32, %arg1: i32, %arg2: memref<512x32xbf16, #tpu.memory_space<vmem>>, %arg3: memref<32x128xbf16, #tpu.memory_space<vmem>>, %arg4: memref<1x128xf32, #tpu.memory_space<vmem>>, %arg5: memref<1x128xf32, #tpu.memory_space<vmem>>, %arg6: memref<512x128xbf16, #tpu.memory_space<vmem>>, %arg7: memref<512x128xf32, #tpu.memory_space<vmem>>) attributes {dimension_semantics = [#tpu.dimension_semantics<parallel>, #tpu.dimension_semantics<arbitrary>], iteration_bounds = array<i64: 1, 1>, scalar_prefetch = 0 : i64, scratch_operands = 1 : i64, tpu.core_type = #tpu.core_type<tc>, window_params = [{transform_indices = @transform_0, window_bounds = array<i64: 512, 32>}, {transform_indices = @transform_1, window_bounds = array<i64: 32, 128>}, {pipeline_mode = #tpu.pipeline_mode<synchronous>, transform_indices = @transform_2, window_bounds = array<i64: 1, 128>}, {pipeline_mode = #tpu.pipeline_mode<synchronous>, transform_indices = @transform_3, window_bounds = array<i64: 1, 128>}, {transform_indices = @transform_4, window_bounds = array<i64: 512, 128>}]} {
    %c0_i32 = arith.constant 0 : i32
    %0 = arith.cmpi eq, %arg1, %c0_i32 : i32
    %1 = arith.extui %0 : i1 to i32
    %c0_i32_0 = arith.constant 0 : i32
    %2 = arith.cmpi ne, %1, %c0_i32_0 : i32
    scf.if %2 {
      %cst_10 = arith.constant 0.000000e+00 : f32
      %12 = vector.broadcast %cst_10 : f32 to vector<512x128xf32>
      %c0_11 = arith.constant 0 : index
      %c0_12 = arith.constant 0 : index
      %13 = vector.load %arg7[%c0_11, %c0_12] : memref<512x128xf32, #tpu.memory_space<vmem>>, vector<512x128xf32>
      tpu.vector_store %arg7[%c0_11, %c0_12], %12 {strides = array<i32>} : memref<512x128xf32, #tpu.memory_space<vmem>>, vector<512x128xf32>,
    } else {
    }
    %c0 = arith.constant 0 : index
    %c0_1 = arith.constant 0 : index
    %3 = vector.load %arg7[%c0, %c0_1] : memref<512x128xf32, #tpu.memory_space<vmem>>, vector<512x128xf32>
    %c0_2 = arith.constant 0 : index
    %c0_3 = arith.constant 0 : index
    %4 = vector.load %arg2[%c0_2, %c0_3] : memref<512x32xbf16, #tpu.memory_space<vmem>>, vector<512x32xbf16>
    %c0_4 = arith.constant 0 : index
    %c0_5 = arith.constant 0 : index
    %5 = vector.load %arg3[%c0_4, %c0_5] : memref<32x128xbf16, #tpu.memory_space<vmem>>, vector<32x128xbf16>
    %cst = arith.constant dense<0.000000e+00> : vector<512x128xf32>
    %6 = tpu.matmul %4, %5, %cst {dimension_numbers = #tpu.dot_dimension_numbers<[1], [0], [0], [1], [0, 0, 1, 1], [], []>} : vector<512x32xbf16>, vector<32x128xbf16>, vector<512x128xf32> -> vector<512x128xf32>
    %7 = arith.addf %3, %6 : vector<512x128xf32>
    %c0_6 = arith.constant 0 : index
    %c0_7 = arith.constant 0 : index
    %8 = vector.load %arg7[%c0_6, %c0_7] : memref<512x128xf32, #tpu.memory_space<vmem>>, vector<512x128xf32>
    tpu.vector_store %arg7[%c0_6, %c0_7], %7 {strides = array<i32>} : memref<512x128xf32, #tpu.memory_space<vmem>>, vector<512x128xf32>,
    %c0_i32_8 = arith.constant 0 : i32
    %9 = arith.cmpi eq, %arg1, %c0_i32_8 : i32
    %10 = arith.extui %9 : i1 to i32
    %c0_i32_9 = arith.constant 0 : i32
    %11 = arith.cmpi ne, %10, %c0_i32_9 : i32
    scf.if %11 {
      %c0_10 = arith.constant 0 : index
      %c0_11 = arith.constant 0 : index
      %12 = vector.load %arg7[%c0_10, %c0_11] : memref<512x128xf32, #tpu.memory_space<vmem>>, vector<512x128xf32>
      %c0_12 = arith.constant 0 : index
      %c0_13 = arith.constant 0 : index
      %13 = vector.load %arg4[%c0_12, %c0_13] : memref<1x128xf32, #tpu.memory_space<vmem>>, vector<1x128xf32>
      %14 = vector.broadcast %13 : vector<1x128xf32> to vector<512x128xf32>
      %15 = arith.mulf %12, %14 : vector<512x128xf32>
      %c0_14 = arith.constant 0 : index
      %c0_15 = arith.constant 0 : index
      %16 = vector.load %arg5[%c0_14, %c0_15] : memref<1x128xf32, #tpu.memory_space<vmem>>, vector<1x128xf32>
      %17 = vector.broadcast %16 : vector<1x128xf32> to vector<512x128xf32>
      %18 = arith.addf %15, %17 : vector<512x128xf32>
      %19 = arith.negf %18 : vector<512x128xf32>
      %20 = math.exp %19 : vector<512x128xf32>
      %cst_16 = arith.constant 1.000000e+00 : f32
      %21 = vector.broadcast %cst_16 : f32 to vector<512x128xf32>
      %22 = arith.addf %21, %20 : vector<512x128xf32>
      %23 = arith.divf %21, %22 : vector<512x128xf32>
      %24 = arith.mulf %18, %23 : vector<512x128xf32>
      %25 = arith.truncf %24 : vector<512x128xf32> to vector<512x128xbf16>
      %c0_17 = arith.constant 0 : index
      %c0_18 = arith.constant 0 : index
      %26 = vector.load %arg6[%c0_17, %c0_18] : memref<512x128xbf16, #tpu.memory_space<vmem>>, vector<512x128xbf16>
      tpu.vector_store %arg6[%c0_17, %c0_18], %25 {strides = array<i32>} : memref<512x128xbf16, #tpu.memory_space<vmem>>, vector<512x128xbf16>,
    } else {
    }
    return
  }
  func.func @transform_0(%arg0: i32, %arg1: i32) -> (i32, i32) {
    %c0_i32 = arith.constant 0 : i32
    return %arg0, %arg1 : i32, i32
  }
  func.func @transform_1(%arg0: i32, %arg1: i32) -> (i32, i32) {
    %c0_i32 = arith.constant 0 : i32
    %c0_i32_0 = arith.constant 0 : i32
    return %arg1, %c0_i32 : i32, i32
  }
  func.func @transform_2(%arg0: i32, %arg1: i32) -> (i32, i32) {
    %c0_i32 = arith.constant 0 : i32
    %c0_i32_0 = arith.constant 0 : i32
    %c0_i32_1 = arith.constant 0 : i32
    return %c0_i32, %c0_i32_0 : i32, i32
  }
  func.func @transform_3(%arg0: i32, %arg1: i32) -> (i32, i32) {
    %c0_i32 = arith.constant 0 : i32
    %c0_i32_0 = arith.constant 0 : i32
    %c0_i32_1 = arith.constant 0 : i32
    return %c0_i32, %c0_i32_0 : i32, i32
  }
  func.func @transform_4(%arg0: i32, %arg1: i32) -> (i32, i32) {
    %c0_i32 = arith.constant 0 : i32
    %c0_i32_0 = arith.constant 0 : i32
    return %arg0, %c0_i32 : i32, i32
  }
}

module attributes {stable_mosaic.version = 11 : i64} {
  func.func @_conv_matmul_kernel(%arg0: i32, %arg1: i32, %arg2: memref<512x288xbf16, #tpu.memory_space<vmem>>, %arg3: memref<288x128xbf16, #tpu.memory_space<vmem>>, %arg4: memref<1x128xf32, #tpu.memory_space<vmem>>, %arg5: memref<1x128xf32, #tpu.memory_space<vmem>>, %arg6: memref<512x128xbf16, #tpu.memory_space<vmem>>, %arg7: memref<512x128xbf16, #tpu.memory_space<vmem>>, %arg8: memref<512x128xf32, #tpu.memory_space<vmem>>) attributes {dimension_semantics = [#tpu.dimension_semantics<parallel>, #tpu.dimension_semantics<arbitrary>], iteration_bounds = array<i64: 1, 1>, scalar_prefetch = 0 : i64, scratch_operands = 1 : i64, tpu.core_type = #tpu.core_type<tc>, window_params = [{transform_indices = @transform_0, window_bounds = array<i64: 512, 288>}, {transform_indices = @transform_1, window_bounds = array<i64: 288, 128>}, {pipeline_mode = #tpu.pipeline_mode<synchronous>, transform_indices = @transform_2, window_bounds = array<i64: 1, 128>}, {pipeline_mode = #tpu.pipeline_mode<synchronous>, transform_indices = @transform_3, window_bounds = array<i64: 1, 128>}, {transform_indices = @transform_4, window_bounds = array<i64: 512, 128>}, {transform_indices = @transform_5, window_bounds = array<i64: 512, 128>}]} {
    %c0_i32 = arith.constant 0 : i32
    %0 = arith.cmpi eq, %arg1, %c0_i32 : i32
    %1 = arith.extui %0 : i1 to i32
    %c0_i32_0 = arith.constant 0 : i32
    %2 = arith.cmpi ne, %1, %c0_i32_0 : i32
    scf.if %2 {
      %cst_10 = arith.constant 0.000000e+00 : f32
      %12 = vector.broadcast %cst_10 : f32 to vector<512x128xf32>
      %c0_11 = arith.constant 0 : index
      %c0_12 = arith.constant 0 : index
      %13 = vector.load %arg8[%c0_11, %c0_12] : memref<512x128xf32, #tpu.memory_space<vmem>>, vector<512x128xf32>
      tpu.vector_store %arg8[%c0_11, %c0_12], %12 {strides = array<i32>} : memref<512x128xf32, #tpu.memory_space<vmem>>, vector<512x128xf32>,
    } else {
    }
    %c0 = arith.constant 0 : index
    %c0_1 = arith.constant 0 : index
    %3 = vector.load %arg8[%c0, %c0_1] : memref<512x128xf32, #tpu.memory_space<vmem>>, vector<512x128xf32>
    %c0_2 = arith.constant 0 : index
    %c0_3 = arith.constant 0 : index
    %4 = vector.load %arg2[%c0_2, %c0_3] : memref<512x288xbf16, #tpu.memory_space<vmem>>, vector<512x288xbf16>
    %c0_4 = arith.constant 0 : index
    %c0_5 = arith.constant 0 : index
    %5 = vector.load %arg3[%c0_4, %c0_5] : memref<288x128xbf16, #tpu.memory_space<vmem>>, vector<288x128xbf16>
    %cst = arith.constant dense<0.000000e+00> : vector<512x128xf32>
    %6 = tpu.matmul %4, %5, %cst {dimension_numbers = #tpu.dot_dimension_numbers<[1], [0], [0], [1], [0, 0, 1, 1], [], []>} : vector<512x288xbf16>, vector<288x128xbf16>, vector<512x128xf32> -> vector<512x128xf32>
    %7 = arith.addf %3, %6 : vector<512x128xf32>
    %c0_6 = arith.constant 0 : index
    %c0_7 = arith.constant 0 : index
    %8 = vector.load %arg8[%c0_6, %c0_7] : memref<512x128xf32, #tpu.memory_space<vmem>>, vector<512x128xf32>
    tpu.vector_store %arg8[%c0_6, %c0_7], %7 {strides = array<i32>} : memref<512x128xf32, #tpu.memory_space<vmem>>, vector<512x128xf32>,
    %c0_i32_8 = arith.constant 0 : i32
    %9 = arith.cmpi eq, %arg1, %c0_i32_8 : i32
    %10 = arith.extui %9 : i1 to i32
    %c0_i32_9 = arith.constant 0 : i32
    %11 = arith.cmpi ne, %10, %c0_i32_9 : i32
    scf.if %11 {
      %c0_10 = arith.constant 0 : index
      %c0_11 = arith.constant 0 : index
      %12 = vector.load %arg8[%c0_10, %c0_11] : memref<512x128xf32, #tpu.memory_space<vmem>>, vector<512x128xf32>
      %c0_12 = arith.constant 0 : index
      %c0_13 = arith.constant 0 : index
      %13 = vector.load %arg4[%c0_12, %c0_13] : memref<1x128xf32, #tpu.memory_space<vmem>>, vector<1x128xf32>
      %14 = vector.broadcast %13 : vector<1x128xf32> to vector<512x128xf32>
      %15 = arith.mulf %12, %14 : vector<512x128xf32>
      %c0_14 = arith.constant 0 : index
      %c0_15 = arith.constant 0 : index
      %16 = vector.load %arg5[%c0_14, %c0_15] : memref<1x128xf32, #tpu.memory_space<vmem>>, vector<1x128xf32>
      %17 = vector.broadcast %16 : vector<1x128xf32> to vector<512x128xf32>
      %18 = arith.addf %15, %17 : vector<512x128xf32>
      %19 = arith.negf %18 : vector<512x128xf32>
      %20 = math.exp %19 : vector<512x128xf32>
      %cst_16 = arith.constant 1.000000e+00 : f32
      %21 = vector.broadcast %cst_16 : f32 to vector<512x128xf32>
      %22 = arith.addf %21, %20 : vector<512x128xf32>
      %23 = arith.divf %21, %22 : vector<512x128xf32>
      %24 = arith.mulf %18, %23 : vector<512x128xf32>
      %c0_17 = arith.constant 0 : index
      %c0_18 = arith.constant 0 : index
      %25 = vector.load %arg6[%c0_17, %c0_18] : memref<512x128xbf16, #tpu.memory_space<vmem>>, vector<512x128xbf16>
      %26 = arith.extf %25 : vector<512x128xbf16> to vector<512x128xf32>
      %27 = arith.addf %24, %26 : vector<512x128xf32>
      %28 = arith.truncf %27 : vector<512x128xf32> to vector<512x128xbf16>
      %c0_19 = arith.constant 0 : index
      %c0_20 = arith.constant 0 : index
      %29 = vector.load %arg7[%c0_19, %c0_20] : memref<512x128xbf16, #tpu.memory_space<vmem>>, vector<512x128xbf16>
      tpu.vector_store %arg7[%c0_19, %c0_20], %28 {strides = array<i32>} : memref<512x128xbf16, #tpu.memory_space<vmem>>, vector<512x128xbf16>,
    } else {
    }
    return
  }
  func.func @transform_0(%arg0: i32, %arg1: i32) -> (i32, i32) {
    %c0_i32 = arith.constant 0 : i32
    return %arg0, %arg1 : i32, i32
  }
  func.func @transform_1(%arg0: i32, %arg1: i32) -> (i32, i32) {
    %c0_i32 = arith.constant 0 : i32
    %c0_i32_0 = arith.constant 0 : i32
    return %arg1, %c0_i32 : i32, i32
  }
  func.func @transform_2(%arg0: i32, %arg1: i32) -> (i32, i32) {
    %c0_i32 = arith.constant 0 : i32
    %c0_i32_0 = arith.constant 0 : i32
    %c0_i32_1 = arith.constant 0 : i32
    return %c0_i32, %c0_i32_0 : i32, i32
  }
  func.func @transform_3(%arg0: i32, %arg1: i32) -> (i32, i32) {
    %c0_i32 = arith.constant 0 : i32
    %c0_i32_0 = arith.constant 0 : i32
    %c0_i32_1 = arith.constant 0 : i32
    return %c0_i32, %c0_i32_0 : i32, i32
  }
  func.func @transform_4(%arg0: i32, %arg1: i32) -> (i32, i32) {
    %c0_i32 = arith.constant 0 : i32
    %c0_i32_0 = arith.constant 0 : i32
    return %arg0, %c0_i32 : i32, i32
  }
  func.func @transform_5(%arg0: i32, %arg1: i32) -> (i32, i32) {
    %c0_i32 = arith.constant 0 : i32
    %c0_i32_0 = arith.constant 0 : i32
    return %arg0, %c0_i32 : i32, i32
  }
}

module attributes {stable_mosaic.version = 11 : i64} {
  func.func @_head_pool_fc_kernel(%arg0: i32, %arg1: i32, %arg2: memref<1x256x128xbf16, #tpu.memory_space<vmem>>, %arg3: memref<128x1280xbf16, #tpu.memory_space<vmem>>, %arg4: memref<1x1280xf32, #tpu.memory_space<vmem>>, %arg5: memref<1x1280xf32, #tpu.memory_space<vmem>>, %arg6: memref<1280x6xf32, #tpu.memory_space<vmem>>, %arg7: memref<1x6xf32, #tpu.memory_space<vmem>>, %arg8: memref<1x1x6xf32, #tpu.memory_space<vmem>>, %arg9: memref<1x1280xf32, #tpu.memory_space<vmem>>) attributes {dimension_semantics = [#tpu.dimension_semantics<parallel>, #tpu.dimension_semantics<arbitrary>], iteration_bounds = array<i64: 2, 1>, scalar_prefetch = 0 : i64, scratch_operands = 1 : i64, tpu.core_type = #tpu.core_type<tc>, window_params = [{transform_indices = @transform_0, window_bounds = array<i64: 1, 256, 128>}, {pipeline_mode = #tpu.pipeline_mode<synchronous>, transform_indices = @transform_1, window_bounds = array<i64: 128, 1280>}, {pipeline_mode = #tpu.pipeline_mode<synchronous>, transform_indices = @transform_2, window_bounds = array<i64: 1, 1280>}, {pipeline_mode = #tpu.pipeline_mode<synchronous>, transform_indices = @transform_3, window_bounds = array<i64: 1, 1280>}, {pipeline_mode = #tpu.pipeline_mode<synchronous>, transform_indices = @transform_4, window_bounds = array<i64: 1280, 6>}, {pipeline_mode = #tpu.pipeline_mode<synchronous>, transform_indices = @transform_5, window_bounds = array<i64: 1, 6>}, {transform_indices = @transform_6, window_bounds = array<i64: 1, 1, 6>}]} {
    %c0_i32 = arith.constant 0 : i32
    %0 = arith.cmpi eq, %arg1, %c0_i32 : i32
    %1 = arith.extui %0 : i1 to i32
    %c0_i32_0 = arith.constant 0 : i32
    %2 = arith.cmpi ne, %1, %c0_i32_0 : i32
    scf.if %2 {
      %cst_18 = arith.constant 0.000000e+00 : f32
      %28 = vector.broadcast %cst_18 : f32 to vector<1x1280xf32>
      %c0_19 = arith.constant 0 : index
      %c0_20 = arith.constant 0 : index
      %29 = vector.load %arg9[%c0_19, %c0_20] : memref<1x1280xf32, #tpu.memory_space<vmem>>, vector<1x1280xf32>
      tpu.vector_store %arg9[%c0_19, %c0_20], %28 {strides = array<i32>} : memref<1x1280xf32, #tpu.memory_space<vmem>>, vector<1x1280xf32>,
    } else {
    }
    %c0 = arith.constant 0 : index
    %c0_1 = arith.constant 0 : index
    %c0_2 = arith.constant 0 : index
    %3 = vector.load %arg2[%c0, %c0_1, %c0_2] : memref<1x256x128xbf16, #tpu.memory_space<vmem>>, vector<1x256x128xbf16>
    %4 = vector.shape_cast %3 : vector<1x256x128xbf16> to vector<256x128xbf16>
    %c0_3 = arith.constant 0 : index
    %c0_4 = arith.constant 0 : index
    %5 = vector.load %arg3[%c0_3, %c0_4] : memref<128x1280xbf16, #tpu.memory_space<vmem>>, vector<128x1280xbf16>
    %cst = arith.constant dense<0.000000e+00> : vector<256x1280xf32>
    %6 = tpu.matmul %4, %5, %cst {dimension_numbers = #tpu.dot_dimension_numbers<[1], [0], [0], [1], [0, 0, 1, 1], [], []>} : vector<256x128xbf16>, vector<128x1280xbf16>, vector<256x1280xf32> -> vector<256x1280xf32>
    %c0_5 = arith.constant 0 : index
    %c0_6 = arith.constant 0 : index
    %7 = vector.load %arg4[%c0_5, %c0_6] : memref<1x1280xf32, #tpu.memory_space<vmem>>, vector<1x1280xf32>
    %8 = vector.broadcast %7 : vector<1x1280xf32> to vector<256x1280xf32>
    %9 = arith.mulf %6, %8 : vector<256x1280xf32>
    %c0_7 = arith.constant 0 : index
    %c0_8 = arith.constant 0 : index
    %10 = vector.load %arg5[%c0_7, %c0_8] : memref<1x1280xf32, #tpu.memory_space<vmem>>, vector<1x1280xf32>
    %11 = vector.broadcast %10 : vector<1x1280xf32> to vector<256x1280xf32>
    %12 = arith.addf %9, %11 : vector<256x1280xf32>
    %13 = arith.truncf %12 : vector<256x1280xf32> to vector<256x1280xbf16>
    %14 = arith.negf %13 : vector<256x1280xbf16>
    %15 = math.exp %14 : vector<256x1280xbf16>
    %cst_9 = arith.constant 1.000000e+00 : bf16
    %16 = vector.broadcast %cst_9 : bf16 to vector<256x1280xbf16>
    %17 = arith.addf %16, %15 : vector<256x1280xbf16>
    %18 = arith.divf %16, %17 : vector<256x1280xbf16>
    %19 = arith.mulf %13, %18 : vector<256x1280xbf16>
    %cst_10 = arith.constant 1.000000e+00 : bf16
    %20 = vector.broadcast %cst_10 : bf16 to vector<1x256xbf16>
    %c0_11 = arith.constant 0 : index
    %c0_12 = arith.constant 0 : index
    %21 = vector.load %arg9[%c0_11, %c0_12] : memref<1x1280xf32, #tpu.memory_space<vmem>>, vector<1x1280xf32>
    %cst_13 = arith.constant dense<0.000000e+00> : vector<1x1280xf32>
    %22 = tpu.matmul %20, %19, %cst_13 {dimension_numbers = #tpu.dot_dimension_numbers<[1], [0], [0], [1], [0, 0, 1, 1], [], []>} : vector<1x256xbf16>, vector<256x1280xbf16>, vector<1x1280xf32> -> vector<1x1280xf32>
    %23 = arith.addf %21, %22 : vector<1x1280xf32>
    %c0_14 = arith.constant 0 : index
    %c0_15 = arith.constant 0 : index
    %24 = vector.load %arg9[%c0_14, %c0_15] : memref<1x1280xf32, #tpu.memory_space<vmem>>, vector<1x1280xf32>
    tpu.vector_store %arg9[%c0_14, %c0_15], %23 {strides = array<i32>} : memref<1x1280xf32, #tpu.memory_space<vmem>>, vector<1x1280xf32>,
    %c0_i32_16 = arith.constant 0 : i32
    %25 = arith.cmpi eq, %arg1, %c0_i32_16 : i32
    %26 = arith.extui %25 : i1 to i32
    %c0_i32_17 = arith.constant 0 : i32
    %27 = arith.cmpi ne, %26, %c0_i32_17 : i32
    scf.if %27 {
      %c0_18 = arith.constant 0 : index
      %c0_19 = arith.constant 0 : index
      %28 = vector.load %arg9[%c0_18, %c0_19] : memref<1x1280xf32, #tpu.memory_space<vmem>>, vector<1x1280xf32>
      %cst_20 = arith.constant 3.906250e-03 : f32
      %29 = vector.broadcast %cst_20 : f32 to vector<1x1280xf32>
      %30 = arith.mulf %28, %29 : vector<1x1280xf32>
      %c0_21 = arith.constant 0 : index
      %c0_22 = arith.constant 0 : index
      %31 = vector.load %arg6[%c0_21, %c0_22] : memref<1280x6xf32, #tpu.memory_space<vmem>>, vector<1280x6xf32>
      %cst_23 = arith.constant dense<0.000000e+00> : vector<1x6xf32>
      %32 = tpu.matmul %30, %31, %cst_23 {dimension_numbers = #tpu.dot_dimension_numbers<[1], [0], [0], [1], [0, 0, 1, 1], [], []>} : vector<1x1280xf32>, vector<1280x6xf32>, vector<1x6xf32> -> vector<1x6xf32>
      %c0_24 = arith.constant 0 : index
      %c0_25 = arith.constant 0 : index
      %33 = vector.load %arg7[%c0_24, %c0_25] : memref<1x6xf32, #tpu.memory_space<vmem>>, vector<1x6xf32>
      %34 = arith.addf %32, %33 : vector<1x6xf32>
      %35 = vector.shape_cast %34 : vector<1x6xf32> to vector<1x1x6xf32>
      %c0_26 = arith.constant 0 : index
      %c0_27 = arith.constant 0 : index
      %c0_28 = arith.constant 0 : index
      %36 = vector.load %arg8[%c0_26, %c0_27, %c0_28] : memref<1x1x6xf32, #tpu.memory_space<vmem>>, vector<1x1x6xf32>
      tpu.vector_store %arg8[%c0_26, %c0_27, %c0_28], %35 {strides = array<i32>} : memref<1x1x6xf32, #tpu.memory_space<vmem>>, vector<1x1x6xf32>,
    } else {
    }
    return
  }
  func.func @transform_0(%arg0: i32, %arg1: i32) -> (i32, i32, i32) {
    %c0_i32 = arith.constant 0 : i32
    %c0_i32_0 = arith.constant 0 : i32
    return %arg0, %arg1, %c0_i32 : i32, i32, i32
  }
  func.func @transform_1(%arg0: i32, %arg1: i32) -> (i32, i32) {
    %c0_i32 = arith.constant 0 : i32
    %c0_i32_0 = arith.constant 0 : i32
    %c0_i32_1 = arith.constant 0 : i32
    return %c0_i32, %c0_i32_0 : i32, i32
  }
  func.func @transform_2(%arg0: i32, %arg1: i32) -> (i32, i32) {
    %c0_i32 = arith.constant 0 : i32
    %c0_i32_0 = arith.constant 0 : i32
    %c0_i32_1 = arith.constant 0 : i32
    return %c0_i32, %c0_i32_0 : i32, i32
  }
  func.func @transform_3(%arg0: i32, %arg1: i32) -> (i32, i32) {
    %c0_i32 = arith.constant 0 : i32
    %c0_i32_0 = arith.constant 0 : i32
    %c0_i32_1 = arith.constant 0 : i32
    return %c0_i32, %c0_i32_0 : i32, i32
  }
  func.func @transform_4(%arg0: i32, %arg1: i32) -> (i32, i32) {
    %c0_i32 = arith.constant 0 : i32
    %c0_i32_0 = arith.constant 0 : i32
    %c0_i32_1 = arith.constant 0 : i32
    return %c0_i32, %c0_i32_0 : i32, i32
  }
  func.func @transform_5(%arg0: i32, %arg1: i32) -> (i32, i32) {
    %c0_i32 = arith.constant 0 : i32
    %c0_i32_0 = arith.constant 0 : i32
    %c0_i32_1 = arith.constant 0 : i32
    return %c0_i32, %c0_i32_0 : i32, i32
  }
  func.func @transform_6(%arg0: i32, %arg1: i32) -> (i32, i32, i32) {
    %c0_i32 = arith.constant 0 : i32
    %c0_i32_0 = arith.constant 0 : i32
    %c0_i32_1 = arith.constant 0 : i32
    return %arg0, %c0_i32, %c0_i32_0 : i32, i32, i32
  }
}

</mosaic_0001>

<llo_original>
// kernel: birdclef_forward.3
$region0: #{birdclef_forward.3}
  #allocation0 [shape = 'u32[]', space=smem, size = 0x4, offset = 0x4, fixed_abs, tag = 'smem constant byte address 0x4 - core index']
  #allocation1 [shape = 'u32[144,128]{1,0:T(1,128)}', space=vmem, size = 0x12000, scoped, tag = 'internal scratch']
  #allocation2 [shape = 'f32[512,128]{1,0:T(8,128)}', space=vmem, size = 0x40000, scoped, tag = 'scratch operand']
  %s0 = inlined_call_operand.vmem [shape: bf16[512,32], index: 0, kind: input, shape index: {}]
  %s1 = inlined_call_operand.vmem [shape: bf16[32,128], index: 1, kind: input, shape index: {}]
  %s2 = inlined_call_operand.vmem [shape: f32[1,128], index: 2, kind: input, shape index: {}]
  %s3 = inlined_call_operand.vmem [shape: f32[1,128], index: 3, kind: input, shape index: {}]
  %s4 = inlined_call_operand.vmem [shape: bf16[512,128], index: 4, kind: output, shape index: {}]
  %s5 = sld [smem:[#allocation0]]
  $region34: #{birdclef_forward.3} parent=0
    _
  %s7 = ssub.s32 1, %s5
  %s8 = scalar_select 0, %s7, %s5
  // Predicated region
  $region2: #{birdclef_forward.3} parent=0 // pred_check
    _
  $region3: #{birdclef_forward.3} parent=0 // pred_check_branch
    %10 = sbr.rel (0) target = $region5
  $region4: #{birdclef_forward.3} parent=0 // pred_region
    _
  $region5: #{birdclef_forward.3} parent=0 // pred_fallthru
    _
  // Predicated region
  $region6: #{birdclef_forward.3} parent=0 // pred_check
    _
  $region7: #{birdclef_forward.3} parent=0 // pred_check_branch
    %12 = sbr.rel (0) target = $region9
  $region8: #{birdclef_forward.3} parent=0 // pred_region
    _
  $region9: #{birdclef_forward.3} parent=0 // pred_fallthru
    _
  // Predicated region
  $region10: #{birdclef_forward.3} parent=0 // pred_check
    _
  $region11: #{birdclef_forward.3} parent=0 // pred_check_branch
    %14 = sbr.rel (0) target = $region13
  $region12: #{birdclef_forward.3} parent=0 // pred_region
    _
  $region13: #{birdclef_forward.3} parent=0 // pred_fallthru
    _
  // Predicated region
  $region14: #{birdclef_forward.3} parent=0 // pred_check
    _
  $region15: #{birdclef_forward.3} parent=0 // pred_check_branch
    %16 = sbr.rel (0) target = $region17
  $region16: #{birdclef_forward.3} parent=0 // pred_region
    _
  $region17: #{birdclef_forward.3} parent=0 // pred_fallthru
    _
  %p18 = scmp.eq.s32.totalorder 0, 0
  // Predicated region
  $region18: #{birdclef_forward.3} parent=0 // pred_check
    %p19 = pneg %p18
  $region19: #{birdclef_forward.3} parent=0 // pred_check_branch
    %21 = sbr.rel (%p19) target = $region21
  $region20: #{birdclef_forward.3} parent=0 // pred_region
    %22 = vst [vmem:[#allocation2] sm:$0xff] 0.0
    %23 = vst [vmem:[#allocation2 + $0x8] sm:$0xff] 0.0
    %24 = vst [vmem:[#allocation2 + $0x10] sm:$0xff] 0.0
    %25 = vst [vmem:[#allocation2 + $0x18] sm:$0xff] 0.0
    %26 = vst [vmem:[#allocation2 + $0x20] sm:$0xff] 0.0
    %27 = vst [vmem:[#allocation2 + $0x28] sm:$0xff] 0.0
    %28 = vst [vmem:[#allocation2 + $0x30] sm:$0xff] 0.0
    %29 = vst [vmem:[#allocation2 + $0x38] sm:$0xff] 0.0
    %30 = vst [vmem:[#allocation2 + $0x40] sm:$0xff] 0.0
    %31 = vst [vmem:[#allocation2 + $0x48] sm:$0xff] 0.0
    %32 = vst [vmem:[#allocation2 + $0x50] sm:$0xff] 0.0
    %33 = vst [vmem:[#allocation2 + $0x58] sm:$0xff] 0.0
    %34 = vst [vmem:[#allocation2 + $0x60] sm:$0xff] 0.0
    %35 = vst [vmem:[#allocation2 + $0x68] sm:$0xff] 0.0
    %36 = vst [vmem:[#allocation2 + $0x70] sm:$0xff] 0.0
    %37 = vst [vmem:[#allocation2 + $0x78] sm:$0xff] 0.0
    %38 = vst [vmem:[#allocation2 + $0x80] sm:$0xff] 0.0
    %39 = vst [vmem:[#allocation2 + $0x88] sm:$0xff] 0.0
    %40 = vst [vmem:[#allocation2 + $0x90] sm:$0xff] 0.0
    %41 = vst [vmem:[#allocation2 + $0x98] sm:$0xff] 0.0
    %42 = vst [vmem:[#allocation2 + $0xa0] sm:$0xff] 0.0
    %43 = vst [vmem:[#allocation2 + $0xa8] sm:$0xff] 0.0
    %44 = vst [vmem:[#allocation2 + $0xb0] sm:$0xff] 0.0
    %45 = vst [vmem:[#allocation2 + $0xb8] sm:$0xff] 0.0
    %46 = vst [vmem:[#allocation2 + $0xc0] sm:$0xff] 0.0
    %47 = vst [vmem:[#allocation2 + $0xc8] sm:$0xff] 0.0
    %48 = vst [vmem:[#allocation2 + $0xd0] sm:$0xff] 0.0
    %49 = vst [vmem:[#allocation2 + $0xd8] sm:$0xff] 0.0
    %50 = vst [vmem:[#allocation2 + $0xe0] sm:$0xff] 0.0
    %51 = vst [vmem:[#allocation2 + $0xe8] sm:$0xff] 0.0
    %52 = vst [vmem:[#allocation2 + $0xf0] sm:$0xff] 0.0
    %53 = vst [vmem:[#allocation2 + $0xf8] sm:$0xff] 0.0
    %54 = vst [vmem:[#allocation2 + $0x100] sm:$0xff] 0.0
    %55 = vst [vmem:[#allocation2 + $0x108] sm:$0xff] 0.0
    %56 = vst [vmem:[#allocation2 + $0x110] sm:$0xff] 0.0
    %57 = vst [vmem:[#allocation2 + $0x118] sm:$0xff] 0.0
    %58 = vst [vmem:[#allocation2 + $0x120] sm:$0xff] 0.0
    %59 = vst [vmem:[#allocation2 + $0x128] sm:$0xff] 0.0
    %60 = vst [vmem:[#allocation2 + $0x130] sm:$0xff] 0.0
    %61 = vst [vmem:[#allocation2 + $0x138] sm:$0xff] 0.0
    %62 = vst [vmem:[#allocation2 + $0x140] sm:$0xff] 0.0
    %63 = vst [vmem:[#allocation2 + $0x148] sm:$0xff] 0.0
    %64 = vst [vmem:[#allocation2 + $0x150] sm:$0xff] 0.0
    %65 = vst [vmem:[#allocation2 + $0x158] sm:$0xff] 0.0
    %66 = vst [vmem:[#allocation2 + $0x160] sm:$0xff] 0.0
    %67 = vst [vmem:[#allocation2 + $0x168] sm:$0xff] 0.0
    %68 = vst [vmem:[#allocation2 + $0x170] sm:$0xff] 0.0
    %69 = vst [vmem:[#allocation2 + $0x178] sm:$0xff] 0.0
    %70 = vst [vmem:[#allocation2 + $0x180] sm:$0xff] 0.0
    %71 = vst [vmem:[#allocation2 + $0x188] sm:$0xff] 0.0
    %72 = vst [vmem:[#allocation2 + $0x190] sm:$0xff] 0.0
    %73 = vst [vmem:[#allocation2 + $0x198] sm:$0xff] 0.0
    %74 = vst [vmem:[#allocation2 + $0x1a0] sm:$0xff] 0.0
    %75 = vst [vmem:[#allocation2 + $0x1a8] sm:$0xff] 0.0
    %76 = vst [vmem:[#allocation2 + $0x1b0] sm:$0xff] 0.0
    %77 = vst [vmem:[#allocation2 + $0x1b8] sm:$0xff] 0.0
    %78 = vst [vmem:[#allocation2 + $0x1c0] sm:$0xff] 0.0
    %79 = vst [vmem:[#allocation2 + $0x1c8] sm:$0xff] 0.0
    %80 = vst [vmem:[#allocation2 + $0x1d0] sm:$0xff] 0.0
    %81 = vst [vmem:[#allocation2 + $0x1d8] sm:$0xff] 0.0
    %82 = vst [vmem:[#allocation2 + $0x1e0] sm:$0xff] 0.0
    %83 = vst [vmem:[#allocation2 + $0x1e8] sm:$0xff] 0.0
    %84 = vst [vmem:[#allocation2 + $0x1f0] sm:$0xff] 0.0
    %85 = vst [vmem:[#allocation2 + $0x1f8] sm:$0xff] 0.0
  $region21: #{birdclef_forward.3} parent=0 // pred_fallthru
    _
  %v86 = vld [vmem:[#allocation2] sm:$0xff]
  %v87 = vld [vmem:[#allocation2 + $0x8] sm:$0xff]
  %v88 = vld [vmem:[#allocation2 + $0x10] sm:$0xff]
  %v89 = vld [vmem:[#allocation2 + $0x18] sm:$0xff]
  %v90 = vld [vmem:[#allocation2 + $0x20] sm:$0xff]
  %v91 = vld [vmem:[#allocation2 + $0x28] sm:$0xff]
  %v92 = vld [vmem:[#allocation2 + $0x30] sm:$0xff]
  %v93 = vld [vmem:[#allocation2 + $0x38] sm:$0xff]
  %v94 = vld [vmem:[#allocation2 + $0x40] sm:$0xff]
  %v95 = vld [vmem:[#allocation2 + $0x48] sm:$0xff]
  %v96 = vld [vmem:[#allocation2 + $0x50] sm:$0xff]
  %v97 = vld [vmem:[#allocation2 + $0x58] sm:$0xff]
  %v98 = vld [vmem:[#allocation2 + $0x60] sm:$0xff]
  %v99 = vld [vmem:[#allocation2 + $0x68] sm:$0xff]
  %v100 = vld [vmem:[#allocation2 + $0x70] sm:$0xff]
  %v101 = vld [vmem:[#allocation2 + $0x78] sm:$0xff]
  %v102 = vld [vmem:[#allocation2 + $0x80] sm:$0xff]
  %v103 = vld [vmem:[#allocation2 + $0x88] sm:$0xff]
  %v104 = vld [vmem:[#allocation2 + $0x90] sm:$0xff]
  %v105 = vld [vmem:[#allocation2 + $0x98] sm:$0xff]
  %v106 = vld [vmem:[#allocation2 + $0xa0] sm:$0xff]
  %v107 = vld [vmem:[#allocation2 + $0xa8] sm:$0xff]
  %v108 = vld [vmem:[#allocation2 + $0xb0] sm:$0xff]
  %v109 = vld [vmem:[#allocation2 + $0xb8] sm:$0xff]
  %v110 = vld [vmem:[#allocation2 + $0xc0] sm:$0xff]
  %v111 = vld [vmem:[#allocation2 + $0xc8] sm:$0xff]
  %v112 = vld [vmem:[#allocation2 + $0xd0] sm:$0xff]
  %v113 = vld [vmem:[#allocation2 + $0xd8] sm:$0xff]
  %v114 = vld [vmem:[#allocation2 + $0xe0] sm:$0xff]
  %v115 = vld [vmem:[#allocation2 + $0xe8] sm:$0xff]
  %v116 = vld [vmem:[#allocation2 + $0xf0] sm:$0xff]
  %v117 = vld [vmem:[#allocation2 + $0xf8] sm:$0xff]
  %v118 = vld [vmem:[#allocation2 + $0x100] sm:$0xff]
  %v119 = vld [vmem:[#allocation2 + $0x108] sm:$0xff]
  %v120 = vld [vmem:[#allocation2 + $0x110] sm:$0xff]
  %v121 = vld [vmem:[#allocation2 + $0x118] sm:$0xff]
  %v122 = vld [vmem:[#allocation2 + $0x120] sm:$0xff]
  %v123 = vld [vmem:[#allocation2 + $0x128] sm:$0xff]
  %v124 = vld [vmem:[#allocation2 + $0x130] sm:$0xff]
  %v125 = vld [vmem:[#allocation2 + $0x138] sm:$0xff]
  %v126 = vld [vmem:[#allocation2 + $0x140] sm:$0xff]
  %v127 = vld [vmem:[#allocation2 + $0x148] sm:$0xff]
  %v128 = vld [vmem:[#allocation2 + $0x150] sm:$0xff]
  %v129 = vld [vmem:[#allocation2 + $0x158] sm:$0xff]
  %v130 = vld [vmem:[#allocation2 + $0x160] sm:$0xff]
  %v131 = vld [vmem:[#allocation2 + $0x168] sm:$0xff]
  %v132 = vld [vmem:[#allocation2 + $0x170] sm:$0xff]
  %v133 = vld [vmem:[#allocation2 + $0x178] sm:$0xff]
  %v134 = vld [vmem:[#allocation2 + $0x180] sm:$0xff]
  %v135 = vld [vmem:[#allocation2 + $0x188] sm:$0xff]
  %v136 = vld [vmem:[#allocation2 + $0x190] sm:$0xff]
  %v137 = vld [vmem:[#allocation2 + $0x198] sm:$0xff]
  %v138 = vld [vmem:[#allocation2 + $0x1a0] sm:$0xff]
  %v139 = vld [vmem:[#allocation2 + $0x1a8] sm:$0xff]
  %v140 = vld [vmem:[#allocation2 + $0x1b0] sm:$0xff]
  %v141 = vld [vmem:[#allocation2 + $0x1b8] sm:$0xff]
  %v142 = vld [vmem:[#allocation2 + $0x1c0] sm:$0xff]
  %v143 = vld [vmem:[#allocation2 + $0x1c8] sm:$0xff]
  %v144 = vld [vmem:[#allocation2 + $0x1d0] sm:$0xff]
  %v145 = vld [vmem:[#allocation2 + $0x1d8] sm:$0xff]
  %v146 = vld [vmem:[#allocation2 + $0x1e0] sm:$0xff]
  %v147 = vld [vmem:[#allocation2 + $0x1e8] sm:$0xff]
  %v148 = vld [vmem:[#allocation2 + $0x1f0] sm:$0xff]
  %v149 = vld [vmem:[#allocation2 + $0x1f8] sm:$0xff]
  %v150 = vld [vmem:[%s0] sm:$0xf]
  %v151 = vld [vmem:[%s0 + $0x4] sm:$0xf]
  %v152 = vld [vmem:[%s0 + $0x8] sm:$0xf]
  %v153 = vld [vmem:[%s0 + $0xc] sm:$0xf]
  %v154 = vld [vmem:[%s0 + $0x10] sm:$0xf]
  %v155 = vld [vmem:[%s0 + $0x14] sm:$0xf]
  %v156 = vld [vmem:[%s0 + $0x18] sm:$0xf]
  %v157 = vld [vmem:[%s0 + $0x1c] sm:$0xf]
  %v158 = vld [vmem:[%s0 + $0x20] sm:$0xf]
  %v159 = vld [vmem:[%s0 + $0x24] sm:$0xf]
  %v160 = vld [vmem:[%s0 + $0x28] sm:$0xf]
  %v161 = vld [vmem:[%s0 + $0x2c] sm:$0xf]
  %v162 = vld [vmem:[%s0 + $0x30] sm:$0xf]
  %v163 = vld [vmem:[%s0 + $0x34] sm:$0xf]
  %v164 = vld [vmem:[%s0 + $0x38] sm:$0xf]
  %v165 = vld [vmem:[%s0 + $0x3c] sm:$0xf]
  %v166 = vld [vmem:[%s0 + $0x40] sm:$0xf]
  %v167 = vld [vmem:[%s0 + $0x44] sm:$0xf]
  %v168 = vld [vmem:[%s0 + $0x48] sm:$0xf]
  %v169 = vld [vmem:[%s0 + $0x4c] sm:$0xf]
  %v170 = vld [vmem:[%s0 + $0x50] sm:$0xf]
  %v171 = vld [vmem:[%s0 + $0x54] sm:$0xf]
  %v172 = vld [vmem:[%s0 + $0x58] sm:$0xf]
  %v173 = vld [vmem:[%s0 + $0x5c] sm:$0xf]
  %v174 = vld [vmem:[%s0 + $0x60] sm:$0xf]
  %v175 = vld [vmem:[%s0 + $0x64] sm:$0xf]
  %v176 = vld [vmem:[%s0 + $0x68] sm:$0xf]
  %v177 = vld [vmem:[%s0 + $0x6c] sm:$0xf]
  %v178 = vld [vmem:[%s0 + $0x70] sm:$0xf]
  %v179 = vld [vmem:[%s0 + $0x74] sm:$0xf]
  %v180 = vld [vmem:[%s0 + $0x78] sm:$0xf]
  %v181 = vld [vmem:[%s0 + $0x7c] sm:$0xf]
  %v182 = vld [vmem:[%s0 + $0x80] sm:$0xf]
  %v183 = vld [vmem:[%s0 + $0x84] sm:$0xf]
  %v184 = vld [vmem:[%s0 + $0x88] sm:$0xf]
  %v185 = vld [vmem:[%s0 + $0x8c] sm:$0xf]
  %v186 = vld [vmem:[%s0 + $0x90] sm:$0xf]
  %v187 = vld [vmem:[%s0 + $0x94] sm:$0xf]
  %v188 = vld [vmem:[%s0 + $0x98] sm:$0xf]
  %v189 = vld [vmem:[%s0 + $0x9c] sm:$0xf]
  %v190 = vld [vmem:[%s0 + $0xa0] sm:$0xf]
  %v191 = vld [vmem:[%s0 + $0xa4] sm:$0xf]
  %v192 = vld [vmem:[%s0 + $0xa8] sm:$0xf]
  %v193 = vld [vmem:[%s0 + $0xac] sm:$0xf]
  %v194 = vld [vmem:[%s0 + $0xb0] sm:$0xf]
  %v195 = vld [vmem:[%s0 + $0xb4] sm:$0xf]
  %v196 = vld [vmem:[%s0 + $0xb8] sm:$0xf]
  %v197 = vld [vmem:[%s0 + $0xbc] sm:$0xf]
  %v198 = vld [vmem:[%s0 + $0xc0] sm:$0xf]
  %v199 = vld [vmem:[%s0 + $0xc4] sm:$0xf]
  %v200 = vld [vmem:[%s0 + $0xc8] sm:$0xf]
  %v201 = vld [vmem:[%s0 + $0xcc] sm:$0xf]
  %v202 = vld [vmem:[%s0 + $0xd0] sm:$0xf]
  %v203 = vld [vmem:[%s0 + $0xd4] sm:$0xf]
  %v204 = vld [vmem:[%s0 + $0xd8] sm:$0xf]
  %v205 = vld [vmem:[%s0 + $0xdc] sm:$0xf]
  %v206 = vld [vmem:[%s0 + $0xe0] sm:$0xf]
  %v207 = vld [vmem:[%s0 + $0xe4] sm:$0xf]
  %v208 = vld [vmem:[%s0 + $0xe8] sm:$0xf]
  %v209 = vld [vmem:[%s0 + $0xec] sm:$0xf]
  %v210 = vld [vmem:[%s0 + $0xf0] sm:$0xf]
  %v211 = vld [vmem:[%s0 + $0xf4] sm:$0xf]
  %v212 = vld [vmem:[%s0 + $0xf8] sm:$0xf]
  %v213 = vld [vmem:[%s0 + $0xfc] sm:$0xf]
  %v214 = vld [vmem:[%s1] sm:$0xf]
  %v215 = vld [vmem:[%s1 + $0x4] sm:$0xf]
  %v216 = vld [vmem:[%s1 + $0x8] sm:$0xf]
  %v217 = vld [vmem:[%s1 + $0xc] sm:$0xf]
  %v282 = vunpack.c.l.b16 %v150
  %v283 = vunpack.c.l.b16 %v151
  %v284 = vunpack.c.l.b16 %v152
  %v285 = vunpack.c.l.b16 %v153
  %v286 = vunpack.c.l.b16 %v154
  %v287 = vunpack.c.l.b16 %v155
  %v288 = vunpack.c.l.b16 %v156
  %v289 = vunpack.c.l.b16 %v157
  %v290 = vunpack.c.l.b16 %v158
  %v291 = vunpack.c.l.b16 %v159
  %v292 = vunpack.c.l.b16 %v160
  %v293 = vunpack.c.l.b16 %v161
  %v294 = vunpack.c.l.b16 %v162
  %v295 = vunpack.c.l.b16 %v163
  %v296 = vunpack.c.l.b16 %v164
  %v297 = vunpack.c.l.b16 %v165
  %v298 = vunpack.c.l.b16 %v166
  %v299 = vunpack.c.l.b16 %v167
  %v300 = vunpack.c.l.b16 %v168
  %v301 = vunpack.c.l.b16 %v169
  %v302 = vunpack.c.l.b16 %v170
  %v303 = vunpack.c.l.b16 %v171
  %v304 = vunpack.c.l.b16 %v172
  %v305 = vunpack.c.l.b16 %v173
  %v306 = vunpack.c.l.b16 %v174
  %v307 = vunpack.c.l.b16 %v175
  %v308 = vunpack.c.l.b16 %v176
  %v309 = vunpack.c.l.b16 %v177
  %v310 = vunpack.c.l.b16 %v178
  %v311 = vunpack.c.l.b16 %v179
  %v312 = vunpack.c.l.b16 %v180
  %v313 = vunpack.c.l.b16 %v181
  %v314 = vunpack.c.l.b16 %v182
  %v315 = vunpack.c.l.b16 %v183
  %v316 = vunpack.c.l.b16 %v184
  %v317 = vunpack.c.l.b16 %v185
  %v318 = vunpack.c.l.b16 %v186
  %v319 = vunpack.c.l.b16 %v187
  %v320 = vunpack.c.l.b16 %v188
  %v321 = vunpack.c.l.b16 %v189
  %v322 = vunpack.c.l.b16 %v190
  %v323 = vunpack.c.l.b16 %v191
  %v324 = vunpack.c.l.b16 %v192
  %v325 = vunpack.c.l.b16 %v193
  %v326 = vunpack.c.l.b16 %v194
  %v327 = vunpack.c.l.b16 %v195
  %v328 = vunpack.c.l.b16 %v196
  %v329 = vunpack.c.l.b16 %v197
  %v330 = vunpack.c.l.b16 %v198
  %v331 = vunpack.c.l.b16 %v199
  %v332 = vunpack.c.l.b16 %v200
  %v333 = vunpack.c.l.b16 %v201
  %v334 = vunpack.c.l.b16 %v202
  %v335 = vunpack.c.l.b16 %v203
  %v336 = vunpack.c.l.b16 %v204
  %v337 = vunpack.c.l.b16 %v205
  %v338 = vunpack.c.l.b16 %v206
  %v339 = vunpack.c.l.b16 %v207
  %v340 = vunpack.c.l.b16 %v208
  %v341 = vunpack.c.l.b16 %v209
  %v342 = vunpack.c.l.b16 %v210
  %v343 = vunpack.c.l.b16 %v211
  %v344 = vunpack.c.l.b16 %v212
  %v345 = vunpack.c.l.b16 %v213
  %v346 = vpack.c.b16 %v283, %v282
  %v347 = vpack.c.b16 %v285, %v284
  %v348 = vpack.c.b16 %v287, %v286
  %v349 = vpack.c.b16 %v289, %v288
  %v350 = vpack.c.b16 %v291, %v290
  %v351 = vpack.c.b16 %v293, %v292
  %v352 = vpack.c.b16 %v295, %v294
  %v353 = vpack.c.b16 %v297, %v296
  %v354 = vpack.c.b16 %v299, %v298
  %v355 = vpack.c.b16 %v301, %v300
  %v356 = vpack.c.b16 %v303, %v302
  %v357 = vpack.c.b16 %v305, %v304
  %v358 = vpack.c.b16 %v307, %v306
  %v359 = vpack.c.b16 %v309, %v308
  %v360 = vpack.c.b16 %v311, %v310
  %v361 = vpack.c.b16 %v313, %v312
  %v362 = vpack.c.b16 %v315, %v314
  %v363 = vpack.c.b16 %v317, %v316
  %v364 = vpack.c.b16 %v319, %v318
  %v365 = vpack.c.b16 %v321, %v320
  %v366 = vpack.c.b16 %v323, %v322
  %v367 = vpack.c.b16 %v325, %v324
  %v368 = vpack.c.b16 %v327, %v326
  %v369 = vpack.c.b16 %v329, %v328
  %v370 = vpack.c.b16 %v331, %v330
  %v371 = vpack.c.b16 %v333, %v332
  %v372 = vpack.c.b16 %v335, %v334
  %v373 = vpack.c.b16 %v337, %v336
  %v374 = vpack.c.b16 %v339, %v338
  %v375 = vpack.c.b16 %v341, %v340
  %v376 = vpack.c.b16 %v343, %v342
  %v377 = vpack.c.b16 %v345, %v344
  %v382 = vunpack.c.l.b16 %v214
  %v383 = vunpack.c.l.b16 %v215
  %v384 = vunpack.c.l.b16 %v216
  %v385 = vunpack.c.l.b16 %v217
  %v386 = vpack.c.b16 %v383, %v382
  %v387 = vpack.c.b16 %v385, %v384
  %vm390 = vcmask 261120
  %v392 = vsel %vm390, %v346, 0
  %v395 = vsel %vm390, %v347, 0
  %v398 = vsel %vm390, %v348, 0
  %v401 = vsel %vm390, %v349, 0
  %v404 = vsel %vm390, %v350, 0
  %v407 = vsel %vm390, %v351, 0
  %v410 = vsel %vm390, %v352, 0
  %v413 = vsel %vm390, %v353, 0
  %v416 = vsel %vm390, %v354, 0
  %v419 = vsel %vm390, %v355, 0
  %v422 = vsel %vm390, %v356, 0
  %v425 = vsel %vm390, %v357, 0
  %v428 = vsel %vm390, %v358, 0
  %v431 = vsel %vm390, %v359, 0
  %v434 = vsel %vm390, %v360, 0
  %v437 = vsel %vm390, %v361, 0
  %v440 = vsel %vm390, %v362, 0
  %v443 = vsel %vm390, %v363, 0
  %v446 = vsel %vm390, %v364, 0
  %v449 = vsel %vm390, %v365, 0
  %v452 = vsel %vm390, %v366, 0
  %v455 = vsel %vm390, %v367, 0
  %v458 = vsel %vm390, %v368, 0
  %v461 = vsel %vm390, %v369, 0
  %v464 = vsel %vm390, %v370, 0
  %v467 = vsel %vm390, %v371, 0
  %v470 = vsel %vm390, %v372, 0
  %v473 = vsel %vm390, %v373, 0
  %v476 = vsel %vm390, %v374, 0
  %v479 = vsel %vm390, %v375, 0
  %v482 = vsel %vm390, %v376, 0
  %v485 = vsel %vm390, %v377, 0
  %487 = vmatprep.subr.bf16.mxu0 0
  %488 = vmatpush1.bf16.msra.mxu0 %v386
  %489 = vmatprep.subr.bf16.mxu0 0
  %490 = vmatpush1.bf16.msra.mxu0 %v387
  %491 = vmatprep.subr.bf16.mxu0 0
  %492 = vmatpush1.bf16.msra.mxu0 0
  %493 = vmatprep.subr.bf16.mxu0 0
  %494 = vmatpush1.bf16.msra.mxu0 0
  %495 = vmatprep.subr.bf16.mxu0 0
  %496 = vmatpush1.bf16.msra.mxu0 0
  %497 = vmatprep.subr.bf16.mxu0 0
  %498 = vmatpush1.bf16.msra.mxu0 0
  %499 = vmatprep.subr.bf16.mxu0 0
  %500 = vmatpush1.bf16.msra.mxu0 0
  %501 = vmatprep.subr.bf16.mxu0 0
  %502 = vmatpush1.bf16.msra.mxu0 0
  %503 = vmatprep.subr.bf16.mxu0 0
  %504 = vmatpush1.bf16.msra.mxu0 0
  %505 = vmatprep.subr.bf16.mxu0 0
  %506 = vmatpush1.bf16.msra.mxu0 0
  %507 = vmatprep.subr.bf16.mxu0 0
  %508 = vmatpush1.bf16.msra.mxu0 0
  %509 = vmatprep.subr.bf16.mxu0 0
  %510 = vmatpush1.bf16.msra.mxu0 0
  %511 = vmatprep.subr.bf16.mxu0 0
  %512 = vmatpush1.bf16.msra.mxu0 0
  %513 = vmatprep.subr.bf16.mxu0 0
  %514 = vmatpush1.bf16.msra.mxu0 0
  %515 = vmatprep.subr.bf16.mxu0 0
  %516 = vmatpush1.bf16.msra.mxu0 0
  %517 = vmatprep.subr.bf16.mxu0 0
  %518 = vmatpush1.bf16.msra.mxu0 0
  %519 = vmatprep.mubr.bf16.mxu0 0
  %520 = vmatmul.mubr.bf16.gmra.mrb[0].mxu0 %v392
  %v521 = vpop.f32.mrb[0].mxu0
  %v522 = vadd.f32 0.0, %v521
  %v523 = vpop.f32.mrb[0].mxu0
  %v524 = vpop.f32.mrb[0].mxu0
  %v525 = vadd.f32 0.0, %v524
  %v526 = vpop.f32.mrb[0].mxu0
  %527 = vmatprep.mubr.bf16.mxu0 0
  %528 = vmatmul.mubr.bf16.gmra.mrb[0].mxu0 %v395
  %v529 = vpop.f32.mrb[0].mxu0
  %v530 = vadd.f32 0.0, %v529
  %v531 = vpop.f32.mrb[0].mxu0
  %v532 = vpop.f32.mrb[0].mxu0
  %v533 = vadd.f32 0.0, %v532
  %v534 = vpop.f32.mrb[0].mxu0
  %535 = vmatprep.mubr.bf16.mxu0 0
  %536 = vmatmul.mubr.bf16.gmra.mrb[0].mxu0 %v398
  %v537 = vpop.f32.mrb[0].mxu0
  %v538 = vadd.f32 0.0, %v537
  %v539 = vpop.f32.mrb[0].mxu0
  %v540 = vpop.f32.mrb[0].mxu0
  %v541 = vadd.f32 0.0, %v540
  %v542 = vpop.f32.mrb[0].mxu0
  %543 = vmatprep.mubr.bf16.mxu0 0
  %544 = vmatmul.mubr.bf16.gmra.mrb[0].mxu0 %v401
  %v545 = vpop.f32.mrb[0].mxu0
  %v546 = vadd.f32 0.0, %v545
  %v547 = vpop.f32.mrb[0].mxu0
  %v548 = vpop.f32.mrb[0].mxu0
  %v549 = vadd.f32 0.0, %v548
  %v550 = vpop.f32.mrb[0].mxu0
  %551 = vmatprep.mubr.bf16.mxu0 0
  %552 = vmatmul.mubr.bf16.gmra.mrb[0].mxu0 %v404
  %v553 = vpop.f32.mrb[0].mxu0
  %v554 = vadd.f32 0.0, %v553
  %v555 = vpop.f32.mrb[0].mxu0
  %v556 = vpop.f32.mrb[0].mxu0
  %v557 = vadd.f32 0.0, %v556
  %v558 = vpop.f32.mrb[0].mxu0
  %559 = vmatprep.mubr.bf16.mxu0 0
  %560 = vmatmul.mubr.bf16.gmra.mrb[0].mxu0 %v407
  %v561 = vpop.f32.mrb[0].mxu0
  %v562 = vadd.f32 0.0, %v561
  %v563 = vpop.f32.mrb[0].mxu0
  %v564 = vpop.f32.mrb[0].mxu0
  %v565 = vadd.f32 0.0, %v564
  %v566 = vpop.f32.mrb[0].mxu0
  %567 = vmatprep.mubr.bf16.mxu0 0
  %568 = vmatmul.mubr.bf16.gmra.mrb[0].mxu0 %v410
  %v569 = vpop.f32.mrb[0].mxu0
  %v570 = vadd.f32 0.0, %v569
  %v571 = vpop.f32.mrb[0].mxu0
  %v572 = vpop.f32.mrb[0].mxu0
  %v573 = vadd.f32 0.0, %v572
  %v574 = vpop.f32.mrb[0].mxu0
  %575 = vmatprep.mubr.bf16.mxu0 0
  %576 = vmatmul.mubr.bf16.gmra.mrb[0].mxu0 %v413
  %v577 = vpop.f32.mrb[0].mxu0
  %v578 = vadd.f32 0.0, %v577
  %v579 = vpop.f32.mrb[0].mxu0
  %v580 = vpop.f32.mrb[0].mxu0
  %v581 = vadd.f32 0.0, %v580
  %v582 = vpop.f32.mrb[0].mxu0
  %583 = vmatprep.mubr.bf16.mxu0 0
  %584 = vmatmul.mubr.bf16.gmra.mrb[0].mxu0 %v416
  %v585 = vpop.f32.mrb[0].mxu0
  %v586 = vadd.f32 0.0, %v585
  %v587 = vpop.f32.mrb[0].mxu0
  %v588 = vpop.f32.mrb[0].mxu0
  %v589 = vadd.f32 0.0, %v588
  %v590 = vpop.f32.mrb[0].mxu0
  %591 = vmatprep.mubr.bf16.mxu0 0
  %592 = vmatmul.mubr.bf16.gmra.mrb[0].mxu0 %v419
  %v593 = vpop.f32.mrb[0].mxu0
  %v594 = vadd.f32 0.0, %v593
  %v595 = vpop.f32.mrb[0].mxu0
  %v596 = vpop.f32.mrb[0].mxu0
  %v597 = vadd.f32 0.0, %v596
  %v598 = vpop.f32.mrb[0].mxu0
  %599 = vmatprep.mubr.bf16.mxu0 0
  %600 = vmatmul.mubr.bf16.gmra.mrb[0].mxu0 %v422
  %v601 = vpop.f32.mrb[0].mxu0
  %v602 = vadd.f32 0.0, %v601
  %v603 = vpop.f32.mrb[0].mxu0
  %v604 = vpop.f32.mrb[0].mxu0
  %v605 = vadd.f32 0.0, %v604
  %v606 = vpop.f32.mrb[0].mxu0
  %607 = vmatprep.mubr.bf16.mxu0 0
  %608 = vmatmul.mubr.bf16.gmra.mrb[0].mxu0 %v425
  %v609 = vpop.f32.mrb[0].mxu0
  %v610 = vadd.f32 0.0, %v609
  %v611 = vpop.f32.mrb[0].mxu0
  %v612 = vpop.f32.mrb[0].mxu0
  %v613 = vadd.f32 0.0, %v612
  %v614 = vpop.f32.mrb[0].mxu0
  %615 = vmatprep.mubr.bf16.mxu0 0
  %616 = vmatmul.mubr.bf16.gmra.mrb[0].mxu0 %v428
  %v617 = vpop.f32.mrb[0].mxu0
  %v618 = vadd.f32 0.0, %v617
  %v619 = vpop.f32.mrb[0].mxu0
  %v620 = vpop.f32.mrb[0].mxu0
  %v621 = vadd.f32 0.0, %v620
  %v622 = vpop.f32.mrb[0].mxu0
  %623 = vmatprep.mubr.bf16.mxu0 0
  %624 = vmatmul.mubr.bf16.gmra.mrb[0].mxu0 %v431
  %v625 = vpop.f32.mrb[0].mxu0
  %v626 = vadd.f32 0.0, %v625
  %v627 = vpop.f32.mrb[0].mxu0
  %v628 = vpop.f32.mrb[0].mxu0
  %v629 = vadd.f32 0.0, %v628
  %v630 = vpop.f32.mrb[0].mxu0
  %631 = vmatprep.mubr.bf16.mxu0 0
  %632 = vmatmul.mubr.bf16.gmra.mrb[0].mxu0 %v434
  %v633 = vpop.f32.mrb[0].mxu0
  %v634 = vadd.f32 0.0, %v633
  %v635 = vpop.f32.mrb[0].mxu0
  %v636 = vpop.f32.mrb[0].mxu0
  %v637 = vadd.f32 0.0, %v636
  %v638 = vpop.f32.mrb[0].mxu0
  %639 = vmatprep.mubr.bf16.mxu0 0
  %640 = vmatmul.mubr.bf16.gmra.mrb[0].mxu0 %v437
  %v641 = vpop.f32.mrb[0].mxu0
  %v642 = vadd.f32 0.0, %v641
  %v643 = vpop.f32.mrb[0].mxu0
  %v644 = vpop.f32.mrb[0].mxu0
  %v645 = vadd.f32 0.0, %v644
  %v646 = vpop.f32.mrb[0].mxu0
  %647 = vmatprep.mubr.bf16.mxu0 0
  %648 = vmatmul.mubr.bf16.gmra.mrb[0].mxu0 %v440
  %v649 = vpop.f32.mrb[0].mxu0
  %v650 = vadd.f32 0.0, %v649
  %v651 = vpop.f32.mrb[0].mxu0
  %v652 = vpop.f32.mrb[0].mxu0
  %v653 = vadd.f32 0.0, %v652
  %v654 = vpop.f32.mrb[0].mxu0
  %655 = vmatprep.mubr.bf16.mxu0 0
  %656 = vmatmul.mubr.bf16.gmra.mrb[0].mxu0 %v443
  %v657 = vpop.f32.mrb[0].mxu0
  %v658 = vadd.f32 0.0, %v657
  %v659 = vpop.f32.mrb[0].mxu0
  %v660 = vpop.f32.mrb[0].mxu0
  %v661 = vadd.f32 0.0, %v660
  %v662 = vpop.f32.mrb[0].mxu0
  %663 = vmatprep.mubr.bf16.mxu0 0
  %664 = vmatmul.mubr.bf16.gmra.mrb[0].mxu0 %v446
  %v665 = vpop.f32.mrb[0].mxu0
  %v666 = vadd.f32 0.0, %v665
  %v667 = vpop.f32.mrb[0].mxu0
  %v668 = vpop.f32.mrb[0].mxu0
  %v669 = vadd.f32 0.0, %v668
  %v670 = vpop.f32.mrb[0].mxu0
  %671 = vmatprep.mubr.bf16.mxu0 0
  %672 = vmatmul.mubr.bf16.gmra.mrb[0].mxu0 %v449
  %v673 = vpop.f32.mrb[0].mxu0
  %v674 = vadd.f32 0.0, %v673
  %v675 = vpop.f32.mrb[0].mxu0
  %v676 = vpop.f32.mrb[0].mxu0
  %v677 = vadd.f32 0.0, %v676
  %v678 = vpop.f32.mrb[0].mxu0
  %679 = vmatprep.mubr.bf16.mxu0 0
  %680 = vmatmul.mubr.bf16.gmra.mrb[0].mxu0 %v452
  %v681 = vpop.f32.mrb[0].mxu0
  %v682 = vadd.f32 0.0, %v681
  %v683 = vpop.f32.mrb[0].mxu0
  %v684 = vpop.f32.mrb[0].mxu0
  %v685 = vadd.f32 0.0, %v684
  %v686 = vpop.f32.mrb[0].mxu0
  %687 = vmatprep.mubr.bf16.mxu0 0
  %688 = vmatmul.mubr.bf16.gmra.mrb[0].mxu0 %v455
  %v689 = vpop.f32.mrb[0].mxu0
  %v690 = vadd.f32 0.0, %v689
  %v691 = vpop.f32.mrb[0].mxu0
  %v692 = vpop.f32.mrb[0].mxu0
  %v693 = vadd.f32 0.0, %v692
  %v694 = vpop.f32.mrb[0].mxu0
  %695 = vmatprep.mubr.bf16.mxu0 0
  %696 = vmatmul.mubr.bf16.gmra.mrb[0].mxu0 %v458
  %v697 = vpop.f32.mrb[0].mxu0
  %v698 = vadd.f32 0.0, %v697
  %v699 = vpop.f32.mrb[0].mxu0
  %v700 = vpop.f32.mrb[0].mxu0
  %v701 = vadd.f32 0.0, %v700
  %v702 = vpop.f32.mrb[0].mxu0
  %703 = vmatprep.mubr.bf16.mxu0 0
  %704 = vmatmul.mubr.bf16.gmra.mrb[0].mxu0 %v461
  %v705 = vpop.f32.mrb[0].mxu0
  %v706 = vadd.f32 0.0, %v705
  %v707 = vpop.f32.mrb[0].mxu0
  %v708 = vpop.f32.mrb[0].mxu0
  %v709 = vadd.f32 0.0, %v708
  %v710 = vpop.f32.mrb[0].mxu0
  %711 = vmatprep.mubr.bf16.mxu0 0
  %712 = vmatmul.mubr.bf16.gmra.mrb[0].mxu0 %v464
  %v713 = vpop.f32.mrb[0].mxu0
  %v714 = vadd.f32 0.0, %v713
  %v715 = vpop.f32.mrb[0].mxu0
  %v716 = vpop.f32.mrb[0].mxu0
  %v717 = vadd.f32 0.0, %v716
  %v718 = vpop.f32.mrb[0].mxu0
  %719 = vmatprep.mubr.bf16.mxu0 0
  %720 = vmatmul.mubr.bf16.gmra.mrb[0].mxu0 %v467
  %v721 = vpop.f32.mrb[0].mxu0
  %v722 = vadd.f32 0.0, %v721
  %v723 = vpop.f32.mrb[0].mxu0
  %v724 = vpop.f32.mrb[0].mxu0
  %v725 = vadd.f32 0.0, %v724
  %v726 = vpop.f32.mrb[0].mxu0
  %727 = vmatprep.mubr.bf16.mxu0 0
  %728 = vmatmul.mubr.bf16.gmra.mrb[0].mxu0 %v470
  %v729 = vpop.f32.mrb[0].mxu0
  %v730 = vadd.f32 0.0, %v729
  %v731 = vpop.f32.mrb[0].mxu0
  %v732 = vpop.f32.mrb[0].mxu0
  %v733 = vadd.f32 0.0, %v732
  %v734 = vpop.f32.mrb[0].mxu0
  %735 = vmatprep.mubr.bf16.mxu0 0
  %736 = vmatmul.mubr.bf16.gmra.mrb[0].mxu0 %v473
  %v737 = vpop.f32.mrb[0].mxu0
  %v738 = vadd.f32 0.0, %v737
  %v739 = vpop.f32.mrb[0].mxu0
  %v740 = vpop.f32.mrb[0].mxu0
  %v741 = vadd.f32 0.0, %v740
  %v742 = vpop.f32.mrb[0].mxu0
  %743 = vmatprep.mubr.bf16.mxu0 0
  %744 = vmatmul.mubr.bf16.gmra.mrb[0].mxu0 %v476
  %v745 = vpop.f32.mrb[0].mxu0
  %v746 = vadd.f32 0.0, %v745
  %v747 = vpop.f32.mrb[0].mxu0
  %v748 = vpop.f32.mrb[0].mxu0
  %v749 = vadd.f32 0.0, %v748
  %v750 = vpop.f32.mrb[0].mxu0
  %751 = vmatprep.mubr.bf16.mxu0 0
  %752 = vmatmul.mubr.bf16.gmra.mrb[0].mxu0 %v479
  %v753 = vpop.f32.mrb[0].mxu0
  %v754 = vadd.f32 0.0, %v753
  %v755 = vpop.f32.mrb[0].mxu0
  %v756 = vpop.f32.mrb[0].mxu0
  %v757 = vadd.f32 0.0, %v756
  %v758 = vpop.f32.mrb[0].mxu0
  %759 = vmatprep.mubr.bf16.mxu0 0
  %760 = vmatmul.mubr.bf16.gmra.mrb[0].mxu0 %v482
  %v761 = vpop.f32.mrb[0].mxu0
  %v762 = vadd.f32 0.0, %v761
  %v763 = vpop.f32.mrb[0].mxu0
  %v764 = vpop.f32.mrb[0].mxu0
  %v765 = vadd.f32 0.0, %v764
  %v766 = vpop.f32.mrb[0].mxu0
  %767 = vmatprep.mubr.bf16.mxu0 0
  %768 = vmatmul.mubr.bf16.gmra.mrb[0].mxu0 %v485
  %v769 = vpop.f32.mrb[0].mxu0
  %v770 = vadd.f32 0.0, %v769
  %v771 = vpop.f32.mrb[0].mxu0
  %v772 = vpop.f32.mrb[0].mxu0
  %v773 = vadd.f32 0.0, %v772
  %v774 = vpop.f32.mrb[0].mxu0
  %775 = vdwg.mxu0
  %v776 = vadd.f32 %v86, %v522
  %v777 = vadd.f32 %v87, %v525
  %v778 = vadd.f32 %v88, %v530
  %v779 = vadd.f32 %v89, %v533
  %v780 = vadd.f32 %v90, %v538
  %v781 = vadd.f32 %v91, %v541
  %v782 = vadd.f32 %v92, %v546
  %v783 = vadd.f32 %v93, %v549
  %v784 = vadd.f32 %v94, %v554
  %v785 = vadd.f32 %v95, %v557
  %v786 = vadd.f32 %v96, %v562
  %v787 = vadd.f32 %v97, %v565
  %v788 = vadd.f32 %v98, %v570
  %v789 = vadd.f32 %v99, %v573
  %v790 = vadd.f32 %v100, %v578
  %v791 = vadd.f32 %v101, %v581
  %v792 = vadd.f32 %v102, %v586
  %v793 = vadd.f32 %v103, %v589
  %v794 = vadd.f32 %v104, %v594
  %v795 = vadd.f32 %v105, %v597
  %v796 = vadd.f32 %v106, %v602
  %v797 = vadd.f32 %v107, %v605
  %v798 = vadd.f32 %v108, %v610
  %v799 = vadd.f32 %v109, %v613
  %v800 = vadd.f32 %v110, %v618
  %v801 = vadd.f32 %v111, %v621
  %v802 = vadd.f32 %v112, %v626
  %v803 = vadd.f32 %v113, %v629
  %v804 = vadd.f32 %v114, %v634
  %v805 = vadd.f32 %v115, %v637
  %v806 = vadd.f32 %v116, %v642
  %v807 = vadd.f32 %v117, %v645
  %v808 = vadd.f32 %v118, %v650
  %v809 = vadd.f32 %v119, %v653
  %v810 = vadd.f32 %v120, %v658
  %v811 = vadd.f32 %v121, %v661
  %v812 = vadd.f32 %v122, %v666
  %v813 = vadd.f32 %v123, %v669
  %v814 = vadd.f32 %v124, %v674
  %v815 = vadd.f32 %v125, %v677
  %v816 = vadd.f32 %v126, %v682
  %v817 = vadd.f32 %v127, %v685
  %v818 = vadd.f32 %v128, %v690
  %v819 = vadd.f32 %v129, %v693
  %v820 = vadd.f32 %v130, %v698
  %v821 = vadd.f32 %v131, %v701
  %v822 = vadd.f32 %v132, %v706
  %v823 = vadd.f32 %v133, %v709
  %v824 = vadd.f32 %v134, %v714
  %v825 = vadd.f32 %v135, %v717
  %v826 = vadd.f32 %v136, %v722
  %v827 = vadd.f32 %v137, %v725
  %v828 = vadd.f32 %v138, %v730
  %v829 = vadd.f32 %v139, %v733
  %v830 = vadd.f32 %v140, %v738
  %v831 = vadd.f32 %v141, %v741
  %v832 = vadd.f32 %v142, %v746
  %v833 = vadd.f32 %v143, %v749
  %v834 = vadd.f32 %v144, %v754
  %v835 = vadd.f32 %v145, %v757
  %v836 = vadd.f32 %v146, %v762
  %v837 = vadd.f32 %v147, %v765
  %v838 = vadd.f32 %v148, %v770
  %v839 = vadd.f32 %v149, %v773
  %840 = vst [vmem:[#allocation2] sm:$0xff] %v776
  %841 = vst [vmem:[#allocation2 + $0x8] sm:$0xff] %v777
  %842 = vst [vmem:[#allocation2 + $0x10] sm:$0xff] %v778
  %843 = vst [vmem:[#allocation2 + $0x18] sm:$0xff] %v779
  %844 = vst [vmem:[#allocation2 + $0x20] sm:$0xff] %v780
  %845 = vst [vmem:[#allocation2 + $0x28] sm:$0xff] %v781
  %846 = vst [vmem:[#allocation2 + $0x30] sm:$0xff] %v782
  %847 = vst [vmem:[#allocation2 + $0x38] sm:$0xff] %v783
  %848 = vst [vmem:[#allocation2 + $0x40] sm:$0xff] %v784
  %849 = vst [vmem:[#allocation2 + $0x48] sm:$0xff] %v785
  %850 = vst [vmem:[#allocation2 + $0x50] sm:$0xff] %v786
  %851 = vst [vmem:[#allocation2 + $0x58] sm:$0xff] %v787
  %852 = vst [vmem:[#allocation2 + $0x60] sm:$0xff] %v788
  %853 = vst [vmem:[#allocation2 + $0x68] sm:$0xff] %v789
  %854 = vst [vmem:[#allocation2 + $0x70] sm:$0xff] %v790
  %855 = vst [vmem:[#allocation2 + $0x78] sm:$0xff] %v791
  %856 = vst [vmem:[#allocation2 + $0x80] sm:$0xff] %v792
  %857 = vst [vmem:[#allocation2 + $0x88] sm:$0xff] %v793
  %858 = vst [vmem:[#allocation2 + $0x90] sm:$0xff] %v794
  %859 = vst [vmem:[#allocation2 + $0x98] sm:$0xff] %v795
  %860 = vst [vmem:[#allocation2 + $0xa0] sm:$0xff] %v796
  %861 = vst [vmem:[#allocation2 + $0xa8] sm:$0xff] %v797
  %862 = vst [vmem:[#allocation2 + $0xb0] sm:$0xff] %v798
  %863 = vst [vmem:[#allocation2 + $0xb8] sm:$0xff] %v799
  %864 = vst [vmem:[#allocation2 + $0xc0] sm:$0xff] %v800
  %865 = vst [vmem:[#allocation2 + $0xc8] sm:$0xff] %v801
  %866 = vst [vmem:[#allocation2 + $0xd0] sm:$0xff] %v802
  %867 = vst [vmem:[#allocation2 + $0xd8] sm:$0xff] %v803
  %868 = vst [vmem:[#allocation2 + $0xe0] sm:$0xff] %v804
  %869 = vst [vmem:[#allocation2 + $0xe8] sm:$0xff] %v805
  %870 = vst [vmem:[#allocation2 + $0xf0] sm:$0xff] %v806
  %871 = vst [vmem:[#allocation2 + $0xf8] sm:$0xff] %v807
  %872 = vst [vmem:[#allocation2 + $0x100] sm:$0xff] %v808
  %873 = vst [vmem:[#allocation2 + $0x108] sm:$0xff] %v809
  %874 = vst [vmem:[#allocation2 + $0x110] sm:$0xff] %v810
  %875 = vst [vmem:[#allocation2 + $0x118] sm:$0xff] %v811
  %876 = vst [vmem:[#allocation2 + $0x120] sm:$0xff] %v812
  %877 = vst [vmem:[#allocation2 + $0x128] sm:$0xff] %v813
  %878 = vst [vmem:[#allocation2 + $0x130] sm:$0xff] %v814
  %879 = vst [vmem:[#allocation2 + $0x138] sm:$0xff] %v815
  %880 = vst [vmem:[#allocation2 + $0x140] sm:$0xff] %v816
  %881 = vst [vmem:[#allocation2 + $0x148] sm:$0xff] %v817
  %882 = vst [vmem:[#allocation2 + $0x150] sm:$0xff] %v818
  %883 = vst [vmem:[#allocation2 + $0x158] sm:$0xff] %v819
  %884 = vst [vmem:[#allocation2 + $0x160] sm:$0xff] %v820
  %885 = vst [vmem:[#allocation2 + $0x168] sm:$0xff] %v821
  %886 = vst [vmem:[#allocation2 + $0x170] sm:$0xff] %v822
  %887 = vst [vmem:[#allocation2 + $0x178] sm:$0xff] %v823
  %888 = vst [vmem:[#allocation2 + $0x180] sm:$0xff] %v824
  %889 = vst [vmem:[#allocation2 + $0x188] sm:$0xff] %v825
  %890 = vst [vmem:[#allocation2 + $0x190] sm:$0xff] %v826
  %891 = vst [vmem:[#allocation2 + $0x198] sm:$0xff] %v827
  %892 = vst [vmem:[#allocation2 + $0x1a0] sm:$0xff] %v828
  %893 = vst [vmem:[#allocation2 + $0x1a8] sm:$0xff] %v829
  %894 = vst [vmem:[#allocation2 + $0x1b0] sm:$0xff] %v830
  %895 = vst [vmem:[#allocation2 + $0x1b8] sm:$0xff] %v831
  %896 = vst [vmem:[#allocation2 + $0x1c0] sm:$0xff] %v832
  %897 = vst [vmem:[#allocation2 + $0x1c8] sm:$0xff] %v833
  %898 = vst [vmem:[#allocation2 + $0x1d0] sm:$0xff] %v834
  %899 = vst [vmem:[#allocation2 + $0x1d8] sm:$0xff] %v835
  %900 = vst [vmem:[#allocation2 + $0x1e0] sm:$0xff] %v836
  %901 = vst [vmem:[#allocation2 + $0x1e8] sm:$0xff] %v837
  %902 = vst [vmem:[#allocation2 + $0x1f0] sm:$0xff] %v838
  %903 = vst [vmem:[#allocation2 + $0x1f8] sm:$0xff] %v839
  // Predicated region
  $region22: #{birdclef_forward.3} parent=0 // pred_check
    %p904 = pneg %p18
  $region23: #{birdclef_forward.3} parent=0 // pred_check_branch
    %906 = sbr.rel (%p904) target = $region25
  $region24: #{birdclef_forward.3} parent=0 // pred_region
    %v907 = vld [vmem:[#allocation2] sm:$0xff]
    %v908 = vld [vmem:[#allocation2 + $0x8] sm:$0xff]
    %v909 = vld [vmem:[#allocation2 + $0x10] sm:$0xff]
    %v910 = vld [vmem:[#allocation2 + $0x18] sm:$0xff]
    %v911 = vld [vmem:[#allocation2 + $0x20] sm:$0xff]
    %v912 = vld [vmem:[#allocation2 + $0x28] sm:$0xff]
    %v913 = vld [vmem:[#allocation2 + $0x30] sm:$0xff]
    %v914 = vld [vmem:[#allocation2 + $0x38] sm:$0xff]
    %v915 = vld [vmem:[#allocation2 + $0x40] sm:$0xff]
    %v916 = vld [vmem:[#allocation2 + $0x48] sm:$0xff]
    %v917 = vld [vmem:[#allocation2 + $0x50] sm:$0xff]
    %v918 = vld [vmem:[#allocation2 + $0x58] sm:$0xff]
    %v919 = vld [vmem:[#allocation2 + $0x60] sm:$0xff]
    %v920 = vld [vmem:[#allocation2 + $0x68] sm:$0xff]
    %v921 = vld [vmem:[#allocation2 + $0x70] sm:$0xff]
    %v922 = vld [vmem:[#allocation2 + $0x78] sm:$0xff]
    %v923 = vld [vmem:[#allocation2 + $0x80] sm:$0xff]
    %v924 = vld [vmem:[#allocation2 + $0x88] sm:$0xff]
    %v925 = vld [vmem:[#allocation2 + $0x90] sm:$0xff]
    %v926 = vld [vmem:[#allocation2 + $0x98] sm:$0xff]
    %v927 = vld [vmem:[#allocation2 + $0xa0] sm:$0xff]
    %v928 = vld [vmem:[#allocation2 + $0xa8] sm:$0xff]
    %v929 = vld [vmem:[#allocation2 + $0xb0] sm:$0xff]
    %v930 = vld [vmem:[#allocation2 + $0xb8] sm:$0xff]
    %v931 = vld [vmem:[#allocation2 + $0xc0] sm:$0xff]
    %v932 = vld [vmem:[#allocation2 + $0xc8] sm:$0xff]
    %v933 = vld [vmem:[#allocation2 + $0xd0] sm:$0xff]
    %v934 = vld [vmem:[#allocation2 + $0xd8] sm:$0xff]
    %v935 = vld [vmem:[#allocation2 + $0xe0] sm:$0xff]
    %v936 = vld [vmem:[#allocation2 + $0xe8] sm:$0xff]
    %v937 = vld [vmem:[#allocation2 + $0xf0] sm:$0xff]
    %v938 = vld [vmem:[#allocation2 + $0xf8] sm:$0xff]
    %v939 = vld [vmem:[#allocation2 + $0x100] sm:$0xff]
    %v940 = vld [vmem:[#allocation2 + $0x108] sm:$0xff]
    %v941 = vld [vmem:[#allocation2 + $0x110] sm:$0xff]
    %v942 = vld [vmem:[#allocation2 + $0x118] sm:$0xff]
    %v943 = vld [vmem:[#allocation2 + $0x120] sm:$0xff]
    %v944 = vld [vmem:[#allocation2 + $0x128] sm:$0xff]
    %v945 = vld [vmem:[#allocation2 + $0x130] sm:$0xff]
    %v946 = vld [vmem:[#allocation2 + $0x138] sm:$0xff]
    %v947 = vld [vmem:[#allocation2 + $0x140] sm:$0xff]
    %v948 = vld [vmem:[#allocation2 + $0x148] sm:$0xff]
    %v949 = vld [vmem:[#allocation2 + $0x150] sm:$0xff]
    %v950 = vld [vmem:[#allocation2 + $0x158] sm:$0xff]
    %v951 = vld [vmem:[#allocation2 + $0x160] sm:$0xff]
    %v952 = vld [vmem:[#allocation2 + $0x168] sm:$0xff]
    %v953 = vld [vmem:[#allocation2 + $0x170] sm:$0xff]
    %v954 = vld [vmem:[#allocation2 + $0x178] sm:$0xff]
    %v955 = vld [vmem:[#allocation2 + $0x180] sm:$0xff]
    %v956 = vld [vmem:[#allocation2 + $0x188] sm:$0xff]
    %v957 = vld [vmem:[#allocation2 + $0x190] sm:$0xff]
    %v958 = vld [vmem:[#allocation2 + $0x198] sm:$0xff]
    %v959 = vld [vmem:[#allocation2 + $0x1a0] sm:$0xff]
    %v960 = vld [vmem:[#allocation2 + $0x1a8] sm:$0xff]
    %v961 = vld [vmem:[#allocation2 + $0x1b0] sm:$0xff]
    %v962 = vld [vmem:[#allocation2 + $0x1b8] sm:$0xff]
    %v963 = vld [vmem:[#allocation2 + $0x1c0] sm:$0xff]
    %v964 = vld [vmem:[#allocation2 + $0x1c8] sm:$0xff]
    %v965 = vld [vmem:[#allocation2 + $0x1d0] sm:$0xff]
    %v966 = vld [vmem:[#allocation2 + $0x1d8] sm:$0xff]
    %v967 = vld [vmem:[#allocation2 + $0x1e0] sm:$0xff]
    %v968 = vld [vmem:[#allocation2 + $0x1e8] sm:$0xff]
    %v969 = vld [vmem:[#allocation2 + $0x1f0] sm:$0xff]
    %v970 = vld [vmem:[#allocation2 + $0x1f8] sm:$0xff]
    %v971 = vld [vmem:[%s2] sm:$0x1]
    %v973 = vlaneseq
    %v974 = vshrl.u32 %v973, 7
    %v975 = vsub.s32 0, %v974
    %v976 = vrot.slane %v971, %v975
    %v978 = vmul.f32 %v907, %v976
    %v979 = vmul.f32 %v908, %v976
    %v980 = vmul.f32 %v909, %v976
    %v981 = vmul.f32 %v910, %v976
    %v982 = vmul.f32 %v911, %v976
    %v983 = vmul.f32 %v912, %v976
    %v984 = vmul.f32 %v913, %v976
    %v985 = vmul.f32 %v914, %v976
    %v986 = vmul.f32 %v915, %v976
    %v987 = vmul.f32 %v916, %v976
    %v988 = vmul.f32 %v917, %v976
    %v989 = vmul.f32 %v918, %v976
    %v990 = vmul.f32 %v919, %v976
    %v991 = vmul.f32 %v920, %v976
    %v992 = vmul.f32 %v921, %v976
    %v993 = vmul.f32 %v922, %v976
    %v994 = vmul.f32 %v923, %v976
    %v995 = vmul.f32 %v924, %v976
    %v996 = vmul.f32 %v925, %v976
    %v997 = vmul.f32 %v926, %v976
    %v998 = vmul.f32 %v927, %v976
    %v999 = vmul.f32 %v928, %v976
    %v1000 = vmul.f32 %v929, %v976
    %v1001 = vmul.f32 %v930, %v976
    %v1002 = vmul.f32 %v931, %v976
    %v1003 = vmul.f32 %v932, %v976
    %v1004 = vmul.f32 %v933, %v976
    %v1005 = vmul.f32 %v934, %v976
    %v1006 = vmul.f32 %v935, %v976
    %v1007 = vmul.f32 %v936, %v976
    %v1008 = vmul.f32 %v937, %v976
    %v1009 = vmul.f32 %v938, %v976
    %v1010 = vmul.f32 %v939, %v976
    %v1011 = vmul.f32 %v940, %v976
    %v1012 = vmul.f32 %v941, %v976
    %v1013 = vmul.f32 %v942, %v976
    %v1014 = vmul.f32 %v943, %v976
    %v1015 = vmul.f32 %v944, %v976
    %v1016 = vmul.f32 %v945, %v976
    %v1017 = vmul.f32 %v946, %v976
    %v1018 = vmul.f32 %v947, %v976
    %v1019 = vmul.f32 %v948, %v976
    %v1020 = vmul.f32 %v949, %v976
    %v1021 = vmul.f32 %v950, %v976
    %v1022 = vmul.f32 %v951, %v976
    %v1023 = vmul.f32 %v952, %v976
    %v1024 = vmul.f32 %v953, %v976
    %v1025 = vmul.f32 %v954, %v976
    %v1026 = vmul.f32 %v955, %v976
    %v1027 = vmul.f32 %v956, %v976
    %v1028 = vmul.f32 %v957, %v976
    %v1029 = vmul.f32 %v958, %v976
    %v1030 = vmul.f32 %v959, %v976
    %v1031 = vmul.f32 %v960, %v976
    %v1032 = vmul.f32 %v961, %v976
    %v1033 = vmul.f32 %v962, %v976
    %v1034 = vmul.f32 %v963, %v976
    %v1035 = vmul.f32 %v964, %v976
    %v1036 = vmul.f32 %v965, %v976
    %v1037 = vmul.f32 %v966, %v976
    %v1038 = vmul.f32 %v967, %v976
    %v1039 = vmul.f32 %v968, %v976
    %v1040 = vmul.f32 %v969, %v976
    %v1041 = vmul.f32 %v970, %v976
    %v1042 = vld [vmem:[%s3] sm:$0x1]
    %v1044 = vlaneseq
    %v1045 = vshrl.u32 %v1044, 7
    %v1046 = vsub.s32 0, %v1045
    %v1047 = vrot.slane %v1042, %v1046
    %v1049 = vadd.f32 %v978, %v1047
    %v1050 = vadd.f32 %v979, %v1047
    %v1051 = vadd.f32 %v980, %v1047
    %v1052 = vadd.f32 %v981, %v1047
    %v1053 = vadd.f32 %v982, %v1047
    %v1054 = vadd.f32 %v983, %v1047
    %v1055 = vadd.f32 %v984, %v1047
    %v1056 = vadd.f32 %v985, %v1047
    %v1057 = vadd.f32 %v986, %v1047
    %v1058 = vadd.f32 %v987, %v1047
    %v1059 = vadd.f32 %v988, %v1047
    %v1060 = vadd.f32 %v989, %v1047
    %v1061 = vadd.f32 %v990, %v1047
    %v1062 = vadd.f32 %v991, %v1047
    %v1063 = vadd.f32 %v992, %v1047
    %v1064 = vadd.f32 %v993, %v1047
    %v1065 = vadd.f32 %v994, %v1047
    %v1066 = vadd.f32 %v995, %v1047
    %v1067 = vadd.f32 %v996, %v1047
    %v1068 = vadd.f32 %v997, %v1047
    %v1069 = vadd.f32 %v998, %v1047
    %v1070 = vadd.f32 %v999, %v1047
    %v1071 = vadd.f32 %v1000, %v1047
    %v1072 = vadd.f32 %v1001, %v1047
    %v1073 = vadd.f32 %v1002, %v1047
    %v1074 = vadd.f32 %v1003, %v1047
    %v1075 = vadd.f32 %v1004, %v1047
    %v1076 = vadd.f32 %v1005, %v1047
    %v1077 = vadd.f32 %v1006, %v1047
    %v1078 = vadd.f32 %v1007, %v1047
    %v1079 = vadd.f32 %v1008, %v1047
    %v1080 = vadd.f32 %v1009, %v1047
    %v1081 = vadd.f32 %v1010, %v1047
    %v1082 = vadd.f32 %v1011, %v1047
    %v1083 = vadd.f32 %v1012, %v1047
    %v1084 = vadd.f32 %v1013, %v1047
    %v1085 = vadd.f32 %v1014, %v1047
    %v1086 = vadd.f32 %v1015, %v1047
    %v1087 = vadd.f32 %v1016, %v1047
    %v1088 = vadd.f32 %v1017, %v1047
    %v1089 = vadd.f32 %v1018, %v1047
    %v1090 = vadd.f32 %v1019, %v1047
    %v1091 = vadd.f32 %v1020, %v1047
    %v1092 = vadd.f32 %v1021, %v1047
    %v1093 = vadd.f32 %v1022, %v1047
    %v1094 = vadd.f32 %v1023, %v1047
    %v1095 = vadd.f32 %v1024, %v1047
    %v1096 = vadd.f32 %v1025, %v1047
    %v1097 = vadd.f32 %v1026, %v1047
    %v1098 = vadd.f32 %v1027, %v1047
    %v1099 = vadd.f32 %v1028, %v1047
    %v1100 = vadd.f32 %v1029, %v1047
    %v1101 = vadd.f32 %v1030, %v1047
    %v1102 = vadd.f32 %v1031, %v1047
    %v1103 = vadd.f32 %v1032, %v1047
    %v1104 = vadd.f32 %v1033, %v1047
    %v1105 = vadd.f32 %v1034, %v1047
    %v1106 = vadd.f32 %v1035, %v1047
    %v1107 = vadd.f32 %v1036, %v1047
    %v1108 = vadd.f32 %v1037, %v1047
    %v1109 = vadd.f32 %v1038, %v1047
    %v1110 = vadd.f32 %v1039, %v1047
    %v1111 = vadd.f32 %v1040, %v1047
    %v1112 = vadd.f32 %v1041, %v1047
    %v1113 = vxor.u32 %v1049, 2147483648
    %v1114 = vxor.u32 %v1050, 2147483648
    %v1115 = vxor.u32 %v1051, 2147483648
    %v1116 = vxor.u32 %v1052, 2147483648
    %v1117 = vxor.u32 %v1053, 2147483648
    %v1118 = vxor.u32 %v1054, 2147483648
    %v1119 = vxor.u32 %v1055, 2147483648
    %v1120 = vxor.u32 %v1056, 2147483648
    %v1121 = vxor.u32 %v1057, 2147483648
    %v1122 = vxor.u32 %v1058, 2147483648
    %v1123 = vxor.u32 %v1059, 2147483648
    %v1124 = vxor.u32 %v1060, 2147483648
    %v1125 = vxor.u32 %v1061, 2147483648
    %v1126 = vxor.u32 %v1062, 2147483648
    %v1127 = vxor.u32 %v1063, 2147483648
    %v1128 = vxor.u32 %v1064, 2147483648
    %v1129 = vxor.u32 %v1065, 2147483648
    %v1130 = vxor.u32 %v1066, 2147483648
    %v1131 = vxor.u32 %v1067, 2147483648
    %v1132 = vxor.u32 %v1068, 2147483648
    %v1133 = vxor.u32 %v1069, 2147483648
    %v1134 = vxor.u32 %v1070, 2147483648
    %v1135 = vxor.u32 %v1071, 2147483648
    %v1136 = vxor.u32 %v1072, 2147483648
    %v1137 = vxor.u32 %v1073, 2147483648
    %v1138 = vxor.u32 %v1074, 2147483648
    %v1139 = vxor.u32 %v1075, 2147483648
    %v1140 = vxor.u32 %v1076, 2147483648
    %v1141 = vxor.u32 %v1077, 2147483648
    %v1142 = vxor.u32 %v1078, 2147483648
    %v1143 = vxor.u32 %v1079, 2147483648
    %v1144 = vxor.u32 %v1080, 2147483648
    %v1145 = vxor.u32 %v1081, 2147483648
    %v1146 = vxor.u32 %v1082, 2147483648
    %v1147 = vxor.u32 %v1083, 2147483648
    %v1148 = vxor.u32 %v1084, 2147483648
    %v1149 = vxor.u32 %v1085, 2147483648
    %v1150 = vxor.u32 %v1086, 2147483648
    %v1151 = vxor.u32 %v1087, 2147483648
    %v1152 = vxor.u32 %v1088, 2147483648
    %v1153 = vxor.u32 %v1089, 2147483648
    %v1154 = vxor.u32 %v1090, 2147483648
    %v1155 = vxor.u32 %v1091, 2147483648
    %v1156 = vxor.u32 %v1092, 2147483648
    %v1157 = vxor.u32 %v1093, 2147483648
    %v1158 = vxor.u32 %v1094, 2147483648
    %v1159 = vxor.u32 %v1095, 2147483648
    %v1160 = vxor.u32 %v1096, 2147483648
    %v1161 = vxor.u32 %v1097, 2147483648
    %v1162 = vxor.u32 %v1098, 2147483648
    %v1163 = vxor.u32 %v1099, 2147483648
    %v1164 = vxor.u32 %v1100, 2147483648
    %v1165 = vxor.u32 %v1101, 2147483648
    %v1166 = vxor.u32 %v1102, 2147483648
    %v1167 = vxor.u32 %v1103, 2147483648
    %v1168 = vxor.u32 %v1104, 2147483648
    %v1169 = vxor.u32 %v1105, 2147483648
    %v1170 = vxor.u32 %v1106, 2147483648
    %v1171 = vxor.u32 %v1107, 2147483648
    %v1172 = vxor.u32 %v1108, 2147483648
    %v1173 = vxor.u32 %v1109, 2147483648
    %v1174 = vxor.u32 %v1110, 2147483648
    %v1175 = vxor.u32 %v1111, 2147483648
    %v1176 = vxor.u32 %v1112, 2147483648
    %v1177 = vmul.f32 %v1113, 1.442695
    %v1178 = vpow.pop %v1177
    %v1179 = vmul.f32 %v1114, 1.442695
    %v1180 = vpow.pop %v1179
    %v1181 = vmul.f32 %v1115, 1.442695
    %v1182 = vpow.pop %v1181
    %v1183 = vmul.f32 %v1116, 1.442695
    %v1184 = vpow.pop %v1183
    %v1185 = vmul.f32 %v1117, 1.442695
    %v1186 = vpow.pop %v1185
    %v1187 = vmul.f32 %v1118, 1.442695
    %v1188 = vpow.pop %v1187
    %v1189 = vmul.f32 %v1119, 1.442695
    %v1190 = vpow.pop %v1189
    %v1191 = vmul.f32 %v1120, 1.442695
    %v1192 = vpow.pop %v1191
    %v1193 = vmul.f32 %v1121, 1.442695
    %v1194 = vpow.pop %v1193
    %v1195 = vmul.f32 %v1122, 1.442695
    %v1196 = vpow.pop %v1195
    %v1197 = vmul.f32 %v1123, 1.442695
    %v1198 = vpow.pop %v1197
    %v1199 = vmul.f32 %v1124, 1.442695
    %v1200 = vpow.pop %v1199
    %v1201 = vmul.f32 %v1125, 1.442695
    %v1202 = vpow.pop %v1201
    %v1203 = vmul.f32 %v1126, 1.442695
    %v1204 = vpow.pop %v1203
    %v1205 = vmul.f32 %v1127, 1.442695
    %v1206 = vpow.pop %v1205
    %v1207 = vmul.f32 %v1128, 1.442695
    %v1208 = vpow.pop %v1207
    %v1209 = vmul.f32 %v1129, 1.442695
    %v1210 = vpow.pop %v1209
    %v1211 = vmul.f32 %v1130, 1.442695
    %v1212 = vpow.pop %v1211
    %v1213 = vmul.f32 %v1131, 1.442695
    %v1214 = vpow.pop %v1213
    %v1215 = vmul.f32 %v1132, 1.442695
    %v1216 = vpow.pop %v1215
    %v1217 = vmul.f32 %v1133, 1.442695
    %v1218 = vpow.pop %v1217
    %v1219 = vmul.f32 %v1134, 1.442695
    %v1220 = vpow.pop %v1219
    %v1221 = vmul.f32 %v1135, 1.442695
    %v1222 = vpow.pop %v1221
    %v1223 = vmul.f32 %v1136, 1.442695
    %v1224 = vpow.pop %v1223
    %v1225 = vmul.f32 %v1137, 1.442695
    %v1226 = vpow.pop %v1225
    %v1227 = vmul.f32 %v1138, 1.442695
    %v1228 = vpow.pop %v1227
    %v1229 = vmul.f32 %v1139, 1.442695
    %v1230 = vpow.pop %v1229
    %v1231 = vmul.f32 %v1140, 1.442695
    %v1232 = vpow.pop %v1231
    %v1233 = vmul.f32 %v1141, 1.442695
    %v1234 = vpow.pop %v1233
    %v1235 = vmul.f32 %v1142, 1.442695
    %v1236 = vpow.pop %v1235
    %v1237 = vmul.f32 %v1143, 1.442695
    %v1238 = vpow.pop %v1237
    %v1239 = vmul.f32 %v1144, 1.442695
    %v1240 = vpow.pop %v1239
    %v1241 = vmul.f32 %v1145, 1.442695
    %v1242 = vpow.pop %v1241
    %v1243 = vmul.f32 %v1146, 1.442695
    %v1244 = vpow.pop %v1243
    %v1245 = vmul.f32 %v1147, 1.442695
    %v1246 = vpow.pop %v1245
    %v1247 = vmul.f32 %v1148, 1.442695
    %v1248 = vpow.pop %v1247
    %v1249 = vmul.f32 %v1149, 1.442695
    %v1250 = vpow.pop %v1249
    %v1251 = vmul.f32 %v1150, 1.442695
    %v1252 = vpow.pop %v1251
    %v1253 = vmul.f32 %v1151, 1.442695
    %v1254 = vpow.pop %v1253
    %v1255 = vmul.f32 %v1152, 1.442695
    %v1256 = vpow.pop %v1255
    %v1257 = vmul.f32 %v1153, 1.442695
    %v1258 = vpow.pop %v1257
    %v1259 = vmul.f32 %v1154, 1.442695
    %v1260 = vpow.pop %v1259
    %v1261 = vmul.f32 %v1155, 1.442695
    %v1262 = vpow.pop %v1261
    %v1263 = vmul.f32 %v1156, 1.442695
    %v1264 = vpow.pop %v1263
    %v1265 = vmul.f32 %v1157, 1.442695
    %v1266 = vpow.pop %v1265
    %v1267 = vmul.f32 %v1158, 1.442695
    %v1268 = vpow.pop %v1267
    %v1269 = vmul.f32 %v1159, 1.442695
    %v1270 = vpow.pop %v1269
    %v1271 = vmul.f32 %v1160, 1.442695
    %v1272 = vpow.pop %v1271
    %v1273 = vmul.f32 %v1161, 1.442695
    %v1274 = vpow.pop %v1273
    %v1275 = vmul.f32 %v1162, 1.442695
    %v1276 = vpow.pop %v1275
    %v1277 = vmul.f32 %v1163, 1.442695
    %v1278 = vpow.pop %v1277
    %v1279 = vmul.f32 %v1164, 1.442695
    %v1280 = vpow.pop %v1279
    %v1281 = vmul.f32 %v1165, 1.442695
    %v1282 = vpow.pop %v1281
    %v1283 = vmul.f32 %v1166, 1.442695
    %v1284 = vpow.pop %v1283
    %v1285 = vmul.f32 %v1167, 1.442695
    %v1286 = vpow.pop %v1285
    %v1287 = vmul.f32 %v1168, 1.442695
    %v1288 = vpow.pop %v1287
    %v1289 = vmul.f32 %v1169, 1.442695
    %v1290 = vpow.pop %v1289
    %v1291 = vmul.f32 %v1170, 1.442695
    %v1292 = vpow.pop %v1291
    %v1293 = vmul.f32 %v1171, 1.442695
    %v1294 = vpow.pop %v1293
    %v1295 = vmul.f32 %v1172, 1.442695
    %v1296 = vpow.pop %v1295
    %v1297 = vmul.f32 %v1173, 1.442695
    %v1298 = vpow.pop %v1297
    %v1299 = vmul.f32 %v1174, 1.442695
    %v1300 = vpow.pop %v1299
    %v1301 = vmul.f32 %v1175, 1.442695
    %v1302 = vpow.pop %v1301
    %v1303 = vmul.f32 %v1176, 1.442695
    %v1304 = vpow.pop %v1303
    %v1305 = vadd.f32 %v1178, 1.0
    %v1306 = vadd.f32 %v1180, 1.0
    %v1307 = vadd.f32 %v1182, 1.0
    %v1308 = vadd.f32 %v1184, 1.0
    %v1309 = vadd.f32 %v1186, 1.0
    %v1310 = vadd.f32 %v1188, 1.0
    %v1311 = vadd.f32 %v1190, 1.0
    %v1312 = vadd.f32 %v1192, 1.0
    %v1313 = vadd.f32 %v1194, 1.0
    %v1314 = vadd.f32 %v1196, 1.0
    %v1315 = vadd.f32 %v1198, 1.0
    %v1316 = vadd.f32 %v1200, 1.0
    %v1317 = vadd.f32 %v1202, 1.0
    %v1318 = vadd.f32 %v1204, 1.0
    %v1319 = vadd.f32 %v1206, 1.0
    %v1320 = vadd.f32 %v1208, 1.0
    %v1321 = vadd.f32 %v1210, 1.0
    %v1322 = vadd.f32 %v1212, 1.0
    %v1323 = vadd.f32 %v1214, 1.0
    %v1324 = vadd.f32 %v1216, 1.0
    %v1325 = vadd.f32 %v1218, 1.0
    %v1326 = vadd.f32 %v1220, 1.0
    %v1327 = vadd.f32 %v1222, 1.0
    %v1328 = vadd.f32 %v1224, 1.0
    %v1329 = vadd.f32 %v1226, 1.0
    %v1330 = vadd.f32 %v1228, 1.0
    %v1331 = vadd.f32 %v1230, 1.0
    %v1332 = vadd.f32 %v1232, 1.0
    %v1333 = vadd.f32 %v1234, 1.0
    %v1334 = vadd.f32 %v1236, 1.0
    %v1335 = vadd.f32 %v1238, 1.0
    %v1336 = vadd.f32 %v1240, 1.0
    %v1337 = vadd.f32 %v1242, 1.0
    %v1338 = vadd.f32 %v1244, 1.0
    %v1339 = vadd.f32 %v1246, 1.0
    %v1340 = vadd.f32 %v1248, 1.0
    %v1341 = vadd.f32 %v1250, 1.0
    %v1342 = vadd.f32 %v1252, 1.0
    %v1343 = vadd.f32 %v1254, 1.0
    %v1344 = vadd.f32 %v1256, 1.0
    %v1345 = vadd.f32 %v1258, 1.0
    %v1346 = vadd.f32 %v1260, 1.0
    %v1347 = vadd.f32 %v1262, 1.0
    %v1348 = vadd.f32 %v1264, 1.0
    %v1349 = vadd.f32 %v1266, 1.0
    %v1350 = vadd.f32 %v1268, 1.0
    %v1351 = vadd.f32 %v1270, 1.0
    %v1352 = vadd.f32 %v1272, 1.0
    %v1353 = vadd.f32 %v1274, 1.0
    %v1354 = vadd.f32 %v1276, 1.0
    %v1355 = vadd.f32 %v1278, 1.0
    %v1356 = vadd.f32 %v1280, 1.0
    %v1357 = vadd.f32 %v1282, 1.0
    %v1358 = vadd.f32 %v1284, 1.0
    %v1359 = vadd.f32 %v1286, 1.0
    %v1360 = vadd.f32 %v1288, 1.0
    %v1361 = vadd.f32 %v1290, 1.0
    %v1362 = vadd.f32 %v1292, 1.0
    %v1363 = vadd.f32 %v1294, 1.0
    %v1364 = vadd.f32 %v1296, 1.0
    %v1365 = vadd.f32 %v1298, 1.0
    %v1366 = vadd.f32 %v1300, 1.0
    %v1367 = vadd.f32 %v1302, 1.0
    %v1368 = vadd.f32 %v1304, 1.0
    %v1369 = vrcp.pop %v1305
    %v1370 = vmul.f32 1.0, %v1369
    %v1371 = vrcp.pop %v1306
    %v1372 = vmul.f32 1.0, %v1371
    %v1373 = vrcp.pop %v1307
    %v1374 = vmul.f32 1.0, %v1373
    %v1375 = vrcp.pop %v1308
    %v1376 = vmul.f32 1.0, %v1375
    %v1377 = vrcp.pop %v1309
    %v1378 = vmul.f32 1.0, %v1377
    %v1379 = vrcp.pop %v1310
    %v1380 = vmul.f32 1.0, %v1379
    %v1381 = vrcp.pop %v1311
    %v1382 = vmul.f32 1.0, %v1381
    %v1383 = vrcp.pop %v1312
    %v1384 = vmul.f32 1.0, %v1383
    %v1385 = vrcp.pop %v1313
    %v1386 = vmul.f32 1.0, %v1385
    %v1387 = vrcp.pop %v1314
    %v1388 = vmul.f32 1.0, %v1387
    %v1389 = vrcp.pop %v1315
    %v1390 = vmul.f32 1.0, %v1389
    %v1391 = vrcp.pop %v1316
    %v1392 = vmul.f32 1.0, %v1391
    %v1393 = vrcp.pop %v1317
    %v1394 = vmul.f32 1.0, %v1393
    %v1395 = vrcp.pop %v1318
    %v1396 = vmul.f32 1.0, %v1395
    %v1397 = vrcp.pop %v1319
    %v1398 = vmul.f32 1.0, %v1397
    %v1399 = vrcp.pop %v1320
    %v1400 = vmul.f32 1.0, %v1399
    %v1401 = vrcp.pop %v1321
    %v1402 = vmul.f32 1.0, %v1401
    %v1403 = vrcp.pop %v1322
    %v1404 = vmul.f32 1.0, %v1403
    %v1405 = vrcp.pop %v1323
    %v1406 = vmul.f32 1.0, %v1405
    %v1407 = vrcp.pop %v1324
    %v1408 = vmul.f32 1.0, %v1407
    %v1409 = vrcp.pop %v1325
    %v1410 = vmul.f32 1.0, %v1409
    %v1411 = vrcp.pop %v1326
    %v1412 = vmul.f32 1.0, %v1411
    %v1413 = vrcp.pop %v1327
    %v1414 = vmul.f32 1.0, %v1413
    %v1415 = vrcp.pop %v1328
    %v1416 = vmul.f32 1.0, %v1415
    %v1417 = vrcp.pop %v1329
    %v1418 = vmul.f32 1.0, %v1417
    %v1419 = vrcp.pop %v1330
    %v1420 = vmul.f32 1.0, %v1419
    %v1421 = vrcp.pop %v1331
    %v1422 = vmul.f32 1.0, %v1421
    %v1423 = vrcp.pop %v1332
    %v1424 = vmul.f32 1.0, %v1423
    %v1425 = vrcp.pop %v1333
    %v1426 = vmul.f32 1.0, %v1425
    %v1427 = vrcp.pop %v1334
    %v1428 = vmul.f32 1.0, %v1427
    %v1429 = vrcp.pop %v1335
    %v1430 = vmul.f32 1.0, %v1429
    %v1431 = vrcp.pop %v1336
    %v1432 = vmul.f32 1.0, %v1431
    %v1433 = vrcp.pop %v1337
    %v1434 = vmul.f32 1.0, %v1433
    %v1435 = vrcp.pop %v1338
    %v1436 = vmul.f32 1.0, %v1435
    %v1437 = vrcp.pop %v1339
    %v1438 = vmul.f32 1.0, %v1437
    %v1439 = vrcp.pop %v1340
    %v1440 = vmul.f32 1.0, %v1439
    %v1441 = vrcp.pop %v1341
    %v1442 = vmul.f32 1.0, %v1441
    %v1443 = vrcp.pop %v1342
    %v1444 = vmul.f32 1.0, %v1443
    %v1445 = vrcp.pop %v1343
    %v1446 = vmul.f32 1.0, %v1445
    %v1447 = vrcp.pop %v1344
    %v1448 = vmul.f32 1.0, %v1447
    %v1449 = vrcp.pop %v1345
    %v1450 = vmul.f32 1.0, %v1449
    %v1451 = vrcp.pop %v1346
    %v1452 = vmul.f32 1.0, %v1451
    %v1453 = vrcp.pop %v1347
    %v1454 = vmul.f32 1.0, %v1453
    %v1455 = vrcp.pop %v1348
    %v1456 = vmul.f32 1.0, %v1455
    %v1457 = vrcp.pop %v1349
    %v1458 = vmul.f32 1.0, %v1457
    %v1459 = vrcp.pop %v1350
    %v1460 = vmul.f32 1.0, %v1459
    %v1461 = vrcp.pop %v1351
    %v1462 = vmul.f32 1.0, %v1461
    %v1463 = vrcp.pop %v1352
    %v1464 = vmul.f32 1.0, %v1463
    %v1465 = vrcp.pop %v1353
    %v1466 = vmul.f32 1.0, %v1465
    %v1467 = vrcp.pop %v1354
    %v1468 = vmul.f32 1.0, %v1467
    %v1469 = vrcp.pop %v1355
    %v1470 = vmul.f32 1.0, %v1469
    %v1471 = vrcp.pop %v1356
    %v1472 = vmul.f32 1.0, %v1471
    %v1473 = vrcp.pop %v1357
    %v1474 = vmul.f32 1.0, %v1473
    %v1475 = vrcp.pop %v1358
    %v1476 = vmul.f32 1.0, %v1475
    %v1477 = vrcp.pop %v1359
    %v1478 = vmul.f32 1.0, %v1477
    %v1479 = vrcp.pop %v1360
    %v1480 = vmul.f32 1.0, %v1479
    %v1481 = vrcp.pop %v1361
    %v1482 = vmul.f32 1.0, %v1481
    %v1483 = vrcp.pop %v1362
    %v1484 = vmul.f32 1.0, %v1483
    %v1485 = vrcp.pop %v1363
    %v1486 = vmul.f32 1.0, %v1485
    %v1487 = vrcp.pop %v1364
    %v1488 = vmul.f32 1.0, %v1487
    %v1489 = vrcp.pop %v1365
    %v1490 = vmul.f32 1.0, %v1489
    %v1491 = vrcp.pop %v1366
    %v1492 = vmul.f32 1.0, %v1491
    %v1493 = vrcp.pop %v1367
    %v1494 = vmul.f32 1.0, %v1493
    %v1495 = vrcp.pop %v1368
    %v1496 = vmul.f32 1.0, %v1495
    %v1497 = vmul.f32 %v1049, %v1370
    %v1498 = vmul.f32 %v1050, %v1372
    %v1499 = vmul.f32 %v1051, %v1374
    %v1500 = vmul.f32 %v1052, %v1376
    %v1501 = vmul.f32 %v1053, %v1378
    %v1502 = vmul.f32 %v1054, %v1380
    %v1503 = vmul.f32 %v1055, %v1382
    %v1504 = vmul.f32 %v1056, %v1384
    %v1505 = vmul.f32 %v1057, %v1386
    %v1506 = vmul.f32 %v1058, %v1388
    %v1507 = vmul.f32 %v1059, %v1390
    %v1508 = vmul.f32 %v1060, %v1392
    %v1509 = vmul.f32 %v1061, %v1394
    %v1510 = vmul.f32 %v1062, %v1396
    %v1511 = vmul.f32 %v1063, %v1398
    %v1512 = vmul.f32 %v1064, %v1400
    %v1513 = vmul.f32 %v1065, %v1402
    %v1514 = vmul.f32 %v1066, %v1404
    %v1515 = vmul.f32 %v1067, %v1406
    %v1516 = vmul.f32 %v1068, %v1408
    %v1517 = vmul.f32 %v1069, %v1410
    %v1518 = vmul.f32 %v1070, %v1412
    %v1519 = vmul.f32 %v1071, %v1414
    %v1520 = vmul.f32 %v1072, %v1416
    %v1521 = vmul.f32 %v1073, %v1418
    %v1522 = vmul.f32 %v1074, %v1420
    %v1523 = vmul.f32 %v1075, %v1422
    %v1524 = vmul.f32 %v1076, %v1424
    %v1525 = vmul.f32 %v1077, %v1426
    %v1526 = vmul.f32 %v1078, %v1428
    %v1527 = vmul.f32 %v1079, %v1430
    %v1528 = vmul.f32 %v1080, %v1432
    %v1529 = vmul.f32 %v1081, %v1434
    %v1530 = vmul.f32 %v1082, %v1436
    %v1531 = vmul.f32 %v1083, %v1438
    %v1532 = vmul.f32 %v1084, %v1440
    %v1533 = vmul.f32 %v1085, %v1442
    %v1534 = vmul.f32 %v1086, %v1444
    %v1535 = vmul.f32 %v1087, %v1446
    %v1536 = vmul.f32 %v1088, %v1448
    %v1537 = vmul.f32 %v1089, %v1450
    %v1538 = vmul.f32 %v1090, %v1452
    %v1539 = vmul.f32 %v1091, %v1454
    %v1540 = vmul.f32 %v1092, %v1456
    %v1541 = vmul.f32 %v1093, %v1458
    %v1542 = vmul.f32 %v1094, %v1460
    %v1543 = vmul.f32 %v1095, %v1462
    %v1544 = vmul.f32 %v1096, %v1464
    %v1545 = vmul.f32 %v1097, %v1466
    %v1546 = vmul.f32 %v1098, %v1468
    %v1547 = vmul.f32 %v1099, %v1470
    %v1548 = vmul.f32 %v1100, %v1472
    %v1549 = vmul.f32 %v1101, %v1474
    %v1550 = vmul.f32 %v1102, %v1476
    %v1551 = vmul.f32 %v1103, %v1478
    %v1552 = vmul.f32 %v1104, %v1480
    %v1553 = vmul.f32 %v1105, %v1482
    %v1554 = vmul.f32 %v1106, %v1484
    %v1555 = vmul.f32 %v1107, %v1486
    %v1556 = vmul.f32 %v1108, %v1488
    %v1557 = vmul.f32 %v1109, %v1490
    %v1558 = vmul.f32 %v1110, %v1492
    %v1559 = vmul.f32 %v1111, %v1494
    %v1560 = vmul.f32 %v1112, %v1496
    %v1561 = vpack.c.bf16 %v1498, %v1497
    %v1562 = vpack.c.bf16 %v1500, %v1499
    %v1563 = vpack.c.bf16 %v1502, %v1501
    %v1564 = vpack.c.bf16 %v1504, %v1503
    %v1565 = vpack.c.bf16 %v1506, %v1505
    %v1566 = vpack.c.bf16 %v1508, %v1507
    %v1567 = vpack.c.bf16 %v1510, %v1509
    %v1568 = vpack.c.bf16 %v1512, %v1511
    %v1569 = vpack.c.bf16 %v1514, %v1513
    %v1570 = vpack.c.bf16 %v1516, %v1515
    %v1571 = vpack.c.bf16 %v1518, %v1517
    %v1572 = vpack.c.bf16 %v1520, %v1519
    %v1573 = vpack.c.bf16 %v1522, %v1521
    %v1574 = vpack.c.bf16 %v1524, %v1523
    %v1575 = vpack.c.bf16 %v1526, %v1525
    %v1576 = vpack.c.bf16 %v1528, %v1527
    %v1577 = vpack.c.bf16 %v1530, %v1529
    %v1578 = vpack.c.bf16 %v1532, %v1531
    %v1579 = vpack.c.bf16 %v1534, %v1533
    %v1580 = vpack.c.bf16 %v1536, %v1535
    %v1581 = vpack.c.bf16 %v1538, %v1537
    %v1582 = vpack.c.bf16 %v1540, %v1539
    %v1583 = vpack.c.bf16 %v1542, %v1541
    %v1584 = vpack.c.bf16 %v1544, %v1543
    %v1585 = vpack.c.bf16 %v1546, %v1545
    %v1586 = vpack.c.bf16 %v1548, %v1547
    %v1587 = vpack.c.bf16 %v1550, %v1549
    %v1588 = vpack.c.bf16 %v1552, %v1551
    %v1589 = vpack.c.bf16 %v1554, %v1553
    %v1590 = vpack.c.bf16 %v1556, %v1555
    %v1591 = vpack.c.bf16 %v1558, %v1557
    %v1592 = vpack.c.bf16 %v1560, %v1559
    %v1625 = vunpack.c.l.b16 %v1561
    %v1626 = vunpack.c.h.b16 %v1561
    %v1627 = vunpack.c.l.b16 %v1562
    %v1628 = vunpack.c.h.b16 %v1562
    %v1629 = vunpack.c.l.b16 %v1563
    %v1630 = vunpack.c.h.b16 %v1563
    %v1631 = vunpack.c.l.b16 %v1564
    %v1632 = vunpack.c.h.b16 %v1564
    %v1633 = vunpack.c.l.b16 %v1565
    %v1634 = vunpack.c.h.b16 %v1565
    %v1635 = vunpack.c.l.b16 %v1566
    %v1636 = vunpack.c.h.b16 %v1566
    %v1637 = vunpack.c.l.b16 %v1567
    %v1638 = vunpack.c.h.b16 %v1567
    %v1639 = vunpack.c.l.b16 %v1568
    %v1640 = vunpack.c.h.b16 %v1568
    %v1641 = vunpack.c.l.b16 %v1569
    %v1642 = vunpack.c.h.b16 %v1569
    %v1643 = vunpack.c.l.b16 %v1570
    %v1644 = vunpack.c.h.b16 %v1570
    %v1645 = vunpack.c.l.b16 %v1571
    %v1646 = vunpack.c.h.b16 %v1571
    %v1647 = vunpack.c.l.b16 %v1572
    %v1648 = vunpack.c.h.b16 %v1572
    %v1649 = vunpack.c.l.b16 %v1573
    %v1650 = vunpack.c.h.b16 %v1573
    %v1651 = vunpack.c.l.b16 %v1574
    %v1652 = vunpack.c.h.b16 %v1574
    %v1653 = vunpack.c.l.b16 %v1575
    %v1654 = vunpack.c.h.b16 %v1575
    %v1655 = vunpack.c.l.b16 %v1576
    %v1656 = vunpack.c.h.b16 %v1576
    %v1657 = vunpack.c.l.b16 %v1577
    %v1658 = vunpack.c.h.b16 %v1577
    %v1659 = vunpack.c.l.b16 %v1578
    %v1660 = vunpack.c.h.b16 %v1578
    %v1661 = vunpack.c.l.b16 %v1579
    %v1662 = vunpack.c.h.b16 %v1579
    %v1663 = vunpack.c.l.b16 %v1580
    %v1664 = vunpack.c.h.b16 %v1580
    %v1665 = vunpack.c.l.b16 %v1581
    %v1666 = vunpack.c.h.b16 %v1581
    %v1667 = vunpack.c.l.b16 %v1582
    %v1668 = vunpack.c.h.b16 %v1582
    %v1669 = vunpack.c.l.b16 %v1583
    %v1670 = vunpack.c.h.b16 %v1583
    %v1671 = vunpack.c.l.b16 %v1584
    %v1672 = vunpack.c.h.b16 %v1584
    %v1673 = vunpack.c.l.b16 %v1585
    %v1674 = vunpack.c.h.b16 %v1585
    %v1675 = vunpack.c.l.b16 %v1586
    %v1676 = vunpack.c.h.b16 %v1586
    %v1677 = vunpack.c.l.b16 %v1587
    %v1678 = vunpack.c.h.b16 %v1587
    %v1679 = vunpack.c.l.b16 %v1588
    %v1680 = vunpack.c.h.b16 %v1588
    %v1681 = vunpack.c.l.b16 %v1589
    %v1682 = vunpack.c.h.b16 %v1589
    %v1683 = vunpack.c.l.b16 %v1590
    %v1684 = vunpack.c.h.b16 %v1590
    %v1685 = vunpack.c.l.b16 %v1591
    %v1686 = vunpack.c.h.b16 %v1591
    %v1687 = vunpack.c.l.b16 %v1592
    %v1688 = vunpack.c.h.b16 %v1592
    %v1689 = vpack.c.b16 %v1625, %v1625
    %v1690 = vpack.c.b16 %v1626, %v1626
    %v1691 = vpack.c.b16 %v1627, %v1627
    %v1692 = vpack.c.b16 %v1628, %v1628
    %v1693 = vpack.c.b16 %v1629, %v1629
    %v1694 = vpack.c.b16 %v1630, %v1630
    %v1695 = vpack.c.b16 %v1631, %v1631
    %v1696 = vpack.c.b16 %v1632, %v1632
    %v1697 = vpack.c.b16 %v1633, %v1633
    %v1698 = vpack.c.b16 %v1634, %v1634
    %v1699 = vpack.c.b16 %v1635, %v1635
    %v1700 = vpack.c.b16 %v1636, %v1636
    %v1701 = vpack.c.b16 %v1637, %v1637
    %v1702 = vpack.c.b16 %v1638, %v1638
    %v1703 = vpack.c.b16 %v1639, %v1639
    %v1704 = vpack.c.b16 %v1640, %v1640
    %v1705 = vpack.c.b16 %v1641, %v1641
    %v1706 = vpack.c.b16 %v1642, %v1642
    %v1707 = vpack.c.b16 %v1643, %v1643
    %v1708 = vpack.c.b16 %v1644, %v1644
    %v1709 = vpack.c.b16 %v1645, %v1645
    %v1710 = vpack.c.b16 %v1646, %v1646
    %v1711 = vpack.c.b16 %v1647, %v1647
    %v1712 = vpack.c.b16 %v1648, %v1648
    %v1713 = vpack.c.b16 %v1649, %v1649
    %v1714 = vpack.c.b16 %v1650, %v1650
    %v1715 = vpack.c.b16 %v1651, %v1651
    %v1716 = vpack.c.b16 %v1652, %v1652
    %v1717 = vpack.c.b16 %v1653, %v1653
    %v1718 = vpack.c.b16 %v1654, %v1654
    %v1719 = vpack.c.b16 %v1655, %v1655
    %v1720 = vpack.c.b16 %v1656, %v1656
    %v1721 = vpack.c.b16 %v1657, %v1657
    %v1722 = vpack.c.b16 %v1658, %v1658
    %v1723 = vpack.c.b16 %v1659, %v1659
    %v1724 = vpack.c.b16 %v1660, %v1660
    %v1725 = vpack.c.b16 %v1661, %v1661
    %v1726 = vpack.c.b16 %v1662, %v1662
    %v1727 = vpack.c.b16 %v1663, %v1663
    %v1728 = vpack.c.b16 %v1664, %v1664
    %v1729 = vpack.c.b16 %v1665, %v1665
    %v1730 = vpack.c.b16 %v1666, %v1666
    %v1731 = vpack.c.b16 %v1667, %v1667
    %v1732 = vpack.c.b16 %v1668, %v1668
    %v1733 = vpack.c.b16 %v1669, %v1669
    %v1734 = vpack.c.b16 %v1670, %v1670
    %v1735 = vpack.c.b16 %v1671, %v1671
    %v1736 = vpack.c.b16 %v1672, %v1672
    %v1737 = vpack.c.b16 %v1673, %v1673
    %v1738 = vpack.c.b16 %v1674, %v1674
    %v1739 = vpack.c.b16 %v1675, %v1675
    %v1740 = vpack.c.b16 %v1676, %v1676
    %v1741 = vpack.c.b16 %v1677, %v1677
    %v1742 = vpack.c.b16 %v1678, %v1678
    %v1743 = vpack.c.b16 %v1679, %v1679
    %v1744 = vpack.c.b16 %v1680, %v1680
    %v1745 = vpack.c.b16 %v1681, %v1681
    %v1746 = vpack.c.b16 %v1682, %v1682
    %v1747 = vpack.c.b16 %v1683, %v1683
    %v1748 = vpack.c.b16 %v1684, %v1684
    %v1749 = vpack.c.b16 %v1685, %v1685
    %v1750 = vpack.c.b16 %v1686, %v1686
    %v1751 = vpack.c.b16 %v1687, %v1687
    %v1752 = vpack.c.b16 %v1688, %v1688
    %1817 = vst [vmem:[%s4] sm:$0xf] %v1689
    %1818 = vst [vmem:[%s4 + $0x4] sm:$0xf] %v1690
    %1819 = vst [vmem:[%s4 + $0x8] sm:$0xf] %v1691
    %1820 = vst [vmem:[%s4 + $0xc] sm:$0xf] %v1692
    %1821 = vst [vmem:[%s4 + $0x10] sm:$0xf] %v1693
    %1822 = vst [vmem:[%s4 + $0x14] sm:$0xf] %v1694
    %1823 = vst [vmem:[%s4 + $0x18] sm:$0xf] %v1695
    %1824 = vst [vmem:[%s4 + $0x1c] sm:$0xf] %v1696
    %1825 = vst [vmem:[%s4 + $0x20] sm:$0xf] %v1697
    %1826 = vst [vmem:[%s4 + $0x24] sm:$0xf] %v1698
    %1827 = vst [vmem:[%s4 + $0x28] sm:$0xf] %v1699
    %1828 = vst [vmem:[%s4 + $0x2c] sm:$0xf] %v1700
    %1829 = vst [vmem:[%s4 + $0x30] sm:$0xf] %v1701
    %1830 = vst [vmem:[%s4 + $0x34] sm:$0xf] %v1702
    %1831 = vst [vmem:[%s4 + $0x38] sm:$0xf] %v1703
    %1832 = vst [vmem:[%s4 + $0x3c] sm:$0xf] %v1704
    %1833 = vst [vmem:[%s4 + $0x40] sm:$0xf] %v1705
    %1834 = vst [vmem:[%s4 + $0x44] sm:$0xf] %v1706
    %1835 = vst [vmem:[%s4 + $0x48] sm:$0xf] %v1707
    %1836 = vst [vmem:[%s4 + $0x4c] sm:$0xf] %v1708
    %1837 = vst [vmem:[%s4 + $0x50] sm:$0xf] %v1709
    %1838 = vst [vmem:[%s4 + $0x54] sm:$0xf] %v1710
    %1839 = vst [vmem:[%s4 + $0x58] sm:$0xf] %v1711
    %1840 = vst [vmem:[%s4 + $0x5c] sm:$0xf] %v1712
    %1841 = vst [vmem:[%s4 + $0x60] sm:$0xf] %v1713
    %1842 = vst [vmem:[%s4 + $0x64] sm:$0xf] %v1714
    %1843 = vst [vmem:[%s4 + $0x68] sm:$0xf] %v1715
    %1844 = vst [vmem:[%s4 + $0x6c] sm:$0xf] %v1716
    %1845 = vst [vmem:[%s4 + $0x70] sm:$0xf] %v1717
    %1846 = vst [vmem:[%s4 + $0x74] sm:$0xf] %v1718
    %1847 = vst [vmem:[%s4 + $0x78] sm:$0xf] %v1719
    %1848 = vst [vmem:[%s4 + $0x7c] sm:$0xf] %v1720
    %1849 = vst [vmem:[%s4 + $0x80] sm:$0xf] %v1721
    %1850 = vst [vmem:[%s4 + $0x84] sm:$0xf] %v1722
    %1851 = vst [vmem:[%s4 + $0x88] sm:$0xf] %v1723
    %1852 = vst [vmem:[%s4 + $0x8c] sm:$0xf] %v1724
    %1853 = vst [vmem:[%s4 + $0x90] sm:$0xf] %v1725
    %1854 = vst [vmem:[%s4 + $0x94] sm:$0xf] %v1726
    %1855 = vst [vmem:[%s4 + $0x98] sm:$0xf] %v1727
    %1856 = vst [vmem:[%s4 + $0x9c] sm:$0xf] %v1728
    %1857 = vst [vmem:[%s4 + $0xa0] sm:$0xf] %v1729
    %1858 = vst [vmem:[%s4 + $0xa4] sm:$0xf] %v1730
    %1859 = vst [vmem:[%s4 + $0xa8] sm:$0xf] %v1731
    %1860 = vst [vmem:[%s4 + $0xac] sm:$0xf] %v1732
    %1861 = vst [vmem:[%s4 + $0xb0] sm:$0xf] %v1733
    %1862 = vst [vmem:[%s4 + $0xb4] sm:$0xf] %v1734
    %1863 = vst [vmem:[%s4 + $0xb8] sm:$0xf] %v1735
    %1864 = vst [vmem:[%s4 + $0xbc] sm:$0xf] %v1736
    %1865 = vst [vmem:[%s4 + $0xc0] sm:$0xf] %v1737
    %1866 = vst [vmem:[%s4 + $0xc4] sm:$0xf] %v1738
    %1867 = vst [vmem:[%s4 + $0xc8] sm:$0xf] %v1739
    %1868 = vst [vmem:[%s4 + $0xcc] sm:$0xf] %v1740
    %1869 = vst [vmem:[%s4 + $0xd0] sm:$0xf] %v1741
    %1870 = vst [vmem:[%s4 + $0xd4] sm:$0xf] %v1742
    %1871 = vst [vmem:[%s4 + $0xd8] sm:$0xf] %v1743
    %1872 = vst [vmem:[%s4 + $0xdc] sm:$0xf] %v1744
    %1873 = vst [vmem:[%s4 + $0xe0] sm:$0xf] %v1745
    %1874 = vst [vmem:[%s4 + $0xe4] sm:$0xf] %v1746
    %1875 = vst [vmem:[%s4 + $0xe8] sm:$0xf] %v1747
    %1876 = vst [vmem:[%s4 + $0xec] sm:$0xf] %v1748
    %1877 = vst [vmem:[%s4 + $0xf0] sm:$0xf] %v1749
    %1878 = vst [vmem:[%s4 + $0xf4] sm:$0xf] %v1750
    %1879 = vst [vmem:[%s4 + $0xf8] sm:$0xf] %v1751
    %1880 = vst [vmem:[%s4 + $0xfc] sm:$0xf] %v1752
  $region25: #{birdclef_forward.3} parent=0 // pred_fallthru
    _
  // Predicated region
  $region26: #{birdclef_forward.3} parent=0 // pred_check
    _
  $region27: #{birdclef_forward.3} parent=0 // pred_check_branch
    %1882 = sbr.rel (0) target = $region29
  $region28: #{birdclef_forward.3} parent=0 // pred_region
    _
  $region29: #{birdclef_forward.3} parent=0 // pred_fallthru
    _
  // Predicated region
  $region30: #{birdclef_forward.3} parent=0 // pred_check
    _
  $region31: #{birdclef_forward.3} parent=0 // pred_check_branch
    %1884 = sbr.rel (0) target = $region33
  $region32: #{birdclef_forward.3} parent=0 // pred_region
    _
  $region33: #{birdclef_forward.3} parent=0 // pred_fallthru
    _

// kernel: birdclef_forward.4
$region0: #{birdclef_forward.4}
  #allocation0 [shape = 'u32[]', space=smem, size = 0x4, offset = 0x4, fixed_abs, tag = 'smem constant byte address 0x4 - core index']
  #allocation1 [shape = 'u32[144,128]{1,0:T(1,128)}', space=vmem, size = 0x12000, scoped, tag = 'internal scratch']
  #allocation2 [shape = 'f32[512,128]{1,0:T(8,128)}', space=vmem, size = 0x40000, scoped, tag = 'scratch operand']
  %s0 = inlined_call_operand.vmem [shape: bf16[512,288], index: 0, kind: input, shape index: {}]
  %s1 = inlined_call_operand.vmem [shape: bf16[288,128], index: 1, kind: input, shape index: {}]
  %s2 = inlined_call_operand.vmem [shape: f32[1,128], index: 2, kind: input, shape index: {}]
  %s3 = inlined_call_operand.vmem [shape: f32[1,128], index: 3, kind: input, shape index: {}]
  %s4 = inlined_call_operand.vmem [shape: bf16[512,128], index: 4, kind: input, shape index: {}]
  %s5 = inlined_call_operand.vmem [shape: bf16[512,128], index: 5, kind: output, shape index: {}]
  %s6 = sld [smem:[#allocation0]]
  $region38: #{birdclef_forward.4} parent=0
    _
  %s8 = ssub.s32 1, %s6
  %s9 = scalar_select 0, %s8, %s6
  // Predicated region
  $region2: #{birdclef_forward.4} parent=0 // pred_check
    _
  $region3: #{birdclef_forward.4} parent=0 // pred_check_branch
    %11 = sbr.rel (0) target = $region5
  $region4: #{birdclef_forward.4} parent=0 // pred_region
    _
  $region5: #{birdclef_forward.4} parent=0 // pred_fallthru
    _
  // Predicated region
  $region6: #{birdclef_forward.4} parent=0 // pred_check
    _
  $region7: #{birdclef_forward.4} parent=0 // pred_check_branch
    %13 = sbr.rel (0) target = $region9
  $region8: #{birdclef_forward.4} parent=0 // pred_region
    _
  $region9: #{birdclef_forward.4} parent=0 // pred_fallthru
    _
  // Predicated region
  $region10: #{birdclef_forward.4} parent=0 // pred_check
    _
  $region11: #{birdclef_forward.4} parent=0 // pred_check_branch
    %15 = sbr.rel (0) target = $region13
  $region12: #{birdclef_forward.4} parent=0 // pred_region
    _
  $region13: #{birdclef_forward.4} parent=0 // pred_fallthru
    _
  // Predicated region
  $region14: #{birdclef_forward.4} parent=0 // pred_check
    _
  $region15: #{birdclef_forward.4} parent=0 // pred_check_branch
    %17 = sbr.rel (0) target = $region17
  $region16: #{birdclef_forward.4} parent=0 // pred_region
    _
  $region17: #{birdclef_forward.4} parent=0 // pred_fallthru
    _
  // Predicated region
  $region18: #{birdclef_forward.4} parent=0 // pred_check
    _
  $region19: #{birdclef_forward.4} parent=0 // pred_check_branch
    %19 = sbr.rel (0) target = $region21
  $region20: #{birdclef_forward.4} parent=0 // pred_region
    _
  $region21: #{birdclef_forward.4} parent=0 // pred_fallthru
    _
  %p21 = scmp.eq.s32.totalorder 0, 0
  // Predicated region
  $region22: #{birdclef_forward.4} parent=0 // pred_check
    %p22 = pneg %p21
  $region23: #{birdclef_forward.4} parent=0 // pred_check_branch
    %24 = sbr.rel (%p22) target = $region25
  $region24: #{birdclef_forward.4} parent=0 // pred_region
    %25 = vst [vmem:[#allocation2] sm:$0xff] 0.0
    %26 = vst [vmem:[#allocation2 + $0x8] sm:$0xff] 0.0
    %27 = vst [vmem:[#allocation2 + $0x10] sm:$0xff] 0.0
    %28 = vst [vmem:[#allocation2 + $0x18] sm:$0xff] 0.0
    %29 = vst [vmem:[#allocation2 + $0x20] sm:$0xff] 0.0
    %30 = vst [vmem:[#allocation2 + $0x28] sm:$0xff] 0.0
    %31 = vst [vmem:[#allocation2 + $0x30] sm:$0xff] 0.0
    %32 = vst [vmem:[#allocation2 + $0x38] sm:$0xff] 0.0
    %33 = vst [vmem:[#allocation2 + $0x40] sm:$0xff] 0.0
    %34 = vst [vmem:[#allocation2 + $0x48] sm:$0xff] 0.0
    %35 = vst [vmem:[#allocation2 + $0x50] sm:$0xff] 0.0
    %36 = vst [vmem:[#allocation2 + $0x58] sm:$0xff] 0.0
    %37 = vst [vmem:[#allocation2 + $0x60] sm:$0xff] 0.0
    %38 = vst [vmem:[#allocation2 + $0x68] sm:$0xff] 0.0
    %39 = vst [vmem:[#allocation2 + $0x70] sm:$0xff] 0.0
    %40 = vst [vmem:[#allocation2 + $0x78] sm:$0xff] 0.0
    %41 = vst [vmem:[#allocation2 + $0x80] sm:$0xff] 0.0
    %42 = vst [vmem:[#allocation2 + $0x88] sm:$0xff] 0.0
    %43 = vst [vmem:[#allocation2 + $0x90] sm:$0xff] 0.0
    %44 = vst [vmem:[#allocation2 + $0x98] sm:$0xff] 0.0
    %45 = vst [vmem:[#allocation2 + $0xa0] sm:$0xff] 0.0
    %46 = vst [vmem:[#allocation2 + $0xa8] sm:$0xff] 0.0
    %47 = vst [vmem:[#allocation2 + $0xb0] sm:$0xff] 0.0
    %48 = vst [vmem:[#allocation2 + $0xb8] sm:$0xff] 0.0
    %49 = vst [vmem:[#allocation2 + $0xc0] sm:$0xff] 0.0
    %50 = vst [vmem:[#allocation2 + $0xc8] sm:$0xff] 0.0
    %51 = vst [vmem:[#allocation2 + $0xd0] sm:$0xff] 0.0
    %52 = vst [vmem:[#allocation2 + $0xd8] sm:$0xff] 0.0
    %53 = vst [vmem:[#allocation2 + $0xe0] sm:$0xff] 0.0
    %54 = vst [vmem:[#allocation2 + $0xe8] sm:$0xff] 0.0
    %55 = vst [vmem:[#allocation2 + $0xf0] sm:$0xff] 0.0
    %56 = vst [vmem:[#allocation2 + $0xf8] sm:$0xff] 0.0
    %57 = vst [vmem:[#allocation2 + $0x100] sm:$0xff] 0.0
    %58 = vst [vmem:[#allocation2 + $0x108] sm:$0xff] 0.0
    %59 = vst [vmem:[#allocation2 + $0x110] sm:$0xff] 0.0
    %60 = vst [vmem:[#allocation2 + $0x118] sm:$0xff] 0.0
    %61 = vst [vmem:[#allocation2 + $0x120] sm:$0xff] 0.0
    %62 = vst [vmem:[#allocation2 + $0x128] sm:$0xff] 0.0
    %63 = vst [vmem:[#allocation2 + $0x130] sm:$0xff] 0.0
    %64 = vst [vmem:[#allocation2 + $0x138] sm:$0xff] 0.0
    %65 = vst [vmem:[#allocation2 + $0x140] sm:$0xff] 0.0
    %66 = vst [vmem:[#allocation2 + $0x148] sm:$0xff] 0.0
    %67 = vst [vmem:[#allocation2 + $0x150] sm:$0xff] 0.0
    %68 = vst [vmem:[#allocation2 + $0x158] sm:$0xff] 0.0
    %69 = vst [vmem:[#allocation2 + $0x160] sm:$0xff] 0.0
    %70 = vst [vmem:[#allocation2 + $0x168] sm:$0xff] 0.0
    %71 = vst [vmem:[#allocation2 + $0x170] sm:$0xff] 0.0
    %72 = vst [vmem:[#allocation2 + $0x178] sm:$0xff] 0.0
    %73 = vst [vmem:[#allocation2 + $0x180] sm:$0xff] 0.0
    %74 = vst [vmem:[#allocation2 + $0x188] sm:$0xff] 0.0
    %75 = vst [vmem:[#allocation2 + $0x190] sm:$0xff] 0.0
    %76 = vst [vmem:[#allocation2 + $0x198] sm:$0xff] 0.0
    %77 = vst [vmem:[#allocation2 + $0x1a0] sm:$0xff] 0.0
    %78 = vst [vmem:[#allocation2 + $0x1a8] sm:$0xff] 0.0
    %79 = vst [vmem:[#allocation2 + $0x1b0] sm:$0xff] 0.0
    %80 = vst [vmem:[#allocation2 + $0x1b8] sm:$0xff] 0.0
    %81 = vst [vmem:[#allocation2 + $0x1c0] sm:$0xff] 0.0
    %82 = vst [vmem:[#allocation2 + $0x1c8] sm:$0xff] 0.0
    %83 = vst [vmem:[#allocation2 + $0x1d0] sm:$0xff] 0.0
    %84 = vst [vmem:[#allocation2 + $0x1d8] sm:$0xff] 0.0
    %85 = vst [vmem:[#allocation2 + $0x1e0] sm:$0xff] 0.0
    %86 = vst [vmem:[#allocation2 + $0x1e8] sm:$0xff] 0.0
    %87 = vst [vmem:[#allocation2 + $0x1f0] sm:$0xff] 0.0
    %88 = vst [vmem:[#allocation2 + $0x1f8] sm:$0xff] 0.0
  $region25: #{birdclef_forward.4} parent=0 // pred_fallthru
    _
  %v89 = vld [vmem:[#allocation2] sm:$0xff]
  %v90 = vld [vmem:[#allocation2 + $0x8] sm:$0xff]
  %v91 = vld [vmem:[#allocation2 + $0x10] sm:$0xff]
  %v92 = vld [vmem:[#allocation2 + $0x18] sm:$0xff]
  %v93 = vld [vmem:[#allocation2 + $0x20] sm:$0xff]
  %v94 = vld [vmem:[#allocation2 + $0x28] sm:$0xff]
  %v95 = vld [vmem:[#allocation2 + $0x30] sm:$0xff]
  %v96 = vld [vmem:[#allocation2 + $0x38] sm:$0xff]
  %v97 = vld [vmem:[#allocation2 + $0x40] sm:$0xff]
  %v98 = vld [vmem:[#allocation2 + $0x48] sm:$0xff]
  %v99 = vld [vmem:[#allocation2 + $0x50] sm:$0xff]
  %v100 = vld [vmem:[#allocation2 + $0x58] sm:$0xff]
  %v101 = vld [vmem:[#allocation2 + $0x60] sm:$0xff]
  %v102 = vld [vmem:[#allocation2 + $0x68] sm:$0xff]
  %v103 = vld [vmem:[#allocation2 + $0x70] sm:$0xff]
  %v104 = vld [vmem:[#allocation2 + $0x78] sm:$0xff]
  %v105 = vld [vmem:[#allocation2 + $0x80] sm:$0xff]
  %v106 = vld [vmem:[#allocation2 + $0x88] sm:$0xff]
  %v107 = vld [vmem:[#allocation2 + $0x90] sm:$0xff]
  %v108 = vld [vmem:[#allocation2 + $0x98] sm:$0xff]
  %v109 = vld [vmem:[#allocation2 + $0xa0] sm:$0xff]
  %v110 = vld [vmem:[#allocation2 + $0xa8] sm:$0xff]
  %v111 = vld [vmem:[#allocation2 + $0xb0] sm:$0xff]
  %v112 = vld [vmem:[#allocation2 + $0xb8] sm:$0xff]
  %v113 = vld [vmem:[#allocation2 + $0xc0] sm:$0xff]
  %v114 = vld [vmem:[#allocation2 + $0xc8] sm:$0xff]
  %v115 = vld [vmem:[#allocation2 + $0xd0] sm:$0xff]
  %v116 = vld [vmem:[#allocation2 + $0xd8] sm:$0xff]
  %v117 = vld [vmem:[#allocation2 + $0xe0] sm:$0xff]
  %v118 = vld [vmem:[#allocation2 + $0xe8] sm:$0xff]
  %v119 = vld [vmem:[#allocation2 + $0xf0] sm:$0xff]
  %v120 = vld [vmem:[#allocation2 + $0xf8] sm:$0xff]
  %v121 = vld [vmem:[#allocation2 + $0x100] sm:$0xff]
  %v122 = vld [vmem:[#allocation2 + $0x108] sm:$0xff]
  %v123 = vld [vmem:[#allocation2 + $0x110] sm:$0xff]
  %v124 = vld [vmem:[#allocation2 + $0x118] sm:$0xff]
  %v125 = vld [vmem:[#allocation2 + $0x120] sm:$0xff]
  %v126 = vld [vmem:[#allocation2 + $0x128] sm:$0xff]
  %v127 = vld [vmem:[#allocation2 + $0x130] sm:$0xff]
  %v128 = vld [vmem:[#allocation2 + $0x138] sm:$0xff]
  %v129 = vld [vmem:[#allocation2 + $0x140] sm:$0xff]
  %v130 = vld [vmem:[#allocation2 + $0x148] sm:$0xff]
  %v131 = vld [vmem:[#allocation2 + $0x150] sm:$0xff]
  %v132 = vld [vmem:[#allocation2 + $0x158] sm:$0xff]
  %v133 = vld [vmem:[#allocation2 + $0x160] sm:$0xff]
  %v134 = vld [vmem:[#allocation2 + $0x168] sm:$0xff]
  %v135 = vld [vmem:[#allocation2 + $0x170] sm:$0xff]
  %v136 = vld [vmem:[#allocation2 + $0x178] sm:$0xff]
  %v137 = vld [vmem:[#allocation2 + $0x180] sm:$0xff]
  %v138 = vld [vmem:[#allocation2 + $0x188] sm:$0xff]
  %v139 = vld [vmem:[#allocation2 + $0x190] sm:$0xff]
  %v140 = vld [vmem:[#allocation2 + $0x198] sm:$0xff]
  %v141 = vld [vmem:[#allocation2 + $0x1a0] sm:$0xff]
  %v142 = vld [vmem:[#allocation2 + $0x1a8] sm:$0xff]
  %v143 = vld [vmem:[#allocation2 + $0x1b0] sm:$0xff]
  %v144 = vld [vmem:[#allocation2 + $0x1b8] sm:$0xff]
  %v145 = vld [vmem:[#allocation2 + $0x1c0] sm:$0xff]
  %v146 = vld [vmem:[#allocation2 + $0x1c8] sm:$0xff]
  %v147 = vld [vmem:[#allocation2 + $0x1d0] sm:$0xff]
  %v148 = vld [vmem:[#allocation2 + $0x1d8] sm:$0xff]
  %v149 = vld [vmem:[#allocation2 + $0x1e0] sm:$0xff]
  %v150 = vld [vmem:[#allocation2 + $0x1e8] sm:$0xff]
  %v151 = vld [vmem:[#allocation2 + $0x1f0] sm:$0xff]
  %v152 = vld [vmem:[#allocation2 + $0x1f8] sm:$0xff]
  %v153 = vld [vmem:[%s0] sm:$0xff]
  %v154 = vld [vmem:[%s0 + $0x8] sm:$0xf]
  %v155 = vld [vmem:[%s0 + $0xc] sm:$0xff]
  %v156 = vld [vmem:[%s0 + $0x14] sm:$0xf]
  %v157 = vld [vmem:[%s0 + $0x18] sm:$0xff]
  %v158 = vld [vmem:[%s0 + $0x20] sm:$0xf]
  %v159 = vld [vmem:[%s0 + $0x24] sm:$0xff]
  %v160 = vld [vmem:[%s0 + $0x2c] sm:$0xf]
  %v161 = vld [vmem:[%s0 + $0x30] sm:$0xff]
  %v162 = vld [vmem:[%s0 + $0x38] sm:$0xf]
  %v163 = vld [vmem:[%s0 + $0x3c] sm:$0xff]
  %v164 = vld [vmem:[%s0 + $0x44] sm:$0xf]
  %v165 = vld [vmem:[%s0 + $0x48] sm:$0xff]
  %v166 = vld [vmem:[%s0 + $0x50] sm:$0xf]
  %v167 = vld [vmem:[%s0 + $0x54] sm:$0xff]
  %v168 = vld [vmem:[%s0 + $0x5c] sm:$0xf]
  %v169 = vld [vmem:[%s0 + $0x60] sm:$0xff]
  %v170 = vld [vmem:[%s0 + $0x68] sm:$0xf]
  %v171 = vld [vmem:[%s0 + $0x6c] sm:$0xff]
  %v172 = vld [vmem:[%s0 + $0x74] sm:$0xf]
  %v173 = vld [vmem:[%s0 + $0x78] sm:$0xff]
  %v174 = vld [vmem:[%s0 + $0x80] sm:$0xf]
  %v175 = vld [vmem:[%s0 + $0x84] sm:$0xff]
  %v176 = vld [vmem:[%s0 + $0x8c] sm:$0xf]
  %v177 = vld [vmem:[%s0 + $0x90] sm:$0xff]
  %v178 = vld [vmem:[%s0 + $0x98] sm:$0xf]
  %v179 = vld [vmem:[%s0 + $0x9c] sm:$0xff]
  %v180 = vld [vmem:[%s0 + $0xa4] sm:$0xf]
  %v181 = vld [vmem:[%s0 + $0xa8] sm:$0xff]
  %v182 = vld [vmem:[%s0 + $0xb0] sm:$0xf]
  %v183 = vld [vmem:[%s0 + $0xb4] sm:$0xff]
  %v184 = vld [vmem:[%s0 + $0xbc] sm:$0xf]
  %v185 = vld [vmem:[%s0 + $0xc0] sm:$0xff]
  %v186 = vld [vmem:[%s0 + $0xc8] sm:$0xf]
  %v187 = vld [vmem:[%s0 + $0xcc] sm:$0xff]
  %v188 = vld [vmem:[%s0 + $0xd4] sm:$0xf]
  %v189 = vld [vmem:[%s0 + $0xd8] sm:$0xff]
  %v190 = vld [vmem:[%s0 + $0xe0] sm:$0xf]
  %v191 = vld [vmem:[%s0 + $0xe4] sm:$0xff]
  %v192 = vld [vmem:[%s0 + $0xec] sm:$0xf]
  %v193 = vld [vmem:[%s0 + $0xf0] sm:$0xff]
  %v194 = vld [vmem:[%s0 + $0xf8] sm:$0xf]
  %v195 = vld [vmem:[%s0 + $0xfc] sm:$0xff]
  %v196 = vld [vmem:[%s0 + $0x104] sm:$0xf]
  %v197 = vld [vmem:[%s0 + $0x108] sm:$0xff]
  %v198 = vld [vmem:[%s0 + $0x110] sm:$0xf]
  %v199 = vld [vmem:[%s0 + $0x114] sm:$0xff]
  %v200 = vld [vmem:[%s0 + $0x11c] sm:$0xf]
  %v201 = vld [vmem:[%s0 + $0x120] sm:$0xff]
  %v202 = vld [vmem:[%s0 + $0x128] sm:$0xf]
  %v203 = vld [vmem:[%s0 + $0x12c] sm:$0xff]
  %v204 = vld [vmem:[%s0 + $0x134] sm:$0xf]
  %v205 = vld [vmem:[%s0 + $0x138] sm:$0xff]
  %v206 = vld [vmem:[%s0 + $0x140] sm:$0xf]
  %v207 = vld [vmem:[%s0 + $0x144] sm:$0xff]
  %v208 = vld [vmem:[%s0 + $0x14c] sm:$0xf]
  %v209 = vld [vmem:[%s0 + $0x150] sm:$0xff]
  %v210 = vld [vmem:[%s0 + $0x158] sm:$0xf]
  %v211 = vld [vmem:[%s0 + $0x15c] sm:$0xff]
  %v212 = vld [vmem:[%s0 + $0x164] sm:$0xf]
  %v213 = vld [vmem:[%s0 + $0x168] sm:$0xff]
  %v214 = vld [vmem:[%s0 + $0x170] sm:$0xf]
  %v215 = vld [vmem:[%s0 + $0x174] sm:$0xff]
  %v216 = vld [vmem:[%s0 + $0x17c] sm:$0xf]
  %v217 = vld [vmem:[%s0 + $0x180] sm:$0xff]
  %v218 = vld [vmem:[%s0 + $0x188] sm:$0xf]
  %v219 = vld [vmem:[%s0 + $0x18c] sm:$0xff]
  %v220 = vld [vmem:[%s0 + $0x194] sm:$0xf]
  %v221 = vld [vmem:[%s0 + $0x198] sm:$0xff]
  %v222 = vld [vmem:[%s0 + $0x1a0] sm:$0xf]
  %v223 = vld [vmem:[%s0 + $0x1a4] sm:$0xff]
  %v224 = vld [vmem:[%s0 + $0x1ac] sm:$0xf]
  %v225 = vld [vmem:[%s0 + $0x1b0] sm:$0xff]
  %v226 = vld [vmem:[%s0 + $0x1b8] sm:$0xf]
  %v227 = vld [vmem:[%s0 + $0x1bc] sm:$0xff]
  %v228 = vld [vmem:[%s0 + $0x1c4] sm:$0xf]
  %v229 = vld [vmem:[%s0 + $0x1c8] sm:$0xff]
  %v230 = vld [vmem:[%s0 + $0x1d0] sm:$0xf]
  %v231 = vld [vmem:[%s0 + $0x1d4] sm:$0xff]
  %v232 = vld [vmem:[%s0 + $0x1dc] sm:$0xf]
  %v233 = vld [vmem:[%s0 + $0x1e0] sm:$0xff]
  %v234 = vld [vmem:[%s0 + $0x1e8] sm:$0xf]
  %v235 = vld [vmem:[%s0 + $0x1ec] sm:$0xff]
  %v236 = vld [vmem:[%s0 + $0x1f4] sm:$0xf]
  %v237 = vld [vmem:[%s0 + $0x1f8] sm:$0xff]
  %v238 = vld [vmem:[%s0 + $0x200] sm:$0xf]
  %v239 = vld [vmem:[%s0 + $0x204] sm:$0xff]
  %v240 = vld [vmem:[%s0 + $0x20c] sm:$0xf]
  %v241 = vld [vmem:[%s0 + $0x210] sm:$0xff]
  %v242 = vld [vmem:[%s0 + $0x218] sm:$0xf]
  %v243 = vld [vmem:[%s0 + $0x21c] sm:$0xff]
  %v244 = vld [vmem:[%s0 + $0x224] sm:$0xf]
  %v245 = vld [vmem:[%s0 + $0x228] sm:$0xff]
  %v246 = vld [vmem:[%s0 + $0x230] sm:$0xf]
  %v247 = vld [vmem:[%s0 + $0x234] sm:$0xff]
  %v248 = vld [vmem:[%s0 + $0x23c] sm:$0xf]
  %v249 = vld [vmem:[%s0 + $0x240] sm:$0xff]
  %v250 = vld [vmem:[%s0 + $0x248] sm:$0xf]
  %v251 = vld [vmem:[%s0 + $0x24c] sm:$0xff]
  %v252 = vld [vmem:[%s0 + $0x254] sm:$0xf]
  %v253 = vld [vmem:[%s0 + $0x258] sm:$0xff]
  %v254 = vld [vmem:[%s0 + $0x260] sm:$0xf]
  %v255 = vld [vmem:[%s0 + $0x264] sm:$0xff]
  %v256 = vld [vmem:[%s0 + $0x26c] sm:$0xf]
  %v257 = vld [vmem:[%s0 + $0x270] sm:$0xff]
  %v258 = vld [vmem:[%s0 + $0x278] sm:$0xf]
  %v259 = vld [vmem:[%s0 + $0x27c] sm:$0xff]
  %v260 = vld [vmem:[%s0 + $0x284] sm:$0xf]
  %v261 = vld [vmem:[%s0 + $0x288] sm:$0xff]
  %v262 = vld [vmem:[%s0 + $0x290] sm:$0xf]
  %v263 = vld [vmem:[%s0 + $0x294] sm:$0xff]
  %v264 = vld [vmem:[%s0 + $0x29c] sm:$0xf]
  %v265 = vld [vmem:[%s0 + $0x2a0] sm:$0xff]
  %v266 = vld [vmem:[%s0 + $0x2a8] sm:$0xf]
  %v267 = vld [vmem:[%s0 + $0x2ac] sm:$0xff]
  %v268 = vld [vmem:[%s0 + $0x2b4] sm:$0xf]
  %v269 = vld [vmem:[%s0 + $0x2b8] sm:$0xff]
  %v270 = vld [vmem:[%s0 + $0x2c0] sm:$0xf]
  %v271 = vld [vmem:[%s0 + $0x2c4] sm:$0xff]
  %v272 = vld [vmem:[%s0 + $0x2cc] sm:$0xf]
  %v273 = vld [vmem:[%s0 + $0x2d0] sm:$0xff]
  %v274 = vld [vmem:[%s0 + $0x2d8] sm:$0xf]
  %v275 = vld [vmem:[%s0 + $0x2dc] sm:$0xff]
  %v276 = vld [vmem:[%s0 + $0x2e4] sm:$0xf]
  %v277 = vld [vmem:[%s0 + $0x2e8] sm:$0xff]
  %v278 = vld [vmem:[%s0 + $0x2f0] sm:$0xf]
  %v279 = vld [vmem:[%s0 + $0x2f4] sm:$0xff]
  %v280 = vld [vmem:[%s0 + $0x2fc] sm:$0xf]
  %v281 = vld [vmem:[%s1] sm:$0xf]
  %v282 = vld [vmem:[%s1 + $0x4] sm:$0xf]
  %v283 = vld [vmem:[%s1 + $0x8] sm:$0xf]
  %v284 = vld [vmem:[%s1 + $0xc] sm:$0xf]
  %v285 = vld [vmem:[%s1 + $0x10] sm:$0xf]
  %v286 = vld [vmem:[%s1 + $0x14] sm:$0xf]
  %v287 = vld [vmem:[%s1 + $0x18] sm:$0xf]
  %v288 = vld [vmem:[%s1 + $0x1c] sm:$0xf]
  %v289 = vld [vmem:[%s1 + $0x20] sm:$0xf]
  %v290 = vld [vmem:[%s1 + $0x24] sm:$0xf]
  %v291 = vld [vmem:[%s1 + $0x28] sm:$0xf]
  %v292 = vld [vmem:[%s1 + $0x2c] sm:$0xf]
  %v293 = vld [vmem:[%s1 + $0x30] sm:$0xf]
  %v294 = vld [vmem:[%s1 + $0x34] sm:$0xf]
  %v295 = vld [vmem:[%s1 + $0x38] sm:$0xf]
  %v296 = vld [vmem:[%s1 + $0x3c] sm:$0xf]
  %v297 = vld [vmem:[%s1 + $0x40] sm:$0xf]
  %v298 = vld [vmem:[%s1 + $0x44] sm:$0xf]
  %v299 = vld [vmem:[%s1 + $0x48] sm:$0xf]
  %v300 = vld [vmem:[%s1 + $0x4c] sm:$0xf]
  %v301 = vld [vmem:[%s1 + $0x50] sm:$0xf]
  %v302 = vld [vmem:[%s1 + $0x54] sm:$0xf]
  %v303 = vld [vmem:[%s1 + $0x58] sm:$0xf]
  %v304 = vld [vmem:[%s1 + $0x5c] sm:$0xf]
  %v305 = vld [vmem:[%s1 + $0x60] sm:$0xf]
  %v306 = vld [vmem:[%s1 + $0x64] sm:$0xf]
  %v307 = vld [vmem:[%s1 + $0x68] sm:$0xf]
  %v308 = vld [vmem:[%s1 + $0x6c] sm:$0xf]
  %v309 = vld [vmem:[%s1 + $0x70] sm:$0xf]
  %v310 = vld [vmem:[%s1 + $0x74] sm:$0xf]
  %v311 = vld [vmem:[%s1 + $0x78] sm:$0xf]
  %v312 = vld [vmem:[%s1 + $0x7c] sm:$0xf]
  %v313 = vld [vmem:[%s1 + $0x80] sm:$0xf]
  %v314 = vld [vmem:[%s1 + $0x84] sm:$0xf]
  %v315 = vld [vmem:[%s1 + $0x88] sm:$0xf]
  %v316 = vld [vmem:[%s1 + $0x8c] sm:$0xf]
  %v445 = vunpack.c.l.b16 %v153
  %v446 = vunpack.c.h.b16 %v153
  %v447 = vunpack.c.l.b16 %v154
  %v448 = vunpack.c.l.b16 %v155
  %v449 = vunpack.c.h.b16 %v155
  %v450 = vunpack.c.l.b16 %v156
  %v451 = vunpack.c.l.b16 %v157
  %v452 = vunpack.c.h.b16 %v157
  %v453 = vunpack.c.l.b16 %v158
  %v454 = vunpack.c.l.b16 %v159
  %v455 = vunpack.c.h.b16 %v159
  %v456 = vunpack.c.l.b16 %v160
  %v457 = vunpack.c.l.b16 %v161
  %v458 = vunpack.c.h.b16 %v161
  %v459 = vunpack.c.l.b16 %v162
  %v460 = vunpack.c.l.b16 %v163
  %v461 = vunpack.c.h.b16 %v163
  %v462 = vunpack.c.l.b16 %v164
  %v463 = vunpack.c.l.b16 %v165
  %v464 = vunpack.c.h.b16 %v165
  %v465 = vunpack.c.l.b16 %v166
  %v466 = vunpack.c.l.b16 %v167
  %v467 = vunpack.c.h.b16 %v167
  %v468 = vunpack.c.l.b16 %v168
  %v469 = vunpack.c.l.b16 %v169
  %v470 = vunpack.c.h.b16 %v169
  %v471 = vunpack.c.l.b16 %v170
  %v472 = vunpack.c.l.b16 %v171
  %v473 = vunpack.c.h.b16 %v171
  %v474 = vunpack.c.l.b16 %v172
  %v475 = vunpack.c.l.b16 %v173
  %v476 = vunpack.c.h.b16 %v173
  %v477 = vunpack.c.l.b16 %v174
  %v478 = vunpack.c.l.b16 %v175
  %v479 = vunpack.c.h.b16 %v175
  %v480 = vunpack.c.l.b16 %v176
  %v481 = vunpack.c.l.b16 %v177
  %v482 = vunpack.c.h.b16 %v177
  %v483 = vunpack.c.l.b16 %v178
  %v484 = vunpack.c.l.b16 %v179
  %v485 = vunpack.c.h.b16 %v179
  %v486 = vunpack.c.l.b16 %v180
  %v487 = vunpack.c.l.b16 %v181
  %v488 = vunpack.c.h.b16 %v181
  %v489 = vunpack.c.l.b16 %v182
  %v490 = vunpack.c.l.b16 %v183
  %v491 = vunpack.c.h.b16 %v183
  %v492 = vunpack.c.l.b16 %v184
  %v493 = vunpack.c.l.b16 %v185
  %v494 = vunpack.c.h.b16 %v185
  %v495 = vunpack.c.l.b16 %v186
  %v496 = vunpack.c.l.b16 %v187
  %v497 = vunpack.c.h.b16 %v187
  %v498 = vunpack.c.l.b16 %v188
  %v499 = vunpack.c.l.b16 %v189
  %v500 = vunpack.c.h.b16 %v189
  %v501 = vunpack.c.l.b16 %v190
  %v502 = vunpack.c.l.b16 %v191
  %v503 = vunpack.c.h.b16 %v191
  %v504 = vunpack.c.l.b16 %v192
  %v505 = vunpack.c.l.b16 %v193
  %v506 = vunpack.c.h.b16 %v193
  %v507 = vunpack.c.l.b16 %v194
  %v508 = vunpack.c.l.b16 %v195
  %v509 = vunpack.c.h.b16 %v195
  %v510 = vunpack.c.l.b16 %v196
  %v511 = vunpack.c.l.b16 %v197
  %v512 = vunpack.c.h.b16 %v197
  %v513 = vunpack.c.l.b16 %v198
  %v514 = vunpack.c.l.b16 %v199
  %v515 = vunpack.c.h.b16 %v199
  %v516 = vunpack.c.l.b16 %v200
  %v517 = vunpack.c.l.b16 %v201
  %v518 = vunpack.c.h.b16 %v201
  %v519 = vunpack.c.l.b16 %v202
  %v520 = vunpack.c.l.b16 %v203
  %v521 = vunpack.c.h.b16 %v203
  %v522 = vunpack.c.l.b16 %v204
  %v523 = vunpack.c.l.b16 %v205
  %v524 = vunpack.c.h.b16 %v205
  %v525 = vunpack.c.l.b16 %v206
  %v526 = vunpack.c.l.b16 %v207
  %v527 = vunpack.c.h.b16 %v207
  %v528 = vunpack.c.l.b16 %v208
  %v529 = vunpack.c.l.b16 %v209
  %v530 = vunpack.c.h.b16 %v209
  %v531 = vunpack.c.l.b16 %v210
  %v532 = vunpack.c.l.b16 %v211
  %v533 = vunpack.c.h.b16 %v211
  %v534 = vunpack.c.l.b16 %v212
  %v535 = vunpack.c.l.b16 %v213
  %v536 = vunpack.c.h.b16 %v213
  %v537 = vunpack.c.l.b16 %v214
  %v538 = vunpack.c.l.b16 %v215
  %v539 = vunpack.c.h.b16 %v215
  %v540 = vunpack.c.l.b16 %v216
  %v541 = vunpack.c.l.b16 %v217
  %v542 = vunpack.c.h.b16 %v217
  %v543 = vunpack.c.l.b16 %v218
  %v544 = vunpack.c.l.b16 %v219
  %v545 = vunpack.c.h.b16 %v219
  %v546 = vunpack.c.l.b16 %v220
  %v547 = vunpack.c.l.b16 %v221
  %v548 = vunpack.c.h.b16 %v221
  %v549 = vunpack.c.l.b16 %v222
  %v550 = vunpack.c.l.b16 %v223
  %v551 = vunpack.c.h.b16 %v223
  %v552 = vunpack.c.l.b16 %v224
  %v553 = vunpack.c.l.b16 %v225
  %v554 = vunpack.c.h.b16 %v225
  %v555 = vunpack.c.l.b16 %v226
  %v556 = vunpack.c.l.b16 %v227
  %v557 = vunpack.c.h.b16 %v227
  %v558 = vunpack.c.l.b16 %v228
  %v559 = vunpack.c.l.b16 %v229
  %v560 = vunpack.c.h.b16 %v229
  %v561 = vunpack.c.l.b16 %v230
  %v562 = vunpack.c.l.b16 %v231
  %v563 = vunpack.c.h.b16 %v231
  %v564 = vunpack.c.l.b16 %v232
  %v565 = vunpack.c.l.b16 %v233
  %v566 = vunpack.c.h.b16 %v233
  %v567 = vunpack.c.l.b16 %v234
  %v568 = vunpack.c.l.b16 %v235
  %v569 = vunpack.c.h.b16 %v235
  %v570 = vunpack.c.l.b16 %v236
  %v571 = vunpack.c.l.b16 %v237
  %v572 = vunpack.c.h.b16 %v237
  %v573 = vunpack.c.l.b16 %v238
  %v574 = vunpack.c.l.b16 %v239
  %v575 = vunpack.c.h.b16 %v239
  %v576 = vunpack.c.l.b16 %v240
  %v577 = vunpack.c.l.b16 %v241
  %v578 = vunpack.c.h.b16 %v241
  %v579 = vunpack.c.l.b16 %v242
  %v580 = vunpack.c.l.b16 %v243
  %v581 = vunpack.c.h.b16 %v243
  %v582 = vunpack.c.l.b16 %v244
  %v583 = vunpack.c.l.b16 %v245
  %v584 = vunpack.c.h.b16 %v245
  %v585 = vunpack.c.l.b16 %v246
  %v586 = vunpack.c.l.b16 %v247
  %v587 = vunpack.c.h.b16 %v247
  %v588 = vunpack.c.l.b16 %v248
  %v589 = vunpack.c.l.b16 %v249
  %v590 = vunpack.c.h.b16 %v249
  %v591 = vunpack.c.l.b16 %v250
  %v592 = vunpack.c.l.b16 %v251
  %v593 = vunpack.c.h.b16 %v251
  %v594 = vunpack.c.l.b16 %v252
  %v595 = vunpack.c.l.b16 %v253
  %v596 = vunpack.c.h.b16 %v253
  %v597 = vunpack.c.l.b16 %v254
  %v598 = vunpack.c.l.b16 %v255
  %v599 = vunpack.c.h.b16 %v255
  %v600 = vunpack.c.l.b16 %v256
  %v601 = vunpack.c.l.b16 %v257
  %v602 = vunpack.c.h.b16 %v257
  %v603 = vunpack.c.l.b16 %v258
  %v604 = vunpack.c.l.b16 %v259
  %v605 = vunpack.c.h.b16 %v259
  %v606 = vunpack.c.l.b16 %v260
  %v607 = vunpack.c.l.b16 %v261
  %v608 = vunpack.c.h.b16 %v261
  %v609 = vunpack.c.l.b16 %v262
  %v610 = vunpack.c.l.b16 %v263
  %v611 = vunpack.c.h.b16 %v263
  %v612 = vunpack.c.l.b16 %v264
  %v613 = vunpack.c.l.b16 %v265
  %v614 = vunpack.c.h.b16 %v265
  %v615 = vunpack.c.l.b16 %v266
  %v616 = vunpack.c.l.b16 %v267
  %v617 = vunpack.c.h.b16 %v267
  %v618 = vunpack.c.l.b16 %v268
  %v619 = vunpack.c.l.b16 %v269
  %v620 = vunpack.c.h.b16 %v269
  %v621 = vunpack.c.l.b16 %v270
  %v622 = vunpack.c.l.b16 %v271
  %v623 = vunpack.c.h.b16 %v271
  %v624 = vunpack.c.l.b16 %v272
  %v625 = vunpack.c.l.b16 %v273
  %v626 = vunpack.c.h.b16 %v273
  %v627 = vunpack.c.l.b16 %v274
  %v628 = vunpack.c.l.b16 %v275
  %v629 = vunpack.c.h.b16 %v275
  %v630 = vunpack.c.l.b16 %v276
  %v631 = vunpack.c.l.b16 %v277
  %v632 = vunpack.c.h.b16 %v277
  %v633 = vunpack.c.l.b16 %v278
  %v634 = vunpack.c.l.b16 %v279
  %v635 = vunpack.c.h.b16 %v279
  %v636 = vunpack.c.l.b16 %v280
  %v637 = vpack.c.b16 %v448, %v445
  %v638 = vpack.c.b16 %v449, %v446
  %v639 = vpack.c.b16 %v450, %v447
  %v640 = vpack.c.b16 %v454, %v451
  %v641 = vpack.c.b16 %v455, %v452
  %v642 = vpack.c.b16 %v456, %v453
  %v643 = vpack.c.b16 %v460, %v457
  %v644 = vpack.c.b16 %v461, %v458
  %v645 = vpack.c.b16 %v462, %v459
  %v646 = vpack.c.b16 %v466, %v463
  %v647 = vpack.c.b16 %v467, %v464
  %v648 = vpack.c.b16 %v468, %v465
  %v649 = vpack.c.b16 %v472, %v469
  %v650 = vpack.c.b16 %v473, %v470
  %v651 = vpack.c.b16 %v474, %v471
  %v652 = vpack.c.b16 %v478, %v475
  %v653 = vpack.c.b16 %v479, %v476
  %v654 = vpack.c.b16 %v480, %v477
  %v655 = vpack.c.b16 %v484, %v481
  %v656 = vpack.c.b16 %v485, %v482
  %v657 = vpack.c.b16 %v486, %v483
  %v658 = vpack.c.b16 %v490, %v487
  %v659 = vpack.c.b16 %v491, %v488
  %v660 = vpack.c.b16 %v492, %v489
  %v661 = vpack.c.b16 %v496, %v493
  %v662 = vpack.c.b16 %v497, %v494
  %v663 = vpack.c.b16 %v498, %v495
  %v664 = vpack.c.b16 %v502, %v499
  %v665 = vpack.c.b16 %v503, %v500
  %v666 = vpack.c.b16 %v504, %v501
  %v667 = vpack.c.b16 %v508, %v505
  %v668 = vpack.c.b16 %v509, %v506
  %v669 = vpack.c.b16 %v510, %v507
  %v670 = vpack.c.b16 %v514, %v511
  %v671 = vpack.c.b16 %v515, %v512
  %v672 = vpack.c.b16 %v516, %v513
  %v673 = vpack.c.b16 %v520, %v517
  %v674 = vpack.c.b16 %v521, %v518
  %v675 = vpack.c.b16 %v522, %v519
  %v676 = vpack.c.b16 %v526, %v523
  %v677 = vpack.c.b16 %v527, %v524
  %v678 = vpack.c.b16 %v528, %v525
  %v679 = vpack.c.b16 %v532, %v529
  %v680 = vpack.c.b16 %v533, %v530
  %v681 = vpack.c.b16 %v534, %v531
  %v682 = vpack.c.b16 %v538, %v535
  %v683 = vpack.c.b16 %v539, %v536
  %v684 = vpack.c.b16 %v540, %v537
  %v685 = vpack.c.b16 %v544, %v541
  %v686 = vpack.c.b16 %v545, %v542
  %v687 = vpack.c.b16 %v546, %v543
  %v688 = vpack.c.b16 %v550, %v547
  %v689 = vpack.c.b16 %v551, %v548
  %v690 = vpack.c.b16 %v552, %v549
  %v691 = vpack.c.b16 %v556, %v553
  %v692 = vpack.c.b16 %v557, %v554
  %v693 = vpack.c.b16 %v558, %v555
  %v694 = vpack.c.b16 %v562, %v559
  %v695 = vpack.c.b16 %v563, %v560
  %v696 = vpack.c.b16 %v564, %v561
  %v697 = vpack.c.b16 %v568, %v565
  %v698 = vpack.c.b16 %v569, %v566
  %v699 = vpack.c.b16 %v570, %v567
  %v700 = vpack.c.b16 %v574, %v571
  %v701 = vpack.c.b16 %v575, %v572
  %v702 = vpack.c.b16 %v576, %v573
  %v703 = vpack.c.b16 %v580, %v577
  %v704 = vpack.c.b16 %v581, %v578
  %v705 = vpack.c.b16 %v582, %v579
  %v706 = vpack.c.b16 %v586, %v583
  %v707 = vpack.c.b16 %v587, %v584
  %v708 = vpack.c.b16 %v588, %v585
  %v709 = vpack.c.b16 %v592, %v589
  %v710 = vpack.c.b16 %v593, %v590
  %v711 = vpack.c.b16 %v594, %v591
  %v712 = vpack.c.b16 %v598, %v595
  %v713 = vpack.c.b16 %v599, %v596
  %v714 = vpack.c.b16 %v600, %v597
  %v715 = vpack.c.b16 %v604, %v601
  %v716 = vpack.c.b16 %v605, %v602
  %v717 = vpack.c.b16 %v606, %v603
  %v718 = vpack.c.b16 %v610, %v607
  %v719 = vpack.c.b16 %v611, %v608
  %v720 = vpack.c.b16 %v612, %v609
  %v721 = vpack.c.b16 %v616, %v613
  %v722 = vpack.c.b16 %v617, %v614
  %v723 = vpack.c.b16 %v618, %v615
  %v724 = vpack.c.b16 %v622, %v619
  %v725 = vpack.c.b16 %v623, %v620
  %v726 = vpack.c.b16 %v624, %v621
  %v727 = vpack.c.b16 %v628, %v625
  %v728 = vpack.c.b16 %v629, %v626
  %v729 = vpack.c.b16 %v630, %v627
  %v730 = vpack.c.b16 %v634, %v631
  %v731 = vpack.c.b16 %v635, %v632
  %v732 = vpack.c.b16 %v636, %v633
  %v833 = vunpack.c.l.b16 %v281
  %v834 = vunpack.c.l.b16 %v282
  %v835 = vunpack.c.l.b16 %v283
  %v836 = vunpack.c.l.b16 %v284
  %v837 = vunpack.c.l.b16 %v285
  %v838 = vunpack.c.l.b16 %v286
  %v839 = vunpack.c.l.b16 %v287
  %v840 = vunpack.c.l.b16 %v288
  %v841 = vunpack.c.l.b16 %v289
  %v842 = vunpack.c.l.b16 %v290
  %v843 = vunpack.c.l.b16 %v291
  %v844 = vunpack.c.l.b16 %v292
  %v845 = vunpack.c.l.b16 %v293
  %v846 = vunpack.c.l.b16 %v294
  %v847 = vunpack.c.l.b16 %v295
  %v848 = vunpack.c.l.b16 %v296
  %v849 = vunpack.c.l.b16 %v297
  %v850 = vunpack.c.l.b16 %v298
  %v851 = vunpack.c.l.b16 %v299
  %v852 = vunpack.c.l.b16 %v300
  %v853 = vunpack.c.l.b16 %v301
  %v854 = vunpack.c.l.b16 %v302
  %v855 = vunpack.c.l.b16 %v303
  %v856 = vunpack.c.l.b16 %v304
  %v857 = vunpack.c.l.b16 %v305
  %v858 = vunpack.c.l.b16 %v306
  %v859 = vunpack.c.l.b16 %v307
  %v860 = vunpack.c.l.b16 %v308
  %v861 = vunpack.c.l.b16 %v309
  %v862 = vunpack.c.l.b16 %v310
  %v863 = vunpack.c.l.b16 %v311
  %v864 = vunpack.c.l.b16 %v312
  %v865 = vunpack.c.l.b16 %v313
  %v866 = vunpack.c.l.b16 %v314
  %v867 = vunpack.c.l.b16 %v315
  %v868 = vunpack.c.l.b16 %v316
  %v869 = vpack.c.b16 %v834, %v833
  %v870 = vpack.c.b16 %v836, %v835
  %v871 = vpack.c.b16 %v838, %v837
  %v872 = vpack.c.b16 %v840, %v839
  %v873 = vpack.c.b16 %v842, %v841
  %v874 = vpack.c.b16 %v844, %v843
  %v875 = vpack.c.b16 %v846, %v845
  %v876 = vpack.c.b16 %v848, %v847
  %v877 = vpack.c.b16 %v850, %v849
  %v878 = vpack.c.b16 %v852, %v851
  %v879 = vpack.c.b16 %v854, %v853
  %v880 = vpack.c.b16 %v856, %v855
  %v881 = vpack.c.b16 %v858, %v857
  %v882 = vpack.c.b16 %v860, %v859
  %v883 = vpack.c.b16 %v862, %v861
  %v884 = vpack.c.b16 %v864, %v863
  %v885 = vpack.c.b16 %v866, %v865
  %v886 = vpack.c.b16 %v868, %v867
  %vm905 = vcmask 261120
  %v907 = vsel %vm905, %v639, 0
  %v910 = vsel %vm905, %v642, 0
  %v913 = vsel %vm905, %v645, 0
  %v916 = vsel %vm905, %v648, 0
  %v919 = vsel %vm905, %v651, 0
  %v922 = vsel %vm905, %v654, 0
  %v925 = vsel %vm905, %v657, 0
  %v928 = vsel %vm905, %v660, 0
  %v931 = vsel %vm905, %v663, 0
  %v934 = vsel %vm905, %v666, 0
  %v937 = vsel %vm905, %v669, 0
  %v940 = vsel %vm905, %v672, 0
  %v943 = vsel %vm905, %v675, 0
  %v946 = vsel %vm905, %v678, 0
  %v949 = vsel %vm905, %v681, 0
  %v952 = vsel %vm905, %v684, 0
  %v955 = vsel %vm905, %v687, 0
  %v958 = vsel %vm905, %v690, 0
  %v961 = vsel %vm905, %v693, 0
  %v964 = vsel %vm905, %v696, 0
  %v967 = vsel %vm905, %v699, 0
  %v970 = vsel %vm905, %v702, 0
  %v973 = vsel %vm905, %v705, 0
  %v976 = vsel %vm905, %v708, 0
  %v979 = vsel %vm905, %v711, 0
  %v982 = vsel %vm905, %v714, 0
  %v985 = vsel %vm905, %v717, 0
  %v988 = vsel %vm905, %v720, 0
  %v991 = vsel %vm905, %v723, 0
  %v994 = vsel %vm905, %v726, 0
  %v997 = vsel %vm905, %v729, 0
  %v1000 = vsel %vm905, %v732, 0
  %1002 = vmatprep.subr.bf16.mxu0 0
  %1003 = vmatpush1.bf16.msra.mxu0 %v869
  %1004 = vmatprep.subr.bf16.mxu0 0
  %1005 = vmatpush1.bf16.msra.mxu0 %v870
  %1006 = vmatprep.subr.bf16.mxu0 0
  %1007 = vmatpush1.bf16.msra.mxu0 %v871
  %1008 = vmatprep.subr.bf16.mxu0 0
  %1009 = vmatpush1.bf16.msra.mxu0 %v872
  %1010 = vmatprep.subr.bf16.mxu0 0
  %1011 = vmatpush1.bf16.msra.mxu0 %v873
  %1012 = vmatprep.subr.bf16.mxu0 0
  %1013 = vmatpush1.bf16.msra.mxu0 %v874
  %1014 = vmatprep.subr.bf16.mxu0 0
  %1015 = vmatpush1.bf16.msra.mxu0 %v875
  %1016 = vmatprep.subr.bf16.mxu0 0
  %1017 = vmatpush1.bf16.msra.mxu0 %v876
  %1018 = vmatprep.subr.bf16.mxu0 0
  %1019 = vmatpush1.bf16.msra.mxu0 %v877
  %1020 = vmatprep.subr.bf16.mxu0 0
  %1021 = vmatpush1.bf16.msra.mxu0 %v878
  %1022 = vmatprep.subr.bf16.mxu0 0
  %1023 = vmatpush1.bf16.msra.mxu0 %v879
  %1024 = vmatprep.subr.bf16.mxu0 0
  %1025 = vmatpush1.bf16.msra.mxu0 %v880
  %1026 = vmatprep.subr.bf16.mxu0 0
  %1027 = vmatpush1.bf16.msra.mxu0 %v881
  %1028 = vmatprep.subr.bf16.mxu0 0
  %1029 = vmatpush1.bf16.msra.mxu0 %v882
  %1030 = vmatprep.subr.bf16.mxu0 0
  %1031 = vmatpush1.bf16.msra.mxu0 %v883
  %1032 = vmatprep.subr.bf16.mxu0 0
  %1033 = vmatpush1.bf16.msra.mxu0 %v884
  %1034 = vmatprep.mubr.bf16.mxu0 %v638
  %1035 = vmatmul.mubr.bf16.gmra.mrb[0].mxu0 %v637
  %v1036 = vpop.f32.mrb[0].mxu0
  %v1037 = vadd.f32 0.0, %v1036
  %v1038 = vpop.f32.mrb[0].mxu0
  %v1039 = vpop.f32.mrb[0].mxu0
  %v1040 = vadd.f32 0.0, %v1039
  %v1041 = vpop.f32.mrb[0].mxu0
  %1042 = vmatprep.mubr.bf16.mxu0 %v641
  %1043 = vmatmul.mubr.bf16.gmra.mrb[0].mxu0 %v640
  %v1044 = vpop.f32.mrb[0].mxu0
  %v1045 = vadd.f32 0.0, %v1044
  %v1046 = vpop.f32.mrb[0].mxu0
  %v1047 = vpop.f32.mrb[0].mxu0
  %v1048 = vadd.f32 0.0, %v1047
  %v1049 = vpop.f32.mrb[0].mxu0
  %1050 = vmatprep.mubr.bf16.mxu0 %v644
  %1051 = vmatmul.mubr.bf16.gmra.mrb[0].mxu0 %v643
  %v1052 = vpop.f32.mrb[0].mxu0
  %v1053 = vadd.f32 0.0, %v1052
  %v1054 = vpop.f32.mrb[0].mxu0
  %v1055 = vpop.f32.mrb[0].mxu0
  %v1056 = vadd.f32 0.0, %v1055
  %v1057 = vpop.f32.mrb[0].mxu0
  %1058 = vmatprep.mubr.bf16.mxu0 %v647
  %1059 = vmatmul.mubr.bf16.gmra.mrb[0].mxu0 %v646
  %v1060 = vpop.f32.mrb[0].mxu0
  %v1061 = vadd.f32 0.0, %v1060
  %v1062 = vpop.f32.mrb[0].mxu0
  %v1063 = vpop.f32.mrb[0].mxu0
  %v1064 = vadd.f32 0.0, %v1063
  %v1065 = vpop.f32.mrb[0].mxu0
  %1066 = vmatprep.mubr.bf16.mxu0 %v650
  %1067 = vmatmul.mubr.bf16.gmra.mrb[0].mxu0 %v649
  %v1068 = vpop.f32.mrb[0].mxu0
  %v1069 = vadd.f32 0.0, %v1068
  %v1070 = vpop.f32.mrb[0].mxu0
  %v1071 = vpop.f32.mrb[0].mxu0
  %v1072 = vadd.f32 0.0, %v1071
  %v1073 = vpop.f32.mrb[0].mxu0
  %1074 = vmatprep.mubr.bf16.mxu0 %v653
  %1075 = vmatmul.mubr.bf16.gmra.mrb[0].mxu0 %v652
  %v1076 = vpop.f32.mrb[0].mxu0
  %v1077 = vadd.f32 0.0, %v1076
  %v1078 = vpop.f32.mrb[0].mxu0
  %v1079 = vpop.f32.mrb[0].mxu0
  %v1080 = vadd.f32 0.0, %v1079
  %v1081 = vpop.f32.mrb[0].mxu0
  %1082 = vmatprep.mubr.bf16.mxu0 %v656
  %1083 = vmatmul.mubr.bf16.gmra.mrb[0].mxu0 %v655
  %v1084 = vpop.f32.mrb[0].mxu0
  %v1085 = vadd.f32 0.0, %v1084
  %v1086 = vpop.f32.mrb[0].mxu0
  %v1087 = vpop.f32.mrb[0].mxu0
  %v1088 = vadd.f32 0.0, %v1087
  %v1089 = vpop.f32.mrb[0].mxu0
  %1090 = vmatprep.mubr.bf16.mxu0 %v659
  %1091 = vmatmul.mubr.bf16.gmra.mrb[0].mxu0 %v658
  %v1092 = vpop.f32.mrb[0].mxu0
  %v1093 = vadd.f32 0.0, %v1092
  %v1094 = vpop.f32.mrb[0].mxu0
  %v1095 = vpop.f32.mrb[0].mxu0
  %v1096 = vadd.f32 0.0, %v1095
  %v1097 = vpop.f32.mrb[0].mxu0
  %1098 = vmatprep.mubr.bf16.mxu0 %v662
  %1099 = vmatmul.mubr.bf16.gmra.mrb[0].mxu0 %v661
  %v1100 = vpop.f32.mrb[0].mxu0
  %v1101 = vadd.f32 0.0, %v1100
  %v1102 = vpop.f32.mrb[0].mxu0
  %v1103 = vpop.f32.mrb[0].mxu0
  %v1104 = vadd.f32 0.0, %v1103
  %v1105 = vpop.f32.mrb[0].mxu0
  %1106 = vmatprep.mubr.bf16.mxu0 %v665
  %1107 = vmatmul.mubr.bf16.gmra.mrb[0].mxu0 %v664
  %v1108 = vpop.f32.mrb[0].mxu0
  %v1109 = vadd.f32 0.0, %v1108
  %v1110 = vpop.f32.mrb[0].mxu0
  %v1111 = vpop.f32.mrb[0].mxu0
  %v1112 = vadd.f32 0.0, %v1111
  %v1113 = vpop.f32.mrb[0].mxu0
  %1114 = vmatprep.mubr.bf16.mxu0 %v668
  %1115 = vmatmul.mubr.bf16.gmra.mrb[0].mxu0 %v667
  %v1116 = vpop.f32.mrb[0].mxu0
  %v1117 = vadd.f32 0.0, %v1116
  %v1118 = vpop.f32.mrb[0].mxu0
  %v1119 = vpop.f32.mrb[0].mxu0
  %v1120 = vadd.f32 0.0, %v1119
  %v1121 = vpop.f32.mrb[0].mxu0
  %1122 = vmatprep.mubr.bf16.mxu0 %v671
  %1123 = vmatmul.mubr.bf16.gmra.mrb[0].mxu0 %v670
  %v1124 = vpop.f32.mrb[0].mxu0
  %v1125 = vadd.f32 0.0, %v1124
  %v1126 = vpop.f32.mrb[0].mxu0
  %v1127 = vpop.f32.mrb[0].mxu0
  %v1128 = vadd.f32 0.0, %v1127
  %v1129 = vpop.f32.mrb[0].mxu0
  %1130 = vmatprep.mubr.bf16.mxu0 %v674
  %1131 = vmatmul.mubr.bf16.gmra.mrb[0].mxu0 %v673
  %v1132 = vpop.f32.mrb[0].mxu0
  %v1133 = vadd.f32 0.0, %v1132
  %v1134 = vpop.f32.mrb[0].mxu0
  %v1135 = vpop.f32.mrb[0].mxu0
  %v1136 = vadd.f32 0.0, %v1135
  %v1137 = vpop.f32.mrb[0].mxu0
  %1138 = vmatprep.mubr.bf16.mxu0 %v677
  %1139 = vmatmul.mubr.bf16.gmra.mrb[0].mxu0 %v676
  %v1140 = vpop.f32.mrb[0].mxu0
  %v1141 = vadd.f32 0.0, %v1140
  %v1142 = vpop.f32.mrb[0].mxu0
  %v1143 = vpop.f32.mrb[0].mxu0
  %v1144 = vadd.f32 0.0, %v1143
  %v1145 = vpop.f32.mrb[0].mxu0
  %1146 = vmatprep.mubr.bf16.mxu0 %v680
  %1147 = vmatmul.mubr.bf16.gmra.mrb[0].mxu0 %v679
  %v1148 = vpop.f32.mrb[0].mxu0
  %v1149 = vadd.f32 0.0, %v1148
  %v1150 = vpop.f32.mrb[0].mxu0
  %v1151 = vpop.f32.mrb[0].mxu0
  %v1152 = vadd.f32 0.0, %v1151
  %v1153 = vpop.f32.mrb[0].mxu0
  %1154 = vmatprep.mubr.bf16.mxu0 %v683
  %1155 = vmatmul.mubr.bf16.gmra.mrb[0].mxu0 %v682
  %v1156 = vpop.f32.mrb[0].mxu0
  %v1157 = vadd.f32 0.0, %v1156
  %v1158 = vpop.f32.mrb[0].mxu0
  %v1159 = vpop.f32.mrb[0].mxu0
  %v1160 = vadd.f32 0.0, %v1159
  %v1161 = vpop.f32.mrb[0].mxu0
  %1162 = vmatprep.mubr.bf16.mxu0 %v686
  %1163 = vmatmul.mubr.bf16.gmra.mrb[0].mxu0 %v685
  %v1164 = vpop.f32.mrb[0].mxu0
  %v1165 = vadd.f32 0.0, %v1164
  %v1166 = vpop.f32.mrb[0].mxu0
  %v1167 = vpop.f32.mrb[0].mxu0
  %v1168 = vadd.f32 0.0, %v1167
  %v1169 = vpop.f32.mrb[0].mxu0
  %1170 = vmatprep.mubr.bf16.mxu0 %v689
  %1171 = vmatmul.mubr.bf16.gmra.mrb[0].mxu0 %v688
  %v1172 = vpop.f32.mrb[0].mxu0
  %v1173 = vadd.f32 0.0, %v1172
  %v1174 = vpop.f32.mrb[0].mxu0
  %v1175 = vpop.f32.mrb[0].mxu0
  %v1176 = vadd.f32 0.0, %v1175
  %v1177 = vpop.f32.mrb[0].mxu0
  %1178 = vmatprep.mubr.bf16.mxu0 %v692
  %1179 = vmatmul.mubr.bf16.gmra.mrb[0].mxu0 %v691
  %v1180 = vpop.f32.mrb[0].mxu0
  %v1181 = vadd.f32 0.0, %v1180
  %v1182 = vpop.f32.mrb[0].mxu0
  %v1183 = vpop.f32.mrb[0].mxu0
  %v1184 = vadd.f32 0.0, %v1183
  %v1185 = vpop.f32.mrb[0].mxu0
  %1186 = vmatprep.mubr.bf16.mxu0 %v695
  %1187 = vmatmul.mubr.bf16.gmra.mrb[0].mxu0 %v694
  %v1188 = vpop.f32.mrb[0].mxu0
  %v1189 = vadd.f32 0.0, %v1188
  %v1190 = vpop.f32.mrb[0].mxu0
  %v1191 = vpop.f32.mrb[0].mxu0
  %v1192 = vadd.f32 0.0, %v1191
  %v1193 = vpop.f32.mrb[0].mxu0
  %1194 = vmatprep.mubr.bf16.mxu0 %v698
  %1195 = vmatmul.mubr.bf16.gmra.mrb[0].mxu0 %v697
  %v1196 = vpop.f32.mrb[0].mxu0
  %v1197 = vadd.f32 0.0, %v1196
  %v1198 = vpop.f32.mrb[0].mxu0
  %v1199 = vpop.f32.mrb[0].mxu0
  %v1200 = vadd.f32 0.0, %v1199
  %v1201 = vpop.f32.mrb[0].mxu0
  %1202 = vmatprep.mubr.bf16.mxu0 %v701
  %1203 = vmatmul.mubr.bf16.gmra.mrb[0].mxu0 %v700
  %v1204 = vpop.f32.mrb[0].mxu0
  %v1205 = vadd.f32 0.0, %v1204
  %v1206 = vpop.f32.mrb[0].mxu0
  %v1207 = vpop.f32.mrb[0].mxu0
  %v1208 = vadd.f32 0.0, %v1207
  %v1209 = vpop.f32.mrb[0].mxu0
  %1210 = vmatprep.mubr.bf16.mxu0 %v704
  %1211 = vmatmul.mubr.bf16.gmra.mrb[0].mxu0 %v703
  %v1212 = vpop.f32.mrb[0].mxu0
  %v1213 = vadd.f32 0.0, %v1212
  %v1214 = vpop.f32.mrb[0].mxu0
  %v1215 = vpop.f32.mrb[0].mxu0
  %v1216 = vadd.f32 0.0, %v1215
  %v1217 = vpop.f32.mrb[0].mxu0
  %1218 = vmatprep.mubr.bf16.mxu0 %v707
  %1219 = vmatmul.mubr.bf16.gmra.mrb[0].mxu0 %v706
  %v1220 = vpop.f32.mrb[0].mxu0
  %v1221 = vadd.f32 0.0, %v1220
  %v1222 = vpop.f32.mrb[0].mxu0
  %v1223 = vpop.f32.mrb[0].mxu0
  %v1224 = vadd.f32 0.0, %v1223
  %v1225 = vpop.f32.mrb[0].mxu0
  %1226 = vmatprep.mubr.bf16.mxu0 %v710
  %1227 = vmatmul.mubr.bf16.gmra.mrb[0].mxu0 %v709
  %v1228 = vpop.f32.mrb[0].mxu0
  %v1229 = vadd.f32 0.0, %v1228
  %v1230 = vpop.f32.mrb[0].mxu0
  %v1231 = vpop.f32.mrb[0].mxu0
  %v1232 = vadd.f32 0.0, %v1231
  %v1233 = vpop.f32.mrb[0].mxu0
  %1234 = vmatprep.mubr.bf16.mxu0 %v713
  %1235 = vmatmul.mubr.bf16.gmra.mrb[0].mxu0 %v712
  %v1236 = vpop.f32.mrb[0].mxu0
  %v1237 = vadd.f32 0.0, %v1236
  %v1238 = vpop.f32.mrb[0].mxu0
  %v1239 = vpop.f32.mrb[0].mxu0
  %v1240 = vadd.f32 0.0, %v1239
  %v1241 = vpop.f32.mrb[0].mxu0
  %1242 = vmatprep.mubr.bf16.mxu0 %v716
  %1243 = vmatmul.mubr.bf16.gmra.mrb[0].mxu0 %v715
  %v1244 = vpop.f32.mrb[0].mxu0
  %v1245 = vadd.f32 0.0, %v1244
  %v1246 = vpop.f32.mrb[0].mxu0
  %v1247 = vpop.f32.mrb[0].mxu0
  %v1248 = vadd.f32 0.0, %v1247
  %v1249 = vpop.f32.mrb[0].mxu0
  %1250 = vmatprep.mubr.bf16.mxu0 %v719
  %1251 = vmatmul.mubr.bf16.gmra.mrb[0].mxu0 %v718
  %v1252 = vpop.f32.mrb[0].mxu0
  %v1253 = vadd.f32 0.0, %v1252
  %v1254 = vpop.f32.mrb[0].mxu0
  %v1255 = vpop.f32.mrb[0].mxu0
  %v1256 = vadd.f32 0.0, %v1255
  %v1257 = vpop.f32.mrb[0].mxu0
  %1258 = vmatprep.mubr.bf16.mxu0 %v722
  %1259 = vmatmul.mubr.bf16.gmra.mrb[0].mxu0 %v721
  %v1260 = vpop.f32.mrb[0].mxu0
  %v1261 = vadd.f32 0.0, %v1260
  %v1262 = vpop.f32.mrb[0].mxu0
  %v1263 = vpop.f32.mrb[0].mxu0
  %v1264 = vadd.f32 0.0, %v1263
  %v1265 = vpop.f32.mrb[0].mxu0
  %1266 = vmatprep.mubr.bf16.mxu0 %v725
  %1267 = vmatmul.mubr.bf16.gmra.mrb[0].mxu0 %v724
  %v1268 = vpop.f32.mrb[0].mxu0
  %v1269 = vadd.f32 0.0, %v1268
  %v1270 = vpop.f32.mrb[0].mxu0
  %v1271 = vpop.f32.mrb[0].mxu0
  %v1272 = vadd.f32 0.0, %v1271
  %v1273 = vpop.f32.mrb[0].mxu0
  %1274 = vmatprep.mubr.bf16.mxu0 %v728
  %1275 = vmatmul.mubr.bf16.gmra.mrb[0].mxu0 %v727
  %v1276 = vpop.f32.mrb[0].mxu0
  %v1277 = vadd.f32 0.0, %v1276
  %v1278 = vpop.f32.mrb[0].mxu0
  %v1279 = vpop.f32.mrb[0].mxu0
  %v1280 = vadd.f32 0.0, %v1279
  %v1281 = vpop.f32.mrb[0].mxu0
  %1282 = vmatprep.mubr.bf16.mxu0 %v731
  %1283 = vmatmul.mubr.bf16.gmra.mrb[0].mxu0 %v730
  %v1284 = vpop.f32.mrb[0].mxu0
  %v1285 = vadd.f32 0.0, %v1284
  %v1286 = vpop.f32.mrb[0].mxu0
  %v1287 = vpop.f32.mrb[0].mxu0
  %v1288 = vadd.f32 0.0, %v1287
  %v1289 = vpop.f32.mrb[0].mxu0
  %1290 = vdwg.mxu0
  %1291 = vmatprep.subr.bf16.mxu0 0
  %1292 = vmatpush1.bf16.msra.mxu0 %v885
  %1293 = vmatprep.subr.bf16.mxu0 0
  %1294 = vmatpush1.bf16.msra.mxu0 %v886
  %1295 = vmatprep.subr.bf16.mxu0 0
  %1296 = vmatpush1.bf16.msra.mxu0 0
  %1297 = vmatprep.subr.bf16.mxu0 0
  %1298 = vmatpush1.bf16.msra.mxu0 0
  %1299 = vmatprep.subr.bf16.mxu0 0
  %1300 = vmatpush1.bf16.msra.mxu0 0
  %1301 = vmatprep.subr.bf16.mxu0 0
  %1302 = vmatpush1.bf16.msra.mxu0 0
  %1303 = vmatprep.subr.bf16.mxu0 0
  %1304 = vmatpush1.bf16.msra.mxu0 0
  %1305 = vmatprep.subr.bf16.mxu0 0
  %1306 = vmatpush1.bf16.msra.mxu0 0
  %1307 = vmatprep.subr.bf16.mxu0 0
  %1308 = vmatpush1.bf16.msra.mxu0 0
  %1309 = vmatprep.subr.bf16.mxu0 0
  %1310 = vmatpush1.bf16.msra.mxu0 0
  %1311 = vmatprep.subr.bf16.mxu0 0
  %1312 = vmatpush1.bf16.msra.mxu0 0
  %1313 = vmatprep.subr.bf16.mxu0 0
  %1314 = vmatpush1.bf16.msra.mxu0 0
  %1315 = vmatprep.subr.bf16.mxu0 0
  %1316 = vmatpush1.bf16.msra.mxu0 0
  %1317 = vmatprep.subr.bf16.mxu0 0
  %1318 = vmatpush1.bf16.msra.mxu0 0
  %1319 = vmatprep.subr.bf16.mxu0 0
  %1320 = vmatpush1.bf16.msra.mxu0 0
  %1321 = vmatprep.subr.bf16.mxu0 0
  %1322 = vmatpush1.bf16.msra.mxu0 0
  %1323 = vmatprep.mubr.bf16.mxu0 0
  %1324 = vmatmul.mubr.bf16.gmra.mrb[0].mxu0 %v907
  %v1325 = vpop.f32.mrb[0].mxu0
  %v1326 = vadd.f32 %v1037, %v1325
  %v1327 = vpop.f32.mrb[0].mxu0
  %v1328 = vpop.f32.mrb[0].mxu0
  %v1329 = vadd.f32 %v1040, %v1328
  %v1330 = vpop.f32.mrb[0].mxu0
  %1331 = vmatprep.mubr.bf16.mxu0 0
  %1332 = vmatmul.mubr.bf16.gmra.mrb[0].mxu0 %v910
  %v1333 = vpop.f32.mrb[0].mxu0
  %v1334 = vadd.f32 %v1045, %v1333
  %v1335 = vpop.f32.mrb[0].mxu0
  %v1336 = vpop.f32.mrb[0].mxu0
  %v1337 = vadd.f32 %v1048, %v1336
  %v1338 = vpop.f32.mrb[0].mxu0
  %1339 = vmatprep.mubr.bf16.mxu0 0
  %1340 = vmatmul.mubr.bf16.gmra.mrb[0].mxu0 %v913
  %v1341 = vpop.f32.mrb[0].mxu0
  %v1342 = vadd.f32 %v1053, %v1341
  %v1343 = vpop.f32.mrb[0].mxu0
  %v1344 = vpop.f32.mrb[0].mxu0
  %v1345 = vadd.f32 %v1056, %v1344
  %v1346 = vpop.f32.mrb[0].mxu0
  %1347 = vmatprep.mubr.bf16.mxu0 0
  %1348 = vmatmul.mubr.bf16.gmra.mrb[0].mxu0 %v916
  %v1349 = vpop.f32.mrb[0].mxu0
  %v1350 = vadd.f32 %v1061, %v1349
  %v1351 = vpop.f32.mrb[0].mxu0
  %v1352 = vpop.f32.mrb[0].mxu0
  %v1353 = vadd.f32 %v1064, %v1352
  %v1354 = vpop.f32.mrb[0].mxu0
  %1355 = vmatprep.mubr.bf16.mxu0 0
  %1356 = vmatmul.mubr.bf16.gmra.mrb[0].mxu0 %v919
  %v1357 = vpop.f32.mrb[0].mxu0
  %v1358 = vadd.f32 %v1069, %v1357
  %v1359 = vpop.f32.mrb[0].mxu0
  %v1360 = vpop.f32.mrb[0].mxu0
  %v1361 = vadd.f32 %v1072, %v1360
  %v1362 = vpop.f32.mrb[0].mxu0
  %1363 = vmatprep.mubr.bf16.mxu0 0
  %1364 = vmatmul.mubr.bf16.gmra.mrb[0].mxu0 %v922
  %v1365 = vpop.f32.mrb[0].mxu0
  %v1366 = vadd.f32 %v1077, %v1365
  %v1367 = vpop.f32.mrb[0].mxu0
  %v1368 = vpop.f32.mrb[0].mxu0
  %v1369 = vadd.f32 %v1080, %v1368
  %v1370 = vpop.f32.mrb[0].mxu0
  %1371 = vmatprep.mubr.bf16.mxu0 0
  %1372 = vmatmul.mubr.bf16.gmra.mrb[0].mxu0 %v925
  %v1373 = vpop.f32.mrb[0].mxu0
  %v1374 = vadd.f32 %v1085, %v1373
  %v1375 = vpop.f32.mrb[0].mxu0
  %v1376 = vpop.f32.mrb[0].mxu0
  %v1377 = vadd.f32 %v1088, %v1376
  %v1378 = vpop.f32.mrb[0].mxu0
  %1379 = vmatprep.mubr.bf16.mxu0 0
  %1380 = vmatmul.mubr.bf16.gmra.mrb[0].mxu0 %v928
  %v1381 = vpop.f32.mrb[0].mxu0
  %v1382 = vadd.f32 %v1093, %v1381
  %v1383 = vpop.f32.mrb[0].mxu0
  %v1384 = vpop.f32.mrb[0].mxu0
  %v1385 = vadd.f32 %v1096, %v1384
  %v1386 = vpop.f32.mrb[0].mxu0
  %1387 = vmatprep.mubr.bf16.mxu0 0
  %1388 = vmatmul.mubr.bf16.gmra.mrb[0].mxu0 %v931
  %v1389 = vpop.f32.mrb[0].mxu0
  %v1390 = vadd.f32 %v1101, %v1389
  %v1391 = vpop.f32.mrb[0].mxu0
  %v1392 = vpop.f32.mrb[0].mxu0
  %v1393 = vadd.f32 %v1104, %v1392
  %v1394 = vpop.f32.mrb[0].mxu0
  %1395 = vmatprep.mubr.bf16.mxu0 0
  %1396 = vmatmul.mubr.bf16.gmra.mrb[0].mxu0 %v934
  %v1397 = vpop.f32.mrb[0].mxu0
  %v1398 = vadd.f32 %v1109, %v1397
  %v1399 = vpop.f32.mrb[0].mxu0
  %v1400 = vpop.f32.mrb[0].mxu0
  %v1401 = vadd.f32 %v1112, %v1400
  %v1402 = vpop.f32.mrb[0].mxu0
  %1403 = vmatprep.mubr.bf16.mxu0 0
  %1404 = vmatmul.mubr.bf16.gmra.mrb[0].mxu0 %v937
  %v1405 = vpop.f32.mrb[0].mxu0
  %v1406 = vadd.f32 %v1117, %v1405
  %v1407 = vpop.f32.mrb[0].mxu0
  %v1408 = vpop.f32.mrb[0].mxu0
  %v1409 = vadd.f32 %v1120, %v1408
  %v1410 = vpop.f32.mrb[0].mxu0
  %1411 = vmatprep.mubr.bf16.mxu0 0
  %1412 = vmatmul.mubr.bf16.gmra.mrb[0].mxu0 %v940
  %v1413 = vpop.f32.mrb[0].mxu0
  %v1414 = vadd.f32 %v1125, %v1413
  %v1415 = vpop.f32.mrb[0].mxu0
  %v1416 = vpop.f32.mrb[0].mxu0
  %v1417 = vadd.f32 %v1128, %v1416
  %v1418 = vpop.f32.mrb[0].mxu0
  %1419 = vmatprep.mubr.bf16.mxu0 0
  %1420 = vmatmul.mubr.bf16.gmra.mrb[0].mxu0 %v943
  %v1421 = vpop.f32.mrb[0].mxu0
  %v1422 = vadd.f32 %v1133, %v1421
  %v1423 = vpop.f32.mrb[0].mxu0
  %v1424 = vpop.f32.mrb[0].mxu0
  %v1425 = vadd.f32 %v1136, %v1424
  %v1426 = vpop.f32.mrb[0].mxu0
  %1427 = vmatprep.mubr.bf16.mxu0 0
  %1428 = vmatmul.mubr.bf16.gmra.mrb[0].mxu0 %v946
  %v1429 = vpop.f32.mrb[0].mxu0
  %v1430 = vadd.f32 %v1141, %v1429
  %v1431 = vpop.f32.mrb[0].mxu0
  %v1432 = vpop.f32.mrb[0].mxu0
  %v1433 = vadd.f32 %v1144, %v1432
  %v1434 = vpop.f32.mrb[0].mxu0
  %1435 = vmatprep.mubr.bf16.mxu0 0
  %1436 = vmatmul.mubr.bf16.gmra.mrb[0].mxu0 %v949
  %v1437 = vpop.f32.mrb[0].mxu0
  %v1438 = vadd.f32 %v1149, %v1437
  %v1439 = vpop.f32.mrb[0].mxu0
  %v1440 = vpop.f32.mrb[0].mxu0
  %v1441 = vadd.f32 %v1152, %v1440
  %v1442 = vpop.f32.mrb[0].mxu0
  %1443 = vmatprep.mubr.bf16.mxu0 0
  %1444 = vmatmul.mubr.bf16.gmra.mrb[0].mxu0 %v952
  %v1445 = vpop.f32.mrb[0].mxu0
  %v1446 = vadd.f32 %v1157, %v1445
  %v1447 = vpop.f32.mrb[0].mxu0
  %v1448 = vpop.f32.mrb[0].mxu0
  %v1449 = vadd.f32 %v1160, %v1448
  %v1450 = vpop.f32.mrb[0].mxu0
  %1451 = vmatprep.mubr.bf16.mxu0 0
  %1452 = vmatmul.mubr.bf16.gmra.mrb[0].mxu0 %v955
  %v1453 = vpop.f32.mrb[0].mxu0
  %v1454 = vadd.f32 %v1165, %v1453
  %v1455 = vpop.f32.mrb[0].mxu0
  %v1456 = vpop.f32.mrb[0].mxu0
  %v1457 = vadd.f32 %v1168, %v1456
  %v1458 = vpop.f32.mrb[0].mxu0
  %1459 = vmatprep.mubr.bf16.mxu0 0
  %1460 = vmatmul.mubr.bf16.gmra.mrb[0].mxu0 %v958
  %v1461 = vpop.f32.mrb[0].mxu0
  %v1462 = vadd.f32 %v1173, %v1461
  %v1463 = vpop.f32.mrb[0].mxu0
  %v1464 = vpop.f32.mrb[0].mxu0
  %v1465 = vadd.f32 %v1176, %v1464
  %v1466 = vpop.f32.mrb[0].mxu0
  %1467 = vmatprep.mubr.bf16.mxu0 0
  %1468 = vmatmul.mubr.bf16.gmra.mrb[0].mxu0 %v961
  %v1469 = vpop.f32.mrb[0].mxu0
  %v1470 = vadd.f32 %v1181, %v1469
  %v1471 = vpop.f32.mrb[0].mxu0
  %v1472 = vpop.f32.mrb[0].mxu0
  %v1473 = vadd.f32 %v1184, %v1472
  %v1474 = vpop.f32.mrb[0].mxu0
  %1475 = vmatprep.mubr.bf16.mxu0 0
  %1476 = vmatmul.mubr.bf16.gmra.mrb[0].mxu0 %v964
  %v1477 = vpop.f32.mrb[0].mxu0
  %v1478 = vadd.f32 %v1189, %v1477
  %v1479 = vpop.f32.mrb[0].mxu0
  %v1480 = vpop.f32.mrb[0].mxu0
  %v1481 = vadd.f32 %v1192, %v1480
  %v1482 = vpop.f32.mrb[0].mxu0
  %1483 = vmatprep.mubr.bf16.mxu0 0
  %1484 = vmatmul.mubr.bf16.gmra.mrb[0].mxu0 %v967
  %v1485 = vpop.f32.mrb[0].mxu0
  %v1486 = vadd.f32 %v1197, %v1485
  %v1487 = vpop.f32.mrb[0].mxu0
  %v1488 = vpop.f32.mrb[0].mxu0
  %v1489 = vadd.f32 %v1200, %v1488
  %v1490 = vpop.f32.mrb[0].mxu0
  %1491 = vmatprep.mubr.bf16.mxu0 0
  %1492 = vmatmul.mubr.bf16.gmra.mrb[0].mxu0 %v970
  %v1493 = vpop.f32.mrb[0].mxu0
  %v1494 = vadd.f32 %v1205, %v1493
  %v1495 = vpop.f32.mrb[0].mxu0
  %v1496 = vpop.f32.mrb[0].mxu0
  %v1497 = vadd.f32 %v1208, %v1496
  %v1498 = vpop.f32.mrb[0].mxu0
  %1499 = vmatprep.mubr.bf16.mxu0 0
  %1500 = vmatmul.mubr.bf16.gmra.mrb[0].mxu0 %v973
  %v1501 = vpop.f32.mrb[0].mxu0
  %v1502 = vadd.f32 %v1213, %v1501
  %v1503 = vpop.f32.mrb[0].mxu0
  %v1504 = vpop.f32.mrb[0].mxu0
  %v1505 = vadd.f32 %v1216, %v1504
  %v1506 = vpop.f32.mrb[0].mxu0
  %1507 = vmatprep.mubr.bf16.mxu0 0
  %1508 = vmatmul.mubr.bf16.gmra.mrb[0].mxu0 %v976
  %v1509 = vpop.f32.mrb[0].mxu0
  %v1510 = vadd.f32 %v1221, %v1509
  %v1511 = vpop.f32.mrb[0].mxu0
  %v1512 = vpop.f32.mrb[0].mxu0
  %v1513 = vadd.f32 %v1224, %v1512
  %v1514 = vpop.f32.mrb[0].mxu0
  %1515 = vmatprep.mubr.bf16.mxu0 0
  %1516 = vmatmul.mubr.bf16.gmra.mrb[0].mxu0 %v979
  %v1517 = vpop.f32.mrb[0].mxu0
  %v1518 = vadd.f32 %v1229, %v1517
  %v1519 = vpop.f32.mrb[0].mxu0
  %v1520 = vpop.f32.mrb[0].mxu0
  %v1521 = vadd.f32 %v1232, %v1520
  %v1522 = vpop.f32.mrb[0].mxu0
  %1523 = vmatprep.mubr.bf16.mxu0 0
  %1524 = vmatmul.mubr.bf16.gmra.mrb[0].mxu0 %v982
  %v1525 = vpop.f32.mrb[0].mxu0
  %v1526 = vadd.f32 %v1237, %v1525
  %v1527 = vpop.f32.mrb[0].mxu0
  %v1528 = vpop.f32.mrb[0].mxu0
  %v1529 = vadd.f32 %v1240, %v1528
  %v1530 = vpop.f32.mrb[0].mxu0
  %1531 = vmatprep.mubr.bf16.mxu0 0
  %1532 = vmatmul.mubr.bf16.gmra.mrb[0].mxu0 %v985
  %v1533 = vpop.f32.mrb[0].mxu0
  %v1534 = vadd.f32 %v1245, %v1533
  %v1535 = vpop.f32.mrb[0].mxu0
  %v1536 = vpop.f32.mrb[0].mxu0
  %v1537 = vadd.f32 %v1248, %v1536
  %v1538 = vpop.f32.mrb[0].mxu0
  %1539 = vmatprep.mubr.bf16.mxu0 0
  %1540 = vmatmul.mubr.bf16.gmra.mrb[0].mxu0 %v988
  %v1541 = vpop.f32.mrb[0].mxu0
  %v1542 = vadd.f32 %v1253, %v1541
  %v1543 = vpop.f32.mrb[0].mxu0
  %v1544 = vpop.f32.mrb[0].mxu0
  %v1545 = vadd.f32 %v1256, %v1544
  %v1546 = vpop.f32.mrb[0].mxu0
  %1547 = vmatprep.mubr.bf16.mxu0 0
  %1548 = vmatmul.mubr.bf16.gmra.mrb[0].mxu0 %v991
  %v1549 = vpop.f32.mrb[0].mxu0
  %v1550 = vadd.f32 %v1261, %v1549
  %v1551 = vpop.f32.mrb[0].mxu0
  %v1552 = vpop.f32.mrb[0].mxu0
  %v1553 = vadd.f32 %v1264, %v1552
  %v1554 = vpop.f32.mrb[0].mxu0
  %1555 = vmatprep.mubr.bf16.mxu0 0
  %1556 = vmatmul.mubr.bf16.gmra.mrb[0].mxu0 %v994
  %v1557 = vpop.f32.mrb[0].mxu0
  %v1558 = vadd.f32 %v1269, %v1557
  %v1559 = vpop.f32.mrb[0].mxu0
  %v1560 = vpop.f32.mrb[0].mxu0
  %v1561 = vadd.f32 %v1272, %v1560
  %v1562 = vpop.f32.mrb[0].mxu0
  %1563 = vmatprep.mubr.bf16.mxu0 0
  %1564 = vmatmul.mubr.bf16.gmra.mrb[0].mxu0 %v997
  %v1565 = vpop.f32.mrb[0].mxu0
  %v1566 = vadd.f32 %v1277, %v1565
  %v1567 = vpop.f32.mrb[0].mxu0
  %v1568 = vpop.f32.mrb[0].mxu0
  %v1569 = vadd.f32 %v1280, %v1568
  %v1570 = vpop.f32.mrb[0].mxu0
  %1571 = vmatprep.mubr.bf16.mxu0 0
  %1572 = vmatmul.mubr.bf16.gmra.mrb[0].mxu0 %v1000
  %v1573 = vpop.f32.mrb[0].mxu0
  %v1574 = vadd.f32 %v1285, %v1573
  %v1575 = vpop.f32.mrb[0].mxu0
  %v1576 = vpop.f32.mrb[0].mxu0
  %v1577 = vadd.f32 %v1288, %v1576
  %v1578 = vpop.f32.mrb[0].mxu0
  %1579 = vdwg.mxu0
  %v1580 = vadd.f32 %v89, %v1326
  %v1581 = vadd.f32 %v90, %v1329
  %v1582 = vadd.f32 %v91, %v1334
  %v1583 = vadd.f32 %v92, %v1337
  %v1584 = vadd.f32 %v93, %v1342
  %v1585 = vadd.f32 %v94, %v1345
  %v1586 = vadd.f32 %v95, %v1350
  %v1587 = vadd.f32 %v96, %v1353
  %v1588 = vadd.f32 %v97, %v1358
  %v1589 = vadd.f32 %v98, %v1361
  %v1590 = vadd.f32 %v99, %v1366
  %v1591 = vadd.f32 %v100, %v1369
  %v1592 = vadd.f32 %v101, %v1374
  %v1593 = vadd.f32 %v102, %v1377
  %v1594 = vadd.f32 %v103, %v1382
  %v1595 = vadd.f32 %v104, %v1385
  %v1596 = vadd.f32 %v105, %v1390
  %v1597 = vadd.f32 %v106, %v1393
  %v1598 = vadd.f32 %v107, %v1398
  %v1599 = vadd.f32 %v108, %v1401
  %v1600 = vadd.f32 %v109, %v1406
  %v1601 = vadd.f32 %v110, %v1409
  %v1602 = vadd.f32 %v111, %v1414
  %v1603 = vadd.f32 %v112, %v1417
  %v1604 = vadd.f32 %v113, %v1422
  %v1605 = vadd.f32 %v114, %v1425
  %v1606 = vadd.f32 %v115, %v1430
  %v1607 = vadd.f32 %v116, %v1433
  %v1608 = vadd.f32 %v117, %v1438
  %v1609 = vadd.f32 %v118, %v1441
  %v1610 = vadd.f32 %v119, %v1446
  %v1611 = vadd.f32 %v120, %v1449
  %v1612 = vadd.f32 %v121, %v1454
  %v1613 = vadd.f32 %v122, %v1457
  %v1614 = vadd.f32 %v123, %v1462
  %v1615 = vadd.f32 %v124, %v1465
  %v1616 = vadd.f32 %v125, %v1470
  %v1617 = vadd.f32 %v126, %v1473
  %v1618 = vadd.f32 %v127, %v1478
  %v1619 = vadd.f32 %v128, %v1481
  %v1620 = vadd.f32 %v129, %v1486
  %v1621 = vadd.f32 %v130, %v1489
  %v1622 = vadd.f32 %v131, %v1494
  %v1623 = vadd.f32 %v132, %v1497
  %v1624 = vadd.f32 %v133, %v1502
  %v1625 = vadd.f32 %v134, %v1505
  %v1626 = vadd.f32 %v135, %v1510
  %v1627 = vadd.f32 %v136, %v1513
  %v1628 = vadd.f32 %v137, %v1518
  %v1629 = vadd.f32 %v138, %v1521
  %v1630 = vadd.f32 %v139, %v1526
  %v1631 = vadd.f32 %v140, %v1529
  %v1632 = vadd.f32 %v141, %v1534
  %v1633 = vadd.f32 %v142, %v1537
  %v1634 = vadd.f32 %v143, %v1542
  %v1635 = vadd.f32 %v144, %v1545
  %v1636 = vadd.f32 %v145, %v1550
  %v1637 = vadd.f32 %v146, %v1553
  %v1638 = vadd.f32 %v147, %v1558
  %v1639 = vadd.f32 %v148, %v1561
  %v1640 = vadd.f32 %v149, %v1566
  %v1641 = vadd.f32 %v150, %v1569
  %v1642 = vadd.f32 %v151, %v1574
  %v1643 = vadd.f32 %v152, %v1577
  %1644 = vst [vmem:[#allocation2] sm:$0xff] %v1580
  %1645 = vst [vmem:[#allocation2 + $0x8] sm:$0xff] %v1581
  %1646 = vst [vmem:[#allocation2 + $0x10] sm:$0xff] %v1582
  %1647 = vst [vmem:[#allocation2 + $0x18] sm:$0xff] %v1583
  %1648 = vst [vmem:[#allocation2 + $0x20] sm:$0xff] %v1584
  %1649 = vst [vmem:[#allocation2 + $0x28] sm:$0xff] %v1585
  %1650 = vst [vmem:[#allocation2 + $0x30] sm:$0xff] %v1586
  %1651 = vst [vmem:[#allocation2 + $0x38] sm:$0xff] %v1587
  %1652 = vst [vmem:[#allocation2 + $0x40] sm:$0xff] %v1588
  %1653 = vst [vmem:[#allocation2 + $0x48] sm:$0xff] %v1589
  %1654 = vst [vmem:[#allocation2 + $0x50] sm:$0xff] %v1590
  %1655 = vst [vmem:[#allocation2 + $0x58] sm:$0xff] %v1591
  %1656 = vst [vmem:[#allocation2 + $0x60] sm:$0xff] %v1592
  %1657 = vst [vmem:[#allocation2 + $0x68] sm:$0xff] %v1593
  %1658 = vst [vmem:[#allocation2 + $0x70] sm:$0xff] %v1594
  %1659 = vst [vmem:[#allocation2 + $0x78] sm:$0xff] %v1595
  %1660 = vst [vmem:[#allocation2 + $0x80] sm:$0xff] %v1596
  %1661 = vst [vmem:[#allocation2 + $0x88] sm:$0xff] %v1597
  %1662 = vst [vmem:[#allocation2 + $0x90] sm:$0xff] %v1598
  %1663 = vst [vmem:[#allocation2 + $0x98] sm:$0xff] %v1599
  %1664 = vst [vmem:[#allocation2 + $0xa0] sm:$0xff] %v1600
  %1665 = vst [vmem:[#allocation2 + $0xa8] sm:$0xff] %v1601
  %1666 = vst [vmem:[#allocation2 + $0xb0] sm:$0xff] %v1602
  %1667 = vst [vmem:[#allocation2 + $0xb8] sm:$0xff] %v1603
  %1668 = vst [vmem:[#allocation2 + $0xc0] sm:$0xff] %v1604
  %1669 = vst [vmem:[#allocation2 + $0xc8] sm:$0xff] %v1605
  %1670 = vst [vmem:[#allocation2 + $0xd0] sm:$0xff] %v1606
  %1671 = vst [vmem:[#allocation2 + $0xd8] sm:$0xff] %v1607
  %1672 = vst [vmem:[#allocation2 + $0xe0] sm:$0xff] %v1608
  %1673 = vst [vmem:[#allocation2 + $0xe8] sm:$0xff] %v1609
  %1674 = vst [vmem:[#allocation2 + $0xf0] sm:$0xff] %v1610
  %1675 = vst [vmem:[#allocation2 + $0xf8] sm:$0xff] %v1611
  %1676 = vst [vmem:[#allocation2 + $0x100] sm:$0xff] %v1612
  %1677 = vst [vmem:[#allocation2 + $0x108] sm:$0xff] %v1613
  %1678 = vst [vmem:[#allocation2 + $0x110] sm:$0xff] %v1614
  %1679 = vst [vmem:[#allocation2 + $0x118] sm:$0xff] %v1615
  %1680 = vst [vmem:[#allocation2 + $0x120] sm:$0xff] %v1616
  %1681 = vst [vmem:[#allocation2 + $0x128] sm:$0xff] %v1617
  %1682 = vst [vmem:[#allocation2 + $0x130] sm:$0xff] %v1618
  %1683 = vst [vmem:[#allocation2 + $0x138] sm:$0xff] %v1619
  %1684 = vst [vmem:[#allocation2 + $0x140] sm:$0xff] %v1620
  %1685 = vst [vmem:[#allocation2 + $0x148] sm:$0xff] %v1621
  %1686 = vst [vmem:[#allocation2 + $0x150] sm:$0xff] %v1622
  %1687 = vst [vmem:[#allocation2 + $0x158] sm:$0xff] %v1623
  %1688 = vst [vmem:[#allocation2 + $0x160] sm:$0xff] %v1624
  %1689 = vst [vmem:[#allocation2 + $0x168] sm:$0xff] %v1625
  %1690 = vst [vmem:[#allocation2 + $0x170] sm:$0xff] %v1626
  %1691 = vst [vmem:[#allocation2 + $0x178] sm:$0xff] %v1627
  %1692 = vst [vmem:[#allocation2 + $0x180] sm:$0xff] %v1628
  %1693 = vst [vmem:[#allocation2 + $0x188] sm:$0xff] %v1629
  %1694 = vst [vmem:[#allocation2 + $0x190] sm:$0xff] %v1630
  %1695 = vst [vmem:[#allocation2 + $0x198] sm:$0xff] %v1631
  %1696 = vst [vmem:[#allocation2 + $0x1a0] sm:$0xff] %v1632
  %1697 = vst [vmem:[#allocation2 + $0x1a8] sm:$0xff] %v1633
  %1698 = vst [vmem:[#allocation2 + $0x1b0] sm:$0xff] %v1634
  %1699 = vst [vmem:[#allocation2 + $0x1b8] sm:$0xff] %v1635
  %1700 = vst [vmem:[#allocation2 + $0x1c0] sm:$0xff] %v1636
  %1701 = vst [vmem:[#allocation2 + $0x1c8] sm:$0xff] %v1637
  %1702 = vst [vmem:[#allocation2 + $0x1d0] sm:$0xff] %v1638
  %1703 = vst [vmem:[#allocation2 + $0x1d8] sm:$0xff] %v1639
  %1704 = vst [vmem:[#allocation2 + $0x1e0] sm:$0xff] %v1640
  %1705 = vst [vmem:[#allocation2 + $0x1e8] sm:$0xff] %v1641
  %1706 = vst [vmem:[#allocation2 + $0x1f0] sm:$0xff] %v1642
  %1707 = vst [vmem:[#allocation2 + $0x1f8] sm:$0xff] %v1643
  // Predicated region
  $region26: #{birdclef_forward.4} parent=0 // pred_check
    %p1708 = pneg %p21
  $region27: #{birdclef_forward.4} parent=0 // pred_check_branch
    %1710 = sbr.rel (%p1708) target = $region29
  $region28: #{birdclef_forward.4} parent=0 // pred_region
    %v1711 = vld [vmem:[#allocation2] sm:$0xff]
    %v1712 = vld [vmem:[#allocation2 + $0x8] sm:$0xff]
    %v1713 = vld [vmem:[#allocation2 + $0x10] sm:$0xff]
    %v1714 = vld [vmem:[#allocation2 + $0x18] sm:$0xff]
    %v1715 = vld [vmem:[#allocation2 + $0x20] sm:$0xff]
    %v1716 = vld [vmem:[#allocation2 + $0x28] sm:$0xff]
    %v1717 = vld [vmem:[#allocation2 + $0x30] sm:$0xff]
    %v1718 = vld [vmem:[#allocation2 + $0x38] sm:$0xff]
    %v1719 = vld [vmem:[#allocation2 + $0x40] sm:$0xff]
    %v1720 = vld [vmem:[#allocation2 + $0x48] sm:$0xff]
    %v1721 = vld [vmem:[#allocation2 + $0x50] sm:$0xff]
    %v1722 = vld [vmem:[#allocation2 + $0x58] sm:$0xff]
    %v1723 = vld [vmem:[#allocation2 + $0x60] sm:$0xff]
    %v1724 = vld [vmem:[#allocation2 + $0x68] sm:$0xff]
    %v1725 = vld [vmem:[#allocation2 + $0x70] sm:$0xff]
    %v1726 = vld [vmem:[#allocation2 + $0x78] sm:$0xff]
    %v1727 = vld [vmem:[#allocation2 + $0x80] sm:$0xff]
    %v1728 = vld [vmem:[#allocation2 + $0x88] sm:$0xff]
    %v1729 = vld [vmem:[#allocation2 + $0x90] sm:$0xff]
    %v1730 = vld [vmem:[#allocation2 + $0x98] sm:$0xff]
    %v1731 = vld [vmem:[#allocation2 + $0xa0] sm:$0xff]
    %v1732 = vld [vmem:[#allocation2 + $0xa8] sm:$0xff]
    %v1733 = vld [vmem:[#allocation2 + $0xb0] sm:$0xff]
    %v1734 = vld [vmem:[#allocation2 + $0xb8] sm:$0xff]
    %v1735 = vld [vmem:[#allocation2 + $0xc0] sm:$0xff]
    %v1736 = vld [vmem:[#allocation2 + $0xc8] sm:$0xff]
    %v1737 = vld [vmem:[#allocation2 + $0xd0] sm:$0xff]
    %v1738 = vld [vmem:[#allocation2 + $0xd8] sm:$0xff]
    %v1739 = vld [vmem:[#allocation2 + $0xe0] sm:$0xff]
    %v1740 = vld [vmem:[#allocation2 + $0xe8] sm:$0xff]
    %v1741 = vld [vmem:[#allocation2 + $0xf0] sm:$0xff]
    %v1742 = vld [vmem:[#allocation2 + $0xf8] sm:$0xff]
    %v1743 = vld [vmem:[#allocation2 + $0x100] sm:$0xff]
    %v1744 = vld [vmem:[#allocation2 + $0x108] sm:$0xff]
    %v1745 = vld [vmem:[#allocation2 + $0x110] sm:$0xff]
    %v1746 = vld [vmem:[#allocation2 + $0x118] sm:$0xff]
    %v1747 = vld [vmem:[#allocation2 + $0x120] sm:$0xff]
    %v1748 = vld [vmem:[#allocation2 + $0x128] sm:$0xff]
    %v1749 = vld [vmem:[#allocation2 + $0x130] sm:$0xff]
    %v1750 = vld [vmem:[#allocation2 + $0x138] sm:$0xff]
    %v1751 = vld [vmem:[#allocation2 + $0x140] sm:$0xff]
    %v1752 = vld [vmem:[#allocation2 + $0x148] sm:$0xff]
    %v1753 = vld [vmem:[#allocation2 + $0x150] sm:$0xff]
    %v1754 = vld [vmem:[#allocation2 + $0x158] sm:$0xff]
    %v1755 = vld [vmem:[#allocation2 + $0x160] sm:$0xff]
    %v1756 = vld [vmem:[#allocation2 + $0x168] sm:$0xff]
    %v1757 = vld [vmem:[#allocation2 + $0x170] sm:$0xff]
    %v1758 = vld [vmem:[#allocation2 + $0x178] sm:$0xff]
    %v1759 = vld [vmem:[#allocation2 + $0x180] sm:$0xff]
    %v1760 = vld [vmem:[#allocation2 + $0x188] sm:$0xff]
    %v1761 = vld [vmem:[#allocation2 + $0x190] sm:$0xff]
    %v1762 = vld [vmem:[#allocation2 + $0x198] sm:$0xff]
    %v1763 = vld [vmem:[#allocation2 + $0x1a0] sm:$0xff]
    %v1764 = vld [vmem:[#allocation2 + $0x1a8] sm:$0xff]
    %v1765 = vld [vmem:[#allocation2 + $0x1b0] sm:$0xff]
    %v1766 = vld [vmem:[#allocation2 + $0x1b8] sm:$0xff]
    %v1767 = vld [vmem:[#allocation2 + $0x1c0] sm:$0xff]
    %v1768 = vld [vmem:[#allocation2 + $0x1c8] sm:$0xff]
    %v1769 = vld [vmem:[#allocation2 + $0x1d0] sm:$0xff]
    %v1770 = vld [vmem:[#allocation2 + $0x1d8] sm:$0xff]
    %v1771 = vld [vmem:[#allocation2 + $0x1e0] sm:$0xff]
    %v1772 = vld [vmem:[#allocation2 + $0x1e8] sm:$0xff]
    %v1773 = vld [vmem:[#allocation2 + $0x1f0] sm:$0xff]
    %v1774 = vld [vmem:[#allocation2 + $0x1f8] sm:$0xff]
    %v1775 = vld [vmem:[%s2] sm:$0x1]
    %v1777 = vlaneseq
    %v1778 = vshrl.u32 %v1777, 7
    %v1779 = vsub.s32 0, %v1778
    %v1780 = vrot.slane %v1775, %v1779
    %v1782 = vmul.f32 %v1711, %v1780
    %v1783 = vmul.f32 %v1712, %v1780
    %v1784 = vmul.f32 %v1713, %v1780
    %v1785 = vmul.f32 %v1714, %v1780
    %v1786 = vmul.f32 %v1715, %v1780
    %v1787 = vmul.f32 %v1716, %v1780
    %v1788 = vmul.f32 %v1717, %v1780
    %v1789 = vmul.f32 %v1718, %v1780
    %v1790 = vmul.f32 %v1719, %v1780
    %v1791 = vmul.f32 %v1720, %v1780
    %v1792 = vmul.f32 %v1721, %v1780
    %v1793 = vmul.f32 %v1722, %v1780
    %v1794 = vmul.f32 %v1723, %v1780
    %v1795 = vmul.f32 %v1724, %v1780
    %v1796 = vmul.f32 %v1725, %v1780
    %v1797 = vmul.f32 %v1726, %v1780
    %v1798 = vmul.f32 %v1727, %v1780
    %v1799 = vmul.f32 %v1728, %v1780
    %v1800 = vmul.f32 %v1729, %v1780
    %v1801 = vmul.f32 %v1730, %v1780
    %v1802 = vmul.f32 %v1731, %v1780
    %v1803 = vmul.f32 %v1732, %v1780
    %v1804 = vmul.f32 %v1733, %v1780
    %v1805 = vmul.f32 %v1734, %v1780
    %v1806 = vmul.f32 %v1735, %v1780
    %v1807 = vmul.f32 %v1736, %v1780
    %v1808 = vmul.f32 %v1737, %v1780
    %v1809 = vmul.f32 %v1738, %v1780
    %v1810 = vmul.f32 %v1739, %v1780
    %v1811 = vmul.f32 %v1740, %v1780
    %v1812 = vmul.f32 %v1741, %v1780
    %v1813 = vmul.f32 %v1742, %v1780
    %v1814 = vmul.f32 %v1743, %v1780
    %v1815 = vmul.f32 %v1744, %v1780
    %v1816 = vmul.f32 %v1745, %v1780
    %v1817 = vmul.f32 %v1746, %v1780
    %v1818 = vmul.f32 %v1747, %v1780
    %v1819 = vmul.f32 %v1748, %v1780
    %v1820 = vmul.f32 %v1749, %v1780
    %v1821 = vmul.f32 %v1750, %v1780
    %v1822 = vmul.f32 %v1751, %v1780
    %v1823 = vmul.f32 %v1752, %v1780
    %v1824 = vmul.f32 %v1753, %v1780
    %v1825 = vmul.f32 %v1754, %v1780
    %v1826 = vmul.f32 %v1755, %v1780
    %v1827 = vmul.f32 %v1756, %v1780
    %v1828 = vmul.f32 %v1757, %v1780
    %v1829 = vmul.f32 %v1758, %v1780
    %v1830 = vmul.f32 %v1759, %v1780
    %v1831 = vmul.f32 %v1760, %v1780
    %v1832 = vmul.f32 %v1761, %v1780
    %v1833 = vmul.f32 %v1762, %v1780
    %v1834 = vmul.f32 %v1763, %v1780
    %v1835 = vmul.f32 %v1764, %v1780
    %v1836 = vmul.f32 %v1765, %v1780
    %v1837 = vmul.f32 %v1766, %v1780
    %v1838 = vmul.f32 %v1767, %v1780
    %v1839 = vmul.f32 %v1768, %v1780
    %v1840 = vmul.f32 %v1769, %v1780
    %v1841 = vmul.f32 %v1770, %v1780
    %v1842 = vmul.f32 %v1771, %v1780
    %v1843 = vmul.f32 %v1772, %v1780
    %v1844 = vmul.f32 %v1773, %v1780
    %v1845 = vmul.f32 %v1774, %v1780
    %v1846 = vld [vmem:[%s3] sm:$0x1]
    %v1848 = vlaneseq
    %v1849 = vshrl.u32 %v1848, 7
    %v1850 = vsub.s32 0, %v1849
    %v1851 = vrot.slane %v1846, %v1850
    %v1853 = vadd.f32 %v1782, %v1851
    %v1854 = vadd.f32 %v1783, %v1851
    %v1855 = vadd.f32 %v1784, %v1851
    %v1856 = vadd.f32 %v1785, %v1851
    %v1857 = vadd.f32 %v1786, %v1851
    %v1858 = vadd.f32 %v1787, %v1851
    %v1859 = vadd.f32 %v1788, %v1851
    %v1860 = vadd.f32 %v1789, %v1851
    %v1861 = vadd.f32 %v1790, %v1851
    %v1862 = vadd.f32 %v1791, %v1851
    %v1863 = vadd.f32 %v1792, %v1851
    %v1864 = vadd.f32 %v1793, %v1851
    %v1865 = vadd.f32 %v1794, %v1851
    %v1866 = vadd.f32 %v1795, %v1851
    %v1867 = vadd.f32 %v1796, %v1851
    %v1868 = vadd.f32 %v1797, %v1851
    %v1869 = vadd.f32 %v1798, %v1851
    %v1870 = vadd.f32 %v1799, %v1851
    %v1871 = vadd.f32 %v1800, %v1851
    %v1872 = vadd.f32 %v1801, %v1851
    %v1873 = vadd.f32 %v1802, %v1851
    %v1874 = vadd.f32 %v1803, %v1851
    %v1875 = vadd.f32 %v1804, %v1851
    %v1876 = vadd.f32 %v1805, %v1851
    %v1877 = vadd.f32 %v1806, %v1851
    %v1878 = vadd.f32 %v1807, %v1851
    %v1879 = vadd.f32 %v1808, %v1851
    %v1880 = vadd.f32 %v1809, %v1851
    %v1881 = vadd.f32 %v1810, %v1851
    %v1882 = vadd.f32 %v1811, %v1851
    %v1883 = vadd.f32 %v1812, %v1851
    %v1884 = vadd.f32 %v1813, %v1851
    %v1885 = vadd.f32 %v1814, %v1851
    %v1886 = vadd.f32 %v1815, %v1851
    %v1887 = vadd.f32 %v1816, %v1851
    %v1888 = vadd.f32 %v1817, %v1851
    %v1889 = vadd.f32 %v1818, %v1851
    %v1890 = vadd.f32 %v1819, %v1851
    %v1891 = vadd.f32 %v1820, %v1851
    %v1892 = vadd.f32 %v1821, %v1851
    %v1893 = vadd.f32 %v1822, %v1851
    %v1894 = vadd.f32 %v1823, %v1851
    %v1895 = vadd.f32 %v1824, %v1851
    %v1896 = vadd.f32 %v1825, %v1851
    %v1897 = vadd.f32 %v1826, %v1851
    %v1898 = vadd.f32 %v1827, %v1851
    %v1899 = vadd.f32 %v1828, %v1851
    %v1900 = vadd.f32 %v1829, %v1851
    %v1901 = vadd.f32 %v1830, %v1851
    %v1902 = vadd.f32 %v1831, %v1851
    %v1903 = vadd.f32 %v1832, %v1851
    %v1904 = vadd.f32 %v1833, %v1851
    %v1905 = vadd.f32 %v1834, %v1851
    %v1906 = vadd.f32 %v1835, %v1851
    %v1907 = vadd.f32 %v1836, %v1851
    %v1908 = vadd.f32 %v1837, %v1851
    %v1909 = vadd.f32 %v1838, %v1851
    %v1910 = vadd.f32 %v1839, %v1851
    %v1911 = vadd.f32 %v1840, %v1851
    %v1912 = vadd.f32 %v1841, %v1851
    %v1913 = vadd.f32 %v1842, %v1851
    %v1914 = vadd.f32 %v1843, %v1851
    %v1915 = vadd.f32 %v1844, %v1851
    %v1916 = vadd.f32 %v1845, %v1851
    %v1917 = vxor.u32 %v1853, 2147483648
    %v1918 = vxor.u32 %v1854, 2147483648
    %v1919 = vxor.u32 %v1855, 2147483648
    %v1920 = vxor.u32 %v1856, 2147483648
    %v1921 = vxor.u32 %v1857, 2147483648
    %v1922 = vxor.u32 %v1858, 2147483648
    %v1923 = vxor.u32 %v1859, 2147483648
    %v1924 = vxor.u32 %v1860, 2147483648
    %v1925 = vxor.u32 %v1861, 2147483648
    %v1926 = vxor.u32 %v1862, 2147483648
    %v1927 = vxor.u32 %v1863, 2147483648
    %v1928 = vxor.u32 %v1864, 2147483648
    %v1929 = vxor.u32 %v1865, 2147483648
    %v1930 = vxor.u32 %v1866, 2147483648
    %v1931 = vxor.u32 %v1867, 2147483648
    %v1932 = vxor.u32 %v1868, 2147483648
    %v1933 = vxor.u32 %v1869, 2147483648
    %v1934 = vxor.u32 %v1870, 2147483648
    %v1935 = vxor.u32 %v1871, 2147483648
    %v1936 = vxor.u32 %v1872, 2147483648
    %v1937 = vxor.u32 %v1873, 2147483648
    %v1938 = vxor.u32 %v1874, 2147483648
    %v1939 = vxor.u32 %v1875, 2147483648
    %v1940 = vxor.u32 %v1876, 2147483648
    %v1941 = vxor.u32 %v1877, 2147483648
    %v1942 = vxor.u32 %v1878, 2147483648
    %v1943 = vxor.u32 %v1879, 2147483648
    %v1944 = vxor.u32 %v1880, 2147483648
    %v1945 = vxor.u32 %v1881, 2147483648
    %v1946 = vxor.u32 %v1882, 2147483648
    %v1947 = vxor.u32 %v1883, 2147483648
    %v1948 = vxor.u32 %v1884, 2147483648
    %v1949 = vxor.u32 %v1885, 2147483648
    %v1950 = vxor.u32 %v1886, 2147483648
    %v1951 = vxor.u32 %v1887, 2147483648
    %v1952 = vxor.u32 %v1888, 2147483648
    %v1953 = vxor.u32 %v1889, 2147483648
    %v1954 = vxor.u32 %v1890, 2147483648
    %v1955 = vxor.u32 %v1891, 2147483648
    %v1956 = vxor.u32 %v1892, 2147483648
    %v1957 = vxor.u32 %v1893, 2147483648
    %v1958 = vxor.u32 %v1894, 2147483648
    %v1959 = vxor.u32 %v1895, 2147483648
    %v1960 = vxor.u32 %v1896, 2147483648
    %v1961 = vxor.u32 %v1897, 2147483648
    %v1962 = vxor.u32 %v1898, 2147483648
    %v1963 = vxor.u32 %v1899, 2147483648
    %v1964 = vxor.u32 %v1900, 2147483648
    %v1965 = vxor.u32 %v1901, 2147483648
    %v1966 = vxor.u32 %v1902, 2147483648
    %v1967 = vxor.u32 %v1903, 2147483648
    %v1968 = vxor.u32 %v1904, 2147483648
    %v1969 = vxor.u32 %v1905, 2147483648
    %v1970 = vxor.u32 %v1906, 2147483648
    %v1971 = vxor.u32 %v1907, 2147483648
    %v1972 = vxor.u32 %v1908, 2147483648
    %v1973 = vxor.u32 %v1909, 2147483648
    %v1974 = vxor.u32 %v1910, 2147483648
    %v1975 = vxor.u32 %v1911, 2147483648
    %v1976 = vxor.u32 %v1912, 2147483648
    %v1977 = vxor.u32 %v1913, 2147483648
    %v1978 = vxor.u32 %v1914, 2147483648
    %v1979 = vxor.u32 %v1915, 2147483648
    %v1980 = vxor.u32 %v1916, 2147483648
    %v1981 = vmul.f32 %v1917, 1.442695
    %v1982 = vpow.pop %v1981
    %v1983 = vmul.f32 %v1918, 1.442695
    %v1984 = vpow.pop %v1983
    %v1985 = vmul.f32 %v1919, 1.442695
    %v1986 = vpow.pop %v1985
    %v1987 = vmul.f32 %v1920, 1.442695
    %v1988 = vpow.pop %v1987
    %v1989 = vmul.f32 %v1921, 1.442695
    %v1990 = vpow.pop %v1989
    %v1991 = vmul.f32 %v1922, 1.442695
    %v1992 = vpow.pop %v1991
    %v1993 = vmul.f32 %v1923, 1.442695
    %v1994 = vpow.pop %v1993
    %v1995 = vmul.f32 %v1924, 1.442695
    %v1996 = vpow.pop %v1995
    %v1997 = vmul.f32 %v1925, 1.442695
    %v1998 = vpow.pop %v1997
    %v1999 = vmul.f32 %v1926, 1.442695
    %v2000 = vpow.pop %v1999
    %v2001 = vmul.f32 %v1927, 1.442695
    %v2002 = vpow.pop %v2001
    %v2003 = vmul.f32 %v1928, 1.442695
    %v2004 = vpow.pop %v2003
    %v2005 = vmul.f32 %v1929, 1.442695
    %v2006 = vpow.pop %v2005
    %v2007 = vmul.f32 %v1930, 1.442695
    %v2008 = vpow.pop %v2007
    %v2009 = vmul.f32 %v1931, 1.442695
    %v2010 = vpow.pop %v2009
    %v2011 = vmul.f32 %v1932, 1.442695
    %v2012 = vpow.pop %v2011
    %v2013 = vmul.f32 %v1933, 1.442695
    %v2014 = vpow.pop %v2013
    %v2015 = vmul.f32 %v1934, 1.442695
    %v2016 = vpow.pop %v2015
    %v2017 = vmul.f32 %v1935, 1.442695
    %v2018 = vpow.pop %v2017
    %v2019 = vmul.f32 %v1936, 1.442695
    %v2020 = vpow.pop %v2019
    %v2021 = vmul.f32 %v1937, 1.442695
    %v2022 = vpow.pop %v2021
    %v2023 = vmul.f32 %v1938, 1.442695
    %v2024 = vpow.pop %v2023
    %v2025 = vmul.f32 %v1939, 1.442695
    %v2026 = vpow.pop %v2025
    %v2027 = vmul.f32 %v1940, 1.442695
    %v2028 = vpow.pop %v2027
    %v2029 = vmul.f32 %v1941, 1.442695
    %v2030 = vpow.pop %v2029
    %v2031 = vmul.f32 %v1942, 1.442695
    %v2032 = vpow.pop %v2031
    %v2033 = vmul.f32 %v1943, 1.442695
    %v2034 = vpow.pop %v2033
    %v2035 = vmul.f32 %v1944, 1.442695
    %v2036 = vpow.pop %v2035
    %v2037 = vmul.f32 %v1945, 1.442695
    %v2038 = vpow.pop %v2037
    %v2039 = vmul.f32 %v1946, 1.442695
    %v2040 = vpow.pop %v2039
    %v2041 = vmul.f32 %v1947, 1.442695
    %v2042 = vpow.pop %v2041
    %v2043 = vmul.f32 %v1948, 1.442695
    %v2044 = vpow.pop %v2043
    %v2045 = vmul.f32 %v1949, 1.442695
    %v2046 = vpow.pop %v2045
    %v2047 = vmul.f32 %v1950, 1.442695
    %v2048 = vpow.pop %v2047
    %v2049 = vmul.f32 %v1951, 1.442695
    %v2050 = vpow.pop %v2049
    %v2051 = vmul.f32 %v1952, 1.442695
    %v2052 = vpow.pop %v2051
    %v2053 = vmul.f32 %v1953, 1.442695
    %v2054 = vpow.pop %v2053
    %v2055 = vmul.f32 %v1954, 1.442695
    %v2056 = vpow.pop %v2055
    %v2057 = vmul.f32 %v1955, 1.442695
    %v2058 = vpow.pop %v2057
    %v2059 = vmul.f32 %v1956, 1.442695
    %v2060 = vpow.pop %v2059
    %v2061 = vmul.f32 %v1957, 1.442695
    %v2062 = vpow.pop %v2061
    %v2063 = vmul.f32 %v1958, 1.442695
    %v2064 = vpow.pop %v2063
    %v2065 = vmul.f32 %v1959, 1.442695
    %v2066 = vpow.pop %v2065
    %v2067 = vmul.f32 %v1960, 1.442695
    %v2068 = vpow.pop %v2067
    %v2069 = vmul.f32 %v1961, 1.442695
    %v2070 = vpow.pop %v2069
    %v2071 = vmul.f32 %v1962, 1.442695
    %v2072 = vpow.pop %v2071
    %v2073 = vmul.f32 %v1963, 1.442695
    %v2074 = vpow.pop %v2073
    %v2075 = vmul.f32 %v1964, 1.442695
    %v2076 = vpow.pop %v2075
    %v2077 = vmul.f32 %v1965, 1.442695
    %v2078 = vpow.pop %v2077
    %v2079 = vmul.f32 %v1966, 1.442695
    %v2080 = vpow.pop %v2079
    %v2081 = vmul.f32 %v1967, 1.442695
    %v2082 = vpow.pop %v2081
    %v2083 = vmul.f32 %v1968, 1.442695
    %v2084 = vpow.pop %v2083
    %v2085 = vmul.f32 %v1969, 1.442695
    %v2086 = vpow.pop %v2085
    %v2087 = vmul.f32 %v1970, 1.442695
    %v2088 = vpow.pop %v2087
    %v2089 = vmul.f32 %v1971, 1.442695
    %v2090 = vpow.pop %v2089
    %v2091 = vmul.f32 %v1972, 1.442695
    %v2092 = vpow.pop %v2091
    %v2093 = vmul.f32 %v1973, 1.442695
    %v2094 = vpow.pop %v2093
    %v2095 = vmul.f32 %v1974, 1.442695
    %v2096 = vpow.pop %v2095
    %v2097 = vmul.f32 %v1975, 1.442695
    %v2098 = vpow.pop %v2097
    %v2099 = vmul.f32 %v1976, 1.442695
    %v2100 = vpow.pop %v2099
    %v2101 = vmul.f32 %v1977, 1.442695
    %v2102 = vpow.pop %v2101
    %v2103 = vmul.f32 %v1978, 1.442695
    %v2104 = vpow.pop %v2103
    %v2105 = vmul.f32 %v1979, 1.442695
    %v2106 = vpow.pop %v2105
    %v2107 = vmul.f32 %v1980, 1.442695
    %v2108 = vpow.pop %v2107
    %v2109 = vadd.f32 %v1982, 1.0
    %v2110 = vadd.f32 %v1984, 1.0
    %v2111 = vadd.f32 %v1986, 1.0
    %v2112 = vadd.f32 %v1988, 1.0
    %v2113 = vadd.f32 %v1990, 1.0
    %v2114 = vadd.f32 %v1992, 1.0
    %v2115 = vadd.f32 %v1994, 1.0
    %v2116 = vadd.f32 %v1996, 1.0
    %v2117 = vadd.f32 %v1998, 1.0
    %v2118 = vadd.f32 %v2000, 1.0
    %v2119 = vadd.f32 %v2002, 1.0
    %v2120 = vadd.f32 %v2004, 1.0
    %v2121 = vadd.f32 %v2006, 1.0
    %v2122 = vadd.f32 %v2008, 1.0
    %v2123 = vadd.f32 %v2010, 1.0
    %v2124 = vadd.f32 %v2012, 1.0
    %v2125 = vadd.f32 %v2014, 1.0
    %v2126 = vadd.f32 %v2016, 1.0
    %v2127 = vadd.f32 %v2018, 1.0
    %v2128 = vadd.f32 %v2020, 1.0
    %v2129 = vadd.f32 %v2022, 1.0
    %v2130 = vadd.f32 %v2024, 1.0
    %v2131 = vadd.f32 %v2026, 1.0
    %v2132 = vadd.f32 %v2028, 1.0
    %v2133 = vadd.f32 %v2030, 1.0
    %v2134 = vadd.f32 %v2032, 1.0
    %v2135 = vadd.f32 %v2034, 1.0
    %v2136 = vadd.f32 %v2036, 1.0
    %v2137 = vadd.f32 %v2038, 1.0
    %v2138 = vadd.f32 %v2040, 1.0
    %v2139 = vadd.f32 %v2042, 1.0
    %v2140 = vadd.f32 %v2044, 1.0
    %v2141 = vadd.f32 %v2046, 1.0
    %v2142 = vadd.f32 %v2048, 1.0
    %v2143 = vadd.f32 %v2050, 1.0
    %v2144 = vadd.f32 %v2052, 1.0
    %v2145 = vadd.f32 %v2054, 1.0
    %v2146 = vadd.f32 %v2056, 1.0
    %v2147 = vadd.f32 %v2058, 1.0
    %v2148 = vadd.f32 %v2060, 1.0
    %v2149 = vadd.f32 %v2062, 1.0
    %v2150 = vadd.f32 %v2064, 1.0
    %v2151 = vadd.f32 %v2066, 1.0
    %v2152 = vadd.f32 %v2068, 1.0
    %v2153 = vadd.f32 %v2070, 1.0
    %v2154 = vadd.f32 %v2072, 1.0
    %v2155 = vadd.f32 %v2074, 1.0
    %v2156 = vadd.f32 %v2076, 1.0
    %v2157 = vadd.f32 %v2078, 1.0
    %v2158 = vadd.f32 %v2080, 1.0
    %v2159 = vadd.f32 %v2082, 1.0
    %v2160 = vadd.f32 %v2084, 1.0
    %v2161 = vadd.f32 %v2086, 1.0
    %v2162 = vadd.f32 %v2088, 1.0
    %v2163 = vadd.f32 %v2090, 1.0
    %v2164 = vadd.f32 %v2092, 1.0
    %v2165 = vadd.f32 %v2094, 1.0
    %v2166 = vadd.f32 %v2096, 1.0
    %v2167 = vadd.f32 %v2098, 1.0
    %v2168 = vadd.f32 %v2100, 1.0
    %v2169 = vadd.f32 %v2102, 1.0
    %v2170 = vadd.f32 %v2104, 1.0
    %v2171 = vadd.f32 %v2106, 1.0
    %v2172 = vadd.f32 %v2108, 1.0
    %v2173 = vrcp.pop %v2109
    %v2174 = vmul.f32 1.0, %v2173
    %v2175 = vrcp.pop %v2110
    %v2176 = vmul.f32 1.0, %v2175
    %v2177 = vrcp.pop %v2111
    %v2178 = vmul.f32 1.0, %v2177
    %v2179 = vrcp.pop %v2112
    %v2180 = vmul.f32 1.0, %v2179
    %v2181 = vrcp.pop %v2113
    %v2182 = vmul.f32 1.0, %v2181
    %v2183 = vrcp.pop %v2114
    %v2184 = vmul.f32 1.0, %v2183
    %v2185 = vrcp.pop %v2115
    %v2186 = vmul.f32 1.0, %v2185
    %v2187 = vrcp.pop %v2116
    %v2188 = vmul.f32 1.0, %v2187
    %v2189 = vrcp.pop %v2117
    %v2190 = vmul.f32 1.0, %v2189
    %v2191 = vrcp.pop %v2118
    %v2192 = vmul.f32 1.0, %v2191
    %v2193 = vrcp.pop %v2119
    %v2194 = vmul.f32 1.0, %v2193
    %v2195 = vrcp.pop %v2120
    %v2196 = vmul.f32 1.0, %v2195
    %v2197 = vrcp.pop %v2121
    %v2198 = vmul.f32 1.0, %v2197
    %v2199 = vrcp.pop %v2122
    %v2200 = vmul.f32 1.0, %v2199
    %v2201 = vrcp.pop %v2123
    %v2202 = vmul.f32 1.0, %v2201
    %v2203 = vrcp.pop %v2124
    %v2204 = vmul.f32 1.0, %v2203
    %v2205 = vrcp.pop %v2125
    %v2206 = vmul.f32 1.0, %v2205
    %v2207 = vrcp.pop %v2126
    %v2208 = vmul.f32 1.0, %v2207
    %v2209 = vrcp.pop %v2127
    %v2210 = vmul.f32 1.0, %v2209
    %v2211 = vrcp.pop %v2128
    %v2212 = vmul.f32 1.0, %v2211
    %v2213 = vrcp.pop %v2129
    %v2214 = vmul.f32 1.0, %v2213
    %v2215 = vrcp.pop %v2130
    %v2216 = vmul.f32 1.0, %v2215
    %v2217 = vrcp.pop %v2131
    %v2218 = vmul.f32 1.0, %v2217
    %v2219 = vrcp.pop %v2132
    %v2220 = vmul.f32 1.0, %v2219
    %v2221 = vrcp.pop %v2133
    %v2222 = vmul.f32 1.0, %v2221
    %v2223 = vrcp.pop %v2134
    %v2224 = vmul.f32 1.0, %v2223
    %v2225 = vrcp.pop %v2135
    %v2226 = vmul.f32 1.0, %v2225
    %v2227 = vrcp.pop %v2136
    %v2228 = vmul.f32 1.0, %v2227
    %v2229 = vrcp.pop %v2137
    %v2230 = vmul.f32 1.0, %v2229
    %v2231 = vrcp.pop %v2138
    %v2232 = vmul.f32 1.0, %v2231
    %v2233 = vrcp.pop %v2139
    %v2234 = vmul.f32 1.0, %v2233
    %v2235 = vrcp.pop %v2140
    %v2236 = vmul.f32 1.0, %v2235
    %v2237 = vrcp.pop %v2141
    %v2238 = vmul.f32 1.0, %v2237
    %v2239 = vrcp.pop %v2142
    %v2240 = vmul.f32 1.0, %v2239
    %v2241 = vrcp.pop %v2143
    %v2242 = vmul.f32 1.0, %v2241
    %v2243 = vrcp.pop %v2144
    %v2244 = vmul.f32 1.0, %v2243
    %v2245 = vrcp.pop %v2145
    %v2246 = vmul.f32 1.0, %v2245
    %v2247 = vrcp.pop %v2146
    %v2248 = vmul.f32 1.0, %v2247
    %v2249 = vrcp.pop %v2147
    %v2250 = vmul.f32 1.0, %v2249
    %v2251 = vrcp.pop %v2148
    %v2252 = vmul.f32 1.0, %v2251
    %v2253 = vrcp.pop %v2149
    %v2254 = vmul.f32 1.0, %v2253
    %v2255 = vrcp.pop %v2150
    %v2256 = vmul.f32 1.0, %v2255
    %v2257 = vrcp.pop %v2151
    %v2258 = vmul.f32 1.0, %v2257
    %v2259 = vrcp.pop %v2152
    %v2260 = vmul.f32 1.0, %v2259
    %v2261 = vrcp.pop %v2153
    %v2262 = vmul.f32 1.0, %v2261
    %v2263 = vrcp.pop %v2154
    %v2264 = vmul.f32 1.0, %v2263
    %v2265 = vrcp.pop %v2155
    %v2266 = vmul.f32 1.0, %v2265
    %v2267 = vrcp.pop %v2156
    %v2268 = vmul.f32 1.0, %v2267
    %v2269 = vrcp.pop %v2157
    %v2270 = vmul.f32 1.0, %v2269
    %v2271 = vrcp.pop %v2158
    %v2272 = vmul.f32 1.0, %v2271
    %v2273 = vrcp.pop %v2159
    %v2274 = vmul.f32 1.0, %v2273
    %v2275 = vrcp.pop %v2160
    %v2276 = vmul.f32 1.0, %v2275
    %v2277 = vrcp.pop %v2161
    %v2278 = vmul.f32 1.0, %v2277
    %v2279 = vrcp.pop %v2162
    %v2280 = vmul.f32 1.0, %v2279
    %v2281 = vrcp.pop %v2163
    %v2282 = vmul.f32 1.0, %v2281
    %v2283 = vrcp.pop %v2164
    %v2284 = vmul.f32 1.0, %v2283
    %v2285 = vrcp.pop %v2165
    %v2286 = vmul.f32 1.0, %v2285
    %v2287 = vrcp.pop %v2166
    %v2288 = vmul.f32 1.0, %v2287
    %v2289 = vrcp.pop %v2167
    %v2290 = vmul.f32 1.0, %v2289
    %v2291 = vrcp.pop %v2168
    %v2292 = vmul.f32 1.0, %v2291
    %v2293 = vrcp.pop %v2169
    %v2294 = vmul.f32 1.0, %v2293
    %v2295 = vrcp.pop %v2170
    %v2296 = vmul.f32 1.0, %v2295
    %v2297 = vrcp.pop %v2171
    %v2298 = vmul.f32 1.0, %v2297
    %v2299 = vrcp.pop %v2172
    %v2300 = vmul.f32 1.0, %v2299
    %v2301 = vmul.f32 %v1853, %v2174
    %v2302 = vmul.f32 %v1854, %v2176
    %v2303 = vmul.f32 %v1855, %v2178
    %v2304 = vmul.f32 %v1856, %v2180
    %v2305 = vmul.f32 %v1857, %v2182
    %v2306 = vmul.f32 %v1858, %v2184
    %v2307 = vmul.f32 %v1859, %v2186
    %v2308 = vmul.f32 %v1860, %v2188
    %v2309 = vmul.f32 %v1861, %v2190
    %v2310 = vmul.f32 %v1862, %v2192
    %v2311 = vmul.f32 %v1863, %v2194
    %v2312 = vmul.f32 %v1864, %v2196
    %v2313 = vmul.f32 %v1865, %v2198
    %v2314 = vmul.f32 %v1866, %v2200
    %v2315 = vmul.f32 %v1867, %v2202
    %v2316 = vmul.f32 %v1868, %v2204
    %v2317 = vmul.f32 %v1869, %v2206
    %v2318 = vmul.f32 %v1870, %v2208
    %v2319 = vmul.f32 %v1871, %v2210
    %v2320 = vmul.f32 %v1872, %v2212
    %v2321 = vmul.f32 %v1873, %v2214
    %v2322 = vmul.f32 %v1874, %v2216
    %v2323 = vmul.f32 %v1875, %v2218
    %v2324 = vmul.f32 %v1876, %v2220
    %v2325 = vmul.f32 %v1877, %v2222
    %v2326 = vmul.f32 %v1878, %v2224
    %v2327 = vmul.f32 %v1879, %v2226
    %v2328 = vmul.f32 %v1880, %v2228
    %v2329 = vmul.f32 %v1881, %v2230
    %v2330 = vmul.f32 %v1882, %v2232
    %v2331 = vmul.f32 %v1883, %v2234
    %v2332 = vmul.f32 %v1884, %v2236
    %v2333 = vmul.f32 %v1885, %v2238
    %v2334 = vmul.f32 %v1886, %v2240
    %v2335 = vmul.f32 %v1887, %v2242
    %v2336 = vmul.f32 %v1888, %v2244
    %v2337 = vmul.f32 %v1889, %v2246
    %v2338 = vmul.f32 %v1890, %v2248
    %v2339 = vmul.f32 %v1891, %v2250
    %v2340 = vmul.f32 %v1892, %v2252
    %v2341 = vmul.f32 %v1893, %v2254
    %v2342 = vmul.f32 %v1894, %v2256
    %v2343 = vmul.f32 %v1895, %v2258
    %v2344 = vmul.f32 %v1896, %v2260
    %v2345 = vmul.f32 %v1897, %v2262
    %v2346 = vmul.f32 %v1898, %v2264
    %v2347 = vmul.f32 %v1899, %v2266
    %v2348 = vmul.f32 %v1900, %v2268
    %v2349 = vmul.f32 %v1901, %v2270
    %v2350 = vmul.f32 %v1902, %v2272
    %v2351 = vmul.f32 %v1903, %v2274
    %v2352 = vmul.f32 %v1904, %v2276
    %v2353 = vmul.f32 %v1905, %v2278
    %v2354 = vmul.f32 %v1906, %v2280
    %v2355 = vmul.f32 %v1907, %v2282
    %v2356 = vmul.f32 %v1908, %v2284
    %v2357 = vmul.f32 %v1909, %v2286
    %v2358 = vmul.f32 %v1910, %v2288
    %v2359 = vmul.f32 %v1911, %v2290
    %v2360 = vmul.f32 %v1912, %v2292
    %v2361 = vmul.f32 %v1913, %v2294
    %v2362 = vmul.f32 %v1914, %v2296
    %v2363 = vmul.f32 %v1915, %v2298
    %v2364 = vmul.f32 %v1916, %v2300
    %v2365 = vld [vmem:[%s4] sm:$0xf]
    %v2366 = vld [vmem:[%s4 + $0x4] sm:$0xf]
    %v2367 = vld [vmem:[%s4 + $0x8] sm:$0xf]
    %v2368 = vld [vmem:[%s4 + $0xc] sm:$0xf]
    %v2369 = vld [vmem:[%s4 + $0x10] sm:$0xf]
    %v2370 = vld [vmem:[%s4 + $0x14] sm:$0xf]
    %v2371 = vld [vmem:[%s4 + $0x18] sm:$0xf]
    %v2372 = vld [vmem:[%s4 + $0x1c] sm:$0xf]
    %v2373 = vld [vmem:[%s4 + $0x20] sm:$0xf]
    %v2374 = vld [vmem:[%s4 + $0x24] sm:$0xf]
    %v2375 = vld [vmem:[%s4 + $0x28] sm:$0xf]
    %v2376 = vld [vmem:[%s4 + $0x2c] sm:$0xf]
    %v2377 = vld [vmem:[%s4 + $0x30] sm:$0xf]
    %v2378 = vld [vmem:[%s4 + $0x34] sm:$0xf]
    %v2379 = vld [vmem:[%s4 + $0x38] sm:$0xf]
    %v2380 = vld [vmem:[%s4 + $0x3c] sm:$0xf]
    %v2381 = vld [vmem:[%s4 + $0x40] sm:$0xf]
    %v2382 = vld [vmem:[%s4 + $0x44] sm:$0xf]
    %v2383 = vld [vmem:[%s4 + $0x48] sm:$0xf]
    %v2384 = vld [vmem:[%s4 + $0x4c] sm:$0xf]
    %v2385 = vld [vmem:[%s4 + $0x50] sm:$0xf]
    %v2386 = vld [vmem:[%s4 + $0x54] sm:$0xf]
    %v2387 = vld [vmem:[%s4 + $0x58] sm:$0xf]
    %v2388 = vld [vmem:[%s4 + $0x5c] sm:$0xf]
    %v2389 = vld [vmem:[%s4 + $0x60] sm:$0xf]
    %v2390 = vld [vmem:[%s4 + $0x64] sm:$0xf]
    %v2391 = vld [vmem:[%s4 + $0x68] sm:$0xf]
    %v2392 = vld [vmem:[%s4 + $0x6c] sm:$0xf]
    %v2393 = vld [vmem:[%s4 + $0x70] sm:$0xf]
    %v2394 = vld [vmem:[%s4 + $0x74] sm:$0xf]
    %v2395 = vld [vmem:[%s4 + $0x78] sm:$0xf]
    %v2396 = vld [vmem:[%s4 + $0x7c] sm:$0xf]
    %v2397 = vld [vmem:[%s4 + $0x80] sm:$0xf]
    %v2398 = vld [vmem:[%s4 + $0x84] sm:$0xf]
    %v2399 = vld [vmem:[%s4 + $0x88] sm:$0xf]
    %v2400 = vld [vmem:[%s4 + $0x8c] sm:$0xf]
    %v2401 = vld [vmem:[%s4 + $0x90] sm:$0xf]
    %v2402 = vld [vmem:[%s4 + $0x94] sm:$0xf]
    %v2403 = vld [vmem:[%s4 + $0x98] sm:$0xf]
    %v2404 = vld [vmem:[%s4 + $0x9c] sm:$0xf]
    %v2405 = vld [vmem:[%s4 + $0xa0] sm:$0xf]
    %v2406 = vld [vmem:[%s4 + $0xa4] sm:$0xf]
    %v2407 = vld [vmem:[%s4 + $0xa8] sm:$0xf]
    %v2408 = vld [vmem:[%s4 + $0xac] sm:$0xf]
    %v2409 = vld [vmem:[%s4 + $0xb0] sm:$0xf]
    %v2410 = vld [vmem:[%s4 + $0xb4] sm:$0xf]
    %v2411 = vld [vmem:[%s4 + $0xb8] sm:$0xf]
    %v2412 = vld [vmem:[%s4 + $0xbc] sm:$0xf]
    %v2413 = vld [vmem:[%s4 + $0xc0] sm:$0xf]
    %v2414 = vld [vmem:[%s4 + $0xc4] sm:$0xf]
    %v2415 = vld [vmem:[%s4 + $0xc8] sm:$0xf]
    %v2416 = vld [vmem:[%s4 + $0xcc] sm:$0xf]
    %v2417 = vld [vmem:[%s4 + $0xd0] sm:$0xf]
    %v2418 = vld [vmem:[%s4 + $0xd4] sm:$0xf]
    %v2419 = vld [vmem:[%s4 + $0xd8] sm:$0xf]
    %v2420 = vld [vmem:[%s4 + $0xdc] sm:$0xf]
    %v2421 = vld [vmem:[%s4 + $0xe0] sm:$0xf]
    %v2422 = vld [vmem:[%s4 + $0xe4] sm:$0xf]
    %v2423 = vld [vmem:[%s4 + $0xe8] sm:$0xf]
    %v2424 = vld [vmem:[%s4 + $0xec] sm:$0xf]
    %v2425 = vld [vmem:[%s4 + $0xf0] sm:$0xf]
    %v2426 = vld [vmem:[%s4 + $0xf4] sm:$0xf]
    %v2427 = vld [vmem:[%s4 + $0xf8] sm:$0xf]
    %v2428 = vld [vmem:[%s4 + $0xfc] sm:$0xf]
    %v2429 = vunpack.c.l.bf16 %v2365
    %v2430 = vunpack.c.l.bf16 %v2366
    %v2431 = vunpack.c.l.bf16 %v2367
    %v2432 = vunpack.c.l.bf16 %v2368
    %v2433 = vunpack.c.l.bf16 %v2369
    %v2434 = vunpack.c.l.bf16 %v2370
    %v2435 = vunpack.c.l.bf16 %v2371
    %v2436 = vunpack.c.l.bf16 %v2372
    %v2437 = vunpack.c.l.bf16 %v2373
    %v2438 = vunpack.c.l.bf16 %v2374
    %v2439 = vunpack.c.l.bf16 %v2375
    %v2440 = vunpack.c.l.bf16 %v2376
    %v2441 = vunpack.c.l.bf16 %v2377
    %v2442 = vunpack.c.l.bf16 %v2378
    %v2443 = vunpack.c.l.bf16 %v2379
    %v2444 = vunpack.c.l.bf16 %v2380
    %v2445 = vunpack.c.l.bf16 %v2381
    %v2446 = vunpack.c.l.bf16 %v2382
    %v2447 = vunpack.c.l.bf16 %v2383
    %v2448 = vunpack.c.l.bf16 %v2384
    %v2449 = vunpack.c.l.bf16 %v2385
    %v2450 = vunpack.c.l.bf16 %v2386
    %v2451 = vunpack.c.l.bf16 %v2387
    %v2452 = vunpack.c.l.bf16 %v2388
    %v2453 = vunpack.c.l.bf16 %v2389
    %v2454 = vunpack.c.l.bf16 %v2390
    %v2455 = vunpack.c.l.bf16 %v2391
    %v2456 = vunpack.c.l.bf16 %v2392
    %v2457 = vunpack.c.l.bf16 %v2393
    %v2458 = vunpack.c.l.bf16 %v2394
    %v2459 = vunpack.c.l.bf16 %v2395
    %v2460 = vunpack.c.l.bf16 %v2396
    %v2461 = vunpack.c.l.bf16 %v2397
    %v2462 = vunpack.c.l.bf16 %v2398
    %v2463 = vunpack.c.l.bf16 %v2399
    %v2464 = vunpack.c.l.bf16 %v2400
    %v2465 = vunpack.c.l.bf16 %v2401
    %v2466 = vunpack.c.l.bf16 %v2402
    %v2467 = vunpack.c.l.bf16 %v2403
    %v2468 = vunpack.c.l.bf16 %v2404
    %v2469 = vunpack.c.l.bf16 %v2405
    %v2470 = vunpack.c.l.bf16 %v2406
    %v2471 = vunpack.c.l.bf16 %v2407
    %v2472 = vunpack.c.l.bf16 %v2408
    %v2473 = vunpack.c.l.bf16 %v2409
    %v2474 = vunpack.c.l.bf16 %v2410
    %v2475 = vunpack.c.l.bf16 %v2411
    %v2476 = vunpack.c.l.bf16 %v2412
    %v2477 = vunpack.c.l.bf16 %v2413
    %v2478 = vunpack.c.l.bf16 %v2414
    %v2479 = vunpack.c.l.bf16 %v2415
    %v2480 = vunpack.c.l.bf16 %v2416
    %v2481 = vunpack.c.l.bf16 %v2417
    %v2482 = vunpack.c.l.bf16 %v2418
    %v2483 = vunpack.c.l.bf16 %v2419
    %v2484 = vunpack.c.l.bf16 %v2420
    %v2485 = vunpack.c.l.bf16 %v2421
    %v2486 = vunpack.c.l.bf16 %v2422
    %v2487 = vunpack.c.l.bf16 %v2423
    %v2488 = vunpack.c.l.bf16 %v2424
    %v2489 = vunpack.c.l.bf16 %v2425
    %v2490 = vunpack.c.l.bf16 %v2426
    %v2491 = vunpack.c.l.bf16 %v2427
    %v2492 = vunpack.c.l.bf16 %v2428
    %v2493 = vadd.f32 %v2301, %v2429
    %v2494 = vadd.f32 %v2302, %v2430
    %v2495 = vadd.f32 %v2303, %v2431
    %v2496 = vadd.f32 %v2304, %v2432
    %v2497 = vadd.f32 %v2305, %v2433
    %v2498 = vadd.f32 %v2306, %v2434
    %v2499 = vadd.f32 %v2307, %v2435
    %v2500 = vadd.f32 %v2308, %v2436
    %v2501 = vadd.f32 %v2309, %v2437
    %v2502 = vadd.f32 %v2310, %v2438
    %v2503 = vadd.f32 %v2311, %v2439
    %v2504 = vadd.f32 %v2312, %v2440
    %v2505 = vadd.f32 %v2313, %v2441
    %v2506 = vadd.f32 %v2314, %v2442
    %v2507 = vadd.f32 %v2315, %v2443
    %v2508 = vadd.f32 %v2316, %v2444
    %v2509 = vadd.f32 %v2317, %v2445
    %v2510 = vadd.f32 %v2318, %v2446
    %v2511 = vadd.f32 %v2319, %v2447
    %v2512 = vadd.f32 %v2320, %v2448
    %v2513 = vadd.f32 %v2321, %v2449
    %v2514 = vadd.f32 %v2322, %v2450
    %v2515 = vadd.f32 %v2323, %v2451
    %v2516 = vadd.f32 %v2324, %v2452
    %v2517 = vadd.f32 %v2325, %v2453
    %v2518 = vadd.f32 %v2326, %v2454
    %v2519 = vadd.f32 %v2327, %v2455
    %v2520 = vadd.f32 %v2328, %v2456
    %v2521 = vadd.f32 %v2329, %v2457
    %v2522 = vadd.f32 %v2330, %v2458
    %v2523 = vadd.f32 %v2331, %v2459
    %v2524 = vadd.f32 %v2332, %v2460
    %v2525 = vadd.f32 %v2333, %v2461
    %v2526 = vadd.f32 %v2334, %v2462
    %v2527 = vadd.f32 %v2335, %v2463
    %v2528 = vadd.f32 %v2336, %v2464
    %v2529 = vadd.f32 %v2337, %v2465
    %v2530 = vadd.f32 %v2338, %v2466
    %v2531 = vadd.f32 %v2339, %v2467
    %v2532 = vadd.f32 %v2340, %v2468
    %v2533 = vadd.f32 %v2341, %v2469
    %v2534 = vadd.f32 %v2342, %v2470
    %v2535 = vadd.f32 %v2343, %v2471
    %v2536 = vadd.f32 %v2344, %v2472
    %v2537 = vadd.f32 %v2345, %v2473
    %v2538 = vadd.f32 %v2346, %v2474
    %v2539 = vadd.f32 %v2347, %v2475
    %v2540 = vadd.f32 %v2348, %v2476
    %v2541 = vadd.f32 %v2349, %v2477
    %v2542 = vadd.f32 %v2350, %v2478
    %v2543 = vadd.f32 %v2351, %v2479
    %v2544 = vadd.f32 %v2352, %v2480
    %v2545 = vadd.f32 %v2353, %v2481
    %v2546 = vadd.f32 %v2354, %v2482
    %v2547 = vadd.f32 %v2355, %v2483
    %v2548 = vadd.f32 %v2356, %v2484
    %v2549 = vadd.f32 %v2357, %v2485
    %v2550 = vadd.f32 %v2358, %v2486
    %v2551 = vadd.f32 %v2359, %v2487
    %v2552 = vadd.f32 %v2360, %v2488
    %v2553 = vadd.f32 %v2361, %v2489
    %v2554 = vadd.f32 %v2362, %v2490
    %v2555 = vadd.f32 %v2363, %v2491
    %v2556 = vadd.f32 %v2364, %v2492
    %v2557 = vpack.c.bf16 %v2494, %v2493
    %v2558 = vpack.c.bf16 %v2496, %v2495
    %v2559 = vpack.c.bf16 %v2498, %v2497
    %v2560 = vpack.c.bf16 %v2500, %v2499
    %v2561 = vpack.c.bf16 %v2502, %v2501
    %v2562 = vpack.c.bf16 %v2504, %v2503
    %v2563 = vpack.c.bf16 %v2506, %v2505
    %v2564 = vpack.c.bf16 %v2508, %v2507
    %v2565 = vpack.c.bf16 %v2510, %v2509
    %v2566 = vpack.c.bf16 %v2512, %v2511
    %v2567 = vpack.c.bf16 %v2514, %v2513
    %v2568 = vpack.c.bf16 %v2516, %v2515
    %v2569 = vpack.c.bf16 %v2518, %v2517
    %v2570 = vpack.c.bf16 %v2520, %v2519
    %v2571 = vpack.c.bf16 %v2522, %v2521
    %v2572 = vpack.c.bf16 %v2524, %v2523
    %v2573 = vpack.c.bf16 %v2526, %v2525
    %v2574 = vpack.c.bf16 %v2528, %v2527
    %v2575 = vpack.c.bf16 %v2530, %v2529
    %v2576 = vpack.c.bf16 %v2532, %v2531
    %v2577 = vpack.c.bf16 %v2534, %v2533
    %v2578 = vpack.c.bf16 %v2536, %v2535
    %v2579 = vpack.c.bf16 %v2538, %v2537
    %v2580 = vpack.c.bf16 %v2540, %v2539
    %v2581 = vpack.c.bf16 %v2542, %v2541
    %v2582 = vpack.c.bf16 %v2544, %v2543
    %v2583 = vpack.c.bf16 %v2546, %v2545
    %v2584 = vpack.c.bf16 %v2548, %v2547
    %v2585 = vpack.c.bf16 %v2550, %v2549
    %v2586 = vpack.c.bf16 %v2552, %v2551
    %v2587 = vpack.c.bf16 %v2554, %v2553
    %v2588 = vpack.c.bf16 %v2556, %v2555
    %v2621 = vunpack.c.l.b16 %v2557
    %v2622 = vunpack.c.h.b16 %v2557
    %v2623 = vunpack.c.l.b16 %v2558
    %v2624 = vunpack.c.h.b16 %v2558
    %v2625 = vunpack.c.l.b16 %v2559
    %v2626 = vunpack.c.h.b16 %v2559
    %v2627 = vunpack.c.l.b16 %v2560
    %v2628 = vunpack.c.h.b16 %v2560
    %v2629 = vunpack.c.l.b16 %v2561
    %v2630 = vunpack.c.h.b16 %v2561
    %v2631 = vunpack.c.l.b16 %v2562
    %v2632 = vunpack.c.h.b16 %v2562
    %v2633 = vunpack.c.l.b16 %v2563
    %v2634 = vunpack.c.h.b16 %v2563
    %v2635 = vunpack.c.l.b16 %v2564
    %v2636 = vunpack.c.h.b16 %v2564
    %v2637 = vunpack.c.l.b16 %v2565
    %v2638 = vunpack.c.h.b16 %v2565
    %v2639 = vunpack.c.l.b16 %v2566
    %v2640 = vunpack.c.h.b16 %v2566
    %v2641 = vunpack.c.l.b16 %v2567
    %v2642 = vunpack.c.h.b16 %v2567
    %v2643 = vunpack.c.l.b16 %v2568
    %v2644 = vunpack.c.h.b16 %v2568
    %v2645 = vunpack.c.l.b16 %v2569
    %v2646 = vunpack.c.h.b16 %v2569
    %v2647 = vunpack.c.l.b16 %v2570
    %v2648 = vunpack.c.h.b16 %v2570
    %v2649 = vunpack.c.l.b16 %v2571
    %v2650 = vunpack.c.h.b16 %v2571
    %v2651 = vunpack.c.l.b16 %v2572
    %v2652 = vunpack.c.h.b16 %v2572
    %v2653 = vunpack.c.l.b16 %v2573
    %v2654 = vunpack.c.h.b16 %v2573
    %v2655 = vunpack.c.l.b16 %v2574
    %v2656 = vunpack.c.h.b16 %v2574
    %v2657 = vunpack.c.l.b16 %v2575
    %v2658 = vunpack.c.h.b16 %v2575
    %v2659 = vunpack.c.l.b16 %v2576
    %v2660 = vunpack.c.h.b16 %v2576
    %v2661 = vunpack.c.l.b16 %v2577
    %v2662 = vunpack.c.h.b16 %v2577
    %v2663 = vunpack.c.l.b16 %v2578
    %v2664 = vunpack.c.h.b16 %v2578
    %v2665 = vunpack.c.l.b16 %v2579
    %v2666 = vunpack.c.h.b16 %v2579
    %v2667 = vunpack.c.l.b16 %v2580
    %v2668 = vunpack.c.h.b16 %v2580
    %v2669 = vunpack.c.l.b16 %v2581
    %v2670 = vunpack.c.h.b16 %v2581
    %v2671 = vunpack.c.l.b16 %v2582
    %v2672 = vunpack.c.h.b16 %v2582
    %v2673 = vunpack.c.l.b16 %v2583
    %v2674 = vunpack.c.h.b16 %v2583
    %v2675 = vunpack.c.l.b16 %v2584
    %v2676 = vunpack.c.h.b16 %v2584
    %v2677 = vunpack.c.l.b16 %v2585
    %v2678 = vunpack.c.h.b16 %v2585
    %v2679 = vunpack.c.l.b16 %v2586
    %v2680 = vunpack.c.h.b16 %v2586
    %v2681 = vunpack.c.l.b16 %v2587
    %v2682 = vunpack.c.h.b16 %v2587
    %v2683 = vunpack.c.l.b16 %v2588
    %v2684 = vunpack.c.h.b16 %v2588
    %v2685 = vpack.c.b16 %v2621, %v2621
    %v2686 = vpack.c.b16 %v2622, %v2622
    %v2687 = vpack.c.b16 %v2623, %v2623
    %v2688 = vpack.c.b16 %v2624, %v2624
    %v2689 = vpack.c.b16 %v2625, %v2625
    %v2690 = vpack.c.b16 %v2626, %v2626
    %v2691 = vpack.c.b16 %v2627, %v2627
    %v2692 = vpack.c.b16 %v2628, %v2628
    %v2693 = vpack.c.b16 %v2629, %v2629
    %v2694 = vpack.c.b16 %v2630, %v2630
    %v2695 = vpack.c.b16 %v2631, %v2631
    %v2696 = vpack.c.b16 %v2632, %v2632
    %v2697 = vpack.c.b16 %v2633, %v2633
    %v2698 = vpack.c.b16 %v2634, %v2634
    %v2699 = vpack.c.b16 %v2635, %v2635
    %v2700 = vpack.c.b16 %v2636, %v2636
    %v2701 = vpack.c.b16 %v2637, %v2637
    %v2702 = vpack.c.b16 %v2638, %v2638
    %v2703 = vpack.c.b16 %v2639, %v2639
    %v2704 = vpack.c.b16 %v2640, %v2640
    %v2705 = vpack.c.b16 %v2641, %v2641
    %v2706 = vpack.c.b16 %v2642, %v2642
    %v2707 = vpack.c.b16 %v2643, %v2643
    %v2708 = vpack.c.b16 %v2644, %v2644
    %v2709 = vpack.c.b16 %v2645, %v2645
    %v2710 = vpack.c.b16 %v2646, %v2646
    %v2711 = vpack.c.b16 %v2647, %v2647
    %v2712 = vpack.c.b16 %v2648, %v2648
    %v2713 = vpack.c.b16 %v2649, %v2649
    %v2714 = vpack.c.b16 %v2650, %v2650
    %v2715 = vpack.c.b16 %v2651, %v2651
    %v2716 = vpack.c.b16 %v2652, %v2652
    %v2717 = vpack.c.b16 %v2653, %v2653
    %v2718 = vpack.c.b16 %v2654, %v2654
    %v2719 = vpack.c.b16 %v2655, %v2655
    %v2720 = vpack.c.b16 %v2656, %v2656
    %v2721 = vpack.c.b16 %v2657, %v2657
    %v2722 = vpack.c.b16 %v2658, %v2658
    %v2723 = vpack.c.b16 %v2659, %v2659
    %v2724 = vpack.c.b16 %v2660, %v2660
    %v2725 = vpack.c.b16 %v2661, %v2661
    %v2726 = vpack.c.b16 %v2662, %v2662
    %v2727 = vpack.c.b16 %v2663, %v2663
    %v2728 = vpack.c.b16 %v2664, %v2664
    %v2729 = vpack.c.b16 %v2665, %v2665
    %v2730 = vpack.c.b16 %v2666, %v2666
    %v2731 = vpack.c.b16 %v2667, %v2667
    %v2732 = vpack.c.b16 %v2668, %v2668
    %v2733 = vpack.c.b16 %v2669, %v2669
    %v2734 = vpack.c.b16 %v2670, %v2670
    %v2735 = vpack.c.b16 %v2671, %v2671
    %v2736 = vpack.c.b16 %v2672, %v2672
    %v2737 = vpack.c.b16 %v2673, %v2673
    %v2738 = vpack.c.b16 %v2674, %v2674
    %v2739 = vpack.c.b16 %v2675, %v2675
    %v2740 = vpack.c.b16 %v2676, %v2676
    %v2741 = vpack.c.b16 %v2677, %v2677
    %v2742 = vpack.c.b16 %v2678, %v2678
    %v2743 = vpack.c.b16 %v2679, %v2679
    %v2744 = vpack.c.b16 %v2680, %v2680
    %v2745 = vpack.c.b16 %v2681, %v2681
    %v2746 = vpack.c.b16 %v2682, %v2682
    %v2747 = vpack.c.b16 %v2683, %v2683
    %v2748 = vpack.c.b16 %v2684, %v2684
    %2813 = vst [vmem:[%s5] sm:$0xf] %v2685
    %2814 = vst [vmem:[%s5 + $0x4] sm:$0xf] %v2686
    %2815 = vst [vmem:[%s5 + $0x8] sm:$0xf] %v2687
    %2816 = vst [vmem:[%s5 + $0xc] sm:$0xf] %v2688
    %2817 = vst [vmem:[%s5 + $0x10] sm:$0xf] %v2689
    %2818 = vst [vmem:[%s5 + $0x14] sm:$0xf] %v2690
    %2819 = vst [vmem:[%s5 + $0x18] sm:$0xf] %v2691
    %2820 = vst [vmem:[%s5 + $0x1c] sm:$0xf] %v2692
    %2821 = vst [vmem:[%s5 + $0x20] sm:$0xf] %v2693
    %2822 = vst [vmem:[%s5 + $0x24] sm:$0xf] %v2694
    %2823 = vst [vmem:[%s5 + $0x28] sm:$0xf] %v2695
    %2824 = vst [vmem:[%s5 + $0x2c] sm:$0xf] %v2696
    %2825 = vst [vmem:[%s5 + $0x30] sm:$0xf] %v2697
    %2826 = vst [vmem:[%s5 + $0x34] sm:$0xf] %v2698
    %2827 = vst [vmem:[%s5 + $0x38] sm:$0xf] %v2699
    %2828 = vst [vmem:[%s5 + $0x3c] sm:$0xf] %v2700
    %2829 = vst [vmem:[%s5 + $0x40] sm:$0xf] %v2701
    %2830 = vst [vmem:[%s5 + $0x44] sm:$0xf] %v2702
    %2831 = vst [vmem:[%s5 + $0x48] sm:$0xf] %v2703
    %2832 = vst [vmem:[%s5 + $0x4c] sm:$0xf] %v2704
    %2833 = vst [vmem:[%s5 + $0x50] sm:$0xf] %v2705
    %2834 = vst [vmem:[%s5 + $0x54] sm:$0xf] %v2706
    %2835 = vst [vmem:[%s5 + $0x58] sm:$0xf] %v2707
    %2836 = vst [vmem:[%s5 + $0x5c] sm:$0xf] %v2708
    %2837 = vst [vmem:[%s5 + $0x60] sm:$0xf] %v2709
    %2838 = vst [vmem:[%s5 + $0x64] sm:$0xf] %v2710
    %2839 = vst [vmem:[%s5 + $0x68] sm:$0xf] %v2711
    %2840 = vst [vmem:[%s5 + $0x6c] sm:$0xf] %v2712
    %2841 = vst [vmem:[%s5 + $0x70] sm:$0xf] %v2713
    %2842 = vst [vmem:[%s5 + $0x74] sm:$0xf] %v2714
    %2843 = vst [vmem:[%s5 + $0x78] sm:$0xf] %v2715
    %2844 = vst [vmem:[%s5 + $0x7c] sm:$0xf] %v2716
    %2845 = vst [vmem:[%s5 + $0x80] sm:$0xf] %v2717
    %2846 = vst [vmem:[%s5 + $0x84] sm:$0xf] %v2718
    %2847 = vst [vmem:[%s5 + $0x88] sm:$0xf] %v2719
    %2848 = vst [vmem:[%s5 + $0x8c] sm:$0xf] %v2720
    %2849 = vst [vmem:[%s5 + $0x90] sm:$0xf] %v2721
    %2850 = vst [vmem:[%s5 + $0x94] sm:$0xf] %v2722
    %2851 = vst [vmem:[%s5 + $0x98] sm:$0xf] %v2723
    %2852 = vst [vmem:[%s5 + $0x9c] sm:$0xf] %v2724
    %2853 = vst [vmem:[%s5 + $0xa0] sm:$0xf] %v2725
    %2854 = vst [vmem:[%s5 + $0xa4] sm:$0xf] %v2726
    %2855 = vst [vmem:[%s5 + $0xa8] sm:$0xf] %v2727
    %2856 = vst [vmem:[%s5 + $0xac] sm:$0xf] %v2728
    %2857 = vst [vmem:[%s5 + $0xb0] sm:$0xf] %v2729
    %2858 = vst [vmem:[%s5 + $0xb4] sm:$0xf] %v2730
    %2859 = vst [vmem:[%s5 + $0xb8] sm:$0xf] %v2731
    %2860 = vst [vmem:[%s5 + $0xbc] sm:$0xf] %v2732
    %2861 = vst [vmem:[%s5 + $0xc0] sm:$0xf] %v2733
    %2862 = vst [vmem:[%s5 + $0xc4] sm:$0xf] %v2734
    %2863 = vst [vmem:[%s5 + $0xc8] sm:$0xf] %v2735
    %2864 = vst [vmem:[%s5 + $0xcc] sm:$0xf] %v2736
    %2865 = vst [vmem:[%s5 + $0xd0] sm:$0xf] %v2737
    %2866 = vst [vmem:[%s5 + $0xd4] sm:$0xf] %v2738
    %2867 = vst [vmem:[%s5 + $0xd8] sm:$0xf] %v2739
    %2868 = vst [vmem:[%s5 + $0xdc] sm:$0xf] %v2740
    %2869 = vst [vmem:[%s5 + $0xe0] sm:$0xf] %v2741
    %2870 = vst [vmem:[%s5 + $0xe4] sm:$0xf] %v2742
    %2871 = vst [vmem:[%s5 + $0xe8] sm:$0xf] %v2743
    %2872 = vst [vmem:[%s5 + $0xec] sm:$0xf] %v2744
    %2873 = vst [vmem:[%s5 + $0xf0] sm:$0xf] %v2745
    %2874 = vst [vmem:[%s5 + $0xf4] sm:$0xf] %v2746
    %2875 = vst [vmem:[%s5 + $0xf8] sm:$0xf] %v2747
    %2876 = vst [vmem:[%s5 + $0xfc] sm:$0xf] %v2748
  $region29: #{birdclef_forward.4} parent=0 // pred_fallthru
    _
  // Predicated region
  $region30: #{birdclef_forward.4} parent=0 // pred_check
    _
  $region31: #{birdclef_forward.4} parent=0 // pred_check_branch
    %2878 = sbr.rel (0) target = $region33
  $region32: #{birdclef_forward.4} parent=0 // pred_region
    _
  $region33: #{birdclef_forward.4} parent=0 // pred_fallthru
    _
  // Predicated region
  $region34: #{birdclef_forward.4} parent=0 // pred_check
    _
  $region35: #{birdclef_forward.4} parent=0 // pred_check_branch
    %2880 = sbr.rel (0) target = $region37
  $region36: #{birdclef_forward.4} parent=0 // pred_region
    _
  $region37: #{birdclef_forward.4} parent=0 // pred_fallthru
    _

// kernel: birdclef_forward.5
$region0: #{birdclef_forward.5}
  #allocation0 [shape = 'u32[]', space=smem, size = 0x4, offset = 0x4, fixed_abs, tag = 'smem constant byte address 0x4 - core index']
  #allocation1 [shape = 'u32[144,128]{1,0:T(1,128)}', space=vmem, size = 0x12000, scoped, tag = 'internal scratch']
  #allocation2 [shape = 'f32[1,1280]{1,0:T(1,128)}', space=vmem, size = 0x1400, scoped, tag = 'scratch operand']
  %s0 = inlined_call_operand.vmem [shape: bf16[2,256,128], index: 0, kind: input, shape index: {}]
  %s1 = inlined_call_operand.vmem [shape: bf16[128,1280], index: 1, kind: input, shape index: {}]
  %s2 = inlined_call_operand.vmem [shape: f32[1,1280], index: 2, kind: input, shape index: {}]
  %s3 = inlined_call_operand.vmem [shape: f32[1,1280], index: 3, kind: input, shape index: {}]
  %s4 = inlined_call_operand.vmem [shape: f32[1280,6], index: 4, kind: input, shape index: {}]
  %s5 = inlined_call_operand.vmem [shape: f32[1,6], index: 5, kind: input, shape index: {}]
  %s6 = inlined_call_operand.hbm [shape: f32[2,1,6], index: 6, kind: output, shape index: {}]
  %s7 = sld [smem:[#allocation0]]
  $region65: #{birdclef_forward.5} parent=0
    _
  %s9 = ssub.s32 1, %s7
  %s10 = scalar_select 0, %s9, %s7
  $region1: #{birdclef_forward.5} parent=0
    #allocation3 [shape = 'u8[1024]{0}', space=vmem, size = 0x400, scoped, tag = 'output window, operand 0']
    #allocation4 [shape = 's32[2]{0}', space=sflag, size = 0x8, scoped, tag = 'scoped memory for birdclef_forward.5']
    %11 = vsyncpa [#allocation4], 0
    %s12 = scalar_lea.sflag [#allocation4], 1
    %13 = vsyncpa %s12, 0
    loop: start=0, step=1, limit=4
    $region2: #{birdclef_forward.5} parent=1 // loop_pre_header
      _
    $region3: #{birdclef_forward.5} parent=1 // loop_header
      %s15 = sphi 0, %s19
      %p16 = scmp.ge.s32.totalorder %s15, 4
      %s22 = sphi 0, %s34
      %s23 = sphi 0, %s30
      %s24 = sphi 0, %s22
      %s25 = sphi 0, %s23
      %s26 = sphi 0, %s24
      %s27 = sphi 0, %s25
      %s39 = sphi 0, %s41
      %s42 = sphi 0, %s39
      %s43 = sphi 0, %s42
      %s59 = sphi 0, %s43
      %s63 = sphi 0, %s63
      %s65 = sphi 0, %s63
      %s66 = sphi 0, %s65
      %s80 = sphi 0, %s66
      %s84 = sphi 0, %s84
      %s86 = sphi 0, %s84
      %s87 = sphi 0, %s86
      %s101 = sphi 0, %s87
      %s105 = sphi 0, %s105
      %s107 = sphi 0, %s105
      %s108 = sphi 0, %s107
      %s122 = sphi 0, %s108
      %s126 = sphi 0, %s126
      %s128 = sphi 0, %s126
      %s129 = sphi 0, %s128
      %s143 = sphi 0, %s129
      %s147 = sphi 0, %s147
      %s149 = sphi 0, %s147
      %s150 = sphi 0, %s149
      %s164 = sphi 0, %s150
      %s170 = sphi 0, %s172
      %s173 = sphi 0, %s170
      %s174 = sphi 0, %s173
      %s190 = sphi 0, %s174
    $region4: #{birdclef_forward.5} parent=1 // loop_header_branch
      %18 = sbr.rel (%p16) target = $region8
    $region5: #{birdclef_forward.5} parent=1 // loop_body
      %s20 = ssub.s32 %s15, 1
      %s21 = ssub.s32 %s15, 2
      %s28 = sadd.s32 1, %s23
      %p29 = scmp.ge.s32.totalorder %s28, 1
      %s30 = scalar_select %p29, 0, %s28
      %s31 = sadd.s32 1, %s22
      %s32 = scalar_select %p29, %s31, %s22
      %p33 = scmp.ge.s32.totalorder %s32, 2
      %s34 = scalar_select %p33, 0, %s32
      %s35 = ssub.s32 %s22, %s34
      %s36 = ssub.s32 %s23, %s30
      %s37 = sor.u32 %s35, %s36
      %p38 = scmp.eq.s32.totalorder %s37, 0
      %s40 = sadd.s32 %s39, 1
      %s41 = scalar_select %p38, %s39, %s40
      %p44 = pneg %p38
      %p45 = scmp.eq.s32.totalorder %s15, 1
      %p46 = por %p44, %p45
      %p47 = scmp.ne.s32.totalorder %s39, %s42
      %p48 = scmp.eq.s32.totalorder %s15, 0
      %p49 = por %p47, %p48
      %p50 = scmp.ne.s32.totalorder %s39, %s42
      %p51 = scmp.eq.s32.totalorder %s20, 1
      %p52 = por %p50, %p51
      %p53 = scmp.ne.s32.totalorder %s42, %s43
      %p54 = scmp.eq.s32.totalorder %s20, 0
      %p55 = por %p53, %p54
      %p56 = scmp.ne.s32.totalorder %s42, %s43
      %p57 = scmp.eq.s32.totalorder %s21, 1
      %p58 = por %p56, %p57
      %p60 = scmp.ne.s32.totalorder %s43, %s59
      %p61 = scmp.eq.s32.totalorder %s21, 0
      %p62 = por %p60, %p61
      %s64 = sadd.s32 %s63, 1
      %p67 = scmp.eq.s32.totalorder %s15, 1
      %p68 = scmp.ne.s32.totalorder %s63, %s65
      %p69 = scmp.eq.s32.totalorder %s15, 0
      %p70 = por %p68, %p69
      %p71 = scmp.ne.s32.totalorder %s63, %s65
      %p72 = scmp.eq.s32.totalorder %s20, 1
      %p73 = por %p71, %p72
      %p74 = scmp.ne.s32.totalorder %s65, %s66
      %p75 = scmp.eq.s32.totalorder %s20, 0
      %p76 = por %p74, %p75
      %p77 = scmp.ne.s32.totalorder %s65, %s66
      %p78 = scmp.eq.s32.totalorder %s21, 1
      %p79 = por %p77, %p78
      %p81 = scmp.ne.s32.totalorder %s66, %s80
      %p82 = scmp.eq.s32.totalorder %s21, 0
      %p83 = por %p81, %p82
      %s85 = sadd.s32 %s84, 1
      %p88 = scmp.eq.s32.totalorder %s15, 1
      %p89 = scmp.ne.s32.totalorder %s84, %s86
      %p90 = scmp.eq.s32.totalorder %s15, 0
      %p91 = por %p89, %p90
      %p92 = scmp.ne.s32.totalorder %s84, %s86
      %p93 = scmp.eq.s32.totalorder %s20, 1
      %p94 = por %p92, %p93
      %p95 = scmp.ne.s32.totalorder %s86, %s87
      %p96 = scmp.eq.s32.totalorder %s20, 0
      %p97 = por %p95, %p96
      %p98 = scmp.ne.s32.totalorder %s86, %s87
      %p99 = scmp.eq.s32.totalorder %s21, 1
      %p100 = por %p98, %p99
      %p102 = scmp.ne.s32.totalorder %s87, %s101
      %p103 = scmp.eq.s32.totalorder %s21, 0
      %p104 = por %p102, %p103
      %s106 = sadd.s32 %s105, 1
      %p109 = scmp.eq.s32.totalorder %s15, 1
      %p110 = scmp.ne.s32.totalorder %s105, %s107
      %p111 = scmp.eq.s32.totalorder %s15, 0
      %p112 = por %p110, %p111
      %p113 = scmp.ne.s32.totalorder %s105, %s107
      %p114 = scmp.eq.s32.totalorder %s20, 1
      %p115 = por %p113, %p114
      %p116 = scmp.ne.s32.totalorder %s107, %s108
      %p117 = scmp.eq.s32.totalorder %s20, 0
      %p118 = por %p116, %p117
      %p119 = scmp.ne.s32.totalorder %s107, %s108
      %p120 = scmp.eq.s32.totalorder %s21, 1
      %p121 = por %p119, %p120
      %p123 = scmp.ne.s32.totalorder %s108, %s122
      %p124 = scmp.eq.s32.totalorder %s21, 0
      %p125 = por %p123, %p124
      %s127 = sadd.s32 %s126, 1
      %p130 = scmp.eq.s32.totalorder %s15, 1
      %p131 = scmp.ne.s32.totalorder %s126, %s128
      %p132 = scmp.eq.s32.totalorder %s15, 0
      %p133 = por %p131, %p132
      %p134 = scmp.ne.s32.totalorder %s126, %s128
      %p135 = scmp.eq.s32.totalorder %s20, 1
      %p136 = por %p134, %p135
      %p137 = scmp.ne.s32.totalorder %s128, %s129
      %p138 = scmp.eq.s32.totalorder %s20, 0
      %p139 = por %p137, %p138
      %p140 = scmp.ne.s32.totalorder %s128, %s129
      %p141 = scmp.eq.s32.totalorder %s21, 1
      %p142 = por %p140, %p141
      %p144 = scmp.ne.s32.totalorder %s129, %s143
      %p145 = scmp.eq.s32.totalorder %s21, 0
      %p146 = por %p144, %p145
      %s148 = sadd.s32 %s147, 1
      %p151 = scmp.eq.s32.totalorder %s15, 1
      %p152 = scmp.ne.s32.totalorder %s147, %s149
      %p153 = scmp.eq.s32.totalorder %s15, 0
      %p154 = por %p152, %p153
      %p155 = scmp.ne.s32.totalorder %s147, %s149
      %p156 = scmp.eq.s32.totalorder %s20, 1
      %p157 = por %p155, %p156
      %p158 = scmp.ne.s32.totalorder %s149, %s150
      %p159 = scmp.eq.s32.totalorder %s20, 0
      %p160 = por %p158, %p159
      %p161 = scmp.ne.s32.totalorder %s149, %s150
      %p162 = scmp.eq.s32.totalorder %s21, 1
      %p163 = por %p161, %p162
      %p165 = scmp.ne.s32.totalorder %s150, %s164
      %p166 = scmp.eq.s32.totalorder %s21, 0
      %p167 = por %p165, %p166
      %s168 = ssub.s32 %s22, %s34
      %p169 = scmp.eq.s32.totalorder %s168, 0
      %s171 = sadd.s32 %s170, 1
      %s172 = scalar_select %p169, %s170, %s171
      %p175 = pneg %p169
      %p176 = scmp.eq.s32.totalorder %s15, 1
      %p177 = por %p175, %p176
      %p178 = scmp.ne.s32.totalorder %s170, %s173
      %p179 = scmp.eq.s32.totalorder %s15, 0
      %p180 = por %p178, %p179
      %p181 = scmp.ne.s32.totalorder %s170, %s173
      %p182 = scmp.eq.s32.totalorder %s20, 1
      %p183 = por %p181, %p182
      %p184 = scmp.ne.s32.totalorder %s173, %s174
      %p185 = scmp.eq.s32.totalorder %s20, 0
      %p186 = por %p184, %p185
      %p187 = scmp.ne.s32.totalorder %s173, %s174
      %p188 = scmp.eq.s32.totalorder %s21, 1
      %p189 = por %p187, %p188
      %p191 = scmp.ne.s32.totalorder %s174, %s190
      %p192 = scmp.eq.s32.totalorder %s21, 0
      %p193 = por %p191, %p192
      %p194 = scmp.le.s32.totalorder 1, %s15
      %p195 = scmp.lt.s32.totalorder %s15, 3
      %p196 = pnand %p194, %p195
      %p197 = pneg %p196
      // Predicated region
      $region9: #{birdclef_forward.5} parent=5 // pred_check
        _
      $region10: #{birdclef_forward.5} parent=5 // pred_check_branch
        %199 = sbr.rel (%p196) target = $region12
      $region11: #{birdclef_forward.5} parent=5 // pred_region
        %s200 = ssub.s32 %s15, 1
        // Predicated region
        $region13: #{birdclef_forward.5} parent=11 // pred_check
          %p201 = pneg %p76
        $region14: #{birdclef_forward.5} parent=11 // pred_check_branch
          %203 = sbr.rel (%p201) target = $region16
        $region15: #{birdclef_forward.5} parent=11 // pred_region
          _
        $region16: #{birdclef_forward.5} parent=11 // pred_fallthru
          _
        // Predicated region
        $region17: #{birdclef_forward.5} parent=11 // pred_check
          %p204 = pneg %p97
        $region18: #{birdclef_forward.5} parent=11 // pred_check_branch
          %206 = sbr.rel (%p204) target = $region20
        $region19: #{birdclef_forward.5} parent=11 // pred_region
          _
        $region20: #{birdclef_forward.5} parent=11 // pred_fallthru
          _
        // Predicated region
        $region21: #{birdclef_forward.5} parent=11 // pred_check
          %p207 = pneg %p118
        $region22: #{birdclef_forward.5} parent=11 // pred_check_branch
          %209 = sbr.rel (%p207) target = $region24
        $region23: #{birdclef_forward.5} parent=11 // pred_region
          _
        $region24: #{birdclef_forward.5} parent=11 // pred_fallthru
          _
        // Predicated region
        $region25: #{birdclef_forward.5} parent=11 // pred_check
          %p210 = pneg %p139
        $region26: #{birdclef_forward.5} parent=11 // pred_check_branch
          %212 = sbr.rel (%p210) target = $region28
        $region27: #{birdclef_forward.5} parent=11 // pred_region
          _
        $region28: #{birdclef_forward.5} parent=11 // pred_fallthru
          _
        // Predicated region
        $region29: #{birdclef_forward.5} parent=11 // pred_check
          %p213 = pneg %p160
        $region30: #{birdclef_forward.5} parent=11 // pred_check_branch
          %215 = sbr.rel (%p213) target = $region32
        $region31: #{birdclef_forward.5} parent=11 // pred_region
          _
        $region32: #{birdclef_forward.5} parent=11 // pred_fallthru
          _
      $region12: #{birdclef_forward.5} parent=5 // pred_fallthru
        _
      %p216 = scmp.lt.s32.totalorder %s15, 2
      // Predicated region
      $region33: #{birdclef_forward.5} parent=5 // pred_check
        %p217 = pneg %p216
      $region34: #{birdclef_forward.5} parent=5 // pred_check_branch
        %219 = sbr.rel (%p217) target = $region36
      $region35: #{birdclef_forward.5} parent=5 // pred_region
        // Predicated region
        $region37: #{birdclef_forward.5} parent=35 // pred_check
          %p220 = pneg %p49
        $region38: #{birdclef_forward.5} parent=35 // pred_check_branch
          %222 = sbr.rel (%p220) target = $region40
        $region39: #{birdclef_forward.5} parent=35 // pred_region
          %s223 = smul.u32 32, %s23
          %p224 = scmp.lt.s32.totalorder %s22, 1
          %s225 = scalar_select %p224, %s22, 1
          %p226 = scmp.lt.s32.totalorder %s223, 31
          %s227 = scalar_select %p226, %s223, 31
          %s228 = smul.addr %s225, 32
          %s229 = sadd.s32 %s227, %s228
          %s230 = smul.addr %s229, 4
          %s231 = scalar_lea.vmem %s0, %s230
          %s232 = smul.u32 32, %s23
        $region40: #{birdclef_forward.5} parent=35 // pred_fallthru
          _
      $region36: #{birdclef_forward.5} parent=5 // pred_fallthru
        _
      %p233 = scmp.le.s32.totalorder 1, %s15
      %p234 = scmp.lt.s32.totalorder %s15, 3
      %p235 = pnand %p233, %p234
      %p236 = pneg %p235
      // Predicated region
      $region41: #{birdclef_forward.5} parent=5 // pred_check
        _
      $region42: #{birdclef_forward.5} parent=5 // pred_check_branch
        %238 = sbr.rel (%p235) target = $region44
      $region43: #{birdclef_forward.5} parent=5 // pred_region
        %s239 = ssub.s32 %s15, 1
        %s240 = smul.u32 32, %s25
        %p241 = scmp.lt.s32.totalorder %s24, 1
        %s242 = scalar_select %p241, %s24, 1
        %p243 = scmp.lt.s32.totalorder %s240, 31
        %s244 = scalar_select %p243, %s240, 31
        %s245 = smul.addr %s242, 32
        %s246 = sadd.s32 %s244, %s245
        %s247 = smul.addr %s246, 4
        %s248 = scalar_lea.vmem %s0, %s247
        %p249 = pneg %p55
        %p250 = pneg %p52
        %p251 = pneg %p76
        %p252 = pneg %p73
        %p253 = pneg %p97
        %p254 = pneg %p94
        %p255 = pneg %p118
        %p256 = pneg %p115
        %p257 = pneg %p139
        %p258 = pneg %p136
        %p259 = pneg %p160
        %p260 = pneg %p157
        %p261 = pneg %p186
        %p262 = pneg %p183
        %s263 = sand.u32 %s173, 1
        %s264 = scalar_lea.sflag [#allocation4], %s263
        %s265 = sand.u32 %s173, 1
        %s266 = scalar_lea.vmem [#allocation3], %s265
        %s267 = smul.u32 32, %s25
        %p268 = scmp.lt.s32.totalorder %s24, 1
        %s269 = scalar_select %p268, %s24, 1
        %p270 = scmp.lt.s32.totalorder %s267, 31
        %s271 = scalar_select %p270, %s267, 31
        %s272 = smul.addr %s269, 32
        %s273 = sadd.s32 %s271, %s272
        %s274 = smul.addr %s273, 4
        %s275 = scalar_lea.vmem %s0, %s274
        %s276 = smul.u32 32, %s25
        %p279 = scmp.eq.s32.totalorder %s25, 0
        // Predicated region
        $region45: #{birdclef_forward.5} parent=43 // pred_check
          %p280 = pneg %p279
        $region46: #{birdclef_forward.5} parent=43 // pred_check_branch
          %282 = sbr.rel (%p280) target = $region48
        $region47: #{birdclef_forward.5} parent=43 // pred_region
          %283 = vst [vmem:[#allocation2] sm:$0xff] 0.0
          %v284 = vlaneseq
          %vm285 = vcmp.ge.s32.totalorder %v284, 0
          %vm286 = vcmp.lt.s32.totalorder %v284, 256
          %vm287 = vmand %vm285, %vm286
          %288 = vst.msk [vmem:[#allocation2 + $0x8] sm:$0x3] %vm287, 0.0
        $region48: #{birdclef_forward.5} parent=43 // pred_fallthru
          _
        %v289 = vld [vmem:[%s275] sm:$0xf]
        %v290 = vld [vmem:[%s275 + $0x4] sm:$0xf]
        %v291 = vld [vmem:[%s275 + $0x8] sm:$0xf]
        %v292 = vld [vmem:[%s275 + $0xc] sm:$0xf]
        %v293 = vld [vmem:[%s275 + $0x10] sm:$0xf]
        %v294 = vld [vmem:[%s275 + $0x14] sm:$0xf]
        %v295 = vld [vmem:[%s275 + $0x18] sm:$0xf]
        %v296 = vld [vmem:[%s275 + $0x1c] sm:$0xf]
        %v297 = vld [vmem:[%s275 + $0x20] sm:$0xf]
        %v298 = vld [vmem:[%s275 + $0x24] sm:$0xf]
        %v299 = vld [vmem:[%s275 + $0x28] sm:$0xf]
        %v300 = vld [vmem:[%s275 + $0x2c] sm:$0xf]
        %v301 = vld [vmem:[%s275 + $0x30] sm:$0xf]
        %v302 = vld [vmem:[%s275 + $0x34] sm:$0xf]
        %v303 = vld [vmem:[%s275 + $0x38] sm:$0xf]
        %v304 = vld [vmem:[%s275 + $0x3c] sm:$0xf]
        %v305 = vld [vmem:[%s275 + $0x40] sm:$0xf]
        %v306 = vld [vmem:[%s275 + $0x44] sm:$0xf]
        %v307 = vld [vmem:[%s275 + $0x48] sm:$0xf]
        %v308 = vld [vmem:[%s275 + $0x4c] sm:$0xf]
        %v309 = vld [vmem:[%s275 + $0x50] sm:$0xf]
        %v310 = vld [vmem:[%s275 + $0x54] sm:$0xf]
        %v311 = vld [vmem:[%s275 + $0x58] sm:$0xf]
        %v312 = vld [vmem:[%s275 + $0x5c] sm:$0xf]
        %v313 = vld [vmem:[%s275 + $0x60] sm:$0xf]
        %v314 = vld [vmem:[%s275 + $0x64] sm:$0xf]
        %v315 = vld [vmem:[%s275 + $0x68] sm:$0xf]
        %v316 = vld [vmem:[%s275 + $0x6c] sm:$0xf]
        %v317 = vld [vmem:[%s275 + $0x70] sm:$0xf]
        %v318 = vld [vmem:[%s275 + $0x74] sm:$0xf]
        %v319 = vld [vmem:[%s275 + $0x78] sm:$0xf]
        %v320 = vld [vmem:[%s275 + $0x7c] sm:$0xf]
        %v321 = vld [vmem:[%s1] sm:$0xff]
        %v322 = vld [vmem:[%s1 + $0x8] sm:$0xff]
        %v323 = vld [vmem:[%s1 + $0x10] sm:$0xff]
        %v324 = vld [vmem:[%s1 + $0x18] sm:$0xff]
        %v325 = vld [vmem:[%s1 + $0x20] sm:$0xff]
        %v326 = vld [vmem:[%s1 + $0x28] sm:$0xff]
        %v327 = vld [vmem:[%s1 + $0x30] sm:$0xff]
        %v328 = vld [vmem:[%s1 + $0x38] sm:$0xff]
        %v329 = vld [vmem:[%s1 + $0x40] sm:$0xff]
        %v330 = vld [vmem:[%s1 + $0x48] sm:$0xff]
        %v331 = vld [vmem:[%s1 + $0x50] sm:$0xff]
        %v332 = vld [vmem:[%s1 + $0x58] sm:$0xff]
        %v333 = vld [vmem:[%s1 + $0x60] sm:$0xff]
        %v334 = vld [vmem:[%s1 + $0x68] sm:$0xff]
        %v335 = vld [vmem:[%s1 + $0x70] sm:$0xff]
        %v336 = vld [vmem:[%s1 + $0x78] sm:$0xff]
        %v337 = vld [vmem:[%s1 + $0x80] sm:$0xff]
        %v338 = vld [vmem:[%s1 + $0x88] sm:$0xff]
        %v339 = vld [vmem:[%s1 + $0x90] sm:$0xff]
        %v340 = vld [vmem:[%s1 + $0x98] sm:$0xff]
        %v341 = vld [vmem:[%s1 + $0xa0] sm:$0xff]
        %v342 = vld [vmem:[%s1 + $0xa8] sm:$0xff]
        %v343 = vld [vmem:[%s1 + $0xb0] sm:$0xff]
        %v344 = vld [vmem:[%s1 + $0xb8] sm:$0xff]
        %v345 = vld [vmem:[%s1 + $0xc0] sm:$0xff]
        %v346 = vld [vmem:[%s1 + $0xc8] sm:$0xff]
        %v347 = vld [vmem:[%s1 + $0xd0] sm:$0xff]
        %v348 = vld [vmem:[%s1 + $0xd8] sm:$0xff]
        %v349 = vld [vmem:[%s1 + $0xe0] sm:$0xff]
        %v350 = vld [vmem:[%s1 + $0xe8] sm:$0xff]
        %v351 = vld [vmem:[%s1 + $0xf0] sm:$0xff]
        %v352 = vld [vmem:[%s1 + $0xf8] sm:$0xff]
        %v353 = vld [vmem:[%s1 + $0x100] sm:$0xff]
        %v354 = vld [vmem:[%s1 + $0x108] sm:$0xff]
        %v355 = vld [vmem:[%s1 + $0x110] sm:$0xff]
        %v356 = vld [vmem:[%s1 + $0x118] sm:$0xff]
        %v357 = vld [vmem:[%s1 + $0x120] sm:$0xff]
        %v358 = vld [vmem:[%s1 + $0x128] sm:$0xff]
        %v359 = vld [vmem:[%s1 + $0x130] sm:$0xff]
        %v360 = vld [vmem:[%s1 + $0x138] sm:$0xff]
        %v361 = vld [vmem:[%s1 + $0x140] sm:$0xff]
        %v362 = vld [vmem:[%s1 + $0x148] sm:$0xff]
        %v363 = vld [vmem:[%s1 + $0x150] sm:$0xff]
        %v364 = vld [vmem:[%s1 + $0x158] sm:$0xff]
        %v365 = vld [vmem:[%s1 + $0x160] sm:$0xff]
        %v366 = vld [vmem:[%s1 + $0x168] sm:$0xff]
        %v367 = vld [vmem:[%s1 + $0x170] sm:$0xff]
        %v368 = vld [vmem:[%s1 + $0x178] sm:$0xff]
        %v369 = vld [vmem:[%s1 + $0x180] sm:$0xff]
        %v370 = vld [vmem:[%s1 + $0x188] sm:$0xff]
        %v371 = vld [vmem:[%s1 + $0x190] sm:$0xff]
        %v372 = vld [vmem:[%s1 + $0x198] sm:$0xff]
        %v373 = vld [vmem:[%s1 + $0x1a0] sm:$0xff]
        %v374 = vld [vmem:[%s1 + $0x1a8] sm:$0xff]
        %v375 = vld [vmem:[%s1 + $0x1b0] sm:$0xff]
        %v376 = vld [vmem:[%s1 + $0x1b8] sm:$0xff]
        %v377 = vld [vmem:[%s1 + $0x1c0] sm:$0xff]
        %v378 = vld [vmem:[%s1 + $0x1c8] sm:$0xff]
        %v379 = vld [vmem:[%s1 + $0x1d0] sm:$0xff]
        %v380 = vld [vmem:[%s1 + $0x1d8] sm:$0xff]
        %v381 = vld [vmem:[%s1 + $0x1e0] sm:$0xff]
        %v382 = vld [vmem:[%s1 + $0x1e8] sm:$0xff]
        %v383 = vld [vmem:[%s1 + $0x1f0] sm:$0xff]
        %v384 = vld [vmem:[%s1 + $0x1f8] sm:$0xff]
        %v385 = vld [vmem:[%s1 + $0x200] sm:$0xff]
        %v386 = vld [vmem:[%s1 + $0x208] sm:$0xff]
        %v387 = vld [vmem:[%s1 + $0x210] sm:$0xff]
        %v388 = vld [vmem:[%s1 + $0x218] sm:$0xff]
        %v389 = vld [vmem:[%s1 + $0x220] sm:$0xff]
        %v390 = vld [vmem:[%s1 + $0x228] sm:$0xff]
        %v391 = vld [vmem:[%s1 + $0x230] sm:$0xff]
        %v392 = vld [vmem:[%s1 + $0x238] sm:$0xff]
        %v393 = vld [vmem:[%s1 + $0x240] sm:$0xff]
        %v394 = vld [vmem:[%s1 + $0x248] sm:$0xff]
        %v395 = vld [vmem:[%s1 + $0x250] sm:$0xff]
        %v396 = vld [vmem:[%s1 + $0x258] sm:$0xff]
        %v397 = vld [vmem:[%s1 + $0x260] sm:$0xff]
        %v398 = vld [vmem:[%s1 + $0x268] sm:$0xff]
        %v399 = vld [vmem:[%s1 + $0x270] sm:$0xff]
        %v400 = vld [vmem:[%s1 + $0x278] sm:$0xff]
        %v433 = vunpack.c.l.b16 %v289
        %v434 = vunpack.c.l.b16 %v290
        %v435 = vunpack.c.l.b16 %v291
        %v436 = vunpack.c.l.b16 %v292
        %v437 = vunpack.c.l.b16 %v293
        %v438 = vunpack.c.l.b16 %v294
        %v439 = vunpack.c.l.b16 %v295
        %v440 = vunpack.c.l.b16 %v296
        %v441 = vunpack.c.l.b16 %v297
        %v442 = vunpack.c.l.b16 %v298
        %v443 = vunpack.c.l.b16 %v299
        %v444 = vunpack.c.l.b16 %v300
        %v445 = vunpack.c.l.b16 %v301
        %v446 = vunpack.c.l.b16 %v302
        %v447 = vunpack.c.l.b16 %v303
        %v448 = vunpack.c.l.b16 %v304
        %v449 = vunpack.c.l.b16 %v305
        %v450 = vunpack.c.l.b16 %v306
        %v451 = vunpack.c.l.b16 %v307
        %v452 = vunpack.c.l.b16 %v308
        %v453 = vunpack.c.l.b16 %v309
        %v454 = vunpack.c.l.b16 %v310
        %v455 = vunpack.c.l.b16 %v311
        %v456 = vunpack.c.l.b16 %v312
        %v457 = vunpack.c.l.b16 %v313
        %v458 = vunpack.c.l.b16 %v314
        %v459 = vunpack.c.l.b16 %v315
        %v460 = vunpack.c.l.b16 %v316
        %v461 = vunpack.c.l.b16 %v317
        %v462 = vunpack.c.l.b16 %v318
        %v463 = vunpack.c.l.b16 %v319
        %v464 = vunpack.c.l.b16 %v320
        %v465 = vpack.c.b16 %v434, %v433
        %v466 = vpack.c.b16 %v436, %v435
        %v467 = vpack.c.b16 %v438, %v437
        %v468 = vpack.c.b16 %v440, %v439
        %v469 = vpack.c.b16 %v442, %v441
        %v470 = vpack.c.b16 %v444, %v443
        %v471 = vpack.c.b16 %v446, %v445
        %v472 = vpack.c.b16 %v448, %v447
        %v473 = vpack.c.b16 %v450, %v449
        %v474 = vpack.c.b16 %v452, %v451
        %v475 = vpack.c.b16 %v454, %v453
        %v476 = vpack.c.b16 %v456, %v455
        %v477 = vpack.c.b16 %v458, %v457
        %v478 = vpack.c.b16 %v460, %v459
        %v479 = vpack.c.b16 %v462, %v461
        %v480 = vpack.c.b16 %v464, %v463
        %v577 = vunpack.c.l.b16 %v321
        %v578 = vunpack.c.h.b16 %v321
        %v579 = vunpack.c.l.b16 %v322
        %v580 = vunpack.c.h.b16 %v322
        %v581 = vunpack.c.l.b16 %v323
        %v582 = vunpack.c.h.b16 %v323
        %v583 = vunpack.c.l.b16 %v324
        %v584 = vunpack.c.h.b16 %v324
        %v585 = vunpack.c.l.b16 %v325
        %v586 = vunpack.c.h.b16 %v325
        %v587 = vunpack.c.l.b16 %v326
        %v588 = vunpack.c.h.b16 %v326
        %v589 = vunpack.c.l.b16 %v327
        %v590 = vunpack.c.h.b16 %v327
        %v591 = vunpack.c.l.b16 %v328
        %v592 = vunpack.c.h.b16 %v328
        %v593 = vunpack.c.l.b16 %v329
        %v594 = vunpack.c.h.b16 %v329
        %v595 = vunpack.c.l.b16 %v330
        %v596 = vunpack.c.h.b16 %v330
        %v597 = vunpack.c.l.b16 %v331
        %v598 = vunpack.c.h.b16 %v331
        %v599 = vunpack.c.l.b16 %v332
        %v600 = vunpack.c.h.b16 %v332
        %v601 = vunpack.c.l.b16 %v333
        %v602 = vunpack.c.h.b16 %v333
        %v603 = vunpack.c.l.b16 %v334
        %v604 = vunpack.c.h.b16 %v334
        %v605 = vunpack.c.l.b16 %v335
        %v606 = vunpack.c.h.b16 %v335
        %v607 = vunpack.c.l.b16 %v336
        %v608 = vunpack.c.h.b16 %v336
        %v609 = vunpack.c.l.b16 %v337
        %v610 = vunpack.c.h.b16 %v337
        %v611 = vunpack.c.l.b16 %v338
        %v612 = vunpack.c.h.b16 %v338
        %v613 = vunpack.c.l.b16 %v339
        %v614 = vunpack.c.h.b16 %v339
        %v615 = vunpack.c.l.b16 %v340
        %v616 = vunpack.c.h.b16 %v340
        %v617 = vunpack.c.l.b16 %v341
        %v618 = vunpack.c.h.b16 %v341
        %v619 = vunpack.c.l.b16 %v342
        %v620 = vunpack.c.h.b16 %v342
        %v621 = vunpack.c.l.b16 %v343
        %v622 = vunpack.c.h.b16 %v343
        %v623 = vunpack.c.l.b16 %v344
        %v624 = vunpack.c.h.b16 %v344
        %v625 = vunpack.c.l.b16 %v345
        %v626 = vunpack.c.h.b16 %v345
        %v627 = vunpack.c.l.b16 %v346
        %v628 = vunpack.c.h.b16 %v346
        %v629 = vunpack.c.l.b16 %v347
        %v630 = vunpack.c.h.b16 %v347
        %v631 = vunpack.c.l.b16 %v348
        %v632 = vunpack.c.h.b16 %v348
        %v633 = vunpack.c.l.b16 %v349
        %v634 = vunpack.c.h.b16 %v349
        %v635 = vunpack.c.l.b16 %v350
        %v636 = vunpack.c.h.b16 %v350
        %v637 = vunpack.c.l.b16 %v351
        %v638 = vunpack.c.h.b16 %v351
        %v639 = vunpack.c.l.b16 %v352
        %v640 = vunpack.c.h.b16 %v352
        %v641 = vunpack.c.l.b16 %v353
        %v642 = vunpack.c.h.b16 %v353
        %v643 = vunpack.c.l.b16 %v354
        %v644 = vunpack.c.h.b16 %v354
        %v645 = vunpack.c.l.b16 %v355
        %v646 = vunpack.c.h.b16 %v355
        %v647 = vunpack.c.l.b16 %v356
        %v648 = vunpack.c.h.b16 %v356
        %v649 = vunpack.c.l.b16 %v357
        %v650 = vunpack.c.h.b16 %v357
        %v651 = vunpack.c.l.b16 %v358
        %v652 = vunpack.c.h.b16 %v358
        %v653 = vunpack.c.l.b16 %v359
        %v654 = vunpack.c.h.b16 %v359
        %v655 = vunpack.c.l.b16 %v360
        %v656 = vunpack.c.h.b16 %v360
        %v657 = vunpack.c.l.b16 %v361
        %v658 = vunpack.c.h.b16 %v361
        %v659 = vunpack.c.l.b16 %v362
        %v660 = vunpack.c.h.b16 %v362
        %v661 = vunpack.c.l.b16 %v363
        %v662 = vunpack.c.h.b16 %v363
        %v663 = vunpack.c.l.b16 %v364
        %v664 = vunpack.c.h.b16 %v364
        %v665 = vunpack.c.l.b16 %v365
        %v666 = vunpack.c.h.b16 %v365
        %v667 = vunpack.c.l.b16 %v366
        %v668 = vunpack.c.h.b16 %v366
        %v669 = vunpack.c.l.b16 %v367
        %v670 = vunpack.c.h.b16 %v367
        %v671 = vunpack.c.l.b16 %v368
        %v672 = vunpack.c.h.b16 %v368
        %v673 = vunpack.c.l.b16 %v369
        %v674 = vunpack.c.h.b16 %v369
        %v675 = vunpack.c.l.b16 %v370
        %v676 = vunpack.c.h.b16 %v370
        %v677 = vunpack.c.l.b16 %v371
        %v678 = vunpack.c.h.b16 %v371
        %v679 = vunpack.c.l.b16 %v372
        %v680 = vunpack.c.h.b16 %v372
        %v681 = vunpack.c.l.b16 %v373
        %v682 = vunpack.c.h.b16 %v373
        %v683 = vunpack.c.l.b16 %v374
        %v684 = vunpack.c.h.b16 %v374
        %v685 = vunpack.c.l.b16 %v375
        %v686 = vunpack.c.h.b16 %v375
        %v687 = vunpack.c.l.b16 %v376
        %v688 = vunpack.c.h.b16 %v376
        %v689 = vunpack.c.l.b16 %v377
        %v690 = vunpack.c.h.b16 %v377
        %v691 = vunpack.c.l.b16 %v378
        %v692 = vunpack.c.h.b16 %v378
        %v693 = vunpack.c.l.b16 %v379
        %v694 = vunpack.c.h.b16 %v379
        %v695 = vunpack.c.l.b16 %v380
        %v696 = vunpack.c.h.b16 %v380
        %v697 = vunpack.c.l.b16 %v381
        %v698 = vunpack.c.h.b16 %v381
        %v699 = vunpack.c.l.b16 %v382
        %v700 = vunpack.c.h.b16 %v382
        %v701 = vunpack.c.l.b16 %v383
        %v702 = vunpack.c.h.b16 %v383
        %v703 = vunpack.c.l.b16 %v384
        %v704 = vunpack.c.h.b16 %v384
        %v705 = vunpack.c.l.b16 %v385
        %v706 = vunpack.c.h.b16 %v385
        %v707 = vunpack.c.l.b16 %v386
        %v708 = vunpack.c.h.b16 %v386
        %v709 = vunpack.c.l.b16 %v387
        %v710 = vunpack.c.h.b16 %v387
        %v711 = vunpack.c.l.b16 %v388
        %v712 = vunpack.c.h.b16 %v388
        %v713 = vunpack.c.l.b16 %v389
        %v714 = vunpack.c.h.b16 %v389
        %v715 = vunpack.c.l.b16 %v390
        %v716 = vunpack.c.h.b16 %v390
        %v717 = vunpack.c.l.b16 %v391
        %v718 = vunpack.c.h.b16 %v391
        %v719 = vunpack.c.l.b16 %v392
        %v720 = vunpack.c.h.b16 %v392
        %v721 = vunpack.c.l.b16 %v393
        %v722 = vunpack.c.h.b16 %v393
        %v723 = vunpack.c.l.b16 %v394
        %v724 = vunpack.c.h.b16 %v394
        %v725 = vunpack.c.l.b16 %v395
        %v726 = vunpack.c.h.b16 %v395
        %v727 = vunpack.c.l.b16 %v396
        %v728 = vunpack.c.h.b16 %v396
        %v729 = vunpack.c.l.b16 %v397
        %v730 = vunpack.c.h.b16 %v397
        %v731 = vunpack.c.l.b16 %v398
        %v732 = vunpack.c.h.b16 %v398
        %v733 = vunpack.c.l.b16 %v399
        %v734 = vunpack.c.h.b16 %v399
        %v735 = vunpack.c.l.b16 %v400
        %v736 = vunpack.c.h.b16 %v400
        %v737 = vpack.c.b16 %v587, %v577
        %v738 = vpack.c.b16 %v588, %v578
        %v739 = vpack.c.b16 %v589, %v579
        %v740 = vpack.c.b16 %v590, %v580
        %v741 = vpack.c.b16 %v591, %v581
        %v742 = vpack.c.b16 %v592, %v582
        %v743 = vpack.c.b16 %v593, %v583
        %v744 = vpack.c.b16 %v594, %v584
        %v745 = vpack.c.b16 %v595, %v585
        %v746 = vpack.c.b16 %v596, %v586
        %v747 = vpack.c.b16 %v607, %v597
        %v748 = vpack.c.b16 %v608, %v598
        %v749 = vpack.c.b16 %v609, %v599
        %v750 = vpack.c.b16 %v610, %v600
        %v751 = vpack.c.b16 %v611, %v601
        %v752 = vpack.c.b16 %v612, %v602
        %v753 = vpack.c.b16 %v613, %v603
        %v754 = vpack.c.b16 %v614, %v604
        %v755 = vpack.c.b16 %v615, %v605
        %v756 = vpack.c.b16 %v616, %v606
        %v757 = vpack.c.b16 %v627, %v617
        %v758 = vpack.c.b16 %v628, %v618
        %v759 = vpack.c.b16 %v629, %v619
        %v760 = vpack.c.b16 %v630, %v620
        %v761 = vpack.c.b16 %v631, %v621
        %v762 = vpack.c.b16 %v632, %v622
        %v763 = vpack.c.b16 %v633, %v623
        %v764 = vpack.c.b16 %v634, %v624
        %v765 = vpack.c.b16 %v635, %v625
        %v766 = vpack.c.b16 %v636, %v626
        %v767 = vpack.c.b16 %v647, %v637
        %v768 = vpack.c.b16 %v648, %v638
        %v769 = vpack.c.b16 %v649, %v639
        %v770 = vpack.c.b16 %v650, %v640
        %v771 = vpack.c.b16 %v651, %v641
        %v772 = vpack.c.b16 %v652, %v642
        %v773 = vpack.c.b16 %v653, %v643
        %v774 = vpack.c.b16 %v654, %v644
        %v775 = vpack.c.b16 %v655, %v645
        %v776 = vpack.c.b16 %v656, %v646
        %v777 = vpack.c.b16 %v667, %v657
        %v778 = vpack.c.b16 %v668, %v658
        %v779 = vpack.c.b16 %v669, %v659
        %v780 = vpack.c.b16 %v670, %v660
        %v781 = vpack.c.b16 %v671, %v661
        %v782 = vpack.c.b16 %v672, %v662
        %v783 = vpack.c.b16 %v673, %v663
        %v784 = vpack.c.b16 %v674, %v664
        %v785 = vpack.c.b16 %v675, %v665
        %v786 = vpack.c.b16 %v676, %v666
        %v787 = vpack.c.b16 %v687, %v677
        %v788 = vpack.c.b16 %v688, %v678
        %v789 = vpack.c.b16 %v689, %v679
        %v790 = vpack.c.b16 %v690, %v680
        %v791 = vpack.c.b16 %v691, %v681
        %v792 = vpack.c.b16 %v692, %v682
        %v793 = vpack.c.b16 %v693, %v683
        %v794 = vpack.c.b16 %v694, %v684
        %v795 = vpack.c.b16 %v695, %v685
        %v796 = vpack.c.b16 %v696, %v686
        %v797 = vpack.c.b16 %v707, %v697
        %v798 = vpack.c.b16 %v708, %v698
        %v799 = vpack.c.b16 %v709, %v699
        %v800 = vpack.c.b16 %v710, %v700
        %v801 = vpack.c.b16 %v711, %v701
        %v802 = vpack.c.b16 %v712, %v702
        %v803 = vpack.c.b16 %v713, %v703
        %v804 = vpack.c.b16 %v714, %v704
        %v805 = vpack.c.b16 %v715, %v705
        %v806 = vpack.c.b16 %v716, %v706
        %v807 = vpack.c.b16 %v727, %v717
        %v808 = vpack.c.b16 %v728, %v718
        %v809 = vpack.c.b16 %v729, %v719
        %v810 = vpack.c.b16 %v730, %v720
        %v811 = vpack.c.b16 %v731, %v721
        %v812 = vpack.c.b16 %v732, %v722
        %v813 = vpack.c.b16 %v733, %v723
        %v814 = vpack.c.b16 %v734, %v724
        %v815 = vpack.c.b16 %v735, %v725
        %v816 = vpack.c.b16 %v736, %v726
        %897 = vmatprep.subr.bf16.mxu0 %v738
        %898 = vmatpush1.bf16.msra.mxu0 %v737
        %899 = vmatprep.subr.bf16.mxu0 %v748
        %900 = vmatpush1.bf16.msra.mxu0 %v747
        %901 = vmatprep.subr.bf16.mxu0 %v758
        %902 = vmatpush1.bf16.msra.mxu0 %v757
        %903 = vmatprep.subr.bf16.mxu0 %v768
        %904 = vmatpush1.bf16.msra.mxu0 %v767
        %905 = vmatprep.subr.bf16.mxu0 %v778
        %906 = vmatpush1.bf16.msra.mxu0 %v777
        %907 = vmatprep.subr.bf16.mxu0 %v788
        %908 = vmatpush1.bf16.msra.mxu0 %v787
        %909 = vmatprep.subr.bf16.mxu0 %v798
        %910 = vmatpush1.bf16.msra.mxu0 %v797
        %911 = vmatprep.subr.bf16.mxu0 %v808
        %912 = vmatpush1.bf16.msra.mxu0 %v807
        %913 = vmatprep.subr.bf16.mxu0 0
        %914 = vmatpush1.bf16.msra.mxu0 0
        %915 = vmatprep.subr.bf16.mxu0 0
        %916 = vmatpush1.bf16.msra.mxu0 0
        %917 = vmatprep.subr.bf16.mxu0 0
        %918 = vmatpush1.bf16.msra.mxu0 0
        %919 = vmatprep.subr.bf16.mxu0 0
        %920 = vmatpush1.bf16.msra.mxu0 0
        %921 = vmatprep.subr.bf16.mxu0 0
        %922 = vmatpush1.bf16.msra.mxu0 0
        %923 = vmatprep.subr.bf16.mxu0 0
        %924 = vmatpush1.bf16.msra.mxu0 0
        %925 = vmatprep.subr.bf16.mxu0 0
        %926 = vmatpush1.bf16.msra.mxu0 0
        %927 = vmatprep.subr.bf16.mxu0 0
        %928 = vmatpush1.bf16.msra.mxu0 0
        %929 = vmatprep.mubr.bf16.mxu0 0
        %930 = vmatmul.mubr.bf16.gmra.mrb[0].mxu0 %v465
        %v931 = vpop.f32.mrb[0].mxu0
        %v932 = vadd.f32 0.0, %v931
        %v933 = vpop.f32.mrb[0].mxu0
        %v934 = vadd.f32 0.0, %v933
        %v935 = vpop.f32.mrb[0].mxu0
        %v936 = vadd.f32 0.0, %v935
        %v937 = vpop.f32.mrb[0].mxu0
        %v938 = vadd.f32 0.0, %v937
        %939 = vmatprep.mubr.bf16.mxu0 0
        %940 = vmatmul.mubr.bf16.gmra.mrb[0].mxu0 %v466
        %v941 = vpop.f32.mrb[0].mxu0
        %v942 = vadd.f32 0.0, %v941
        %v943 = vpop.f32.mrb[0].mxu0
        %v944 = vadd.f32 0.0, %v943
        %v945 = vpop.f32.mrb[0].mxu0
        %v946 = vadd.f32 0.0, %v945
        %v947 = vpop.f32.mrb[0].mxu0
        %v948 = vadd.f32 0.0, %v947
        %949 = vmatprep.mubr.bf16.mxu0 0
        %950 = vmatmul.mubr.bf16.gmra.mrb[0].mxu0 %v467
        %v951 = vpop.f32.mrb[0].mxu0
        %v952 = vadd.f32 0.0, %v951
        %v953 = vpop.f32.mrb[0].mxu0
        %v954 = vadd.f32 0.0, %v953
        %v955 = vpop.f32.mrb[0].mxu0
        %v956 = vadd.f32 0.0, %v955
        %v957 = vpop.f32.mrb[0].mxu0
        %v958 = vadd.f32 0.0, %v957
        %959 = vmatprep.mubr.bf16.mxu0 0
        %960 = vmatmul.mubr.bf16.gmra.mrb[0].mxu0 %v468
        %v961 = vpop.f32.mrb[0].mxu0
        %v962 = vadd.f32 0.0, %v961
        %v963 = vpop.f32.mrb[0].mxu0
        %v964 = vadd.f32 0.0, %v963
        %v965 = vpop.f32.mrb[0].mxu0
        %v966 = vadd.f32 0.0, %v965
        %v967 = vpop.f32.mrb[0].mxu0
        %v968 = vadd.f32 0.0, %v967
        %969 = vmatprep.mubr.bf16.mxu0 0
        %970 = vmatmul.mubr.bf16.gmra.mrb[0].mxu0 %v469
        %v971 = vpop.f32.mrb[0].mxu0
        %v972 = vadd.f32 0.0, %v971
        %v973 = vpop.f32.mrb[0].mxu0
        %v974 = vadd.f32 0.0, %v973
        %v975 = vpop.f32.mrb[0].mxu0
        %v976 = vadd.f32 0.0, %v975
        %v977 = vpop.f32.mrb[0].mxu0
        %v978 = vadd.f32 0.0, %v977
        %979 = vmatprep.mubr.bf16.mxu0 0
        %980 = vmatmul.mubr.bf16.gmra.mrb[0].mxu0 %v470
        %v981 = vpop.f32.mrb[0].mxu0
        %v982 = vadd.f32 0.0, %v981
        %v983 = vpop.f32.mrb[0].mxu0
        %v984 = vadd.f32 0.0, %v983
        %v985 = vpop.f32.mrb[0].mxu0
        %v986 = vadd.f32 0.0, %v985
        %v987 = vpop.f32.mrb[0].mxu0
        %v988 = vadd.f32 0.0, %v987
        %989 = vmatprep.mubr.bf16.mxu0 0
        %990 = vmatmul.mubr.bf16.gmra.mrb[0].mxu0 %v471
        %v991 = vpop.f32.mrb[0].mxu0
        %v992 = vadd.f32 0.0, %v991
        %v993 = vpop.f32.mrb[0].mxu0
        %v994 = vadd.f32 0.0, %v993
        %v995 = vpop.f32.mrb[0].mxu0
        %v996 = vadd.f32 0.0, %v995
        %v997 = vpop.f32.mrb[0].mxu0
        %v998 = vadd.f32 0.0, %v997
        %999 = vmatprep.mubr.bf16.mxu0 0
        %1000 = vmatmul.mubr.bf16.gmra.mrb[0].mxu0 %v472
        %v1001 = vpop.f32.mrb[0].mxu0
        %v1002 = vadd.f32 0.0, %v1001
        %v1003 = vpop.f32.mrb[0].mxu0
        %v1004 = vadd.f32 0.0, %v1003
        %v1005 = vpop.f32.mrb[0].mxu0
        %v1006 = vadd.f32 0.0, %v1005
        %v1007 = vpop.f32.mrb[0].mxu0
        %v1008 = vadd.f32 0.0, %v1007
        %1009 = vmatprep.mubr.bf16.mxu0 0
        %1010 = vmatmul.mubr.bf16.gmra.mrb[0].mxu0 %v473
        %v1011 = vpop.f32.mrb[0].mxu0
        %v1012 = vadd.f32 0.0, %v1011
        %v1013 = vpop.f32.mrb[0].mxu0
        %v1014 = vadd.f32 0.0, %v1013
        %v1015 = vpop.f32.mrb[0].mxu0
        %v1016 = vadd.f32 0.0, %v1015
        %v1017 = vpop.f32.mrb[0].mxu0
        %v1018 = vadd.f32 0.0, %v1017
        %1019 = vmatprep.mubr.bf16.mxu0 0
        %1020 = vmatmul.mubr.bf16.gmra.mrb[0].mxu0 %v474
        %v1021 = vpop.f32.mrb[0].mxu0
        %v1022 = vadd.f32 0.0, %v1021
        %v1023 = vpop.f32.mrb[0].mxu0
        %v1024 = vadd.f32 0.0, %v1023
        %v1025 = vpop.f32.mrb[0].mxu0
        %v1026 = vadd.f32 0.0, %v1025
        %v1027 = vpop.f32.mrb[0].mxu0
        %v1028 = vadd.f32 0.0, %v1027
        %1029 = vmatprep.mubr.bf16.mxu0 0
        %1030 = vmatmul.mubr.bf16.gmra.mrb[0].mxu0 %v475
        %v1031 = vpop.f32.mrb[0].mxu0
        %v1032 = vadd.f32 0.0, %v1031
        %v1033 = vpop.f32.mrb[0].mxu0
        %v1034 = vadd.f32 0.0, %v1033
        %v1035 = vpop.f32.mrb[0].mxu0
        %v1036 = vadd.f32 0.0, %v1035
        %v1037 = vpop.f32.mrb[0].mxu0
        %v1038 = vadd.f32 0.0, %v1037
        %1039 = vmatprep.mubr.bf16.mxu0 0
        %1040 = vmatmul.mubr.bf16.gmra.mrb[0].mxu0 %v476
        %v1041 = vpop.f32.mrb[0].mxu0
        %v1042 = vadd.f32 0.0, %v1041
        %v1043 = vpop.f32.mrb[0].mxu0
        %v1044 = vadd.f32 0.0, %v1043
        %v1045 = vpop.f32.mrb[0].mxu0
        %v1046 = vadd.f32 0.0, %v1045
        %v1047 = vpop.f32.mrb[0].mxu0
        %v1048 = vadd.f32 0.0, %v1047
        %1049 = vmatprep.mubr.bf16.mxu0 0
        %1050 = vmatmul.mubr.bf16.gmra.mrb[0].mxu0 %v477
        %v1051 = vpop.f32.mrb[0].mxu0
        %v1052 = vadd.f32 0.0, %v1051
        %v1053 = vpop.f32.mrb[0].mxu0
        %v1054 = vadd.f32 0.0, %v1053
        %v1055 = vpop.f32.mrb[0].mxu0
        %v1056 = vadd.f32 0.0, %v1055
        %v1057 = vpop.f32.mrb[0].mxu0
        %v1058 = vadd.f32 0.0, %v1057
        %1059 = vmatprep.mubr.bf16.mxu0 0
        %1060 = vmatmul.mubr.bf16.gmra.mrb[0].mxu0 %v478
        %v1061 = vpop.f32.mrb[0].mxu0
        %v1062 = vadd.f32 0.0, %v1061
        %v1063 = vpop.f32.mrb[0].mxu0
        %v1064 = vadd.f32 0.0, %v1063
        %v1065 = vpop.f32.mrb[0].mxu0
        %v1066 = vadd.f32 0.0, %v1065
        %v1067 = vpop.f32.mrb[0].mxu0
        %v1068 = vadd.f32 0.0, %v1067
        %1069 = vmatprep.mubr.bf16.mxu0 0
        %1070 = vmatmul.mubr.bf16.gmra.mrb[0].mxu0 %v479
        %v1071 = vpop.f32.mrb[0].mxu0
        %v1072 = vadd.f32 0.0, %v1071
        %v1073 = vpop.f32.mrb[0].mxu0
        %v1074 = vadd.f32 0.0, %v1073
        %v1075 = vpop.f32.mrb[0].mxu0
        %v1076 = vadd.f32 0.0, %v1075
        %v1077 = vpop.f32.mrb[0].mxu0
        %v1078 = vadd.f32 0.0, %v1077
        %1079 = vmatprep.mubr.bf16.mxu0 0
        %1080 = vmatmul.mubr.bf16.gmra.mrb[0].mxu0 %v480
        %v1081 = vpop.f32.mrb[0].mxu0
        %v1082 = vadd.f32 0.0, %v1081
        %v1083 = vpop.f32.mrb[0].mxu0
        %v1084 = vadd.f32 0.0, %v1083
        %v1085 = vpop.f32.mrb[0].mxu0
        %v1086 = vadd.f32 0.0, %v1085
        %v1087 = vpop.f32.mrb[0].mxu0
        %v1088 = vadd.f32 0.0, %v1087
        %1089 = vdwg.mxu0
        %1090 = vmatprep.subr.bf16.mxu0 %v740
        %1091 = vmatpush1.bf16.msra.mxu0 %v739
        %1092 = vmatprep.subr.bf16.mxu0 %v750
        %1093 = vmatpush1.bf16.msra.mxu0 %v749
        %1094 = vmatprep.subr.bf16.mxu0 %v760
        %1095 = vmatpush1.bf16.msra.mxu0 %v759
        %1096 = vmatprep.subr.bf16.mxu0 %v770
        %1097 = vmatpush1.bf16.msra.mxu0 %v769
        %1098 = vmatprep.subr.bf16.mxu0 %v780
        %1099 = vmatpush1.bf16.msra.mxu0 %v779
        %1100 = vmatprep.subr.bf16.mxu0 %v790
        %1101 = vmatpush1.bf16.msra.mxu0 %v789
        %1102 = vmatprep.subr.bf16.mxu0 %v800
        %1103 = vmatpush1.bf16.msra.mxu0 %v799
        %1104 = vmatprep.subr.bf16.mxu0 %v810
        %1105 = vmatpush1.bf16.msra.mxu0 %v809
        %1106 = vmatprep.subr.bf16.mxu0 0
        %1107 = vmatpush1.bf16.msra.mxu0 0
        %1108 = vmatprep.subr.bf16.mxu0 0
        %1109 = vmatpush1.bf16.msra.mxu0 0
        %1110 = vmatprep.subr.bf16.mxu0 0
        %1111 = vmatpush1.bf16.msra.mxu0 0
        %1112 = vmatprep.subr.bf16.mxu0 0
        %1113 = vmatpush1.bf16.msra.mxu0 0
        %1114 = vmatprep.subr.bf16.mxu0 0
        %1115 = vmatpush1.bf16.msra.mxu0 0
        %1116 = vmatprep.subr.bf16.mxu0 0
        %1117 = vmatpush1.bf16.msra.mxu0 0
        %1118 = vmatprep.subr.bf16.mxu0 0
        %1119 = vmatpush1.bf16.msra.mxu0 0
        %1120 = vmatprep.subr.bf16.mxu0 0
        %1121 = vmatpush1.bf16.msra.mxu0 0
        %1122 = vmatprep.mubr.bf16.mxu0 0
        %1123 = vmatmul.mubr.bf16.gmra.mrb[0].mxu0 %v465
        %v1124 = vpop.f32.mrb[0].mxu0
        %v1125 = vadd.f32 0.0, %v1124
        %v1126 = vpop.f32.mrb[0].mxu0
        %v1127 = vadd.f32 0.0, %v1126
        %v1128 = vpop.f32.mrb[0].mxu0
        %v1129 = vadd.f32 0.0, %v1128
        %v1130 = vpop.f32.mrb[0].mxu0
        %v1131 = vadd.f32 0.0, %v1130
        %1132 = vmatprep.mubr.bf16.mxu0 0
        %1133 = vmatmul.mubr.bf16.gmra.mrb[0].mxu0 %v466
        %v1134 = vpop.f32.mrb[0].mxu0
        %v1135 = vadd.f32 0.0, %v1134
        %v1136 = vpop.f32.mrb[0].mxu0
        %v1137 = vadd.f32 0.0, %v1136
        %v1138 = vpop.f32.mrb[0].mxu0
        %v1139 = vadd.f32 0.0, %v1138
        %v1140 = vpop.f32.mrb[0].mxu0
        %v1141 = vadd.f32 0.0, %v1140
        %1142 = vmatprep.mubr.bf16.mxu0 0
        %1143 = vmatmul.mubr.bf16.gmra.mrb[0].mxu0 %v467
        %v1144 = vpop.f32.mrb[0].mxu0
        %v1145 = vadd.f32 0.0, %v1144
        %v1146 = vpop.f32.mrb[0].mxu0
        %v1147 = vadd.f32 0.0, %v1146
        %v1148 = vpop.f32.mrb[0].mxu0
        %v1149 = vadd.f32 0.0, %v1148
        %v1150 = vpop.f32.mrb[0].mxu0
        %v1151 = vadd.f32 0.0, %v1150
        %1152 = vmatprep.mubr.bf16.mxu0 0
        %1153 = vmatmul.mubr.bf16.gmra.mrb[0].mxu0 %v468
        %v1154 = vpop.f32.mrb[0].mxu0
        %v1155 = vadd.f32 0.0, %v1154
        %v1156 = vpop.f32.mrb[0].mxu0
        %v1157 = vadd.f32 0.0, %v1156
        %v1158 = vpop.f32.mrb[0].mxu0
        %v1159 = vadd.f32 0.0, %v1158
        %v1160 = vpop.f32.mrb[0].mxu0
        %v1161 = vadd.f32 0.0, %v1160
        %1162 = vmatprep.mubr.bf16.mxu0 0
        %1163 = vmatmul.mubr.bf16.gmra.mrb[0].mxu0 %v469
        %v1164 = vpop.f32.mrb[0].mxu0
        %v1165 = vadd.f32 0.0, %v1164
        %v1166 = vpop.f32.mrb[0].mxu0
        %v1167 = vadd.f32 0.0, %v1166
        %v1168 = vpop.f32.mrb[0].mxu0
        %v1169 = vadd.f32 0.0, %v1168
        %v1170 = vpop.f32.mrb[0].mxu0
        %v1171 = vadd.f32 0.0, %v1170
        %1172 = vmatprep.mubr.bf16.mxu0 0
        %1173 = vmatmul.mubr.bf16.gmra.mrb[0].mxu0 %v470
        %v1174 = vpop.f32.mrb[0].mxu0
        %v1175 = vadd.f32 0.0, %v1174
        %v1176 = vpop.f32.mrb[0].mxu0
        %v1177 = vadd.f32 0.0, %v1176
        %v1178 = vpop.f32.mrb[0].mxu0
        %v1179 = vadd.f32 0.0, %v1178
        %v1180 = vpop.f32.mrb[0].mxu0
        %v1181 = vadd.f32 0.0, %v1180
        %1182 = vmatprep.mubr.bf16.mxu0 0
        %1183 = vmatmul.mubr.bf16.gmra.mrb[0].mxu0 %v471
        %v1184 = vpop.f32.mrb[0].mxu0
        %v1185 = vadd.f32 0.0, %v1184
        %v1186 = vpop.f32.mrb[0].mxu0
        %v1187 = vadd.f32 0.0, %v1186
        %v1188 = vpop.f32.mrb[0].mxu0
        %v1189 = vadd.f32 0.0, %v1188
        %v1190 = vpop.f32.mrb[0].mxu0
        %v1191 = vadd.f32 0.0, %v1190
        %1192 = vmatprep.mubr.bf16.mxu0 0
        %1193 = vmatmul.mubr.bf16.gmra.mrb[0].mxu0 %v472
        %v1194 = vpop.f32.mrb[0].mxu0
        %v1195 = vadd.f32 0.0, %v1194
        %v1196 = vpop.f32.mrb[0].mxu0
        %v1197 = vadd.f32 0.0, %v1196
        %v1198 = vpop.f32.mrb[0].mxu0
        %v1199 = vadd.f32 0.0, %v1198
        %v1200 = vpop.f32.mrb[0].mxu0
        %v1201 = vadd.f32 0.0, %v1200
        %1202 = vmatprep.mubr.bf16.mxu0 0
        %1203 = vmatmul.mubr.bf16.gmra.mrb[0].mxu0 %v473
        %v1204 = vpop.f32.mrb[0].mxu0
        %v1205 = vadd.f32 0.0, %v1204
        %v1206 = vpop.f32.mrb[0].mxu0
        %v1207 = vadd.f32 0.0, %v1206
        %v1208 = vpop.f32.mrb[0].mxu0
        %v1209 = vadd.f32 0.0, %v1208
        %v1210 = vpop.f32.mrb[0].mxu0
        %v1211 = vadd.f32 0.0, %v1210
        %1212 = vmatprep.mubr.bf16.mxu0 0
        %1213 = vmatmul.mubr.bf16.gmra.mrb[0].mxu0 %v474
        %v1214 = vpop.f32.mrb[0].mxu0
        %v1215 = vadd.f32 0.0, %v1214
        %v1216 = vpop.f32.mrb[0].mxu0
        %v1217 = vadd.f32 0.0, %v1216
        %v1218 = vpop.f32.mrb[0].mxu0
        %v1219 = vadd.f32 0.0, %v1218
        %v1220 = vpop.f32.mrb[0].mxu0
        %v1221 = vadd.f32 0.0, %v1220
        %1222 = vmatprep.mubr.bf16.mxu0 0
        %1223 = vmatmul.mubr.bf16.gmra.mrb[0].mxu0 %v475
        %v1224 = vpop.f32.mrb[0].mxu0
        %v1225 = vadd.f32 0.0, %v1224
        %v1226 = vpop.f32.mrb[0].mxu0
        %v1227 = vadd.f32 0.0, %v1226
        %v1228 = vpop.f32.mrb[0].mxu0
        %v1229 = vadd.f32 0.0, %v1228
        %v1230 = vpop.f32.mrb[0].mxu0
        %v1231 = vadd.f32 0.0, %v1230
        %1232 = vmatprep.mubr.bf16.mxu0 0
        %1233 = vmatmul.mubr.bf16.gmra.mrb[0].mxu0 %v476
        %v1234 = vpop.f32.mrb[0].mxu0
        %v1235 = vadd.f32 0.0, %v1234
        %v1236 = vpop.f32.mrb[0].mxu0
        %v1237 = vadd.f32 0.0, %v1236
        %v1238 = vpop.f32.mrb[0].mxu0
        %v1239 = vadd.f32 0.0, %v1238
        %v1240 = vpop.f32.mrb[0].mxu0
        %v1241 = vadd.f32 0.0, %v1240
        %1242 = vmatprep.mubr.bf16.mxu0 0
        %1243 = vmatmul.mubr.bf16.gmra.mrb[0].mxu0 %v477
        %v1244 = vpop.f32.mrb[0].mxu0
        %v1245 = vadd.f32 0.0, %v1244
        %v1246 = vpop.f32.mrb[0].mxu0
        %v1247 = vadd.f32 0.0, %v1246
        %v1248 = vpop.f32.mrb[0].mxu0
        %v1249 = vadd.f32 0.0, %v1248
        %v1250 = vpop.f32.mrb[0].mxu0
        %v1251 = vadd.f32 0.0, %v1250
        %1252 = vmatprep.mubr.bf16.mxu0 0
        %1253 = vmatmul.mubr.bf16.gmra.mrb[0].mxu0 %v478
        %v1254 = vpop.f32.mrb[0].mxu0
        %v1255 = vadd.f32 0.0, %v1254
        %v1256 = vpop.f32.mrb[0].mxu0
        %v1257 = vadd.f32 0.0, %v1256
        %v1258 = vpop.f32.mrb[0].mxu0
        %v1259 = vadd.f32 0.0, %v1258
        %v1260 = vpop.f32.mrb[0].mxu0
        %v1261 = vadd.f32 0.0, %v1260
        %1262 = vmatprep.mubr.bf16.mxu0 0
        %1263 = vmatmul.mubr.bf16.gmra.mrb[0].mxu0 %v479
        %v1264 = vpop.f32.mrb[0].mxu0
        %v1265 = vadd.f32 0.0, %v1264
        %v1266 = vpop.f32.mrb[0].mxu0
        %v1267 = vadd.f32 0.0, %v1266
        %v1268 = vpop.f32.mrb[0].mxu0
        %v1269 = vadd.f32 0.0, %v1268
        %v1270 = vpop.f32.mrb[0].mxu0
        %v1271 = vadd.f32 0.0, %v1270
        %1272 = vmatprep.mubr.bf16.mxu0 0
        %1273 = vmatmul.mubr.bf16.gmra.mrb[0].mxu0 %v480
        %v1274 = vpop.f32.mrb[0].mxu0
        %v1275 = vadd.f32 0.0, %v1274
        %v1276 = vpop.f32.mrb[0].mxu0
        %v1277 = vadd.f32 0.0, %v1276
        %v1278 = vpop.f32.mrb[0].mxu0
        %v1279 = vadd.f32 0.0, %v1278
        %v1280 = vpop.f32.mrb[0].mxu0
        %v1281 = vadd.f32 0.0, %v1280
        %1282 = vdwg.mxu0
        %1283 = vmatprep.subr.bf16.mxu0 %v742
        %1284 = vmatpush1.bf16.msra.mxu0 %v741
        %1285 = vmatprep.subr.bf16.mxu0 %v752
        %1286 = vmatpush1.bf16.msra.mxu0 %v751
        %1287 = vmatprep.subr.bf16.mxu0 %v762
        %1288 = vmatpush1.bf16.msra.mxu0 %v761
        %1289 = vmatprep.subr.bf16.mxu0 %v772
        %1290 = vmatpush1.bf16.msra.mxu0 %v771
        %1291 = vmatprep.subr.bf16.mxu0 %v782
        %1292 = vmatpush1.bf16.msra.mxu0 %v781
        %1293 = vmatprep.subr.bf16.mxu0 %v792
        %1294 = vmatpush1.bf16.msra.mxu0 %v791
        %1295 = vmatprep.subr.bf16.mxu0 %v802
        %1296 = vmatpush1.bf16.msra.mxu0 %v801
        %1297 = vmatprep.subr.bf16.mxu0 %v812
        %1298 = vmatpush1.bf16.msra.mxu0 %v811
        %1299 = vmatprep.subr.bf16.mxu0 0
        %1300 = vmatpush1.bf16.msra.mxu0 0
        %1301 = vmatprep.subr.bf16.mxu0 0
        %1302 = vmatpush1.bf16.msra.mxu0 0
        %1303 = vmatprep.subr.bf16.mxu0 0
        %1304 = vmatpush1.bf16.msra.mxu0 0
        %1305 = vmatprep.subr.bf16.mxu0 0
        %1306 = vmatpush1.bf16.msra.mxu0 0
        %1307 = vmatprep.subr.bf16.mxu0 0
        %1308 = vmatpush1.bf16.msra.mxu0 0
        %1309 = vmatprep.subr.bf16.mxu0 0
        %1310 = vmatpush1.bf16.msra.mxu0 0
        %1311 = vmatprep.subr.bf16.mxu0 0
        %1312 = vmatpush1.bf16.msra.mxu0 0
        %1313 = vmatprep.subr.bf16.mxu0 0
        %1314 = vmatpush1.bf16.msra.mxu0 0
        %1315 = vmatprep.mubr.bf16.mxu0 0
        %1316 = vmatmul.mubr.bf16.gmra.mrb[0].mxu0 %v465
        %v1317 = vpop.f32.mrb[0].mxu0
        %v1318 = vadd.f32 0.0, %v1317
        %v1319 = vpop.f32.mrb[0].mxu0
        %v1320 = vadd.f32 0.0, %v1319
        %v1321 = vpop.f32.mrb[0].mxu0
        %v1322 = vadd.f32 0.0, %v1321
        %v1323 = vpop.f32.mrb[0].mxu0
        %v1324 = vadd.f32 0.0, %v1323
        %1325 = vmatprep.mubr.bf16.mxu0 0
        %1326 = vmatmul.mubr.bf16.gmra.mrb[0].mxu0 %v466
        %v1327 = vpop.f32.mrb[0].mxu0
        %v1328 = vadd.f32 0.0, %v1327
        %v1329 = vpop.f32.mrb[0].mxu0
        %v1330 = vadd.f32 0.0, %v1329
        %v1331 = vpop.f32.mrb[0].mxu0
        %v1332 = vadd.f32 0.0, %v1331
        %v1333 = vpop.f32.mrb[0].mxu0
        %v1334 = vadd.f32 0.0, %v1333
        %1335 = vmatprep.mubr.bf16.mxu0 0
        %1336 = vmatmul.mubr.bf16.gmra.mrb[0].mxu0 %v467
        %v1337 = vpop.f32.mrb[0].mxu0
        %v1338 = vadd.f32 0.0, %v1337
        %v1339 = vpop.f32.mrb[0].mxu0
        %v1340 = vadd.f32 0.0, %v1339
        %v1341 = vpop.f32.mrb[0].mxu0
        %v1342 = vadd.f32 0.0, %v1341
        %v1343 = vpop.f32.mrb[0].mxu0
        %v1344 = vadd.f32 0.0, %v1343
        %1345 = vmatprep.mubr.bf16.mxu0 0
        %1346 = vmatmul.mubr.bf16.gmra.mrb[0].mxu0 %v468
        %v1347 = vpop.f32.mrb[0].mxu0
        %v1348 = vadd.f32 0.0, %v1347
        %v1349 = vpop.f32.mrb[0].mxu0
        %v1350 = vadd.f32 0.0, %v1349
        %v1351 = vpop.f32.mrb[0].mxu0
        %v1352 = vadd.f32 0.0, %v1351
        %v1353 = vpop.f32.mrb[0].mxu0
        %v1354 = vadd.f32 0.0, %v1353
        %1355 = vmatprep.mubr.bf16.mxu0 0
        %1356 = vmatmul.mubr.bf16.gmra.mrb[0].mxu0 %v469
        %v1357 = vpop.f32.mrb[0].mxu0
        %v1358 = vadd.f32 0.0, %v1357
        %v1359 = vpop.f32.mrb[0].mxu0
        %v1360 = vadd.f32 0.0, %v1359
        %v1361 = vpop.f32.mrb[0].mxu0
        %v1362 = vadd.f32 0.0, %v1361
        %v1363 = vpop.f32.mrb[0].mxu0
        %v1364 = vadd.f32 0.0, %v1363
        %1365 = vmatprep.mubr.bf16.mxu0 0
        %1366 = vmatmul.mubr.bf16.gmra.mrb[0].mxu0 %v470
        %v1367 = vpop.f32.mrb[0].mxu0
        %v1368 = vadd.f32 0.0, %v1367
        %v1369 = vpop.f32.mrb[0].mxu0
        %v1370 = vadd.f32 0.0, %v1369
        %v1371 = vpop.f32.mrb[0].mxu0
        %v1372 = vadd.f32 0.0, %v1371
        %v1373 = vpop.f32.mrb[0].mxu0
        %v1374 = vadd.f32 0.0, %v1373
        %1375 = vmatprep.mubr.bf16.mxu0 0
        %1376 = vmatmul.mubr.bf16.gmra.mrb[0].mxu0 %v471
        %v1377 = vpop.f32.mrb[0].mxu0
        %v1378 = vadd.f32 0.0, %v1377
        %v1379 = vpop.f32.mrb[0].mxu0
        %v1380 = vadd.f32 0.0, %v1379
        %v1381 = vpop.f32.mrb[0].mxu0
        %v1382 = vadd.f32 0.0, %v1381
        %v1383 = vpop.f32.mrb[0].mxu0
        %v1384 = vadd.f32 0.0, %v1383
        %1385 = vmatprep.mubr.bf16.mxu0 0
        %1386 = vmatmul.mubr.bf16.gmra.mrb[0].mxu0 %v472
        %v1387 = vpop.f32.mrb[0].mxu0
        %v1388 = vadd.f32 0.0, %v1387
        %v1389 = vpop.f32.mrb[0].mxu0
        %v1390 = vadd.f32 0.0, %v1389
        %v1391 = vpop.f32.mrb[0].mxu0
        %v1392 = vadd.f32 0.0, %v1391
        %v1393 = vpop.f32.mrb[0].mxu0
        %v1394 = vadd.f32 0.0, %v1393
        %1395 = vmatprep.mubr.bf16.mxu0 0
        %1396 = vmatmul.mubr.bf16.gmra.mrb[0].mxu0 %v473
        %v1397 = vpop.f32.mrb[0].mxu0
        %v1398 = vadd.f32 0.0, %v1397
        %v1399 = vpop.f32.mrb[0].mxu0
        %v1400 = vadd.f32 0.0, %v1399
        %v1401 = vpop.f32.mrb[0].mxu0
        %v1402 = vadd.f32 0.0, %v1401
        %v1403 = vpop.f32.mrb[0].mxu0
        %v1404 = vadd.f32 0.0, %v1403
        %1405 = vmatprep.mubr.bf16.mxu0 0
        %1406 = vmatmul.mubr.bf16.gmra.mrb[0].mxu0 %v474
        %v1407 = vpop.f32.mrb[0].mxu0
        %v1408 = vadd.f32 0.0, %v1407
        %v1409 = vpop.f32.mrb[0].mxu0
        %v1410 = vadd.f32 0.0, %v1409
        %v1411 = vpop.f32.mrb[0].mxu0
        %v1412 = vadd.f32 0.0, %v1411
        %v1413 = vpop.f32.mrb[0].mxu0
        %v1414 = vadd.f32 0.0, %v1413
        %1415 = vmatprep.mubr.bf16.mxu0 0
        %1416 = vmatmul.mubr.bf16.gmra.mrb[0].mxu0 %v475
        %v1417 = vpop.f32.mrb[0].mxu0
        %v1418 = vadd.f32 0.0, %v1417
        %v1419 = vpop.f32.mrb[0].mxu0
        %v1420 = vadd.f32 0.0, %v1419
        %v1421 = vpop.f32.mrb[0].mxu0
        %v1422 = vadd.f32 0.0, %v1421
        %v1423 = vpop.f32.mrb[0].mxu0
        %v1424 = vadd.f32 0.0, %v1423
        %1425 = vmatprep.mubr.bf16.mxu0 0
        %1426 = vmatmul.mubr.bf16.gmra.mrb[0].mxu0 %v476
        %v1427 = vpop.f32.mrb[0].mxu0
        %v1428 = vadd.f32 0.0, %v1427
        %v1429 = vpop.f32.mrb[0].mxu0
        %v1430 = vadd.f32 0.0, %v1429
        %v1431 = vpop.f32.mrb[0].mxu0
        %v1432 = vadd.f32 0.0, %v1431
        %v1433 = vpop.f32.mrb[0].mxu0
        %v1434 = vadd.f32 0.0, %v1433
        %1435 = vmatprep.mubr.bf16.mxu0 0
        %1436 = vmatmul.mubr.bf16.gmra.mrb[0].mxu0 %v477
        %v1437 = vpop.f32.mrb[0].mxu0
        %v1438 = vadd.f32 0.0, %v1437
        %v1439 = vpop.f32.mrb[0].mxu0
        %v1440 = vadd.f32 0.0, %v1439
        %v1441 = vpop.f32.mrb[0].mxu0
        %v1442 = vadd.f32 0.0, %v1441
        %v1443 = vpop.f32.mrb[0].mxu0
        %v1444 = vadd.f32 0.0, %v1443
        %1445 = vmatprep.mubr.bf16.mxu0 0
        %1446 = vmatmul.mubr.bf16.gmra.mrb[0].mxu0 %v478
        %v1447 = vpop.f32.mrb[0].mxu0
        %v1448 = vadd.f32 0.0, %v1447
        %v1449 = vpop.f32.mrb[0].mxu0
        %v1450 = vadd.f32 0.0, %v1449
        %v1451 = vpop.f32.mrb[0].mxu0
        %v1452 = vadd.f32 0.0, %v1451
        %v1453 = vpop.f32.mrb[0].mxu0
        %v1454 = vadd.f32 0.0, %v1453
        %1455 = vmatprep.mubr.bf16.mxu0 0
        %1456 = vmatmul.mubr.bf16.gmra.mrb[0].mxu0 %v479
        %v1457 = vpop.f32.mrb[0].mxu0
        %v1458 = vadd.f32 0.0, %v1457
        %v1459 = vpop.f32.mrb[0].mxu0
        %v1460 = vadd.f32 0.0, %v1459
        %v1461 = vpop.f32.mrb[0].mxu0
        %v1462 = vadd.f32 0.0, %v1461
        %v1463 = vpop.f32.mrb[0].mxu0
        %v1464 = vadd.f32 0.0, %v1463
        %1465 = vmatprep.mubr.bf16.mxu0 0
        %1466 = vmatmul.mubr.bf16.gmra.mrb[0].mxu0 %v480
        %v1467 = vpop.f32.mrb[0].mxu0
        %v1468 = vadd.f32 0.0, %v1467
        %v1469 = vpop.f32.mrb[0].mxu0
        %v1470 = vadd.f32 0.0, %v1469
        %v1471 = vpop.f32.mrb[0].mxu0
        %v1472 = vadd.f32 0.0, %v1471
        %v1473 = vpop.f32.mrb[0].mxu0
        %v1474 = vadd.f32 0.0, %v1473
        %1475 = vdwg.mxu0
        %1476 = vmatprep.subr.bf16.mxu0 %v744
        %1477 = vmatpush1.bf16.msra.mxu0 %v743
        %1478 = vmatprep.subr.bf16.mxu0 %v754
        %1479 = vmatpush1.bf16.msra.mxu0 %v753
        %1480 = vmatprep.subr.bf16.mxu0 %v764
        %1481 = vmatpush1.bf16.msra.mxu0 %v763
        %1482 = vmatprep.subr.bf16.mxu0 %v774
        %1483 = vmatpush1.bf16.msra.mxu0 %v773
        %1484 = vmatprep.subr.bf16.mxu0 %v784
        %1485 = vmatpush1.bf16.msra.mxu0 %v783
        %1486 = vmatprep.subr.bf16.mxu0 %v794
        %1487 = vmatpush1.bf16.msra.mxu0 %v793
        %1488 = vmatprep.subr.bf16.mxu0 %v804
        %1489 = vmatpush1.bf16.msra.mxu0 %v803
        %1490 = vmatprep.subr.bf16.mxu0 %v814
        %1491 = vmatpush1.bf16.msra.mxu0 %v813
        %1492 = vmatprep.subr.bf16.mxu0 0
        %1493 = vmatpush1.bf16.msra.mxu0 0
        %1494 = vmatprep.subr.bf16.mxu0 0
        %1495 = vmatpush1.bf16.msra.mxu0 0
        %1496 = vmatprep.subr.bf16.mxu0 0
        %1497 = vmatpush1.bf16.msra.mxu0 0
        %1498 = vmatprep.subr.bf16.mxu0 0
        %1499 = vmatpush1.bf16.msra.mxu0 0
        %1500 = vmatprep.subr.bf16.mxu0 0
        %1501 = vmatpush1.bf16.msra.mxu0 0
        %1502 = vmatprep.subr.bf16.mxu0 0
        %1503 = vmatpush1.bf16.msra.mxu0 0
        %1504 = vmatprep.subr.bf16.mxu0 0
        %1505 = vmatpush1.bf16.msra.mxu0 0
        %1506 = vmatprep.subr.bf16.mxu0 0
        %1507 = vmatpush1.bf16.msra.mxu0 0
        %1508 = vmatprep.mubr.bf16.mxu0 0
        %1509 = vmatmul.mubr.bf16.gmra.mrb[0].mxu0 %v465
        %v1510 = vpop.f32.mrb[0].mxu0
        %v1511 = vadd.f32 0.0, %v1510
        %v1512 = vpop.f32.mrb[0].mxu0
        %v1513 = vadd.f32 0.0, %v1512
        %v1514 = vpop.f32.mrb[0].mxu0
        %v1515 = vadd.f32 0.0, %v1514
        %v1516 = vpop.f32.mrb[0].mxu0
        %v1517 = vadd.f32 0.0, %v1516
        %1518 = vmatprep.mubr.bf16.mxu0 0
        %1519 = vmatmul.mubr.bf16.gmra.mrb[0].mxu0 %v466
        %v1520 = vpop.f32.mrb[0].mxu0
        %v1521 = vadd.f32 0.0, %v1520
        %v1522 = vpop.f32.mrb[0].mxu0
        %v1523 = vadd.f32 0.0, %v1522
        %v1524 = vpop.f32.mrb[0].mxu0
        %v1525 = vadd.f32 0.0, %v1524
        %v1526 = vpop.f32.mrb[0].mxu0
        %v1527 = vadd.f32 0.0, %v1526
        %1528 = vmatprep.mubr.bf16.mxu0 0
        %1529 = vmatmul.mubr.bf16.gmra.mrb[0].mxu0 %v467
        %v1530 = vpop.f32.mrb[0].mxu0
        %v1531 = vadd.f32 0.0, %v1530
        %v1532 = vpop.f32.mrb[0].mxu0
        %v1533 = vadd.f32 0.0, %v1532
        %v1534 = vpop.f32.mrb[0].mxu0
        %v1535 = vadd.f32 0.0, %v1534
        %v1536 = vpop.f32.mrb[0].mxu0
        %v1537 = vadd.f32 0.0, %v1536
        %1538 = vmatprep.mubr.bf16.mxu0 0
        %1539 = vmatmul.mubr.bf16.gmra.mrb[0].mxu0 %v468
        %v1540 = vpop.f32.mrb[0].mxu0
        %v1541 = vadd.f32 0.0, %v1540
        %v1542 = vpop.f32.mrb[0].mxu0
        %v1543 = vadd.f32 0.0, %v1542
        %v1544 = vpop.f32.mrb[0].mxu0
        %v1545 = vadd.f32 0.0, %v1544
        %v1546 = vpop.f32.mrb[0].mxu0
        %v1547 = vadd.f32 0.0, %v1546
        %1548 = vmatprep.mubr.bf16.mxu0 0
        %1549 = vmatmul.mubr.bf16.gmra.mrb[0].mxu0 %v469
        %v1550 = vpop.f32.mrb[0].mxu0
        %v1551 = vadd.f32 0.0, %v1550
        %v1552 = vpop.f32.mrb[0].mxu0
        %v1553 = vadd.f32 0.0, %v1552
        %v1554 = vpop.f32.mrb[0].mxu0
        %v1555 = vadd.f32 0.0, %v1554
        %v1556 = vpop.f32.mrb[0].mxu0
        %v1557 = vadd.f32 0.0, %v1556
        %1558 = vmatprep.mubr.bf16.mxu0 0
        %1559 = vmatmul.mubr.bf16.gmra.mrb[0].mxu0 %v470
        %v1560 = vpop.f32.mrb[0].mxu0
        %v1561 = vadd.f32 0.0, %v1560
        %v1562 = vpop.f32.mrb[0].mxu0
        %v1563 = vadd.f32 0.0, %v1562
        %v1564 = vpop.f32.mrb[0].mxu0
        %v1565 = vadd.f32 0.0, %v1564
        %v1566 = vpop.f32.mrb[0].mxu0
        %v1567 = vadd.f32 0.0, %v1566
        %1568 = vmatprep.mubr.bf16.mxu0 0
        %1569 = vmatmul.mubr.bf16.gmra.mrb[0].mxu0 %v471
        %v1570 = vpop.f32.mrb[0].mxu0
        %v1571 = vadd.f32 0.0, %v1570
        %v1572 = vpop.f32.mrb[0].mxu0
        %v1573 = vadd.f32 0.0, %v1572
        %v1574 = vpop.f32.mrb[0].mxu0
        %v1575 = vadd.f32 0.0, %v1574
        %v1576 = vpop.f32.mrb[0].mxu0
        %v1577 = vadd.f32 0.0, %v1576
        %1578 = vmatprep.mubr.bf16.mxu0 0
        %1579 = vmatmul.mubr.bf16.gmra.mrb[0].mxu0 %v472
        %v1580 = vpop.f32.mrb[0].mxu0
        %v1581 = vadd.f32 0.0, %v1580
        %v1582 = vpop.f32.mrb[0].mxu0
        %v1583 = vadd.f32 0.0, %v1582
        %v1584 = vpop.f32.mrb[0].mxu0
        %v1585 = vadd.f32 0.0, %v1584
        %v1586 = vpop.f32.mrb[0].mxu0
        %v1587 = vadd.f32 0.0, %v1586
        %1588 = vmatprep.mubr.bf16.mxu0 0
        %1589 = vmatmul.mubr.bf16.gmra.mrb[0].mxu0 %v473
        %v1590 = vpop.f32.mrb[0].mxu0
        %v1591 = vadd.f32 0.0, %v1590
        %v1592 = vpop.f32.mrb[0].mxu0
        %v1593 = vadd.f32 0.0, %v1592
        %v1594 = vpop.f32.mrb[0].mxu0
        %v1595 = vadd.f32 0.0, %v1594
        %v1596 = vpop.f32.mrb[0].mxu0
        %v1597 = vadd.f32 0.0, %v1596
        %1598 = vmatprep.mubr.bf16.mxu0 0
        %1599 = vmatmul.mubr.bf16.gmra.mrb[0].mxu0 %v474
        %v1600 = vpop.f32.mrb[0].mxu0
        %v1601 = vadd.f32 0.0, %v1600
        %v1602 = vpop.f32.mrb[0].mxu0
        %v1603 = vadd.f32 0.0, %v1602
        %v1604 = vpop.f32.mrb[0].mxu0
        %v1605 = vadd.f32 0.0, %v1604
        %v1606 = vpop.f32.mrb[0].mxu0
        %v1607 = vadd.f32 0.0, %v1606
        %1608 = vmatprep.mubr.bf16.mxu0 0
        %1609 = vmatmul.mubr.bf16.gmra.mrb[0].mxu0 %v475
        %v1610 = vpop.f32.mrb[0].mxu0
        %v1611 = vadd.f32 0.0, %v1610
        %v1612 = vpop.f32.mrb[0].mxu0
        %v1613 = vadd.f32 0.0, %v1612
        %v1614 = vpop.f32.mrb[0].mxu0
        %v1615 = vadd.f32 0.0, %v1614
        %v1616 = vpop.f32.mrb[0].mxu0
        %v1617 = vadd.f32 0.0, %v1616
        %1618 = vmatprep.mubr.bf16.mxu0 0
        %1619 = vmatmul.mubr.bf16.gmra.mrb[0].mxu0 %v476
        %v1620 = vpop.f32.mrb[0].mxu0
        %v1621 = vadd.f32 0.0, %v1620
        %v1622 = vpop.f32.mrb[0].mxu0
        %v1623 = vadd.f32 0.0, %v1622
        %v1624 = vpop.f32.mrb[0].mxu0
        %v1625 = vadd.f32 0.0, %v1624
        %v1626 = vpop.f32.mrb[0].mxu0
        %v1627 = vadd.f32 0.0, %v1626
        %1628 = vmatprep.mubr.bf16.mxu0 0
        %1629 = vmatmul.mubr.bf16.gmra.mrb[0].mxu0 %v477
        %v1630 = vpop.f32.mrb[0].mxu0
        %v1631 = vadd.f32 0.0, %v1630
        %v1632 = vpop.f32.mrb[0].mxu0
        %v1633 = vadd.f32 0.0, %v1632
        %v1634 = vpop.f32.mrb[0].mxu0
        %v1635 = vadd.f32 0.0, %v1634
        %v1636 = vpop.f32.mrb[0].mxu0
        %v1637 = vadd.f32 0.0, %v1636
        %1638 = vmatprep.mubr.bf16.mxu0 0
        %1639 = vmatmul.mubr.bf16.gmra.mrb[0].mxu0 %v478
        %v1640 = vpop.f32.mrb[0].mxu0
        %v1641 = vadd.f32 0.0, %v1640
        %v1642 = vpop.f32.mrb[0].mxu0
        %v1643 = vadd.f32 0.0, %v1642
        %v1644 = vpop.f32.mrb[0].mxu0
        %v1645 = vadd.f32 0.0, %v1644
        %v1646 = vpop.f32.mrb[0].mxu0
        %v1647 = vadd.f32 0.0, %v1646
        %1648 = vmatprep.mubr.bf16.mxu0 0
        %1649 = vmatmul.mubr.bf16.gmra.mrb[0].mxu0 %v479
        %v1650 = vpop.f32.mrb[0].mxu0
        %v1651 = vadd.f32 0.0, %v1650
        %v1652 = vpop.f32.mrb[0].mxu0
        %v1653 = vadd.f32 0.0, %v1652
        %v1654 = vpop.f32.mrb[0].mxu0
        %v1655 = vadd.f32 0.0, %v1654
        %v1656 = vpop.f32.mrb[0].mxu0
        %v1657 = vadd.f32 0.0, %v1656
        %1658 = vmatprep.mubr.bf16.mxu0 0
        %1659 = vmatmul.mubr.bf16.gmra.mrb[0].mxu0 %v480
        %v1660 = vpop.f32.mrb[0].mxu0
        %v1661 = vadd.f32 0.0, %v1660
        %v1662 = vpop.f32.mrb[0].mxu0
        %v1663 = vadd.f32 0.0, %v1662
        %v1664 = vpop.f32.mrb[0].mxu0
        %v1665 = vadd.f32 0.0, %v1664
        %v1666 = vpop.f32.mrb[0].mxu0
        %v1667 = vadd.f32 0.0, %v1666
        %1668 = vdwg.mxu0
        %1669 = vmatprep.subr.bf16.mxu0 %v746
        %1670 = vmatpush1.bf16.msra.mxu0 %v745
        %1671 = vmatprep.subr.bf16.mxu0 %v756
        %1672 = vmatpush1.bf16.msra.mxu0 %v755
        %1673 = vmatprep.subr.bf16.mxu0 %v766
        %1674 = vmatpush1.bf16.msra.mxu0 %v765
        %1675 = vmatprep.subr.bf16.mxu0 %v776
        %1676 = vmatpush1.bf16.msra.mxu0 %v775
        %1677 = vmatprep.subr.bf16.mxu0 %v786
        %1678 = vmatpush1.bf16.msra.mxu0 %v785
        %1679 = vmatprep.subr.bf16.mxu0 %v796
        %1680 = vmatpush1.bf16.msra.mxu0 %v795
        %1681 = vmatprep.subr.bf16.mxu0 %v806
        %1682 = vmatpush1.bf16.msra.mxu0 %v805
        %1683 = vmatprep.subr.bf16.mxu0 %v816
        %1684 = vmatpush1.bf16.msra.mxu0 %v815
        %1685 = vmatprep.subr.bf16.mxu0 0
        %1686 = vmatpush1.bf16.msra.mxu0 0
        %1687 = vmatprep.subr.bf16.mxu0 0
        %1688 = vmatpush1.bf16.msra.mxu0 0
        %1689 = vmatprep.subr.bf16.mxu0 0
        %1690 = vmatpush1.bf16.msra.mxu0 0
        %1691 = vmatprep.subr.bf16.mxu0 0
        %1692 = vmatpush1.bf16.msra.mxu0 0
        %1693 = vmatprep.subr.bf16.mxu0 0
        %1694 = vmatpush1.bf16.msra.mxu0 0
        %1695 = vmatprep.subr.bf16.mxu0 0
        %1696 = vmatpush1.bf16.msra.mxu0 0
        %1697 = vmatprep.subr.bf16.mxu0 0
        %1698 = vmatpush1.bf16.msra.mxu0 0
        %1699 = vmatprep.subr.bf16.mxu0 0
        %1700 = vmatpush1.bf16.msra.mxu0 0
        %1701 = vmatprep.mubr.bf16.mxu0 0
        %1702 = vmatmul.mubr.bf16.gmra.mrb[0].mxu0 %v465
        %v1703 = vpop.f32.mrb[0].mxu0
        %v1704 = vadd.f32 0.0, %v1703
        %v1705 = vpop.f32.mrb[0].mxu0
        %v1706 = vadd.f32 0.0, %v1705
        %v1707 = vpop.f32.mrb[0].mxu0
        %v1708 = vadd.f32 0.0, %v1707
        %v1709 = vpop.f32.mrb[0].mxu0
        %v1710 = vadd.f32 0.0, %v1709
        %1711 = vmatprep.mubr.bf16.mxu0 0
        %1712 = vmatmul.mubr.bf16.gmra.mrb[0].mxu0 %v466
        %v1713 = vpop.f32.mrb[0].mxu0
        %v1714 = vadd.f32 0.0, %v1713
        %v1715 = vpop.f32.mrb[0].mxu0
        %v1716 = vadd.f32 0.0, %v1715
        %v1717 = vpop.f32.mrb[0].mxu0
        %v1718 = vadd.f32 0.0, %v1717
        %v1719 = vpop.f32.mrb[0].mxu0
        %v1720 = vadd.f32 0.0, %v1719
        %1721 = vmatprep.mubr.bf16.mxu0 0
        %1722 = vmatmul.mubr.bf16.gmra.mrb[0].mxu0 %v467
        %v1723 = vpop.f32.mrb[0].mxu0
        %v1724 = vadd.f32 0.0, %v1723
        %v1725 = vpop.f32.mrb[0].mxu0
        %v1726 = vadd.f32 0.0, %v1725
        %v1727 = vpop.f32.mrb[0].mxu0
        %v1728 = vadd.f32 0.0, %v1727
        %v1729 = vpop.f32.mrb[0].mxu0
        %v1730 = vadd.f32 0.0, %v1729
        %1731 = vmatprep.mubr.bf16.mxu0 0
        %1732 = vmatmul.mubr.bf16.gmra.mrb[0].mxu0 %v468
        %v1733 = vpop.f32.mrb[0].mxu0
        %v1734 = vadd.f32 0.0, %v1733
        %v1735 = vpop.f32.mrb[0].mxu0
        %v1736 = vadd.f32 0.0, %v1735
        %v1737 = vpop.f32.mrb[0].mxu0
        %v1738 = vadd.f32 0.0, %v1737
        %v1739 = vpop.f32.mrb[0].mxu0
        %v1740 = vadd.f32 0.0, %v1739
        %1741 = vmatprep.mubr.bf16.mxu0 0
        %1742 = vmatmul.mubr.bf16.gmra.mrb[0].mxu0 %v469
        %v1743 = vpop.f32.mrb[0].mxu0
        %v1744 = vadd.f32 0.0, %v1743
        %v1745 = vpop.f32.mrb[0].mxu0
        %v1746 = vadd.f32 0.0, %v1745
        %v1747 = vpop.f32.mrb[0].mxu0
        %v1748 = vadd.f32 0.0, %v1747
        %v1749 = vpop.f32.mrb[0].mxu0
        %v1750 = vadd.f32 0.0, %v1749
        %1751 = vmatprep.mubr.bf16.mxu0 0
        %1752 = vmatmul.mubr.bf16.gmra.mrb[0].mxu0 %v470
        %v1753 = vpop.f32.mrb[0].mxu0
        %v1754 = vadd.f32 0.0, %v1753
        %v1755 = vpop.f32.mrb[0].mxu0
        %v1756 = vadd.f32 0.0, %v1755
        %v1757 = vpop.f32.mrb[0].mxu0
        %v1758 = vadd.f32 0.0, %v1757
        %v1759 = vpop.f32.mrb[0].mxu0
        %v1760 = vadd.f32 0.0, %v1759
        %1761 = vmatprep.mubr.bf16.mxu0 0
        %1762 = vmatmul.mubr.bf16.gmra.mrb[0].mxu0 %v471
        %v1763 = vpop.f32.mrb[0].mxu0
        %v1764 = vadd.f32 0.0, %v1763
        %v1765 = vpop.f32.mrb[0].mxu0
        %v1766 = vadd.f32 0.0, %v1765
        %v1767 = vpop.f32.mrb[0].mxu0
        %v1768 = vadd.f32 0.0, %v1767
        %v1769 = vpop.f32.mrb[0].mxu0
        %v1770 = vadd.f32 0.0, %v1769
        %1771 = vmatprep.mubr.bf16.mxu0 0
        %1772 = vmatmul.mubr.bf16.gmra.mrb[0].mxu0 %v472
        %v1773 = vpop.f32.mrb[0].mxu0
        %v1774 = vadd.f32 0.0, %v1773
        %v1775 = vpop.f32.mrb[0].mxu0
        %v1776 = vadd.f32 0.0, %v1775
        %v1777 = vpop.f32.mrb[0].mxu0
        %v1778 = vadd.f32 0.0, %v1777
        %v1779 = vpop.f32.mrb[0].mxu0
        %v1780 = vadd.f32 0.0, %v1779
        %1781 = vmatprep.mubr.bf16.mxu0 0
        %1782 = vmatmul.mubr.bf16.gmra.mrb[0].mxu0 %v473
        %v1783 = vpop.f32.mrb[0].mxu0
        %v1784 = vadd.f32 0.0, %v1783
        %v1785 = vpop.f32.mrb[0].mxu0
        %v1786 = vadd.f32 0.0, %v1785
        %v1787 = vpop.f32.mrb[0].mxu0
        %v1788 = vadd.f32 0.0, %v1787
        %v1789 = vpop.f32.mrb[0].mxu0
        %v1790 = vadd.f32 0.0, %v1789
        %1791 = vmatprep.mubr.bf16.mxu0 0
        %1792 = vmatmul.mubr.bf16.gmra.mrb[0].mxu0 %v474
        %v1793 = vpop.f32.mrb[0].mxu0
        %v1794 = vadd.f32 0.0, %v1793
        %v1795 = vpop.f32.mrb[0].mxu0
        %v1796 = vadd.f32 0.0, %v1795
        %v1797 = vpop.f32.mrb[0].mxu0
        %v1798 = vadd.f32 0.0, %v1797
        %v1799 = vpop.f32.mrb[0].mxu0
        %v1800 = vadd.f32 0.0, %v1799
        %1801 = vmatprep.mubr.bf16.mxu0 0
        %1802 = vmatmul.mubr.bf16.gmra.mrb[0].mxu0 %v475
        %v1803 = vpop.f32.mrb[0].mxu0
        %v1804 = vadd.f32 0.0, %v1803
        %v1805 = vpop.f32.mrb[0].mxu0
        %v1806 = vadd.f32 0.0, %v1805
        %v1807 = vpop.f32.mrb[0].mxu0
        %v1808 = vadd.f32 0.0, %v1807
        %v1809 = vpop.f32.mrb[0].mxu0
        %v1810 = vadd.f32 0.0, %v1809
        %1811 = vmatprep.mubr.bf16.mxu0 0
        %1812 = vmatmul.mubr.bf16.gmra.mrb[0].mxu0 %v476
        %v1813 = vpop.f32.mrb[0].mxu0
        %v1814 = vadd.f32 0.0, %v1813
        %v1815 = vpop.f32.mrb[0].mxu0
        %v1816 = vadd.f32 0.0, %v1815
        %v1817 = vpop.f32.mrb[0].mxu0
        %v1818 = vadd.f32 0.0, %v1817
        %v1819 = vpop.f32.mrb[0].mxu0
        %v1820 = vadd.f32 0.0, %v1819
        %1821 = vmatprep.mubr.bf16.mxu0 0
        %1822 = vmatmul.mubr.bf16.gmra.mrb[0].mxu0 %v477
        %v1823 = vpop.f32.mrb[0].mxu0
        %v1824 = vadd.f32 0.0, %v1823
        %v1825 = vpop.f32.mrb[0].mxu0
        %v1826 = vadd.f32 0.0, %v1825
        %v1827 = vpop.f32.mrb[0].mxu0
        %v1828 = vadd.f32 0.0, %v1827
        %v1829 = vpop.f32.mrb[0].mxu0
        %v1830 = vadd.f32 0.0, %v1829
        %1831 = vmatprep.mubr.bf16.mxu0 0
        %1832 = vmatmul.mubr.bf16.gmra.mrb[0].mxu0 %v478
        %v1833 = vpop.f32.mrb[0].mxu0
        %v1834 = vadd.f32 0.0, %v1833
        %v1835 = vpop.f32.mrb[0].mxu0
        %v1836 = vadd.f32 0.0, %v1835
        %v1837 = vpop.f32.mrb[0].mxu0
        %v1838 = vadd.f32 0.0, %v1837
        %v1839 = vpop.f32.mrb[0].mxu0
        %v1840 = vadd.f32 0.0, %v1839
        %1841 = vmatprep.mubr.bf16.mxu0 0
        %1842 = vmatmul.mubr.bf16.gmra.mrb[0].mxu0 %v479
        %v1843 = vpop.f32.mrb[0].mxu0
        %v1844 = vadd.f32 0.0, %v1843
        %v1845 = vpop.f32.mrb[0].mxu0
        %v1846 = vadd.f32 0.0, %v1845
        %v1847 = vpop.f32.mrb[0].mxu0
        %v1848 = vadd.f32 0.0, %v1847
        %v1849 = vpop.f32.mrb[0].mxu0
        %v1850 = vadd.f32 0.0, %v1849
        %1851 = vmatprep.mubr.bf16.mxu0 0
        %1852 = vmatmul.mubr.bf16.gmra.mrb[0].mxu0 %v480
        %v1853 = vpop.f32.mrb[0].mxu0
        %v1854 = vadd.f32 0.0, %v1853
        %v1855 = vpop.f32.mrb[0].mxu0
        %v1856 = vadd.f32 0.0, %v1855
        %v1857 = vpop.f32.mrb[0].mxu0
        %v1858 = vadd.f32 0.0, %v1857
        %v1859 = vpop.f32.mrb[0].mxu0
        %v1860 = vadd.f32 0.0, %v1859
        %1861 = vdwg.mxu0
        %v1862 = vld [vmem:[%s2] sm:$0xff]
        %v1863 = vld [vmem:[%s2 + $0x8] sm:$0x3]
        %v1866 = vlaneseq
        %v1867 = vshrl.u32 %v1866, 7
        %v1868 = vsub.s32 0, %v1867
        %v1869 = vrot.slane %v1862, %v1868
        %v1870 = vlaneseq
        %v1871 = vshrl.u32 %v1870, 7
        %v1872 = vsub.s32 1, %v1871
        %v1873 = vrot.slane %v1862, %v1872
        %v1874 = vlaneseq
        %v1875 = vshrl.u32 %v1874, 7
        %v1876 = vsub.s32 2, %v1875
        %v1877 = vrot.slane %v1862, %v1876
        %v1878 = vlaneseq
        %v1879 = vshrl.u32 %v1878, 7
        %v1880 = vsub.s32 3, %v1879
        %v1881 = vrot.slane %v1862, %v1880
        %v1882 = vlaneseq
        %v1883 = vshrl.u32 %v1882, 7
        %v1884 = vsub.s32 4, %v1883
        %v1885 = vrot.slane %v1862, %v1884
        %v1886 = vlaneseq
        %v1887 = vshrl.u32 %v1886, 7
        %v1888 = vsub.s32 5, %v1887
        %v1889 = vrot.slane %v1862, %v1888
        %v1890 = vlaneseq
        %v1891 = vshrl.u32 %v1890, 7
        %v1892 = vsub.s32 6, %v1891
        %v1893 = vrot.slane %v1862, %v1892
        %v1894 = vlaneseq
        %v1895 = vshrl.u32 %v1894, 7
        %v1896 = vsub.s32 7, %v1895
        %v1897 = vrot.slane %v1862, %v1896
        %v1898 = vlaneseq
        %v1899 = vshrl.u32 %v1898, 7
        %v1900 = vsub.s32 0, %v1899
        %v1901 = vrot.slane %v1863, %v1900
        %v1902 = vlaneseq
        %v1903 = vshrl.u32 %v1902, 7
        %v1904 = vsub.s32 1, %v1903
        %v1905 = vrot.slane %v1863, %v1904
        %v1916 = vmul.f32 %v932, %v1869
        %v1917 = vmul.f32 %v934, %v1873
        %v1918 = vmul.f32 %v1125, %v1877
        %v1919 = vmul.f32 %v1127, %v1881
        %v1920 = vmul.f32 %v1318, %v1885
        %v1921 = vmul.f32 %v1320, %v1889
        %v1922 = vmul.f32 %v1511, %v1893
        %v1923 = vmul.f32 %v1513, %v1897
        %v1924 = vmul.f32 %v1704, %v1901
        %v1925 = vmul.f32 %v1706, %v1905
        %v1926 = vmul.f32 %v936, %v1869
        %v1927 = vmul.f32 %v938, %v1873
        %v1928 = vmul.f32 %v1129, %v1877
        %v1929 = vmul.f32 %v1131, %v1881
        %v1930 = vmul.f32 %v1322, %v1885
        %v1931 = vmul.f32 %v1324, %v1889
        %v1932 = vmul.f32 %v1515, %v1893
        %v1933 = vmul.f32 %v1517, %v1897
        %v1934 = vmul.f32 %v1708, %v1901
        %v1935 = vmul.f32 %v1710, %v1905
        %v1936 = vmul.f32 %v942, %v1869
        %v1937 = vmul.f32 %v944, %v1873
        %v1938 = vmul.f32 %v1135, %v1877
        %v1939 = vmul.f32 %v1137, %v1881
        %v1940 = vmul.f32 %v1328, %v1885
        %v1941 = vmul.f32 %v1330, %v1889
        %v1942 = vmul.f32 %v1521, %v1893
        %v1943 = vmul.f32 %v1523, %v1897
        %v1944 = vmul.f32 %v1714, %v1901
        %v1945 = vmul.f32 %v1716, %v1905
        %v1946 = vmul.f32 %v946, %v1869
        %v1947 = vmul.f32 %v948, %v1873
        %v1948 = vmul.f32 %v1139, %v1877
        %v1949 = vmul.f32 %v1141, %v1881
        %v1950 = vmul.f32 %v1332, %v1885
        %v1951 = vmul.f32 %v1334, %v1889
        %v1952 = vmul.f32 %v1525, %v1893
        %v1953 = vmul.f32 %v1527, %v1897
        %v1954 = vmul.f32 %v1718, %v1901
        %v1955 = vmul.f32 %v1720, %v1905
        %v1956 = vmul.f32 %v952, %v1869
        %v1957 = vmul.f32 %v954, %v1873
        %v1958 = vmul.f32 %v1145, %v1877
        %v1959 = vmul.f32 %v1147, %v1881
        %v1960 = vmul.f32 %v1338, %v1885
        %v1961 = vmul.f32 %v1340, %v1889
        %v1962 = vmul.f32 %v1531, %v1893
        %v1963 = vmul.f32 %v1533, %v1897
        %v1964 = vmul.f32 %v1724, %v1901
        %v1965 = vmul.f32 %v1726, %v1905
        %v1966 = vmul.f32 %v956, %v1869
        %v1967 = vmul.f32 %v958, %v1873
        %v1968 = vmul.f32 %v1149, %v1877
        %v1969 = vmul.f32 %v1151, %v1881
        %v1970 = vmul.f32 %v1342, %v1885
        %v1971 = vmul.f32 %v1344, %v1889
        %v1972 = vmul.f32 %v1535, %v1893
        %v1973 = vmul.f32 %v1537, %v1897
        %v1974 = vmul.f32 %v1728, %v1901
        %v1975 = vmul.f32 %v1730, %v1905
        %v1976 = vmul.f32 %v962, %v1869
        %v1977 = vmul.f32 %v964, %v1873
        %v1978 = vmul.f32 %v1155, %v1877
        %v1979 = vmul.f32 %v1157, %v1881
        %v1980 = vmul.f32 %v1348, %v1885
        %v1981 = vmul.f32 %v1350, %v1889
        %v1982 = vmul.f32 %v1541, %v1893
        %v1983 = vmul.f32 %v1543, %v1897
        %v1984 = vmul.f32 %v1734, %v1901
        %v1985 = vmul.f32 %v1736, %v1905
        %v1986 = vmul.f32 %v966, %v1869
        %v1987 = vmul.f32 %v968, %v1873
        %v1988 = vmul.f32 %v1159, %v1877
        %v1989 = vmul.f32 %v1161, %v1881
        %v1990 = vmul.f32 %v1352, %v1885
        %v1991 = vmul.f32 %v1354, %v1889
        %v1992 = vmul.f32 %v1545, %v1893
        %v1993 = vmul.f32 %v1547, %v1897
        %v1994 = vmul.f32 %v1738, %v1901
        %v1995 = vmul.f32 %v1740, %v1905
        %v1996 = vmul.f32 %v972, %v1869
        %v1997 = vmul.f32 %v974, %v1873
        %v1998 = vmul.f32 %v1165, %v1877
        %v1999 = vmul.f32 %v1167, %v1881
        %v2000 = vmul.f32 %v1358, %v1885
        %v2001 = vmul.f32 %v1360, %v1889
        %v2002 = vmul.f32 %v1551, %v1893
        %v2003 = vmul.f32 %v1553, %v1897
        %v2004 = vmul.f32 %v1744, %v1901
        %v2005 = vmul.f32 %v1746, %v1905
        %v2006 = vmul.f32 %v976, %v1869
        %v2007 = vmul.f32 %v978, %v1873
        %v2008 = vmul.f32 %v1169, %v1877
        %v2009 = vmul.f32 %v1171, %v1881
        %v2010 = vmul.f32 %v1362, %v1885
        %v2011 = vmul.f32 %v1364, %v1889
        %v2012 = vmul.f32 %v1555, %v1893
        %v2013 = vmul.f32 %v1557, %v1897
        %v2014 = vmul.f32 %v1748, %v1901
        %v2015 = vmul.f32 %v1750, %v1905
        %v2016 = vmul.f32 %v982, %v1869
        %v2017 = vmul.f32 %v984, %v1873
        %v2018 = vmul.f32 %v1175, %v1877
        %v2019 = vmul.f32 %v1177, %v1881
        %v2020 = vmul.f32 %v1368, %v1885
        %v2021 = vmul.f32 %v1370, %v1889
        %v2022 = vmul.f32 %v1561, %v1893
        %v2023 = vmul.f32 %v1563, %v1897
        %v2024 = vmul.f32 %v1754, %v1901
        %v2025 = vmul.f32 %v1756, %v1905
        %v2026 = vmul.f32 %v986, %v1869
        %v2027 = vmul.f32 %v988, %v1873
        %v2028 = vmul.f32 %v1179, %v1877
        %v2029 = vmul.f32 %v1181, %v1881
        %v2030 = vmul.f32 %v1372, %v1885
        %v2031 = vmul.f32 %v1374, %v1889
        %v2032 = vmul.f32 %v1565, %v1893
        %v2033 = vmul.f32 %v1567, %v1897
        %v2034 = vmul.f32 %v1758, %v1901
        %v2035 = vmul.f32 %v1760, %v1905
        %v2036 = vmul.f32 %v992, %v1869
        %v2037 = vmul.f32 %v994, %v1873
        %v2038 = vmul.f32 %v1185, %v1877
        %v2039 = vmul.f32 %v1187, %v1881
        %v2040 = vmul.f32 %v1378, %v1885
        %v2041 = vmul.f32 %v1380, %v1889
        %v2042 = vmul.f32 %v1571, %v1893
        %v2043 = vmul.f32 %v1573, %v1897
        %v2044 = vmul.f32 %v1764, %v1901
        %v2045 = vmul.f32 %v1766, %v1905
        %v2046 = vmul.f32 %v996, %v1869
        %v2047 = vmul.f32 %v998, %v1873
        %v2048 = vmul.f32 %v1189, %v1877
        %v2049 = vmul.f32 %v1191, %v1881
        %v2050 = vmul.f32 %v1382, %v1885
        %v2051 = vmul.f32 %v1384, %v1889
        %v2052 = vmul.f32 %v1575, %v1893
        %v2053 = vmul.f32 %v1577, %v1897
        %v2054 = vmul.f32 %v1768, %v1901
        %v2055 = vmul.f32 %v1770, %v1905
        %v2056 = vmul.f32 %v1002, %v1869
        %v2057 = vmul.f32 %v1004, %v1873
        %v2058 = vmul.f32 %v1195, %v1877
        %v2059 = vmul.f32 %v1197, %v1881
        %v2060 = vmul.f32 %v1388, %v1885
        %v2061 = vmul.f32 %v1390, %v1889
        %v2062 = vmul.f32 %v1581, %v1893
        %v2063 = vmul.f32 %v1583, %v1897
        %v2064 = vmul.f32 %v1774, %v1901
        %v2065 = vmul.f32 %v1776, %v1905
        %v2066 = vmul.f32 %v1006, %v1869
        %v2067 = vmul.f32 %v1008, %v1873
        %v2068 = vmul.f32 %v1199, %v1877
        %v2069 = vmul.f32 %v1201, %v1881
        %v2070 = vmul.f32 %v1392, %v1885
        %v2071 = vmul.f32 %v1394, %v1889
        %v2072 = vmul.f32 %v1585, %v1893
        %v2073 = vmul.f32 %v1587, %v1897
        %v2074 = vmul.f32 %v1778, %v1901
        %v2075 = vmul.f32 %v1780, %v1905
        %v2076 = vmul.f32 %v1012, %v1869
        %v2077 = vmul.f32 %v1014, %v1873
        %v2078 = vmul.f32 %v1205, %v1877
        %v2079 = vmul.f32 %v1207, %v1881
        %v2080 = vmul.f32 %v1398, %v1885
        %v2081 = vmul.f32 %v1400, %v1889
        %v2082 = vmul.f32 %v1591, %v1893
        %v2083 = vmul.f32 %v1593, %v1897
        %v2084 = vmul.f32 %v1784, %v1901
        %v2085 = vmul.f32 %v1786, %v1905
        %v2086 = vmul.f32 %v1016, %v1869
        %v2087 = vmul.f32 %v1018, %v1873
        %v2088 = vmul.f32 %v1209, %v1877
        %v2089 = vmul.f32 %v1211, %v1881
        %v2090 = vmul.f32 %v1402, %v1885
        %v2091 = vmul.f32 %v1404, %v1889
        %v2092 = vmul.f32 %v1595, %v1893
        %v2093 = vmul.f32 %v1597, %v1897
        %v2094 = vmul.f32 %v1788, %v1901
        %v2095 = vmul.f32 %v1790, %v1905
        %v2096 = vmul.f32 %v1022, %v1869
        %v2097 = vmul.f32 %v1024, %v1873
        %v2098 = vmul.f32 %v1215, %v1877
        %v2099 = vmul.f32 %v1217, %v1881
        %v2100 = vmul.f32 %v1408, %v1885
        %v2101 = vmul.f32 %v1410, %v1889
        %v2102 = vmul.f32 %v1601, %v1893
        %v2103 = vmul.f32 %v1603, %v1897
        %v2104 = vmul.f32 %v1794, %v1901
        %v2105 = vmul.f32 %v1796, %v1905
        %v2106 = vmul.f32 %v1026, %v1869
        %v2107 = vmul.f32 %v1028, %v1873
        %v2108 = vmul.f32 %v1219, %v1877
        %v2109 = vmul.f32 %v1221, %v1881
        %v2110 = vmul.f32 %v1412, %v1885
        %v2111 = vmul.f32 %v1414, %v1889
        %v2112 = vmul.f32 %v1605, %v1893
        %v2113 = vmul.f32 %v1607, %v1897
        %v2114 = vmul.f32 %v1798, %v1901
        %v2115 = vmul.f32 %v1800, %v1905
        %v2116 = vmul.f32 %v1032, %v1869
        %v2117 = vmul.f32 %v1034, %v1873
        %v2118 = vmul.f32 %v1225, %v1877
        %v2119 = vmul.f32 %v1227, %v1881
        %v2120 = vmul.f32 %v1418, %v1885
        %v2121 = vmul.f32 %v1420, %v1889
        %v2122 = vmul.f32 %v1611, %v1893
        %v2123 = vmul.f32 %v1613, %v1897
        %v2124 = vmul.f32 %v1804, %v1901
        %v2125 = vmul.f32 %v1806, %v1905
        %v2126 = vmul.f32 %v1036, %v1869
        %v2127 = vmul.f32 %v1038, %v1873
        %v2128 = vmul.f32 %v1229, %v1877
        %v2129 = vmul.f32 %v1231, %v1881
        %v2130 = vmul.f32 %v1422, %v1885
        %v2131 = vmul.f32 %v1424, %v1889
        %v2132 = vmul.f32 %v1615, %v1893
        %v2133 = vmul.f32 %v1617, %v1897
        %v2134 = vmul.f32 %v1808, %v1901
        %v2135 = vmul.f32 %v1810, %v1905
        %v2136 = vmul.f32 %v1042, %v1869
        %v2137 = vmul.f32 %v1044, %v1873
        %v2138 = vmul.f32 %v1235, %v1877
        %v2139 = vmul.f32 %v1237, %v1881
        %v2140 = vmul.f32 %v1428, %v1885
        %v2141 = vmul.f32 %v1430, %v1889
        %v2142 = vmul.f32 %v1621, %v1893
        %v2143 = vmul.f32 %v1623, %v1897
        %v2144 = vmul.f32 %v1814, %v1901
        %v2145 = vmul.f32 %v1816, %v1905
        %v2146 = vmul.f32 %v1046, %v1869
        %v2147 = vmul.f32 %v1048, %v1873
        %v2148 = vmul.f32 %v1239, %v1877
        %v2149 = vmul.f32 %v1241, %v1881
        %v2150 = vmul.f32 %v1432, %v1885
        %v2151 = vmul.f32 %v1434, %v1889
        %v2152 = vmul.f32 %v1625, %v1893
        %v2153 = vmul.f32 %v1627, %v1897
        %v2154 = vmul.f32 %v1818, %v1901
        %v2155 = vmul.f32 %v1820, %v1905
        %v2156 = vmul.f32 %v1052, %v1869
        %v2157 = vmul.f32 %v1054, %v1873
        %v2158 = vmul.f32 %v1245, %v1877
        %v2159 = vmul.f32 %v1247, %v1881
        %v2160 = vmul.f32 %v1438, %v1885
        %v2161 = vmul.f32 %v1440, %v1889
        %v2162 = vmul.f32 %v1631, %v1893
        %v2163 = vmul.f32 %v1633, %v1897
        %v2164 = vmul.f32 %v1824, %v1901
        %v2165 = vmul.f32 %v1826, %v1905
        %v2166 = vmul.f32 %v1056, %v1869
        %v2167 = vmul.f32 %v1058, %v1873
        %v2168 = vmul.f32 %v1249, %v1877
        %v2169 = vmul.f32 %v1251, %v1881
        %v2170 = vmul.f32 %v1442, %v1885
        %v2171 = vmul.f32 %v1444, %v1889
        %v2172 = vmul.f32 %v1635, %v1893
        %v2173 = vmul.f32 %v1637, %v1897
        %v2174 = vmul.f32 %v1828, %v1901
        %v2175 = vmul.f32 %v1830, %v1905
        %v2176 = vmul.f32 %v1062, %v1869
        %v2177 = vmul.f32 %v1064, %v1873
        %v2178 = vmul.f32 %v1255, %v1877
        %v2179 = vmul.f32 %v1257, %v1881
        %v2180 = vmul.f32 %v1448, %v1885
        %v2181 = vmul.f32 %v1450, %v1889
        %v2182 = vmul.f32 %v1641, %v1893
        %v2183 = vmul.f32 %v1643, %v1897
        %v2184 = vmul.f32 %v1834, %v1901
        %v2185 = vmul.f32 %v1836, %v1905
        %v2186 = vmul.f32 %v1066, %v1869
        %v2187 = vmul.f32 %v1068, %v1873
        %v2188 = vmul.f32 %v1259, %v1877
        %v2189 = vmul.f32 %v1261, %v1881
        %v2190 = vmul.f32 %v1452, %v1885
        %v2191 = vmul.f32 %v1454, %v1889
        %v2192 = vmul.f32 %v1645, %v1893
        %v2193 = vmul.f32 %v1647, %v1897
        %v2194 = vmul.f32 %v1838, %v1901
        %v2195 = vmul.f32 %v1840, %v1905
        %v2196 = vmul.f32 %v1072, %v1869
        %v2197 = vmul.f32 %v1074, %v1873
        %v2198 = vmul.f32 %v1265, %v1877
        %v2199 = vmul.f32 %v1267, %v1881
        %v2200 = vmul.f32 %v1458, %v1885
        %v2201 = vmul.f32 %v1460, %v1889
        %v2202 = vmul.f32 %v1651, %v1893
        %v2203 = vmul.f32 %v1653, %v1897
        %v2204 = vmul.f32 %v1844, %v1901
        %v2205 = vmul.f32 %v1846, %v1905
        %v2206 = vmul.f32 %v1076, %v1869
        %v2207 = vmul.f32 %v1078, %v1873
        %v2208 = vmul.f32 %v1269, %v1877
        %v2209 = vmul.f32 %v1271, %v1881
        %v2210 = vmul.f32 %v1462, %v1885
        %v2211 = vmul.f32 %v1464, %v1889
        %v2212 = vmul.f32 %v1655, %v1893
        %v2213 = vmul.f32 %v1657, %v1897
        %v2214 = vmul.f32 %v1848, %v1901
        %v2215 = vmul.f32 %v1850, %v1905
        %v2216 = vmul.f32 %v1082, %v1869
        %v2217 = vmul.f32 %v1084, %v1873
        %v2218 = vmul.f32 %v1275, %v1877
        %v2219 = vmul.f32 %v1277, %v1881
        %v2220 = vmul.f32 %v1468, %v1885
        %v2221 = vmul.f32 %v1470, %v1889
        %v2222 = vmul.f32 %v1661, %v1893
        %v2223 = vmul.f32 %v1663, %v1897
        %v2224 = vmul.f32 %v1854, %v1901
        %v2225 = vmul.f32 %v1856, %v1905
        %v2226 = vmul.f32 %v1086, %v1869
        %v2227 = vmul.f32 %v1088, %v1873
        %v2228 = vmul.f32 %v1279, %v1877
        %v2229 = vmul.f32 %v1281, %v1881
        %v2230 = vmul.f32 %v1472, %v1885
        %v2231 = vmul.f32 %v1474, %v1889
        %v2232 = vmul.f32 %v1665, %v1893
        %v2233 = vmul.f32 %v1667, %v1897
        %v2234 = vmul.f32 %v1858, %v1901
        %v2235 = vmul.f32 %v1860, %v1905
        %v2236 = vld [vmem:[%s3] sm:$0xff]
        %v2237 = vld [vmem:[%s3 + $0x8] sm:$0x3]
        %v2240 = vlaneseq
        %v2241 = vshrl.u32 %v2240, 7
        %v2242 = vsub.s32 0, %v2241
        %v2243 = vrot.slane %v2236, %v2242
        %v2244 = vlaneseq
        %v2245 = vshrl.u32 %v2244, 7
        %v2246 = vsub.s32 1, %v2245
        %v2247 = vrot.slane %v2236, %v2246
        %v2248 = vlaneseq
        %v2249 = vshrl.u32 %v2248, 7
        %v2250 = vsub.s32 2, %v2249
        %v2251 = vrot.slane %v2236, %v2250
        %v2252 = vlaneseq
        %v2253 = vshrl.u32 %v2252, 7
        %v2254 = vsub.s32 3, %v2253
        %v2255 = vrot.slane %v2236, %v2254
        %v2256 = vlaneseq
        %v2257 = vshrl.u32 %v2256, 7
        %v2258 = vsub.s32 4, %v2257
        %v2259 = vrot.slane %v2236, %v2258
        %v2260 = vlaneseq
        %v2261 = vshrl.u32 %v2260, 7
        %v2262 = vsub.s32 5, %v2261
        %v2263 = vrot.slane %v2236, %v2262
        %v2264 = vlaneseq
        %v2265 = vshrl.u32 %v2264, 7
        %v2266 = vsub.s32 6, %v2265
        %v2267 = vrot.slane %v2236, %v2266
        %v2268 = vlaneseq
        %v2269 = vshrl.u32 %v2268, 7
        %v2270 = vsub.s32 7, %v2269
        %v2271 = vrot.slane %v2236, %v2270
        %v2272 = vlaneseq
        %v2273 = vshrl.u32 %v2272, 7
        %v2274 = vsub.s32 0, %v2273
        %v2275 = vrot.slane %v2237, %v2274
        %v2276 = vlaneseq
        %v2277 = vshrl.u32 %v2276, 7
        %v2278 = vsub.s32 1, %v2277
        %v2279 = vrot.slane %v2237, %v2278
        %v2290 = vadd.f32 %v1916, %v2243
        %v2291 = vadd.f32 %v1917, %v2247
        %v2292 = vadd.f32 %v1918, %v2251
        %v2293 = vadd.f32 %v1919, %v2255
        %v2294 = vadd.f32 %v1920, %v2259
        %v2295 = vadd.f32 %v1921, %v2263
        %v2296 = vadd.f32 %v1922, %v2267
        %v2297 = vadd.f32 %v1923, %v2271
        %v2298 = vadd.f32 %v1924, %v2275
        %v2299 = vadd.f32 %v1925, %v2279
        %v2300 = vadd.f32 %v1926, %v2243
        %v2301 = vadd.f32 %v1927, %v2247
        %v2302 = vadd.f32 %v1928, %v2251
        %v2303 = vadd.f32 %v1929, %v2255
        %v2304 = vadd.f32 %v1930, %v2259
        %v2305 = vadd.f32 %v1931, %v2263
        %v2306 = vadd.f32 %v1932, %v2267
        %v2307 = vadd.f32 %v1933, %v2271
        %v2308 = vadd.f32 %v1934, %v2275
        %v2309 = vadd.f32 %v1935, %v2279
        %v2310 = vadd.f32 %v1936, %v2243
        %v2311 = vadd.f32 %v1937, %v2247
        %v2312 = vadd.f32 %v1938, %v2251
        %v2313 = vadd.f32 %v1939, %v2255
        %v2314 = vadd.f32 %v1940, %v2259
        %v2315 = vadd.f32 %v1941, %v2263
        %v2316 = vadd.f32 %v1942, %v2267
        %v2317 = vadd.f32 %v1943, %v2271
        %v2318 = vadd.f32 %v1944, %v2275
        %v2319 = vadd.f32 %v1945, %v2279
        %v2320 = vadd.f32 %v1946, %v2243
        %v2321 = vadd.f32 %v1947, %v2247
        %v2322 = vadd.f32 %v1948, %v2251
        %v2323 = vadd.f32 %v1949, %v2255
        %v2324 = vadd.f32 %v1950, %v2259
        %v2325 = vadd.f32 %v1951, %v2263
        %v2326 = vadd.f32 %v1952, %v2267
        %v2327 = vadd.f32 %v1953, %v2271
        %v2328 = vadd.f32 %v1954, %v2275
        %v2329 = vadd.f32 %v1955, %v2279
        %v2330 = vadd.f32 %v1956, %v2243
        %v2331 = vadd.f32 %v1957, %v2247
        %v2332 = vadd.f32 %v1958, %v2251
        %v2333 = vadd.f32 %v1959, %v2255
        %v2334 = vadd.f32 %v1960, %v2259
        %v2335 = vadd.f32 %v1961, %v2263
        %v2336 = vadd.f32 %v1962, %v2267
        %v2337 = vadd.f32 %v1963, %v2271
        %v2338 = vadd.f32 %v1964, %v2275
        %v2339 = vadd.f32 %v1965, %v2279
        %v2340 = vadd.f32 %v1966, %v2243
        %v2341 = vadd.f32 %v1967, %v2247
        %v2342 = vadd.f32 %v1968, %v2251
        %v2343 = vadd.f32 %v1969, %v2255
        %v2344 = vadd.f32 %v1970, %v2259
        %v2345 = vadd.f32 %v1971, %v2263
        %v2346 = vadd.f32 %v1972, %v2267
        %v2347 = vadd.f32 %v1973, %v2271
        %v2348 = vadd.f32 %v1974, %v2275
        %v2349 = vadd.f32 %v1975, %v2279
        %v2350 = vadd.f32 %v1976, %v2243
        %v2351 = vadd.f32 %v1977, %v2247
        %v2352 = vadd.f32 %v1978, %v2251
        %v2353 = vadd.f32 %v1979, %v2255
        %v2354 = vadd.f32 %v1980, %v2259
        %v2355 = vadd.f32 %v1981, %v2263
        %v2356 = vadd.f32 %v1982, %v2267
        %v2357 = vadd.f32 %v1983, %v2271
        %v2358 = vadd.f32 %v1984, %v2275
        %v2359 = vadd.f32 %v1985, %v2279
        %v2360 = vadd.f32 %v1986, %v2243
        %v2361 = vadd.f32 %v1987, %v2247
        %v2362 = vadd.f32 %v1988, %v2251
        %v2363 = vadd.f32 %v1989, %v2255
        %v2364 = vadd.f32 %v1990, %v2259
        %v2365 = vadd.f32 %v1991, %v2263
        %v2366 = vadd.f32 %v1992, %v2267
        %v2367 = vadd.f32 %v1993, %v2271
        %v2368 = vadd.f32 %v1994, %v2275
        %v2369 = vadd.f32 %v1995, %v2279
        %v2370 = vadd.f32 %v1996, %v2243
        %v2371 = vadd.f32 %v1997, %v2247
        %v2372 = vadd.f32 %v1998, %v2251
        %v2373 = vadd.f32 %v1999, %v2255
        %v2374 = vadd.f32 %v2000, %v2259
        %v2375 = vadd.f32 %v2001, %v2263
        %v2376 = vadd.f32 %v2002, %v2267
        %v2377 = vadd.f32 %v2003, %v2271
        %v2378 = vadd.f32 %v2004, %v2275
        %v2379 = vadd.f32 %v2005, %v2279
        %v2380 = vadd.f32 %v2006, %v2243
        %v2381 = vadd.f32 %v2007, %v2247
        %v2382 = vadd.f32 %v2008, %v2251
        %v2383 = vadd.f32 %v2009, %v2255
        %v2384 = vadd.f32 %v2010, %v2259
        %v2385 = vadd.f32 %v2011, %v2263
        %v2386 = vadd.f32 %v2012, %v2267
        %v2387 = vadd.f32 %v2013, %v2271
        %v2388 = vadd.f32 %v2014, %v2275
        %v2389 = vadd.f32 %v2015, %v2279
        %v2390 = vadd.f32 %v2016, %v2243
        %v2391 = vadd.f32 %v2017, %v2247
        %v2392 = vadd.f32 %v2018, %v2251
        %v2393 = vadd.f32 %v2019, %v2255
        %v2394 = vadd.f32 %v2020, %v2259
        %v2395 = vadd.f32 %v2021, %v2263
        %v2396 = vadd.f32 %v2022, %v2267
        %v2397 = vadd.f32 %v2023, %v2271
        %v2398 = vadd.f32 %v2024, %v2275
        %v2399 = vadd.f32 %v2025, %v2279
        %v2400 = vadd.f32 %v2026, %v2243
        %v2401 = vadd.f32 %v2027, %v2247
        %v2402 = vadd.f32 %v2028, %v2251
        %v2403 = vadd.f32 %v2029, %v2255
        %v2404 = vadd.f32 %v2030, %v2259
        %v2405 = vadd.f32 %v2031, %v2263
        %v2406 = vadd.f32 %v2032, %v2267
        %v2407 = vadd.f32 %v2033, %v2271
        %v2408 = vadd.f32 %v2034, %v2275
        %v2409 = vadd.f32 %v2035, %v2279
        %v2410 = vadd.f32 %v2036, %v2243
        %v2411 = vadd.f32 %v2037, %v2247
        %v2412 = vadd.f32 %v2038, %v2251
        %v2413 = vadd.f32 %v2039, %v2255
        %v2414 = vadd.f32 %v2040, %v2259
        %v2415 = vadd.f32 %v2041, %v2263
        %v2416 = vadd.f32 %v2042, %v2267
        %v2417 = vadd.f32 %v2043, %v2271
        %v2418 = vadd.f32 %v2044, %v2275
        %v2419 = vadd.f32 %v2045, %v2279
        %v2420 = vadd.f32 %v2046, %v2243
        %v2421 = vadd.f32 %v2047, %v2247
        %v2422 = vadd.f32 %v2048, %v2251
        %v2423 = vadd.f32 %v2049, %v2255
        %v2424 = vadd.f32 %v2050, %v2259
        %v2425 = vadd.f32 %v2051, %v2263
        %v2426 = vadd.f32 %v2052, %v2267
        %v2427 = vadd.f32 %v2053, %v2271
        %v2428 = vadd.f32 %v2054, %v2275
        %v2429 = vadd.f32 %v2055, %v2279
        %v2430 = vadd.f32 %v2056, %v2243
        %v2431 = vadd.f32 %v2057, %v2247
        %v2432 = vadd.f32 %v2058, %v2251
        %v2433 = vadd.f32 %v2059, %v2255
        %v2434 = vadd.f32 %v2060, %v2259
        %v2435 = vadd.f32 %v2061, %v2263
        %v2436 = vadd.f32 %v2062, %v2267
        %v2437 = vadd.f32 %v2063, %v2271
        %v2438 = vadd.f32 %v2064, %v2275
        %v2439 = vadd.f32 %v2065, %v2279
        %v2440 = vadd.f32 %v2066, %v2243
        %v2441 = vadd.f32 %v2067, %v2247
        %v2442 = vadd.f32 %v2068, %v2251
        %v2443 = vadd.f32 %v2069, %v2255
        %v2444 = vadd.f32 %v2070, %v2259
        %v2445 = vadd.f32 %v2071, %v2263
        %v2446 = vadd.f32 %v2072, %v2267
        %v2447 = vadd.f32 %v2073, %v2271
        %v2448 = vadd.f32 %v2074, %v2275
        %v2449 = vadd.f32 %v2075, %v2279
        %v2450 = vadd.f32 %v2076, %v2243
        %v2451 = vadd.f32 %v2077, %v2247
        %v2452 = vadd.f32 %v2078, %v2251
        %v2453 = vadd.f32 %v2079, %v2255
        %v2454 = vadd.f32 %v2080, %v2259
        %v2455 = vadd.f32 %v2081, %v2263
        %v2456 = vadd.f32 %v2082, %v2267
        %v2457 = vadd.f32 %v2083, %v2271
        %v2458 = vadd.f32 %v2084, %v2275
        %v2459 = vadd.f32 %v2085, %v2279
        %v2460 = vadd.f32 %v2086, %v2243
        %v2461 = vadd.f32 %v2087, %v2247
        %v2462 = vadd.f32 %v2088, %v2251
        %v2463 = vadd.f32 %v2089, %v2255
        %v2464 = vadd.f32 %v2090, %v2259
        %v2465 = vadd.f32 %v2091, %v2263
        %v2466 = vadd.f32 %v2092, %v2267
        %v2467 = vadd.f32 %v2093, %v2271
        %v2468 = vadd.f32 %v2094, %v2275
        %v2469 = vadd.f32 %v2095, %v2279
        %v2470 = vadd.f32 %v2096, %v2243
        %v2471 = vadd.f32 %v2097, %v2247
        %v2472 = vadd.f32 %v2098, %v2251
        %v2473 = vadd.f32 %v2099, %v2255
        %v2474 = vadd.f32 %v2100, %v2259
        %v2475 = vadd.f32 %v2101, %v2263
        %v2476 = vadd.f32 %v2102, %v2267
        %v2477 = vadd.f32 %v2103, %v2271
        %v2478 = vadd.f32 %v2104, %v2275
        %v2479 = vadd.f32 %v2105, %v2279
        %v2480 = vadd.f32 %v2106, %v2243
        %v2481 = vadd.f32 %v2107, %v2247
        %v2482 = vadd.f32 %v2108, %v2251
        %v2483 = vadd.f32 %v2109, %v2255
        %v2484 = vadd.f32 %v2110, %v2259
        %v2485 = vadd.f32 %v2111, %v2263
        %v2486 = vadd.f32 %v2112, %v2267
        %v2487 = vadd.f32 %v2113, %v2271
        %v2488 = vadd.f32 %v2114, %v2275
        %v2489 = vadd.f32 %v2115, %v2279
        %v2490 = vadd.f32 %v2116, %v2243
        %v2491 = vadd.f32 %v2117, %v2247
        %v2492 = vadd.f32 %v2118, %v2251
        %v2493 = vadd.f32 %v2119, %v2255
        %v2494 = vadd.f32 %v2120, %v2259
        %v2495 = vadd.f32 %v2121, %v2263
        %v2496 = vadd.f32 %v2122, %v2267
        %v2497 = vadd.f32 %v2123, %v2271
        %v2498 = vadd.f32 %v2124, %v2275
        %v2499 = vadd.f32 %v2125, %v2279
        %v2500 = vadd.f32 %v2126, %v2243
        %v2501 = vadd.f32 %v2127, %v2247
        %v2502 = vadd.f32 %v2128, %v2251
        %v2503 = vadd.f32 %v2129, %v2255
        %v2504 = vadd.f32 %v2130, %v2259
        %v2505 = vadd.f32 %v2131, %v2263
        %v2506 = vadd.f32 %v2132, %v2267
        %v2507 = vadd.f32 %v2133, %v2271
        %v2508 = vadd.f32 %v2134, %v2275
        %v2509 = vadd.f32 %v2135, %v2279
        %v2510 = vadd.f32 %v2136, %v2243
        %v2511 = vadd.f32 %v2137, %v2247
        %v2512 = vadd.f32 %v2138, %v2251
        %v2513 = vadd.f32 %v2139, %v2255
        %v2514 = vadd.f32 %v2140, %v2259
        %v2515 = vadd.f32 %v2141, %v2263
        %v2516 = vadd.f32 %v2142, %v2267
        %v2517 = vadd.f32 %v2143, %v2271
        %v2518 = vadd.f32 %v2144, %v2275
        %v2519 = vadd.f32 %v2145, %v2279
        %v2520 = vadd.f32 %v2146, %v2243
        %v2521 = vadd.f32 %v2147, %v2247
        %v2522 = vadd.f32 %v2148, %v2251
        %v2523 = vadd.f32 %v2149, %v2255
        %v2524 = vadd.f32 %v2150, %v2259
        %v2525 = vadd.f32 %v2151, %v2263
        %v2526 = vadd.f32 %v2152, %v2267
        %v2527 = vadd.f32 %v2153, %v2271
        %v2528 = vadd.f32 %v2154, %v2275
        %v2529 = vadd.f32 %v2155, %v2279
        %v2530 = vadd.f32 %v2156, %v2243
        %v2531 = vadd.f32 %v2157, %v2247
        %v2532 = vadd.f32 %v2158, %v2251
        %v2533 = vadd.f32 %v2159, %v2255
        %v2534 = vadd.f32 %v2160, %v2259
        %v2535 = vadd.f32 %v2161, %v2263
        %v2536 = vadd.f32 %v2162, %v2267
        %v2537 = vadd.f32 %v2163, %v2271
        %v2538 = vadd.f32 %v2164, %v2275
        %v2539 = vadd.f32 %v2165, %v2279
        %v2540 = vadd.f32 %v2166, %v2243
        %v2541 = vadd.f32 %v2167, %v2247
        %v2542 = vadd.f32 %v2168, %v2251
        %v2543 = vadd.f32 %v2169, %v2255
        %v2544 = vadd.f32 %v2170, %v2259
        %v2545 = vadd.f32 %v2171, %v2263
        %v2546 = vadd.f32 %v2172, %v2267
        %v2547 = vadd.f32 %v2173, %v2271
        %v2548 = vadd.f32 %v2174, %v2275
        %v2549 = vadd.f32 %v2175, %v2279
        %v2550 = vadd.f32 %v2176, %v2243
        %v2551 = vadd.f32 %v2177, %v2247
        %v2552 = vadd.f32 %v2178, %v2251
        %v2553 = vadd.f32 %v2179, %v2255
        %v2554 = vadd.f32 %v2180, %v2259
        %v2555 = vadd.f32 %v2181, %v2263
        %v2556 = vadd.f32 %v2182, %v2267
        %v2557 = vadd.f32 %v2183, %v2271
        %v2558 = vadd.f32 %v2184, %v2275
        %v2559 = vadd.f32 %v2185, %v2279
        %v2560 = vadd.f32 %v2186, %v2243
        %v2561 = vadd.f32 %v2187, %v2247
        %v2562 = vadd.f32 %v2188, %v2251
        %v2563 = vadd.f32 %v2189, %v2255
        %v2564 = vadd.f32 %v2190, %v2259
        %v2565 = vadd.f32 %v2191, %v2263
        %v2566 = vadd.f32 %v2192, %v2267
        %v2567 = vadd.f32 %v2193, %v2271
        %v2568 = vadd.f32 %v2194, %v2275
        %v2569 = vadd.f32 %v2195, %v2279
        %v2570 = vadd.f32 %v2196, %v2243
        %v2571 = vadd.f32 %v2197, %v2247
        %v2572 = vadd.f32 %v2198, %v2251
        %v2573 = vadd.f32 %v2199, %v2255
        %v2574 = vadd.f32 %v2200, %v2259
        %v2575 = vadd.f32 %v2201, %v2263
        %v2576 = vadd.f32 %v2202, %v2267
        %v2577 = vadd.f32 %v2203, %v2271
        %v2578 = vadd.f32 %v2204, %v2275
        %v2579 = vadd.f32 %v2205, %v2279
        %v2580 = vadd.f32 %v2206, %v2243
        %v2581 = vadd.f32 %v2207, %v2247
        %v2582 = vadd.f32 %v2208, %v2251
        %v2583 = vadd.f32 %v2209, %v2255
        %v2584 = vadd.f32 %v2210, %v2259
        %v2585 = vadd.f32 %v2211, %v2263
        %v2586 = vadd.f32 %v2212, %v2267
        %v2587 = vadd.f32 %v2213, %v2271
        %v2588 = vadd.f32 %v2214, %v2275
        %v2589 = vadd.f32 %v2215, %v2279
        %v2590 = vadd.f32 %v2216, %v2243
        %v2591 = vadd.f32 %v2217, %v2247
        %v2592 = vadd.f32 %v2218, %v2251
        %v2593 = vadd.f32 %v2219, %v2255
        %v2594 = vadd.f32 %v2220, %v2259
        %v2595 = vadd.f32 %v2221, %v2263
        %v2596 = vadd.f32 %v2222, %v2267
        %v2597 = vadd.f32 %v2223, %v2271
        %v2598 = vadd.f32 %v2224, %v2275
        %v2599 = vadd.f32 %v2225, %v2279
        %v2600 = vadd.f32 %v2226, %v2243
        %v2601 = vadd.f32 %v2227, %v2247
        %v2602 = vadd.f32 %v2228, %v2251
        %v2603 = vadd.f32 %v2229, %v2255
        %v2604 = vadd.f32 %v2230, %v2259
        %v2605 = vadd.f32 %v2231, %v2263
        %v2606 = vadd.f32 %v2232, %v2267
        %v2607 = vadd.f32 %v2233, %v2271
        %v2608 = vadd.f32 %v2234, %v2275
        %v2609 = vadd.f32 %v2235, %v2279
        %v2610 = vpack.c.bf16 %v2300, %v2290
        %v2611 = vpack.c.bf16 %v2301, %v2291
        %v2612 = vpack.c.bf16 %v2302, %v2292
        %v2613 = vpack.c.bf16 %v2303, %v2293
        %v2614 = vpack.c.bf16 %v2304, %v2294
        %v2615 = vpack.c.bf16 %v2305, %v2295
        %v2616 = vpack.c.bf16 %v2306, %v2296
        %v2617 = vpack.c.bf16 %v2307, %v2297
        %v2618 = vpack.c.bf16 %v2308, %v2298
        %v2619 = vpack.c.bf16 %v2309, %v2299
        %v2620 = vpack.c.bf16 %v2320, %v2310
        %v2621 = vpack.c.bf16 %v2321, %v2311
        %v2622 = vpack.c.bf16 %v2322, %v2312
        %v2623 = vpack.c.bf16 %v2323, %v2313
        %v2624 = vpack.c.bf16 %v2324, %v2314
        %v2625 = vpack.c.bf16 %v2325, %v2315
        %v2626 = vpack.c.bf16 %v2326, %v2316
        %v2627 = vpack.c.bf16 %v2327, %v2317
        %v2628 = vpack.c.bf16 %v2328, %v2318
        %v2629 = vpack.c.bf16 %v2329, %v2319
        %v2630 = vpack.c.bf16 %v2340, %v2330
        %v2631 = vpack.c.bf16 %v2341, %v2331
        %v2632 = vpack.c.bf16 %v2342, %v2332
        %v2633 = vpack.c.bf16 %v2343, %v2333
        %v2634 = vpack.c.bf16 %v2344, %v2334
        %v2635 = vpack.c.bf16 %v2345, %v2335
        %v2636 = vpack.c.bf16 %v2346, %v2336
        %v2637 = vpack.c.bf16 %v2347, %v2337
        %v2638 = vpack.c.bf16 %v2348, %v2338
        %v2639 = vpack.c.bf16 %v2349, %v2339
        %v2640 = vpack.c.bf16 %v2360, %v2350
        %v2641 = vpack.c.bf16 %v2361, %v2351
        %v2642 = vpack.c.bf16 %v2362, %v2352
        %v2643 = vpack.c.bf16 %v2363, %v2353
        %v2644 = vpack.c.bf16 %v2364, %v2354
        %v2645 = vpack.c.bf16 %v2365, %v2355
        %v2646 = vpack.c.bf16 %v2366, %v2356
        %v2647 = vpack.c.bf16 %v2367, %v2357
        %v2648 = vpack.c.bf16 %v2368, %v2358
        %v2649 = vpack.c.bf16 %v2369, %v2359
        %v2650 = vpack.c.bf16 %v2380, %v2370
        %v2651 = vpack.c.bf16 %v2381, %v2371
        %v2652 = vpack.c.bf16 %v2382, %v2372
        %v2653 = vpack.c.bf16 %v2383, %v2373
        %v2654 = vpack.c.bf16 %v2384, %v2374
        %v2655 = vpack.c.bf16 %v2385, %v2375
        %v2656 = vpack.c.bf16 %v2386, %v2376
        %v2657 = vpack.c.bf16 %v2387, %v2377
        %v2658 = vpack.c.bf16 %v2388, %v2378
        %v2659 = vpack.c.bf16 %v2389, %v2379
        %v2660 = vpack.c.bf16 %v2400, %v2390
        %v2661 = vpack.c.bf16 %v2401, %v2391
        %v2662 = vpack.c.bf16 %v2402, %v2392
        %v2663 = vpack.c.bf16 %v2403, %v2393
        %v2664 = vpack.c.bf16 %v2404, %v2394
        %v2665 = vpack.c.bf16 %v2405, %v2395
        %v2666 = vpack.c.bf16 %v2406, %v2396
        %v2667 = vpack.c.bf16 %v2407, %v2397
        %v2668 = vpack.c.bf16 %v2408, %v2398
        %v2669 = vpack.c.bf16 %v2409, %v2399
        %v2670 = vpack.c.bf16 %v2420, %v2410
        %v2671 = vpack.c.bf16 %v2421, %v2411
        %v2672 = vpack.c.bf16 %v2422, %v2412
        %v2673 = vpack.c.bf16 %v2423, %v2413
        %v2674 = vpack.c.bf16 %v2424, %v2414
        %v2675 = vpack.c.bf16 %v2425, %v2415
        %v2676 = vpack.c.bf16 %v2426, %v2416
        %v2677 = vpack.c.bf16 %v2427, %v2417
        %v2678 = vpack.c.bf16 %v2428, %v2418
        %v2679 = vpack.c.bf16 %v2429, %v2419
        %v2680 = vpack.c.bf16 %v2440, %v2430
        %v2681 = vpack.c.bf16 %v2441, %v2431
        %v2682 = vpack.c.bf16 %v2442, %v2432
        %v2683 = vpack.c.bf16 %v2443, %v2433
        %v2684 = vpack.c.bf16 %v2444, %v2434
        %v2685 = vpack.c.bf16 %v2445, %v2435
        %v2686 = vpack.c.bf16 %v2446, %v2436
        %v2687 = vpack.c.bf16 %v2447, %v2437
        %v2688 = vpack.c.bf16 %v2448, %v2438
        %v2689 = vpack.c.bf16 %v2449, %v2439
        %v2690 = vpack.c.bf16 %v2460, %v2450
        %v2691 = vpack.c.bf16 %v2461, %v2451
        %v2692 = vpack.c.bf16 %v2462, %v2452
        %v2693 = vpack.c.bf16 %v2463, %v2453
        %v2694 = vpack.c.bf16 %v2464, %v2454
        %v2695 = vpack.c.bf16 %v2465, %v2455
        %v2696 = vpack.c.bf16 %v2466, %v2456
        %v2697 = vpack.c.bf16 %v2467, %v2457
        %v2698 = vpack.c.bf16 %v2468, %v2458
        %v2699 = vpack.c.bf16 %v2469, %v2459
        %v2700 = vpack.c.bf16 %v2480, %v2470
        %v2701 = vpack.c.bf16 %v2481, %v2471
        %v2702 = vpack.c.bf16 %v2482, %v2472
        %v2703 = vpack.c.bf16 %v2483, %v2473
        %v2704 = vpack.c.bf16 %v2484, %v2474
        %v2705 = vpack.c.bf16 %v2485, %v2475
        %v2706 = vpack.c.bf16 %v2486, %v2476
        %v2707 = vpack.c.bf16 %v2487, %v2477
        %v2708 = vpack.c.bf16 %v2488, %v2478
        %v2709 = vpack.c.bf16 %v2489, %v2479
        %v2710 = vpack.c.bf16 %v2500, %v2490
        %v2711 = vpack.c.bf16 %v2501, %v2491
        %v2712 = vpack.c.bf16 %v2502, %v2492
        %v2713 = vpack.c.bf16 %v2503, %v2493
        %v2714 = vpack.c.bf16 %v2504, %v2494
        %v2715 = vpack.c.bf16 %v2505, %v2495
        %v2716 = vpack.c.bf16 %v2506, %v2496
        %v2717 = vpack.c.bf16 %v2507, %v2497
        %v2718 = vpack.c.bf16 %v2508, %v2498
        %v2719 = vpack.c.bf16 %v2509, %v2499
        %v2720 = vpack.c.bf16 %v2520, %v2510
        %v2721 = vpack.c.bf16 %v2521, %v2511
        %v2722 = vpack.c.bf16 %v2522, %v2512
        %v2723 = vpack.c.bf16 %v2523, %v2513
        %v2724 = vpack.c.bf16 %v2524, %v2514
        %v2725 = vpack.c.bf16 %v2525, %v2515
        %v2726 = vpack.c.bf16 %v2526, %v2516
        %v2727 = vpack.c.bf16 %v2527, %v2517
        %v2728 = vpack.c.bf16 %v2528, %v2518
        %v2729 = vpack.c.bf16 %v2529, %v2519
        %v2730 = vpack.c.bf16 %v2540, %v2530
        %v2731 = vpack.c.bf16 %v2541, %v2531
        %v2732 = vpack.c.bf16 %v2542, %v2532
        %v2733 = vpack.c.bf16 %v2543, %v2533
        %v2734 = vpack.c.bf16 %v2544, %v2534
        %v2735 = vpack.c.bf16 %v2545, %v2535
        %v2736 = vpack.c.bf16 %v2546, %v2536
        %v2737 = vpack.c.bf16 %v2547, %v2537
        %v2738 = vpack.c.bf16 %v2548, %v2538
        %v2739 = vpack.c.bf16 %v2549, %v2539
        %v2740 = vpack.c.bf16 %v2560, %v2550
        %v2741 = vpack.c.bf16 %v2561, %v2551
        %v2742 = vpack.c.bf16 %v2562, %v2552
        %v2743 = vpack.c.bf16 %v2563, %v2553
        %v2744 = vpack.c.bf16 %v2564, %v2554
        %v2745 = vpack.c.bf16 %v2565, %v2555
        %v2746 = vpack.c.bf16 %v2566, %v2556
        %v2747 = vpack.c.bf16 %v2567, %v2557
        %v2748 = vpack.c.bf16 %v2568, %v2558
        %v2749 = vpack.c.bf16 %v2569, %v2559
        %v2750 = vpack.c.bf16 %v2580, %v2570
        %v2751 = vpack.c.bf16 %v2581, %v2571
        %v2752 = vpack.c.bf16 %v2582, %v2572
        %v2753 = vpack.c.bf16 %v2583, %v2573
        %v2754 = vpack.c.bf16 %v2584, %v2574
        %v2755 = vpack.c.bf16 %v2585, %v2575
        %v2756 = vpack.c.bf16 %v2586, %v2576
        %v2757 = vpack.c.bf16 %v2587, %v2577
        %v2758 = vpack.c.bf16 %v2588, %v2578
        %v2759 = vpack.c.bf16 %v2589, %v2579
        %v2760 = vpack.c.bf16 %v2600, %v2590
        %v2761 = vpack.c.bf16 %v2601, %v2591
        %v2762 = vpack.c.bf16 %v2602, %v2592
        %v2763 = vpack.c.bf16 %v2603, %v2593
        %v2764 = vpack.c.bf16 %v2604, %v2594
        %v2765 = vpack.c.bf16 %v2605, %v2595
        %v2766 = vpack.c.bf16 %v2606, %v2596
        %v2767 = vpack.c.bf16 %v2607, %v2597
        %v2768 = vpack.c.bf16 %v2608, %v2598
        %v2769 = vpack.c.bf16 %v2609, %v2599
        %v2770 = vxor.u32 %v2610, 2147516416
        %v2771 = vxor.u32 %v2611, 2147516416
        %v2772 = vxor.u32 %v2612, 2147516416
        %v2773 = vxor.u32 %v2613, 2147516416
        %v2774 = vxor.u32 %v2614, 2147516416
        %v2775 = vxor.u32 %v2615, 2147516416
        %v2776 = vxor.u32 %v2616, 2147516416
        %v2777 = vxor.u32 %v2617, 2147516416
        %v2778 = vxor.u32 %v2618, 2147516416
        %v2779 = vxor.u32 %v2619, 2147516416
        %v2780 = vxor.u32 %v2620, 2147516416
        %v2781 = vxor.u32 %v2621, 2147516416
        %v2782 = vxor.u32 %v2622, 2147516416
        %v2783 = vxor.u32 %v2623, 2147516416
        %v2784 = vxor.u32 %v2624, 2147516416
        %v2785 = vxor.u32 %v2625, 2147516416
        %v2786 = vxor.u32 %v2626, 2147516416
        %v2787 = vxor.u32 %v2627, 2147516416
        %v2788 = vxor.u32 %v2628, 2147516416
        %v2789 = vxor.u32 %v2629, 2147516416
        %v2790 = vxor.u32 %v2630, 2147516416
        %v2791 = vxor.u32 %v2631, 2147516416
        %v2792 = vxor.u32 %v2632, 2147516416
        %v2793 = vxor.u32 %v2633, 2147516416
        %v2794 = vxor.u32 %v2634, 2147516416
        %v2795 = vxor.u32 %v2635, 2147516416
        %v2796 = vxor.u32 %v2636, 2147516416
        %v2797 = vxor.u32 %v2637, 2147516416
        %v2798 = vxor.u32 %v2638, 2147516416
        %v2799 = vxor.u32 %v2639, 2147516416
        %v2800 = vxor.u32 %v2640, 2147516416
        %v2801 = vxor.u32 %v2641, 2147516416
        %v2802 = vxor.u32 %v2642, 2147516416
        %v2803 = vxor.u32 %v2643, 2147516416
        %v2804 = vxor.u32 %v2644, 2147516416
        %v2805 = vxor.u32 %v2645, 2147516416
        %v2806 = vxor.u32 %v2646, 2147516416
        %v2807 = vxor.u32 %v2647, 2147516416
        %v2808 = vxor.u32 %v2648, 2147516416
        %v2809 = vxor.u32 %v2649, 2147516416
        %v2810 = vxor.u32 %v2650, 2147516416
        %v2811 = vxor.u32 %v2651, 2147516416
        %v2812 = vxor.u32 %v2652, 2147516416
        %v2813 = vxor.u32 %v2653, 2147516416
        %v2814 = vxor.u32 %v2654, 2147516416
        %v2815 = vxor.u32 %v2655, 2147516416
        %v2816 = vxor.u32 %v2656, 2147516416
        %v2817 = vxor.u32 %v2657, 2147516416
        %v2818 = vxor.u32 %v2658, 2147516416
        %v2819 = vxor.u32 %v2659, 2147516416
        %v2820 = vxor.u32 %v2660, 2147516416
        %v2821 = vxor.u32 %v2661, 2147516416
        %v2822 = vxor.u32 %v2662, 2147516416
        %v2823 = vxor.u32 %v2663, 2147516416
        %v2824 = vxor.u32 %v2664, 2147516416
        %v2825 = vxor.u32 %v2665, 2147516416
        %v2826 = vxor.u32 %v2666, 2147516416
        %v2827 = vxor.u32 %v2667, 2147516416
        %v2828 = vxor.u32 %v2668, 2147516416
        %v2829 = vxor.u32 %v2669, 2147516416
        %v2830 = vxor.u32 %v2670, 2147516416
        %v2831 = vxor.u32 %v2671, 2147516416
        %v2832 = vxor.u32 %v2672, 2147516416
        %v2833 = vxor.u32 %v2673, 2147516416
        %v2834 = vxor.u32 %v2674, 2147516416
        %v2835 = vxor.u32 %v2675, 2147516416
        %v2836 = vxor.u32 %v2676, 2147516416
        %v2837 = vxor.u32 %v2677, 2147516416
        %v2838 = vxor.u32 %v2678, 2147516416
        %v2839 = vxor.u32 %v2679, 2147516416
        %v2840 = vxor.u32 %v2680, 2147516416
        %v2841 = vxor.u32 %v2681, 2147516416
        %v2842 = vxor.u32 %v2682, 2147516416
        %v2843 = vxor.u32 %v2683, 2147516416
        %v2844 = vxor.u32 %v2684, 2147516416
        %v2845 = vxor.u32 %v2685, 2147516416
        %v2846 = vxor.u32 %v2686, 2147516416
        %v2847 = vxor.u32 %v2687, 2147516416
        %v2848 = vxor.u32 %v2688, 2147516416
        %v2849 = vxor.u32 %v2689, 2147516416
        %v2850 = vxor.u32 %v2690, 2147516416
        %v2851 = vxor.u32 %v2691, 2147516416
        %v2852 = vxor.u32 %v2692, 2147516416
        %v2853 = vxor.u32 %v2693, 2147516416
        %v2854 = vxor.u32 %v2694, 2147516416
        %v2855 = vxor.u32 %v2695, 2147516416
        %v2856 = vxor.u32 %v2696, 2147516416
        %v2857 = vxor.u32 %v2697, 2147516416
        %v2858 = vxor.u32 %v2698, 2147516416
        %v2859 = vxor.u32 %v2699, 2147516416
        %v2860 = vxor.u32 %v2700, 2147516416
        %v2861 = vxor.u32 %v2701, 2147516416
        %v2862 = vxor.u32 %v2702, 2147516416
        %v2863 = vxor.u32 %v2703, 2147516416
        %v2864 = vxor.u32 %v2704, 2147516416
        %v2865 = vxor.u32 %v2705, 2147516416
        %v2866 = vxor.u32 %v2706, 2147516416
        %v2867 = vxor.u32 %v2707, 2147516416
        %v2868 = vxor.u32 %v2708, 2147516416
        %v2869 = vxor.u32 %v2709, 2147516416
        %v2870 = vxor.u32 %v2710, 2147516416
        %v2871 = vxor.u32 %v2711, 2147516416
        %v2872 = vxor.u32 %v2712, 2147516416
        %v2873 = vxor.u32 %v2713, 2147516416
        %v2874 = vxor.u32 %v2714, 2147516416
        %v2875 = vxor.u32 %v2715, 2147516416
        %v2876 = vxor.u32 %v2716, 2147516416
        %v2877 = vxor.u32 %v2717, 2147516416
        %v2878 = vxor.u32 %v2718, 2147516416
        %v2879 = vxor.u32 %v2719, 2147516416
        %v2880 = vxor.u32 %v2720, 2147516416
        %v2881 = vxor.u32 %v2721, 2147516416
        %v2882 = vxor.u32 %v2722, 2147516416
        %v2883 = vxor.u32 %v2723, 2147516416
        %v2884 = vxor.u32 %v2724, 2147516416
        %v2885 = vxor.u32 %v2725, 2147516416
        %v2886 = vxor.u32 %v2726, 2147516416
        %v2887 = vxor.u32 %v2727, 2147516416
        %v2888 = vxor.u32 %v2728, 2147516416
        %v2889 = vxor.u32 %v2729, 2147516416
        %v2890 = vxor.u32 %v2730, 2147516416
        %v2891 = vxor.u32 %v2731, 2147516416
        %v2892 = vxor.u32 %v2732, 2147516416
        %v2893 = vxor.u32 %v2733, 2147516416
        %v2894 = vxor.u32 %v2734, 2147516416
        %v2895 = vxor.u32 %v2735, 2147516416
        %v2896 = vxor.u32 %v2736, 2147516416
        %v2897 = vxor.u32 %v2737, 2147516416
        %v2898 = vxor.u32 %v2738, 2147516416
        %v2899 = vxor.u32 %v2739, 2147516416
        %v2900 = vxor.u32 %v2740, 2147516416
        %v2901 = vxor.u32 %v2741, 2147516416
        %v2902 = vxor.u32 %v2742, 2147516416
        %v2903 = vxor.u32 %v2743, 2147516416
        %v2904 = vxor.u32 %v2744, 2147516416
        %v2905 = vxor.u32 %v2745, 2147516416
        %v2906 = vxor.u32 %v2746, 2147516416
        %v2907 = vxor.u32 %v2747, 2147516416
        %v2908 = vxor.u32 %v2748, 2147516416
        %v2909 = vxor.u32 %v2749, 2147516416
        %v2910 = vxor.u32 %v2750, 2147516416
        %v2911 = vxor.u32 %v2751, 2147516416
        %v2912 = vxor.u32 %v2752, 2147516416
        %v2913 = vxor.u32 %v2753, 2147516416
        %v2914 = vxor.u32 %v2754, 2147516416
        %v2915 = vxor.u32 %v2755, 2147516416
        %v2916 = vxor.u32 %v2756, 2147516416
        %v2917 = vxor.u32 %v2757, 2147516416
        %v2918 = vxor.u32 %v2758, 2147516416
        %v2919 = vxor.u32 %v2759, 2147516416
        %v2920 = vxor.u32 %v2760, 2147516416
        %v2921 = vxor.u32 %v2761, 2147516416
        %v2922 = vxor.u32 %v2762, 2147516416
        %v2923 = vxor.u32 %v2763, 2147516416
        %v2924 = vxor.u32 %v2764, 2147516416
        %v2925 = vxor.u32 %v2765, 2147516416
        %v2926 = vxor.u32 %v2766, 2147516416
        %v2927 = vxor.u32 %v2767, 2147516416
        %v2928 = vxor.u32 %v2768, 2147516416
        %v2929 = vxor.u32 %v2769, 2147516416
        %v2931 = vmul.bf16 %v2770, 1069105081
        %v2932 = vpow.bf16.pop %v2931
        %v2934 = vmul.bf16 %v2771, 1069105081
        %v2935 = vpow.bf16.pop %v2934
        %v2937 = vmul.bf16 %v2772, 1069105081
        %v2938 = vpow.bf16.pop %v2937
        %v2940 = vmul.bf16 %v2773, 1069105081
        %v2941 = vpow.bf16.pop %v2940
        %v2943 = vmul.bf16 %v2774, 1069105081
        %v2944 = vpow.bf16.pop %v2943
        %v2946 = vmul.bf16 %v2775, 1069105081
        %v2947 = vpow.bf16.pop %v2946
        %v2949 = vmul.bf16 %v2776, 1069105081
        %v2950 = vpow.bf16.pop %v2949
        %v2952 = vmul.bf16 %v2777, 1069105081
        %v2953 = vpow.bf16.pop %v2952
        %v2955 = vmul.bf16 %v2778, 1069105081
        %v2956 = vpow.bf16.pop %v2955
        %v2958 = vmul.bf16 %v2779, 1069105081
        %v2959 = vpow.bf16.pop %v2958
        %v2961 = vmul.bf16 %v2780, 1069105081
        %v2962 = vpow.bf16.pop %v2961
        %v2964 = vmul.bf16 %v2781, 1069105081
        %v2965 = vpow.bf16.pop %v2964
        %v2967 = vmul.bf16 %v2782, 1069105081
        %v2968 = vpow.bf16.pop %v2967
        %v2970 = vmul.bf16 %v2783, 1069105081
        %v2971 = vpow.bf16.pop %v2970
        %v2973 = vmul.bf16 %v2784, 1069105081
        %v2974 = vpow.bf16.pop %v2973
        %v2976 = vmul.bf16 %v2785, 1069105081
        %v2977 = vpow.bf16.pop %v2976
        %v2979 = vmul.bf16 %v2786, 1069105081
        %v2980 = vpow.bf16.pop %v2979
        %v2982 = vmul.bf16 %v2787, 1069105081
        %v2983 = vpow.bf16.pop %v2982
        %v2985 = vmul.bf16 %v2788, 1069105081
        %v2986 = vpow.bf16.pop %v2985
        %v2988 = vmul.bf16 %v2789, 1069105081
        %v2989 = vpow.bf16.pop %v2988
        %v2991 = vmul.bf16 %v2790, 1069105081
        %v2992 = vpow.bf16.pop %v2991
        %v2994 = vmul.bf16 %v2791, 1069105081
        %v2995 = vpow.bf16.pop %v2994
        %v2997 = vmul.bf16 %v2792, 1069105081
        %v2998 = vpow.bf16.pop %v2997
        %v3000 = vmul.bf16 %v2793, 1069105081
        %v3001 = vpow.bf16.pop %v3000
        %v3003 = vmul.bf16 %v2794, 1069105081
        %v3004 = vpow.bf16.pop %v3003
        %v3006 = vmul.bf16 %v2795, 1069105081
        %v3007 = vpow.bf16.pop %v3006
        %v3009 = vmul.bf16 %v2796, 1069105081
        %v3010 = vpow.bf16.pop %v3009
        %v3012 = vmul.bf16 %v2797, 1069105081
        %v3013 = vpow.bf16.pop %v3012
        %v3015 = vmul.bf16 %v2798, 1069105081
        %v3016 = vpow.bf16.pop %v3015
        %v3018 = vmul.bf16 %v2799, 1069105081
        %v3019 = vpow.bf16.pop %v3018
        %v3021 = vmul.bf16 %v2800, 1069105081
        %v3022 = vpow.bf16.pop %v3021
        %v3024 = vmul.bf16 %v2801, 1069105081
        %v3025 = vpow.bf16.pop %v3024
        %v3027 = vmul.bf16 %v2802, 1069105081
        %v3028 = vpow.bf16.pop %v3027
        %v3030 = vmul.bf16 %v2803, 1069105081
        %v3031 = vpow.bf16.pop %v3030
        %v3033 = vmul.bf16 %v2804, 1069105081
        %v3034 = vpow.bf16.pop %v3033
        %v3036 = vmul.bf16 %v2805, 1069105081
        %v3037 = vpow.bf16.pop %v3036
        %v3039 = vmul.bf16 %v2806, 1069105081
        %v3040 = vpow.bf16.pop %v3039
        %v3042 = vmul.bf16 %v2807, 1069105081
        %v3043 = vpow.bf16.pop %v3042
        %v3045 = vmul.bf16 %v2808, 1069105081
        %v3046 = vpow.bf16.pop %v3045
        %v3048 = vmul.bf16 %v2809, 1069105081
        %v3049 = vpow.bf16.pop %v3048
        %v3051 = vmul.bf16 %v2810, 1069105081
        %v3052 = vpow.bf16.pop %v3051
        %v3054 = vmul.bf16 %v2811, 1069105081
        %v3055 = vpow.bf16.pop %v3054
        %v3057 = vmul.bf16 %v2812, 1069105081
        %v3058 = vpow.bf16.pop %v3057
        %v3060 = vmul.bf16 %v2813, 1069105081
        %v3061 = vpow.bf16.pop %v3060
        %v3063 = vmul.bf16 %v2814, 1069105081
        %v3064 = vpow.bf16.pop %v3063
        %v3066 = vmul.bf16 %v2815, 1069105081
        %v3067 = vpow.bf16.pop %v3066
        %v3069 = vmul.bf16 %v2816, 1069105081
        %v3070 = vpow.bf16.pop %v3069
        %v3072 = vmul.bf16 %v2817, 1069105081
        %v3073 = vpow.bf16.pop %v3072
        %v3075 = vmul.bf16 %v2818, 1069105081
        %v3076 = vpow.bf16.pop %v3075
        %v3078 = vmul.bf16 %v2819, 1069105081
        %v3079 = vpow.bf16.pop %v3078
        %v3081 = vmul.bf16 %v2820, 1069105081
        %v3082 = vpow.bf16.pop %v3081
        %v3084 = vmul.bf16 %v2821, 1069105081
        %v3085 = vpow.bf16.pop %v3084
        %v3087 = vmul.bf16 %v2822, 1069105081
        %v3088 = vpow.bf16.pop %v3087
        %v3090 = vmul.bf16 %v2823, 1069105081
        %v3091 = vpow.bf16.pop %v3090
        %v3093 = vmul.bf16 %v2824, 1069105081
        %v3094 = vpow.bf16.pop %v3093
        %v3096 = vmul.bf16 %v2825, 1069105081
        %v3097 = vpow.bf16.pop %v3096
        %v3099 = vmul.bf16 %v2826, 1069105081
        %v3100 = vpow.bf16.pop %v3099
        %v3102 = vmul.bf16 %v2827, 1069105081
        %v3103 = vpow.bf16.pop %v3102
        %v3105 = vmul.bf16 %v2828, 1069105081
        %v3106 = vpow.bf16.pop %v3105
        %v3108 = vmul.bf16 %v2829, 1069105081
        %v3109 = vpow.bf16.pop %v3108
        %v3111 = vmul.bf16 %v2830, 1069105081
        %v3112 = vpow.bf16.pop %v3111
        %v3114 = vmul.bf16 %v2831, 1069105081
        %v3115 = vpow.bf16.pop %v3114
        %v3117 = vmul.bf16 %v2832, 1069105081
        %v3118 = vpow.bf16.pop %v3117
        %v3120 = vmul.bf16 %v2833, 1069105081
        %v3121 = vpow.bf16.pop %v3120
        %v3123 = vmul.bf16 %v2834, 1069105081
        %v3124 = vpow.bf16.pop %v3123
        %v3126 = vmul.bf16 %v2835, 1069105081
        %v3127 = vpow.bf16.pop %v3126
        %v3129 = vmul.bf16 %v2836, 1069105081
        %v3130 = vpow.bf16.pop %v3129
        %v3132 = vmul.bf16 %v2837, 1069105081
        %v3133 = vpow.bf16.pop %v3132
        %v3135 = vmul.bf16 %v2838, 1069105081
        %v3136 = vpow.bf16.pop %v3135
        %v3138 = vmul.bf16 %v2839, 1069105081
        %v3139 = vpow.bf16.pop %v3138
        %v3141 = vmul.bf16 %v2840, 1069105081
        %v3142 = vpow.bf16.pop %v3141
        %v3144 = vmul.bf16 %v2841, 1069105081
        %v3145 = vpow.bf16.pop %v3144
        %v3147 = vmul.bf16 %v2842, 1069105081
        %v3148 = vpow.bf16.pop %v3147
        %v3150 = vmul.bf16 %v2843, 1069105081
        %v3151 = vpow.bf16.pop %v3150
        %v3153 = vmul.bf16 %v2844, 1069105081
        %v3154 = vpow.bf16.pop %v3153
        %v3156 = vmul.bf16 %v2845, 1069105081
        %v3157 = vpow.bf16.pop %v3156
        %v3159 = vmul.bf16 %v2846, 1069105081
        %v3160 = vpow.bf16.pop %v3159
        %v3162 = vmul.bf16 %v2847, 1069105081
        %v3163 = vpow.bf16.pop %v3162
        %v3165 = vmul.bf16 %v2848, 1069105081
        %v3166 = vpow.bf16.pop %v3165
        %v3168 = vmul.bf16 %v2849, 1069105081
        %v3169 = vpow.bf16.pop %v3168
        %v3171 = vmul.bf16 %v2850, 1069105081
        %v3172 = vpow.bf16.pop %v3171
        %v3174 = vmul.bf16 %v2851, 1069105081
        %v3175 = vpow.bf16.pop %v3174
        %v3177 = vmul.bf16 %v2852, 1069105081
        %v3178 = vpow.bf16.pop %v3177
        %v3180 = vmul.bf16 %v2853, 1069105081
        %v3181 = vpow.bf16.pop %v3180
        %v3183 = vmul.bf16 %v2854, 1069105081
        %v3184 = vpow.bf16.pop %v3183
        %v3186 = vmul.bf16 %v2855, 1069105081
        %v3187 = vpow.bf16.pop %v3186
        %v3189 = vmul.bf16 %v2856, 1069105081
        %v3190 = vpow.bf16.pop %v3189
        %v3192 = vmul.bf16 %v2857, 1069105081
        %v3193 = vpow.bf16.pop %v3192
        %v3195 = vmul.bf16 %v2858, 1069105081
        %v3196 = vpow.bf16.pop %v3195
        %v3198 = vmul.bf16 %v2859, 1069105081
        %v3199 = vpow.bf16.pop %v3198
        %v3201 = vmul.bf16 %v2860, 1069105081
        %v3202 = vpow.bf16.pop %v3201
        %v3204 = vmul.bf16 %v2861, 1069105081
        %v3205 = vpow.bf16.pop %v3204
        %v3207 = vmul.bf16 %v2862, 1069105081
        %v3208 = vpow.bf16.pop %v3207
        %v3210 = vmul.bf16 %v2863, 1069105081
        %v3211 = vpow.bf16.pop %v3210
        %v3213 = vmul.bf16 %v2864, 1069105081
        %v3214 = vpow.bf16.pop %v3213
        %v3216 = vmul.bf16 %v2865, 1069105081
        %v3217 = vpow.bf16.pop %v3216
        %v3219 = vmul.bf16 %v2866, 1069105081
        %v3220 = vpow.bf16.pop %v3219
        %v3222 = vmul.bf16 %v2867, 1069105081
        %v3223 = vpow.bf16.pop %v3222
        %v3225 = vmul.bf16 %v2868, 1069105081
        %v3226 = vpow.bf16.pop %v3225
        %v3228 = vmul.bf16 %v2869, 1069105081
        %v3229 = vpow.bf16.pop %v3228
        %v3231 = vmul.bf16 %v2870, 1069105081
        %v3232 = vpow.bf16.pop %v3231
        %v3234 = vmul.bf16 %v2871, 1069105081
        %v3235 = vpow.bf16.pop %v3234
        %v3237 = vmul.bf16 %v2872, 1069105081
        %v3238 = vpow.bf16.pop %v3237
        %v3240 = vmul.bf16 %v2873, 1069105081
        %v3241 = vpow.bf16.pop %v3240
        %v3243 = vmul.bf16 %v2874, 1069105081
        %v3244 = vpow.bf16.pop %v3243
        %v3246 = vmul.bf16 %v2875, 1069105081
        %v3247 = vpow.bf16.pop %v3246
        %v3249 = vmul.bf16 %v2876, 1069105081
        %v3250 = vpow.bf16.pop %v3249
        %v3252 = vmul.bf16 %v2877, 1069105081
        %v3253 = vpow.bf16.pop %v3252
        %v3255 = vmul.bf16 %v2878, 1069105081
        %v3256 = vpow.bf16.pop %v3255
        %v3258 = vmul.bf16 %v2879, 1069105081
        %v3259 = vpow.bf16.pop %v3258
        %v3261 = vmul.bf16 %v2880, 1069105081
        %v3262 = vpow.bf16.pop %v3261
        %v3264 = vmul.bf16 %v2881, 1069105081
        %v3265 = vpow.bf16.pop %v3264
        %v3267 = vmul.bf16 %v2882, 1069105081
        %v3268 = vpow.bf16.pop %v3267
        %v3270 = vmul.bf16 %v2883, 1069105081
        %v3271 = vpow.bf16.pop %v3270
        %v3273 = vmul.bf16 %v2884, 1069105081
        %v3274 = vpow.bf16.pop %v3273
        %v3276 = vmul.bf16 %v2885, 1069105081
        %v3277 = vpow.bf16.pop %v3276
        %v3279 = vmul.bf16 %v2886, 1069105081
        %v3280 = vpow.bf16.pop %v3279
        %v3282 = vmul.bf16 %v2887, 1069105081
        %v3283 = vpow.bf16.pop %v3282
        %v3285 = vmul.bf16 %v2888, 1069105081
        %v3286 = vpow.bf16.pop %v3285
        %v3288 = vmul.bf16 %v2889, 1069105081
        %v3289 = vpow.bf16.pop %v3288
        %v3291 = vmul.bf16 %v2890, 1069105081
        %v3292 = vpow.bf16.pop %v3291
        %v3294 = vmul.bf16 %v2891, 1069105081
        %v3295 = vpow.bf16.pop %v3294
        %v3297 = vmul.bf16 %v2892, 1069105081
        %v3298 = vpow.bf16.pop %v3297
        %v3300 = vmul.bf16 %v2893, 1069105081
        %v3301 = vpow.bf16.pop %v3300
        %v3303 = vmul.bf16 %v2894, 1069105081
        %v3304 = vpow.bf16.pop %v3303
        %v3306 = vmul.bf16 %v2895, 1069105081
        %v3307 = vpow.bf16.pop %v3306
        %v3309 = vmul.bf16 %v2896, 1069105081
        %v3310 = vpow.bf16.pop %v3309
        %v3312 = vmul.bf16 %v2897, 1069105081
        %v3313 = vpow.bf16.pop %v3312
        %v3315 = vmul.bf16 %v2898, 1069105081
        %v3316 = vpow.bf16.pop %v3315
        %v3318 = vmul.bf16 %v2899, 1069105081
        %v3319 = vpow.bf16.pop %v3318
        %v3321 = vmul.bf16 %v2900, 1069105081
        %v3322 = vpow.bf16.pop %v3321
        %v3324 = vmul.bf16 %v2901, 1069105081
        %v3325 = vpow.bf16.pop %v3324
        %v3327 = vmul.bf16 %v2902, 1069105081
        %v3328 = vpow.bf16.pop %v3327
        %v3330 = vmul.bf16 %v2903, 1069105081
        %v3331 = vpow.bf16.pop %v3330
        %v3333 = vmul.bf16 %v2904, 1069105081
        %v3334 = vpow.bf16.pop %v3333
        %v3336 = vmul.bf16 %v2905, 1069105081
        %v3337 = vpow.bf16.pop %v3336
        %v3339 = vmul.bf16 %v2906, 1069105081
        %v3340 = vpow.bf16.pop %v3339
        %v3342 = vmul.bf16 %v2907, 1069105081
        %v3343 = vpow.bf16.pop %v3342
        %v3345 = vmul.bf16 %v2908, 1069105081
        %v3346 = vpow.bf16.pop %v3345
        %v3348 = vmul.bf16 %v2909, 1069105081
        %v3349 = vpow.bf16.pop %v3348
        %v3351 = vmul.bf16 %v2910, 1069105081
        %v3352 = vpow.bf16.pop %v3351
        %v3354 = vmul.bf16 %v2911, 1069105081
        %v3355 = vpow.bf16.pop %v3354
        %v3357 = vmul.bf16 %v2912, 1069105081
        %v3358 = vpow.bf16.pop %v3357
        %v3360 = vmul.bf16 %v2913, 1069105081
        %v3361 = vpow.bf16.pop %v3360
        %v3363 = vmul.bf16 %v2914, 1069105081
        %v3364 = vpow.bf16.pop %v3363
        %v3366 = vmul.bf16 %v2915, 1069105081
        %v3367 = vpow.bf16.pop %v3366
        %v3369 = vmul.bf16 %v2916, 1069105081
        %v3370 = vpow.bf16.pop %v3369
        %v3372 = vmul.bf16 %v2917, 1069105081
        %v3373 = vpow.bf16.pop %v3372
        %v3375 = vmul.bf16 %v2918, 1069105081
        %v3376 = vpow.bf16.pop %v3375
        %v3378 = vmul.bf16 %v2919, 1069105081
        %v3379 = vpow.bf16.pop %v3378
        %v3381 = vmul.bf16 %v2920, 1069105081
        %v3382 = vpow.bf16.pop %v3381
        %v3384 = vmul.bf16 %v2921, 1069105081
        %v3385 = vpow.bf16.pop %v3384
        %v3387 = vmul.bf16 %v2922, 1069105081
        %v3388 = vpow.bf16.pop %v3387
        %v3390 = vmul.bf16 %v2923, 1069105081
        %v3391 = vpow.bf16.pop %v3390
        %v3393 = vmul.bf16 %v2924, 1069105081
        %v3394 = vpow.bf16.pop %v3393
        %v3396 = vmul.bf16 %v2925, 1069105081
        %v3397 = vpow.bf16.pop %v3396
        %v3399 = vmul.bf16 %v2926, 1069105081
        %v3400 = vpow.bf16.pop %v3399
        %v3402 = vmul.bf16 %v2927, 1069105081
        %v3403 = vpow.bf16.pop %v3402
        %v3405 = vmul.bf16 %v2928, 1069105081
        %v3406 = vpow.bf16.pop %v3405
        %v3408 = vmul.bf16 %v2929, 1069105081
        %v3409 = vpow.bf16.pop %v3408
        %v3410 = vadd.bf16 %v2932, 1065369472
        %v3411 = vadd.bf16 %v2935, 1065369472
        %v3412 = vadd.bf16 %v2938, 1065369472
        %v3413 = vadd.bf16 %v2941, 1065369472
        %v3414 = vadd.bf16 %v2944, 1065369472
        %v3415 = vadd.bf16 %v2947, 1065369472
        %v3416 = vadd.bf16 %v2950, 1065369472
        %v3417 = vadd.bf16 %v2953, 1065369472
        %v3418 = vadd.bf16 %v2956, 1065369472
        %v3419 = vadd.bf16 %v2959, 1065369472
        %v3420 = vadd.bf16 %v2962, 1065369472
        %v3421 = vadd.bf16 %v2965, 1065369472
        %v3422 = vadd.bf16 %v2968, 1065369472
        %v3423 = vadd.bf16 %v2971, 1065369472
        %v3424 = vadd.bf16 %v2974, 1065369472
        %v3425 = vadd.bf16 %v2977, 1065369472
        %v3426 = vadd.bf16 %v2980, 1065369472
        %v3427 = vadd.bf16 %v2983, 1065369472
        %v3428 = vadd.bf16 %v2986, 1065369472
        %v3429 = vadd.bf16 %v2989, 1065369472
        %v3430 = vadd.bf16 %v2992, 1065369472
        %v3431 = vadd.bf16 %v2995, 1065369472
        %v3432 = vadd.bf16 %v2998, 1065369472
        %v3433 = vadd.bf16 %v3001, 1065369472
        %v3434 = vadd.bf16 %v3004, 1065369472
        %v3435 = vadd.bf16 %v3007, 1065369472
        %v3436 = vadd.bf16 %v3010, 1065369472
        %v3437 = vadd.bf16 %v3013, 1065369472
        %v3438 = vadd.bf16 %v3016, 1065369472
        %v3439 = vadd.bf16 %v3019, 1065369472
        %v3440 = vadd.bf16 %v3022, 1065369472
        %v3441 = vadd.bf16 %v3025, 1065369472
        %v3442 = vadd.bf16 %v3028, 1065369472
        %v3443 = vadd.bf16 %v3031, 1065369472
        %v3444 = vadd.bf16 %v3034, 1065369472
        %v3445 = vadd.bf16 %v3037, 1065369472
        %v3446 = vadd.bf16 %v3040, 1065369472
        %v3447 = vadd.bf16 %v3043, 1065369472
        %v3448 = vadd.bf16 %v3046, 1065369472
        %v3449 = vadd.bf16 %v3049, 1065369472
        %v3450 = vadd.bf16 %v3052, 1065369472
        %v3451 = vadd.bf16 %v3055, 1065369472
        %v3452 = vadd.bf16 %v3058, 1065369472
        %v3453 = vadd.bf16 %v3061, 1065369472
        %v3454 = vadd.bf16 %v3064, 1065369472
        %v3455 = vadd.bf16 %v3067, 1065369472
        %v3456 = vadd.bf16 %v3070, 1065369472
        %v3457 = vadd.bf16 %v3073, 1065369472
        %v3458 = vadd.bf16 %v3076, 1065369472
        %v3459 = vadd.bf16 %v3079, 1065369472
        %v3460 = vadd.bf16 %v3082, 1065369472
        %v3461 = vadd.bf16 %v3085, 1065369472
        %v3462 = vadd.bf16 %v3088, 1065369472
        %v3463 = vadd.bf16 %v3091, 1065369472
        %v3464 = vadd.bf16 %v3094, 1065369472
        %v3465 = vadd.bf16 %v3097, 1065369472
        %v3466 = vadd.bf16 %v3100, 1065369472
        %v3467 = vadd.bf16 %v3103, 1065369472
        %v3468 = vadd.bf16 %v3106, 1065369472
        %v3469 = vadd.bf16 %v3109, 1065369472
        %v3470 = vadd.bf16 %v3112, 1065369472
        %v3471 = vadd.bf16 %v3115, 1065369472
        %v3472 = vadd.bf16 %v3118, 1065369472
        %v3473 = vadd.bf16 %v3121, 1065369472
        %v3474 = vadd.bf16 %v3124, 1065369472
        %v3475 = vadd.bf16 %v3127, 1065369472
        %v3476 = vadd.bf16 %v3130, 1065369472
        %v3477 = vadd.bf16 %v3133, 1065369472
        %v3478 = vadd.bf16 %v3136, 1065369472
        %v3479 = vadd.bf16 %v3139, 1065369472
        %v3480 = vadd.bf16 %v3142, 1065369472
        %v3481 = vadd.bf16 %v3145, 1065369472
        %v3482 = vadd.bf16 %v3148, 1065369472
        %v3483 = vadd.bf16 %v3151, 1065369472
        %v3484 = vadd.bf16 %v3154, 1065369472
        %v3485 = vadd.bf16 %v3157, 1065369472
        %v3486 = vadd.bf16 %v3160, 1065369472
        %v3487 = vadd.bf16 %v3163, 1065369472
        %v3488 = vadd.bf16 %v3166, 1065369472
        %v3489 = vadd.bf16 %v3169, 1065369472
        %v3490 = vadd.bf16 %v3172, 1065369472
        %v3491 = vadd.bf16 %v3175, 1065369472
        %v3492 = vadd.bf16 %v3178, 1065369472
        %v3493 = vadd.bf16 %v3181, 1065369472
        %v3494 = vadd.bf16 %v3184, 1065369472
        %v3495 = vadd.bf16 %v3187, 1065369472
        %v3496 = vadd.bf16 %v3190, 1065369472
        %v3497 = vadd.bf16 %v3193, 1065369472
        %v3498 = vadd.bf16 %v3196, 1065369472
        %v3499 = vadd.bf16 %v3199, 1065369472
        %v3500 = vadd.bf16 %v3202, 1065369472
        %v3501 = vadd.bf16 %v3205, 1065369472
        %v3502 = vadd.bf16 %v3208, 1065369472
        %v3503 = vadd.bf16 %v3211, 1065369472
        %v3504 = vadd.bf16 %v3214, 1065369472
        %v3505 = vadd.bf16 %v3217, 1065369472
        %v3506 = vadd.bf16 %v3220, 1065369472
        %v3507 = vadd.bf16 %v3223, 1065369472
        %v3508 = vadd.bf16 %v3226, 1065369472
        %v3509 = vadd.bf16 %v3229, 1065369472
        %v3510 = vadd.bf16 %v3232, 1065369472
        %v3511 = vadd.bf16 %v3235, 1065369472
        %v3512 = vadd.bf16 %v3238, 1065369472
        %v3513 = vadd.bf16 %v3241, 1065369472
        %v3514 = vadd.bf16 %v3244, 1065369472
        %v3515 = vadd.bf16 %v3247, 1065369472
        %v3516 = vadd.bf16 %v3250, 1065369472
        %v3517 = vadd.bf16 %v3253, 1065369472
        %v3518 = vadd.bf16 %v3256, 1065369472
        %v3519 = vadd.bf16 %v3259, 1065369472
        %v3520 = vadd.bf16 %v3262, 1065369472
        %v3521 = vadd.bf16 %v3265, 1065369472
        %v3522 = vadd.bf16 %v3268, 1065369472
        %v3523 = vadd.bf16 %v3271, 1065369472
        %v3524 = vadd.bf16 %v3274, 1065369472
        %v3525 = vadd.bf16 %v3277, 1065369472
        %v3526 = vadd.bf16 %v3280, 1065369472
        %v3527 = vadd.bf16 %v3283, 1065369472
        %v3528 = vadd.bf16 %v3286, 1065369472
        %v3529 = vadd.bf16 %v3289, 1065369472
        %v3530 = vadd.bf16 %v3292, 1065369472
        %v3531 = vadd.bf16 %v3295, 1065369472
        %v3532 = vadd.bf16 %v3298, 1065369472
        %v3533 = vadd.bf16 %v3301, 1065369472
        %v3534 = vadd.bf16 %v3304, 1065369472
        %v3535 = vadd.bf16 %v3307, 1065369472
        %v3536 = vadd.bf16 %v3310, 1065369472
        %v3537 = vadd.bf16 %v3313, 1065369472
        %v3538 = vadd.bf16 %v3316, 1065369472
        %v3539 = vadd.bf16 %v3319, 1065369472
        %v3540 = vadd.bf16 %v3322, 1065369472
        %v3541 = vadd.bf16 %v3325, 1065369472
        %v3542 = vadd.bf16 %v3328, 1065369472
        %v3543 = vadd.bf16 %v3331, 1065369472
        %v3544 = vadd.bf16 %v3334, 1065369472
        %v3545 = vadd.bf16 %v3337, 1065369472
        %v3546 = vadd.bf16 %v3340, 1065369472
        %v3547 = vadd.bf16 %v3343, 1065369472
        %v3548 = vadd.bf16 %v3346, 1065369472
        %v3549 = vadd.bf16 %v3349, 1065369472
        %v3550 = vadd.bf16 %v3352, 1065369472
        %v3551 = vadd.bf16 %v3355, 1065369472
        %v3552 = vadd.bf16 %v3358, 1065369472
        %v3553 = vadd.bf16 %v3361, 1065369472
        %v3554 = vadd.bf16 %v3364, 1065369472
        %v3555 = vadd.bf16 %v3367, 1065369472
        %v3556 = vadd.bf16 %v3370, 1065369472
        %v3557 = vadd.bf16 %v3373, 1065369472
        %v3558 = vadd.bf16 %v3376, 1065369472
        %v3559 = vadd.bf16 %v3379, 1065369472
        %v3560 = vadd.bf16 %v3382, 1065369472
        %v3561 = vadd.bf16 %v3385, 1065369472
        %v3562 = vadd.bf16 %v3388, 1065369472
        %v3563 = vadd.bf16 %v3391, 1065369472
        %v3564 = vadd.bf16 %v3394, 1065369472
        %v3565 = vadd.bf16 %v3397, 1065369472
        %v3566 = vadd.bf16 %v3400, 1065369472
        %v3567 = vadd.bf16 %v3403, 1065369472
        %v3568 = vadd.bf16 %v3406, 1065369472
        %v3569 = vadd.bf16 %v3409, 1065369472
        %v3570 = vrcp.bf16.pop %v3410
        %v3571 = vmul.bf16 1065369472, %v3570
        %v3572 = vrcp.bf16.pop %v3411
        %v3573 = vmul.bf16 1065369472, %v3572
        %v3574 = vrcp.bf16.pop %v3412
        %v3575 = vmul.bf16 1065369472, %v3574
        %v3576 = vrcp.bf16.pop %v3413
        %v3577 = vmul.bf16 1065369472, %v3576
        %v3578 = vrcp.bf16.pop %v3414
        %v3579 = vmul.bf16 1065369472, %v3578
        %v3580 = vrcp.bf16.pop %v3415
        %v3581 = vmul.bf16 1065369472, %v3580
        %v3582 = vrcp.bf16.pop %v3416
        %v3583 = vmul.bf16 1065369472, %v3582
        %v3584 = vrcp.bf16.pop %v3417
        %v3585 = vmul.bf16 1065369472, %v3584
        %v3586 = vrcp.bf16.pop %v3418
        %v3587 = vmul.bf16 1065369472, %v3586
        %v3588 = vrcp.bf16.pop %v3419
        %v3589 = vmul.bf16 1065369472, %v3588
        %v3590 = vrcp.bf16.pop %v3420
        %v3591 = vmul.bf16 1065369472, %v3590
        %v3592 = vrcp.bf16.pop %v3421
        %v3593 = vmul.bf16 1065369472, %v3592
        %v3594 = vrcp.bf16.pop %v3422
        %v3595 = vmul.bf16 1065369472, %v3594
        %v3596 = vrcp.bf16.pop %v3423
        %v3597 = vmul.bf16 1065369472, %v3596
        %v3598 = vrcp.bf16.pop %v3424
        %v3599 = vmul.bf16 1065369472, %v3598
        %v3600 = vrcp.bf16.pop %v3425
        %v3601 = vmul.bf16 1065369472, %v3600
        %v3602 = vrcp.bf16.pop %v3426
        %v3603 = vmul.bf16 1065369472, %v3602
        %v3604 = vrcp.bf16.pop %v3427
        %v3605 = vmul.bf16 1065369472, %v3604
        %v3606 = vrcp.bf16.pop %v3428
        %v3607 = vmul.bf16 1065369472, %v3606
        %v3608 = vrcp.bf16.pop %v3429
        %v3609 = vmul.bf16 1065369472, %v3608
        %v3610 = vrcp.bf16.pop %v3430
        %v3611 = vmul.bf16 1065369472, %v3610
        %v3612 = vrcp.bf16.pop %v3431
        %v3613 = vmul.bf16 1065369472, %v3612
        %v3614 = vrcp.bf16.pop %v3432
        %v3615 = vmul.bf16 1065369472, %v3614
        %v3616 = vrcp.bf16.pop %v3433
        %v3617 = vmul.bf16 1065369472, %v3616
        %v3618 = vrcp.bf16.pop %v3434
        %v3619 = vmul.bf16 1065369472, %v3618
        %v3620 = vrcp.bf16.pop %v3435
        %v3621 = vmul.bf16 1065369472, %v3620
        %v3622 = vrcp.bf16.pop %v3436
        %v3623 = vmul.bf16 1065369472, %v3622
        %v3624 = vrcp.bf16.pop %v3437
        %v3625 = vmul.bf16 1065369472, %v3624
        %v3626 = vrcp.bf16.pop %v3438
        %v3627 = vmul.bf16 1065369472, %v3626
        %v3628 = vrcp.bf16.pop %v3439
        %v3629 = vmul.bf16 1065369472, %v3628
        %v3630 = vrcp.bf16.pop %v3440
        %v3631 = vmul.bf16 1065369472, %v3630
        %v3632 = vrcp.bf16.pop %v3441
        %v3633 = vmul.bf16 1065369472, %v3632
        %v3634 = vrcp.bf16.pop %v3442
        %v3635 = vmul.bf16 1065369472, %v3634
        %v3636 = vrcp.bf16.pop %v3443
        %v3637 = vmul.bf16 1065369472, %v3636
        %v3638 = vrcp.bf16.pop %v3444
        %v3639 = vmul.bf16 1065369472, %v3638
        %v3640 = vrcp.bf16.pop %v3445
        %v3641 = vmul.bf16 1065369472, %v3640
        %v3642 = vrcp.bf16.pop %v3446
        %v3643 = vmul.bf16 1065369472, %v3642
        %v3644 = vrcp.bf16.pop %v3447
        %v3645 = vmul.bf16 1065369472, %v3644
        %v3646 = vrcp.bf16.pop %v3448
        %v3647 = vmul.bf16 1065369472, %v3646
        %v3648 = vrcp.bf16.pop %v3449
        %v3649 = vmul.bf16 1065369472, %v3648
        %v3650 = vrcp.bf16.pop %v3450
        %v3651 = vmul.bf16 1065369472, %v3650
        %v3652 = vrcp.bf16.pop %v3451
        %v3653 = vmul.bf16 1065369472, %v3652
        %v3654 = vrcp.bf16.pop %v3452
        %v3655 = vmul.bf16 1065369472, %v3654
        %v3656 = vrcp.bf16.pop %v3453
        %v3657 = vmul.bf16 1065369472, %v3656
        %v3658 = vrcp.bf16.pop %v3454
        %v3659 = vmul.bf16 1065369472, %v3658
        %v3660 = vrcp.bf16.pop %v3455
        %v3661 = vmul.bf16 1065369472, %v3660
        %v3662 = vrcp.bf16.pop %v3456
        %v3663 = vmul.bf16 1065369472, %v3662
        %v3664 = vrcp.bf16.pop %v3457
        %v3665 = vmul.bf16 1065369472, %v3664
        %v3666 = vrcp.bf16.pop %v3458
        %v3667 = vmul.bf16 1065369472, %v3666
        %v3668 = vrcp.bf16.pop %v3459
        %v3669 = vmul.bf16 1065369472, %v3668
        %v3670 = vrcp.bf16.pop %v3460
        %v3671 = vmul.bf16 1065369472, %v3670
        %v3672 = vrcp.bf16.pop %v3461
        %v3673 = vmul.bf16 1065369472, %v3672
        %v3674 = vrcp.bf16.pop %v3462
        %v3675 = vmul.bf16 1065369472, %v3674
        %v3676 = vrcp.bf16.pop %v3463
        %v3677 = vmul.bf16 1065369472, %v3676
        %v3678 = vrcp.bf16.pop %v3464
        %v3679 = vmul.bf16 1065369472, %v3678
        %v3680 = vrcp.bf16.pop %v3465
        %v3681 = vmul.bf16 1065369472, %v3680
        %v3682 = vrcp.bf16.pop %v3466
        %v3683 = vmul.bf16 1065369472, %v3682
        %v3684 = vrcp.bf16.pop %v3467
        %v3685 = vmul.bf16 1065369472, %v3684
        %v3686 = vrcp.bf16.pop %v3468
        %v3687 = vmul.bf16 1065369472, %v3686
        %v3688 = vrcp.bf16.pop %v3469
        %v3689 = vmul.bf16 1065369472, %v3688
        %v3690 = vrcp.bf16.pop %v3470
        %v3691 = vmul.bf16 1065369472, %v3690
        %v3692 = vrcp.bf16.pop %v3471
        %v3693 = vmul.bf16 1065369472, %v3692
        %v3694 = vrcp.bf16.pop %v3472
        %v3695 = vmul.bf16 1065369472, %v3694
        %v3696 = vrcp.bf16.pop %v3473
        %v3697 = vmul.bf16 1065369472, %v3696
        %v3698 = vrcp.bf16.pop %v3474
        %v3699 = vmul.bf16 1065369472, %v3698
        %v3700 = vrcp.bf16.pop %v3475
        %v3701 = vmul.bf16 1065369472, %v3700
        %v3702 = vrcp.bf16.pop %v3476
        %v3703 = vmul.bf16 1065369472, %v3702
        %v3704 = vrcp.bf16.pop %v3477
        %v3705 = vmul.bf16 1065369472, %v3704
        %v3706 = vrcp.bf16.pop %v3478
        %v3707 = vmul.bf16 1065369472, %v3706
        %v3708 = vrcp.bf16.pop %v3479
        %v3709 = vmul.bf16 1065369472, %v3708
        %v3710 = vrcp.bf16.pop %v3480
        %v3711 = vmul.bf16 1065369472, %v3710
        %v3712 = vrcp.bf16.pop %v3481
        %v3713 = vmul.bf16 1065369472, %v3712
        %v3714 = vrcp.bf16.pop %v3482
        %v3715 = vmul.bf16 1065369472, %v3714
        %v3716 = vrcp.bf16.pop %v3483
        %v3717 = vmul.bf16 1065369472, %v3716
        %v3718 = vrcp.bf16.pop %v3484
        %v3719 = vmul.bf16 1065369472, %v3718
        %v3720 = vrcp.bf16.pop %v3485
        %v3721 = vmul.bf16 1065369472, %v3720
        %v3722 = vrcp.bf16.pop %v3486
        %v3723 = vmul.bf16 1065369472, %v3722
        %v3724 = vrcp.bf16.pop %v3487
        %v3725 = vmul.bf16 1065369472, %v3724
        %v3726 = vrcp.bf16.pop %v3488
        %v3727 = vmul.bf16 1065369472, %v3726
        %v3728 = vrcp.bf16.pop %v3489
        %v3729 = vmul.bf16 1065369472, %v3728
        %v3730 = vrcp.bf16.pop %v3490
        %v3731 = vmul.bf16 1065369472, %v3730
        %v3732 = vrcp.bf16.pop %v3491
        %v3733 = vmul.bf16 1065369472, %v3732
        %v3734 = vrcp.bf16.pop %v3492
        %v3735 = vmul.bf16 1065369472, %v3734
        %v3736 = vrcp.bf16.pop %v3493
        %v3737 = vmul.bf16 1065369472, %v3736
        %v3738 = vrcp.bf16.pop %v3494
        %v3739 = vmul.bf16 1065369472, %v3738
        %v3740 = vrcp.bf16.pop %v3495
        %v3741 = vmul.bf16 1065369472, %v3740
        %v3742 = vrcp.bf16.pop %v3496
        %v3743 = vmul.bf16 1065369472, %v3742
        %v3744 = vrcp.bf16.pop %v3497
        %v3745 = vmul.bf16 1065369472, %v3744
        %v3746 = vrcp.bf16.pop %v3498
        %v3747 = vmul.bf16 1065369472, %v3746
        %v3748 = vrcp.bf16.pop %v3499
        %v3749 = vmul.bf16 1065369472, %v3748
        %v3750 = vrcp.bf16.pop %v3500
        %v3751 = vmul.bf16 1065369472, %v3750
        %v3752 = vrcp.bf16.pop %v3501
        %v3753 = vmul.bf16 1065369472, %v3752
        %v3754 = vrcp.bf16.pop %v3502
        %v3755 = vmul.bf16 1065369472, %v3754
        %v3756 = vrcp.bf16.pop %v3503
        %v3757 = vmul.bf16 1065369472, %v3756
        %v3758 = vrcp.bf16.pop %v3504
        %v3759 = vmul.bf16 1065369472, %v3758
        %v3760 = vrcp.bf16.pop %v3505
        %v3761 = vmul.bf16 1065369472, %v3760
        %v3762 = vrcp.bf16.pop %v3506
        %v3763 = vmul.bf16 1065369472, %v3762
        %v3764 = vrcp.bf16.pop %v3507
        %v3765 = vmul.bf16 1065369472, %v3764
        %v3766 = vrcp.bf16.pop %v3508
        %v3767 = vmul.bf16 1065369472, %v3766
        %v3768 = vrcp.bf16.pop %v3509
        %v3769 = vmul.bf16 1065369472, %v3768
        %v3770 = vrcp.bf16.pop %v3510
        %v3771 = vmul.bf16 1065369472, %v3770
        %v3772 = vrcp.bf16.pop %v3511
        %v3773 = vmul.bf16 1065369472, %v3772
        %v3774 = vrcp.bf16.pop %v3512
        %v3775 = vmul.bf16 1065369472, %v3774
        %v3776 = vrcp.bf16.pop %v3513
        %v3777 = vmul.bf16 1065369472, %v3776
        %v3778 = vrcp.bf16.pop %v3514
        %v3779 = vmul.bf16 1065369472, %v3778
        %v3780 = vrcp.bf16.pop %v3515
        %v3781 = vmul.bf16 1065369472, %v3780
        %v3782 = vrcp.bf16.pop %v3516
        %v3783 = vmul.bf16 1065369472, %v3782
        %v3784 = vrcp.bf16.pop %v3517
        %v3785 = vmul.bf16 1065369472, %v3784
        %v3786 = vrcp.bf16.pop %v3518
        %v3787 = vmul.bf16 1065369472, %v3786
        %v3788 = vrcp.bf16.pop %v3519
        %v3789 = vmul.bf16 1065369472, %v3788
        %v3790 = vrcp.bf16.pop %v3520
        %v3791 = vmul.bf16 1065369472, %v3790
        %v3792 = vrcp.bf16.pop %v3521
        %v3793 = vmul.bf16 1065369472, %v3792
        %v3794 = vrcp.bf16.pop %v3522
        %v3795 = vmul.bf16 1065369472, %v3794
        %v3796 = vrcp.bf16.pop %v3523
        %v3797 = vmul.bf16 1065369472, %v3796
        %v3798 = vrcp.bf16.pop %v3524
        %v3799 = vmul.bf16 1065369472, %v3798
        %v3800 = vrcp.bf16.pop %v3525
        %v3801 = vmul.bf16 1065369472, %v3800
        %v3802 = vrcp.bf16.pop %v3526
        %v3803 = vmul.bf16 1065369472, %v3802
        %v3804 = vrcp.bf16.pop %v3527
        %v3805 = vmul.bf16 1065369472, %v3804
        %v3806 = vrcp.bf16.pop %v3528
        %v3807 = vmul.bf16 1065369472, %v3806
        %v3808 = vrcp.bf16.pop %v3529
        %v3809 = vmul.bf16 1065369472, %v3808
        %v3810 = vrcp.bf16.pop %v3530
        %v3811 = vmul.bf16 1065369472, %v3810
        %v3812 = vrcp.bf16.pop %v3531
        %v3813 = vmul.bf16 1065369472, %v3812
        %v3814 = vrcp.bf16.pop %v3532
        %v3815 = vmul.bf16 1065369472, %v3814
        %v3816 = vrcp.bf16.pop %v3533
        %v3817 = vmul.bf16 1065369472, %v3816
        %v3818 = vrcp.bf16.pop %v3534
        %v3819 = vmul.bf16 1065369472, %v3818
        %v3820 = vrcp.bf16.pop %v3535
        %v3821 = vmul.bf16 1065369472, %v3820
        %v3822 = vrcp.bf16.pop %v3536
        %v3823 = vmul.bf16 1065369472, %v3822
        %v3824 = vrcp.bf16.pop %v3537
        %v3825 = vmul.bf16 1065369472, %v3824
        %v3826 = vrcp.bf16.pop %v3538
        %v3827 = vmul.bf16 1065369472, %v3826
        %v3828 = vrcp.bf16.pop %v3539
        %v3829 = vmul.bf16 1065369472, %v3828
        %v3830 = vrcp.bf16.pop %v3540
        %v3831 = vmul.bf16 1065369472, %v3830
        %v3832 = vrcp.bf16.pop %v3541
        %v3833 = vmul.bf16 1065369472, %v3832
        %v3834 = vrcp.bf16.pop %v3542
        %v3835 = vmul.bf16 1065369472, %v3834
        %v3836 = vrcp.bf16.pop %v3543
        %v3837 = vmul.bf16 1065369472, %v3836
        %v3838 = vrcp.bf16.pop %v3544
        %v3839 = vmul.bf16 1065369472, %v3838
        %v3840 = vrcp.bf16.pop %v3545
        %v3841 = vmul.bf16 1065369472, %v3840
        %v3842 = vrcp.bf16.pop %v3546
        %v3843 = vmul.bf16 1065369472, %v3842
        %v3844 = vrcp.bf16.pop %v3547
        %v3845 = vmul.bf16 1065369472, %v3844
        %v3846 = vrcp.bf16.pop %v3548
        %v3847 = vmul.bf16 1065369472, %v3846
        %v3848 = vrcp.bf16.pop %v3549
        %v3849 = vmul.bf16 1065369472, %v3848
        %v3850 = vrcp.bf16.pop %v3550
        %v3851 = vmul.bf16 1065369472, %v3850
        %v3852 = vrcp.bf16.pop %v3551
        %v3853 = vmul.bf16 1065369472, %v3852
        %v3854 = vrcp.bf16.pop %v3552
        %v3855 = vmul.bf16 1065369472, %v3854
        %v3856 = vrcp.bf16.pop %v3553
        %v3857 = vmul.bf16 1065369472, %v3856
        %v3858 = vrcp.bf16.pop %v3554
        %v3859 = vmul.bf16 1065369472, %v3858
        %v3860 = vrcp.bf16.pop %v3555
        %v3861 = vmul.bf16 1065369472, %v3860
        %v3862 = vrcp.bf16.pop %v3556
        %v3863 = vmul.bf16 1065369472, %v3862
        %v3864 = vrcp.bf16.pop %v3557
        %v3865 = vmul.bf16 1065369472, %v3864
        %v3866 = vrcp.bf16.pop %v3558
        %v3867 = vmul.bf16 1065369472, %v3866
        %v3868 = vrcp.bf16.pop %v3559
        %v3869 = vmul.bf16 1065369472, %v3868
        %v3870 = vrcp.bf16.pop %v3560
        %v3871 = vmul.bf16 1065369472, %v3870
        %v3872 = vrcp.bf16.pop %v3561
        %v3873 = vmul.bf16 1065369472, %v3872
        %v3874 = vrcp.bf16.pop %v3562
        %v3875 = vmul.bf16 1065369472, %v3874
        %v3876 = vrcp.bf16.pop %v3563
        %v3877 = vmul.bf16 1065369472, %v3876
        %v3878 = vrcp.bf16.pop %v3564
        %v3879 = vmul.bf16 1065369472, %v3878
        %v3880 = vrcp.bf16.pop %v3565
        %v3881 = vmul.bf16 1065369472, %v3880
        %v3882 = vrcp.bf16.pop %v3566
        %v3883 = vmul.bf16 1065369472, %v3882
        %v3884 = vrcp.bf16.pop %v3567
        %v3885 = vmul.bf16 1065369472, %v3884
        %v3886 = vrcp.bf16.pop %v3568
        %v3887 = vmul.bf16 1065369472, %v3886
        %v3888 = vrcp.bf16.pop %v3569
        %v3889 = vmul.bf16 1065369472, %v3888
        %v3890 = vmul.bf16 %v2610, %v3571
        %v3891 = vmul.bf16 %v2611, %v3573
        %v3892 = vmul.bf16 %v2612, %v3575
        %v3893 = vmul.bf16 %v2613, %v3577
        %v3894 = vmul.bf16 %v2614, %v3579
        %v3895 = vmul.bf16 %v2615, %v3581
        %v3896 = vmul.bf16 %v2616, %v3583
        %v3897 = vmul.bf16 %v2617, %v3585
        %v3898 = vmul.bf16 %v2618, %v3587
        %v3899 = vmul.bf16 %v2619, %v3589
        %v3900 = vmul.bf16 %v2620, %v3591
        %v3901 = vmul.bf16 %v2621, %v3593
        %v3902 = vmul.bf16 %v2622, %v3595
        %v3903 = vmul.bf16 %v2623, %v3597
        %v3904 = vmul.bf16 %v2624, %v3599
        %v3905 = vmul.bf16 %v2625, %v3601
        %v3906 = vmul.bf16 %v2626, %v3603
        %v3907 = vmul.bf16 %v2627, %v3605
        %v3908 = vmul.bf16 %v2628, %v3607
        %v3909 = vmul.bf16 %v2629, %v3609
        %v3910 = vmul.bf16 %v2630, %v3611
        %v3911 = vmul.bf16 %v2631, %v3613
        %v3912 = vmul.bf16 %v2632, %v3615
        %v3913 = vmul.bf16 %v2633, %v3617
        %v3914 = vmul.bf16 %v2634, %v3619
        %v3915 = vmul.bf16 %v2635, %v3621
        %v3916 = vmul.bf16 %v2636, %v3623
        %v3917 = vmul.bf16 %v2637, %v3625
        %v3918 = vmul.bf16 %v2638, %v3627
        %v3919 = vmul.bf16 %v2639, %v3629
        %v3920 = vmul.bf16 %v2640, %v3631
        %v3921 = vmul.bf16 %v2641, %v3633
        %v3922 = vmul.bf16 %v2642, %v3635
        %v3923 = vmul.bf16 %v2643, %v3637
        %v3924 = vmul.bf16 %v2644, %v3639
        %v3925 = vmul.bf16 %v2645, %v3641
        %v3926 = vmul.bf16 %v2646, %v3643
        %v3927 = vmul.bf16 %v2647, %v3645
        %v3928 = vmul.bf16 %v2648, %v3647
        %v3929 = vmul.bf16 %v2649, %v3649
        %v3930 = vmul.bf16 %v2650, %v3651
        %v3931 = vmul.bf16 %v2651, %v3653
        %v3932 = vmul.bf16 %v2652, %v3655
        %v3933 = vmul.bf16 %v2653, %v3657
        %v3934 = vmul.bf16 %v2654, %v3659
        %v3935 = vmul.bf16 %v2655, %v3661
        %v3936 = vmul.bf16 %v2656, %v3663
        %v3937 = vmul.bf16 %v2657, %v3665
        %v3938 = vmul.bf16 %v2658, %v3667
        %v3939 = vmul.bf16 %v2659, %v3669
        %v3940 = vmul.bf16 %v2660, %v3671
        %v3941 = vmul.bf16 %v2661, %v3673
        %v3942 = vmul.bf16 %v2662, %v3675
        %v3943 = vmul.bf16 %v2663, %v3677
        %v3944 = vmul.bf16 %v2664, %v3679
        %v3945 = vmul.bf16 %v2665, %v3681
        %v3946 = vmul.bf16 %v2666, %v3683
        %v3947 = vmul.bf16 %v2667, %v3685
        %v3948 = vmul.bf16 %v2668, %v3687
        %v3949 = vmul.bf16 %v2669, %v3689
        %v3950 = vmul.bf16 %v2670, %v3691
        %v3951 = vmul.bf16 %v2671, %v3693
        %v3952 = vmul.bf16 %v2672, %v3695
        %v3953 = vmul.bf16 %v2673, %v3697
        %v3954 = vmul.bf16 %v2674, %v3699
        %v3955 = vmul.bf16 %v2675, %v3701
        %v3956 = vmul.bf16 %v2676, %v3703
        %v3957 = vmul.bf16 %v2677, %v3705
        %v3958 = vmul.bf16 %v2678, %v3707
        %v3959 = vmul.bf16 %v2679, %v3709
        %v3960 = vmul.bf16 %v2680, %v3711
        %v3961 = vmul.bf16 %v2681, %v3713
        %v3962 = vmul.bf16 %v2682, %v3715
        %v3963 = vmul.bf16 %v2683, %v3717
        %v3964 = vmul.bf16 %v2684, %v3719
        %v3965 = vmul.bf16 %v2685, %v3721
        %v3966 = vmul.bf16 %v2686, %v3723
        %v3967 = vmul.bf16 %v2687, %v3725
        %v3968 = vmul.bf16 %v2688, %v3727
        %v3969 = vmul.bf16 %v2689, %v3729
        %v3970 = vmul.bf16 %v2690, %v3731
        %v3971 = vmul.bf16 %v2691, %v3733
        %v3972 = vmul.bf16 %v2692, %v3735
        %v3973 = vmul.bf16 %v2693, %v3737
        %v3974 = vmul.bf16 %v2694, %v3739
        %v3975 = vmul.bf16 %v2695, %v3741
        %v3976 = vmul.bf16 %v2696, %v3743
        %v3977 = vmul.bf16 %v2697, %v3745
        %v3978 = vmul.bf16 %v2698, %v3747
        %v3979 = vmul.bf16 %v2699, %v3749
        %v3980 = vmul.bf16 %v2700, %v3751
        %v3981 = vmul.bf16 %v2701, %v3753
        %v3982 = vmul.bf16 %v2702, %v3755
        %v3983 = vmul.bf16 %v2703, %v3757
        %v3984 = vmul.bf16 %v2704, %v3759
        %v3985 = vmul.bf16 %v2705, %v3761
        %v3986 = vmul.bf16 %v2706, %v3763
        %v3987 = vmul.bf16 %v2707, %v3765
        %v3988 = vmul.bf16 %v2708, %v3767
        %v3989 = vmul.bf16 %v2709, %v3769
        %v3990 = vmul.bf16 %v2710, %v3771
        %v3991 = vmul.bf16 %v2711, %v3773
        %v3992 = vmul.bf16 %v2712, %v3775
        %v3993 = vmul.bf16 %v2713, %v3777
        %v3994 = vmul.bf16 %v2714, %v3779
        %v3995 = vmul.bf16 %v2715, %v3781
        %v3996 = vmul.bf16 %v2716, %v3783
        %v3997 = vmul.bf16 %v2717, %v3785
        %v3998 = vmul.bf16 %v2718, %v3787
        %v3999 = vmul.bf16 %v2719, %v3789
        %v4000 = vmul.bf16 %v2720, %v3791
        %v4001 = vmul.bf16 %v2721, %v3793
        %v4002 = vmul.bf16 %v2722, %v3795
        %v4003 = vmul.bf16 %v2723, %v3797
        %v4004 = vmul.bf16 %v2724, %v3799
        %v4005 = vmul.bf16 %v2725, %v3801
        %v4006 = vmul.bf16 %v2726, %v3803
        %v4007 = vmul.bf16 %v2727, %v3805
        %v4008 = vmul.bf16 %v2728, %v3807
        %v4009 = vmul.bf16 %v2729, %v3809
        %v4010 = vmul.bf16 %v2730, %v3811
        %v4011 = vmul.bf16 %v2731, %v3813
        %v4012 = vmul.bf16 %v2732, %v3815
        %v4013 = vmul.bf16 %v2733, %v3817
        %v4014 = vmul.bf16 %v2734, %v3819
        %v4015 = vmul.bf16 %v2735, %v3821
        %v4016 = vmul.bf16 %v2736, %v3823
        %v4017 = vmul.bf16 %v2737, %v3825
        %v4018 = vmul.bf16 %v2738, %v3827
        %v4019 = vmul.bf16 %v2739, %v3829
        %v4020 = vmul.bf16 %v2740, %v3831
        %v4021 = vmul.bf16 %v2741, %v3833
        %v4022 = vmul.bf16 %v2742, %v3835
        %v4023 = vmul.bf16 %v2743, %v3837
        %v4024 = vmul.bf16 %v2744, %v3839
        %v4025 = vmul.bf16 %v2745, %v3841
        %v4026 = vmul.bf16 %v2746, %v3843
        %v4027 = vmul.bf16 %v2747, %v3845
        %v4028 = vmul.bf16 %v2748, %v3847
        %v4029 = vmul.bf16 %v2749, %v3849
        %v4030 = vmul.bf16 %v2750, %v3851
        %v4031 = vmul.bf16 %v2751, %v3853
        %v4032 = vmul.bf16 %v2752, %v3855
        %v4033 = vmul.bf16 %v2753, %v3857
        %v4034 = vmul.bf16 %v2754, %v3859
        %v4035 = vmul.bf16 %v2755, %v3861
        %v4036 = vmul.bf16 %v2756, %v3863
        %v4037 = vmul.bf16 %v2757, %v3865
        %v4038 = vmul.bf16 %v2758, %v3867
        %v4039 = vmul.bf16 %v2759, %v3869
        %v4040 = vmul.bf16 %v2760, %v3871
        %v4041 = vmul.bf16 %v2761, %v3873
        %v4042 = vmul.bf16 %v2762, %v3875
        %v4043 = vmul.bf16 %v2763, %v3877
        %v4044 = vmul.bf16 %v2764, %v3879
        %v4045 = vmul.bf16 %v2765, %v3881
        %v4046 = vmul.bf16 %v2766, %v3883
        %v4047 = vmul.bf16 %v2767, %v3885
        %v4048 = vmul.bf16 %v2768, %v3887
        %v4049 = vmul.bf16 %v2769, %v3889
        %v4050 = vld [vmem:[#allocation2] sm:$0xff]
        %v4051 = vld [vmem:[#allocation2 + $0x8] sm:$0x3]
        %4052 = vmatprep.subr.bf16.mxu0 %v3891
        %4053 = vmatpush1.bf16.msra.mxu0 %v3890
        %4054 = vmatprep.subr.bf16.mxu0 %v3901
        %4055 = vmatpush1.bf16.msra.mxu0 %v3900
        %4056 = vmatprep.subr.bf16.mxu0 %v3911
        %4057 = vmatpush1.bf16.msra.mxu0 %v3910
        %4058 = vmatprep.subr.bf16.mxu0 %v3921
        %4059 = vmatpush1.bf16.msra.mxu0 %v3920
        %4060 = vmatprep.subr.bf16.mxu0 %v3931
        %4061 = vmatpush1.bf16.msra.mxu0 %v3930
        %4062 = vmatprep.subr.bf16.mxu0 %v3941
        %4063 = vmatpush1.bf16.msra.mxu0 %v3940
        %4064 = vmatprep.subr.bf16.mxu0 %v3951
        %4065 = vmatpush1.bf16.msra.mxu0 %v3950
        %4066 = vmatprep.subr.bf16.mxu0 %v3961
        %4067 = vmatpush1.bf16.msra.mxu0 %v3960
        %4068 = vmatprep.subr.bf16.mxu0 %v3971
        %4069 = vmatpush1.bf16.msra.mxu0 %v3970
        %4070 = vmatprep.subr.bf16.mxu0 %v3981
        %4071 = vmatpush1.bf16.msra.mxu0 %v3980
        %4072 = vmatprep.subr.bf16.mxu0 %v3991
        %4073 = vmatpush1.bf16.msra.mxu0 %v3990
        %4074 = vmatprep.subr.bf16.mxu0 %v4001
        %4075 = vmatpush1.bf16.msra.mxu0 %v4000
        %4076 = vmatprep.subr.bf16.mxu0 %v4011
        %4077 = vmatpush1.bf16.msra.mxu0 %v4010
        %4078 = vmatprep.subr.bf16.mxu0 %v4021
        %4079 = vmatpush1.bf16.msra.mxu0 %v4020
        %4080 = vmatprep.subr.bf16.mxu0 %v4031
        %4081 = vmatpush1.bf16.msra.mxu0 %v4030
        %4082 = vmatprep.subr.bf16.mxu0 %v4041
        %4083 = vmatpush1.bf16.msra.mxu0 %v4040
        %4084 = vmatprep.mubr.bf16.mxu0 1065369472
        %4085 = vmatmul.mubr.bf16.gmra.mrb[0].mxu0 1065369472
        %v4086 = vpop.f32.mrb[0].mxu0
        %v4087 = vadd.f32 0.0, %v4086
        %v4088 = vpop.f32.mrb[0].mxu0
        %v4089 = vadd.f32 0.0, %v4088
        %v4090 = vpop.f32.mrb[0].mxu0
        %v4091 = vpop.f32.mrb[0].mxu0
        %4092 = vdwg.mxu0
        %4093 = vmatprep.subr.bf16.mxu0 %v3893
        %4094 = vmatpush1.bf16.msra.mxu0 %v3892
        %4095 = vmatprep.subr.bf16.mxu0 %v3903
        %4096 = vmatpush1.bf16.msra.mxu0 %v3902
        %4097 = vmatprep.subr.bf16.mxu0 %v3913
        %4098 = vmatpush1.bf16.msra.mxu0 %v3912
        %4099 = vmatprep.subr.bf16.mxu0 %v3923
        %4100 = vmatpush1.bf16.msra.mxu0 %v3922
        %4101 = vmatprep.subr.bf16.mxu0 %v3933
        %4102 = vmatpush1.bf16.msra.mxu0 %v3932
        %4103 = vmatprep.subr.bf16.mxu0 %v3943
        %4104 = vmatpush1.bf16.msra.mxu0 %v3942
        %4105 = vmatprep.subr.bf16.mxu0 %v3953
        %4106 = vmatpush1.bf16.msra.mxu0 %v3952
        %4107 = vmatprep.subr.bf16.mxu0 %v3963
        %4108 = vmatpush1.bf16.msra.mxu0 %v3962
        %4109 = vmatprep.subr.bf16.mxu0 %v3973
        %4110 = vmatpush1.bf16.msra.mxu0 %v3972
        %4111 = vmatprep.subr.bf16.mxu0 %v3983
        %4112 = vmatpush1.bf16.msra.mxu0 %v3982
        %4113 = vmatprep.subr.bf16.mxu0 %v3993
        %4114 = vmatpush1.bf16.msra.mxu0 %v3992
        %4115 = vmatprep.subr.bf16.mxu0 %v4003
        %4116 = vmatpush1.bf16.msra.mxu0 %v4002
        %4117 = vmatprep.subr.bf16.mxu0 %v4013
        %4118 = vmatpush1.bf16.msra.mxu0 %v4012
        %4119 = vmatprep.subr.bf16.mxu0 %v4023
        %4120 = vmatpush1.bf16.msra.mxu0 %v4022
        %4121 = vmatprep.subr.bf16.mxu0 %v4033
        %4122 = vmatpush1.bf16.msra.mxu0 %v4032
        %4123 = vmatprep.subr.bf16.mxu0 %v4043
        %4124 = vmatpush1.bf16.msra.mxu0 %v4042
        %4125 = vmatprep.mubr.bf16.mxu0 1065369472
        %4126 = vmatmul.mubr.bf16.gmra.mrb[0].mxu0 1065369472
        %v4127 = vpop.f32.mrb[0].mxu0
        %v4128 = vadd.f32 0.0, %v4127
        %v4129 = vpop.f32.mrb[0].mxu0
        %v4130 = vadd.f32 0.0, %v4129
        %v4131 = vpop.f32.mrb[0].mxu0
        %v4132 = vpop.f32.mrb[0].mxu0
        %4133 = vdwg.mxu0
        %4134 = vmatprep.subr.bf16.mxu0 %v3895
        %4135 = vmatpush1.bf16.msra.mxu0 %v3894
        %4136 = vmatprep.subr.bf16.mxu0 %v3905
        %4137 = vmatpush1.bf16.msra.mxu0 %v3904
        %4138 = vmatprep.subr.bf16.mxu0 %v3915
        %4139 = vmatpush1.bf16.msra.mxu0 %v3914
        %4140 = vmatprep.subr.bf16.mxu0 %v3925
        %4141 = vmatpush1.bf16.msra.mxu0 %v3924
        %4142 = vmatprep.subr.bf16.mxu0 %v3935
        %4143 = vmatpush1.bf16.msra.mxu0 %v3934
        %4144 = vmatprep.subr.bf16.mxu0 %v3945
        %4145 = vmatpush1.bf16.msra.mxu0 %v3944
        %4146 = vmatprep.subr.bf16.mxu0 %v3955
        %4147 = vmatpush1.bf16.msra.mxu0 %v3954
        %4148 = vmatprep.subr.bf16.mxu0 %v3965
        %4149 = vmatpush1.bf16.msra.mxu0 %v3964
        %4150 = vmatprep.subr.bf16.mxu0 %v3975
        %4151 = vmatpush1.bf16.msra.mxu0 %v3974
        %4152 = vmatprep.subr.bf16.mxu0 %v3985
        %4153 = vmatpush1.bf16.msra.mxu0 %v3984
        %4154 = vmatprep.subr.bf16.mxu0 %v3995
        %4155 = vmatpush1.bf16.msra.mxu0 %v3994
        %4156 = vmatprep.subr.bf16.mxu0 %v4005
        %4157 = vmatpush1.bf16.msra.mxu0 %v4004
        %4158 = vmatprep.subr.bf16.mxu0 %v4015
        %4159 = vmatpush1.bf16.msra.mxu0 %v4014
        %4160 = vmatprep.subr.bf16.mxu0 %v4025
        %4161 = vmatpush1.bf16.msra.mxu0 %v4024
        %4162 = vmatprep.subr.bf16.mxu0 %v4035
        %4163 = vmatpush1.bf16.msra.mxu0 %v4034
        %4164 = vmatprep.subr.bf16.mxu0 %v4045
        %4165 = vmatpush1.bf16.msra.mxu0 %v4044
        %4166 = vmatprep.mubr.bf16.mxu0 1065369472
        %4167 = vmatmul.mubr.bf16.gmra.mrb[0].mxu0 1065369472
        %v4168 = vpop.f32.mrb[0].mxu0
        %v4169 = vadd.f32 0.0, %v4168
        %v4170 = vpop.f32.mrb[0].mxu0
        %v4171 = vadd.f32 0.0, %v4170
        %v4172 = vpop.f32.mrb[0].mxu0
        %v4173 = vpop.f32.mrb[0].mxu0
        %4174 = vdwg.mxu0
        %4175 = vmatprep.subr.bf16.mxu0 %v3897
        %4176 = vmatpush1.bf16.msra.mxu0 %v3896
        %4177 = vmatprep.subr.bf16.mxu0 %v3907
        %4178 = vmatpush1.bf16.msra.mxu0 %v3906
        %4179 = vmatprep.subr.bf16.mxu0 %v3917
        %4180 = vmatpush1.bf16.msra.mxu0 %v3916
        %4181 = vmatprep.subr.bf16.mxu0 %v3927
        %4182 = vmatpush1.bf16.msra.mxu0 %v3926
        %4183 = vmatprep.subr.bf16.mxu0 %v3937
        %4184 = vmatpush1.bf16.msra.mxu0 %v3936
        %4185 = vmatprep.subr.bf16.mxu0 %v3947
        %4186 = vmatpush1.bf16.msra.mxu0 %v3946
        %4187 = vmatprep.subr.bf16.mxu0 %v3957
        %4188 = vmatpush1.bf16.msra.mxu0 %v3956
        %4189 = vmatprep.subr.bf16.mxu0 %v3967
        %4190 = vmatpush1.bf16.msra.mxu0 %v3966
        %4191 = vmatprep.subr.bf16.mxu0 %v3977
        %4192 = vmatpush1.bf16.msra.mxu0 %v3976
        %4193 = vmatprep.subr.bf16.mxu0 %v3987
        %4194 = vmatpush1.bf16.msra.mxu0 %v3986
        %4195 = vmatprep.subr.bf16.mxu0 %v3997
        %4196 = vmatpush1.bf16.msra.mxu0 %v3996
        %4197 = vmatprep.subr.bf16.mxu0 %v4007
        %4198 = vmatpush1.bf16.msra.mxu0 %v4006
        %4199 = vmatprep.subr.bf16.mxu0 %v4017
        %4200 = vmatpush1.bf16.msra.mxu0 %v4016
        %4201 = vmatprep.subr.bf16.mxu0 %v4027
        %4202 = vmatpush1.bf16.msra.mxu0 %v4026
        %4203 = vmatprep.subr.bf16.mxu0 %v4037
        %4204 = vmatpush1.bf16.msra.mxu0 %v4036
        %4205 = vmatprep.subr.bf16.mxu0 %v4047
        %4206 = vmatpush1.bf16.msra.mxu0 %v4046
        %4207 = vmatprep.mubr.bf16.mxu0 1065369472
        %4208 = vmatmul.mubr.bf16.gmra.mrb[0].mxu0 1065369472
        %v4209 = vpop.f32.mrb[0].mxu0
        %v4210 = vadd.f32 0.0, %v4209
        %v4211 = vpop.f32.mrb[0].mxu0
        %v4212 = vadd.f32 0.0, %v4211
        %v4213 = vpop.f32.mrb[0].mxu0
        %v4214 = vpop.f32.mrb[0].mxu0
        %4215 = vdwg.mxu0
        %4216 = vmatprep.subr.bf16.mxu0 %v3899
        %4217 = vmatpush1.bf16.msra.mxu0 %v3898
        %4218 = vmatprep.subr.bf16.mxu0 %v3909
        %4219 = vmatpush1.bf16.msra.mxu0 %v3908
        %4220 = vmatprep.subr.bf16.mxu0 %v3919
        %4221 = vmatpush1.bf16.msra.mxu0 %v3918
        %4222 = vmatprep.subr.bf16.mxu0 %v3929
        %4223 = vmatpush1.bf16.msra.mxu0 %v3928
        %4224 = vmatprep.subr.bf16.mxu0 %v3939
        %4225 = vmatpush1.bf16.msra.mxu0 %v3938
        %4226 = vmatprep.subr.bf16.mxu0 %v3949
        %4227 = vmatpush1.bf16.msra.mxu0 %v3948
        %4228 = vmatprep.subr.bf16.mxu0 %v3959
        %4229 = vmatpush1.bf16.msra.mxu0 %v3958
        %4230 = vmatprep.subr.bf16.mxu0 %v3969
        %4231 = vmatpush1.bf16.msra.mxu0 %v3968
        %4232 = vmatprep.subr.bf16.mxu0 %v3979
        %4233 = vmatpush1.bf16.msra.mxu0 %v3978
        %4234 = vmatprep.subr.bf16.mxu0 %v3989
        %4235 = vmatpush1.bf16.msra.mxu0 %v3988
        %4236 = vmatprep.subr.bf16.mxu0 %v3999
        %4237 = vmatpush1.bf16.msra.mxu0 %v3998
        %4238 = vmatprep.subr.bf16.mxu0 %v4009
        %4239 = vmatpush1.bf16.msra.mxu0 %v4008
        %4240 = vmatprep.subr.bf16.mxu0 %v4019
        %4241 = vmatpush1.bf16.msra.mxu0 %v4018
        %4242 = vmatprep.subr.bf16.mxu0 %v4029
        %4243 = vmatpush1.bf16.msra.mxu0 %v4028
        %4244 = vmatprep.subr.bf16.mxu0 %v4039
        %4245 = vmatpush1.bf16.msra.mxu0 %v4038
        %4246 = vmatprep.subr.bf16.mxu0 %v4049
        %4247 = vmatpush1.bf16.msra.mxu0 %v4048
        %4248 = vmatprep.mubr.bf16.mxu0 1065369472
        %4249 = vmatmul.mubr.bf16.gmra.mrb[0].mxu0 1065369472
        %v4250 = vpop.f32.mrb[0].mxu0
        %v4251 = vadd.f32 0.0, %v4250
        %v4252 = vpop.f32.mrb[0].mxu0
        %v4253 = vadd.f32 0.0, %v4252
        %v4254 = vpop.f32.mrb[0].mxu0
        %v4255 = vpop.f32.mrb[0].mxu0
        %4256 = vdwg.mxu0
        %v4267 = vcombine.low %v4087, %v4089
        %v4268 = vcombine.low %v4128, %v4130
        %v4269 = vcombine.low %v4169, %v4171
        %v4270 = vcombine.low %v4210, %v4212
        %v4272 = vunpack.c.l.s4 1966171168
        %v4273 = vunpack.c.0.s8 %v4272
        %v4274 = vlaneseq
        %v4275 = vshrl.u32 %v4274, 7
        %v4276 = vsub.s32 %v4273, %v4275
        %v4277 = vrot.slane %v4267, %v4276
        %v4279 = vunpack.c.l.s4 1966171168
        %v4280 = vunpack.c.0.s8 %v4279
        %v4281 = vlaneseq
        %v4282 = vshrl.u32 %v4281, 7
        %v4283 = vsub.s32 %v4280, %v4282
        %v4284 = vrot.slane %v4268, %v4283
        %v4286 = vunpack.c.l.s4 1966171168
        %v4287 = vunpack.c.0.s8 %v4286
        %v4288 = vlaneseq
        %v4289 = vshrl.u32 %v4288, 7
        %v4290 = vsub.s32 %v4287, %v4289
        %v4291 = vrot.slane %v4269, %v4290
        %v4293 = vunpack.c.l.s4 1966171168
        %v4294 = vunpack.c.0.s8 %v4293
        %v4295 = vlaneseq
        %v4296 = vshrl.u32 %v4295, 7
        %v4297 = vsub.s32 %v4294, %v4296
        %v4298 = vrot.slane %v4270, %v4297
        %v4299 = vcombine.low %v4277, %v4284
        %v4300 = vcombine.low %v4291, %v4298
        %v4302 = vunpack.c.l.s4 1966171168
        %v4303 = vunpack.c.0.s8 %v4302
        %v4304 = vlaneseq
        %v4305 = vshrl.u32 %v4304, 7
        %v4306 = vsub.s32 %v4303, %v4305
        %v4307 = vrot.slane %v4299, %v4306
        %v4309 = vunpack.c.l.s4 1966171168
        %v4310 = vunpack.c.0.s8 %v4309
        %v4311 = vlaneseq
        %v4312 = vshrl.u32 %v4311, 7
        %v4313 = vsub.s32 %v4310, %v4312
        %v4314 = vrot.slane %v4300, %v4313
        %v4315 = vcombine.low %v4307, %v4314
        %v4316 = vcombine.low %v4251, %v4253
        %v4318 = vunpack.c.l.s4 1966171168
        %v4319 = vunpack.c.0.s8 %v4318
        %v4320 = vlaneseq
        %v4321 = vshrl.u32 %v4320, 7
        %v4322 = vsub.s32 %v4319, %v4321
        %v4323 = vrot.slane %v4316, %v4322
        %v4325 = vunpack.c.l.s4 1966171168
        %v4326 = vunpack.c.0.s8 %v4325
        %v4327 = vlaneseq
        %v4328 = vshrl.u32 %v4327, 7
        %v4329 = vsub.s32 %v4326, %v4328
        %v4330 = vrot.slane %v4323, %v4329
        %v4333 = vadd.f32 %v4050, %v4315
        %v4334 = vadd.f32 %v4051, %v4330
        %4335 = vst [vmem:[#allocation2] sm:$0xff] %v4333
        %v4336 = vlaneseq
        %vm4337 = vcmp.ge.s32.totalorder %v4336, 0
        %vm4338 = vcmp.lt.s32.totalorder %v4336, 256
        %vm4339 = vmand %vm4337, %vm4338
        %4340 = vst.msk [vmem:[#allocation2 + $0x8] sm:$0x3] %vm4339, %v4334
        // Predicated region
        $region49: #{birdclef_forward.5} parent=43 // pred_check
          %p4341 = pneg %p279
        $region50: #{birdclef_forward.5} parent=43 // pred_check_branch
          %4343 = sbr.rel (%p4341) target = $region52
        $region51: #{birdclef_forward.5} parent=43 // pred_region
          %v4344 = vld [vmem:[#allocation2] sm:$0xff]
          %v4345 = vld [vmem:[#allocation2 + $0x8] sm:$0x3]
          %v4346 = vmul.f32 %v4344, 0.00390625
          %v4347 = vmul.f32 %v4345, 0.00390625
          %v4348 = vld [vmem:[%s4] sm:$0xff]
          %v4349 = vld [vmem:[%s4 + $0x8] sm:$0xff]
          %v4350 = vld [vmem:[%s4 + $0x10] sm:$0xff]
          %v4351 = vld [vmem:[%s4 + $0x18] sm:$0xff]
          %v4352 = vld [vmem:[%s4 + $0x20] sm:$0xff]
          %v4353 = vld [vmem:[%s4 + $0x28] sm:$0xff]
          %v4354 = vld [vmem:[%s4 + $0x30] sm:$0xff]
          %v4355 = vld [vmem:[%s4 + $0x38] sm:$0xff]
          %v4356 = vld [vmem:[%s4 + $0x40] sm:$0xff]
          %v4357 = vld [vmem:[%s4 + $0x48] sm:$0xff]
          %v4358 = vld [vmem:[%s4 + $0x50] sm:$0xff]
          %v4359 = vld [vmem:[%s4 + $0x58] sm:$0xff]
          %v4360 = vld [vmem:[%s4 + $0x60] sm:$0xff]
          %v4361 = vld [vmem:[%s4 + $0x68] sm:$0xff]
          %v4362 = vld [vmem:[%s4 + $0x70] sm:$0xff]
          %v4363 = vld [vmem:[%s4 + $0x78] sm:$0xff]
          %v4364 = vld [vmem:[%s4 + $0x80] sm:$0xff]
          %v4365 = vld [vmem:[%s4 + $0x88] sm:$0xff]
          %v4366 = vld [vmem:[%s4 + $0x90] sm:$0xff]
          %v4367 = vld [vmem:[%s4 + $0x98] sm:$0xff]
          %v4368 = vld [vmem:[%s4 + $0xa0] sm:$0xff]
          %v4369 = vld [vmem:[%s4 + $0xa8] sm:$0xff]
          %v4370 = vld [vmem:[%s4 + $0xb0] sm:$0xff]
          %v4371 = vld [vmem:[%s4 + $0xb8] sm:$0xff]
          %v4372 = vld [vmem:[%s4 + $0xc0] sm:$0xff]
          %v4373 = vld [vmem:[%s4 + $0xc8] sm:$0xff]
          %v4374 = vld [vmem:[%s4 + $0xd0] sm:$0xff]
          %v4375 = vld [vmem:[%s4 + $0xd8] sm:$0xff]
          %v4376 = vld [vmem:[%s4 + $0xe0] sm:$0xff]
          %v4377 = vld [vmem:[%s4 + $0xe8] sm:$0xff]
          %v4378 = vld [vmem:[%s4 + $0xf0] sm:$0xff]
          %v4379 = vld [vmem:[%s4 + $0xf8] sm:$0xff]
          %v4380 = vld [vmem:[%s4 + $0x100] sm:$0xff]
          %v4381 = vld [vmem:[%s4 + $0x108] sm:$0xff]
          %v4382 = vld [vmem:[%s4 + $0x110] sm:$0xff]
          %v4383 = vld [vmem:[%s4 + $0x118] sm:$0xff]
          %v4384 = vld [vmem:[%s4 + $0x120] sm:$0xff]
          %v4385 = vld [vmem:[%s4 + $0x128] sm:$0xff]
          %v4386 = vld [vmem:[%s4 + $0x130] sm:$0xff]
          %v4387 = vld [vmem:[%s4 + $0x138] sm:$0xff]
          %v4388 = vld [vmem:[%s4 + $0x140] sm:$0xff]
          %v4389 = vld [vmem:[%s4 + $0x148] sm:$0xff]
          %v4390 = vld [vmem:[%s4 + $0x150] sm:$0xff]
          %v4391 = vld [vmem:[%s4 + $0x158] sm:$0xff]
          %v4392 = vld [vmem:[%s4 + $0x160] sm:$0xff]
          %v4393 = vld [vmem:[%s4 + $0x168] sm:$0xff]
          %v4394 = vld [vmem:[%s4 + $0x170] sm:$0xff]
          %v4395 = vld [vmem:[%s4 + $0x178] sm:$0xff]
          %v4396 = vld [vmem:[%s4 + $0x180] sm:$0xff]
          %v4397 = vld [vmem:[%s4 + $0x188] sm:$0xff]
          %v4398 = vld [vmem:[%s4 + $0x190] sm:$0xff]
          %v4399 = vld [vmem:[%s4 + $0x198] sm:$0xff]
          %v4400 = vld [vmem:[%s4 + $0x1a0] sm:$0xff]
          %v4401 = vld [vmem:[%s4 + $0x1a8] sm:$0xff]
          %v4402 = vld [vmem:[%s4 + $0x1b0] sm:$0xff]
          %v4403 = vld [vmem:[%s4 + $0x1b8] sm:$0xff]
          %v4404 = vld [vmem:[%s4 + $0x1c0] sm:$0xff]
          %v4405 = vld [vmem:[%s4 + $0x1c8] sm:$0xff]
          %v4406 = vld [vmem:[%s4 + $0x1d0] sm:$0xff]
          %v4407 = vld [vmem:[%s4 + $0x1d8] sm:$0xff]
          %v4408 = vld [vmem:[%s4 + $0x1e0] sm:$0xff]
          %v4409 = vld [vmem:[%s4 + $0x1e8] sm:$0xff]
          %v4410 = vld [vmem:[%s4 + $0x1f0] sm:$0xff]
          %v4411 = vld [vmem:[%s4 + $0x1f8] sm:$0xff]
          %v4412 = vld [vmem:[%s4 + $0x200] sm:$0xff]
          %v4413 = vld [vmem:[%s4 + $0x208] sm:$0xff]
          %v4414 = vld [vmem:[%s4 + $0x210] sm:$0xff]
          %v4415 = vld [vmem:[%s4 + $0x218] sm:$0xff]
          %v4416 = vld [vmem:[%s4 + $0x220] sm:$0xff]
          %v4417 = vld [vmem:[%s4 + $0x228] sm:$0xff]
          %v4418 = vld [vmem:[%s4 + $0x230] sm:$0xff]
          %v4419 = vld [vmem:[%s4 + $0x238] sm:$0xff]
          %v4420 = vld [vmem:[%s4 + $0x240] sm:$0xff]
          %v4421 = vld [vmem:[%s4 + $0x248] sm:$0xff]
          %v4422 = vld [vmem:[%s4 + $0x250] sm:$0xff]
          %v4423 = vld [vmem:[%s4 + $0x258] sm:$0xff]
          %v4424 = vld [vmem:[%s4 + $0x260] sm:$0xff]
          %v4425 = vld [vmem:[%s4 + $0x268] sm:$0xff]
          %v4426 = vld [vmem:[%s4 + $0x270] sm:$0xff]
          %v4427 = vld [vmem:[%s4 + $0x278] sm:$0xff]
          %v4428 = vld [vmem:[%s4 + $0x280] sm:$0xff]
          %v4429 = vld [vmem:[%s4 + $0x288] sm:$0xff]
          %v4430 = vld [vmem:[%s4 + $0x290] sm:$0xff]
          %v4431 = vld [vmem:[%s4 + $0x298] sm:$0xff]
          %v4432 = vld [vmem:[%s4 + $0x2a0] sm:$0xff]
          %v4433 = vld [vmem:[%s4 + $0x2a8] sm:$0xff]
          %v4434 = vld [vmem:[%s4 + $0x2b0] sm:$0xff]
          %v4435 = vld [vmem:[%s4 + $0x2b8] sm:$0xff]
          %v4436 = vld [vmem:[%s4 + $0x2c0] sm:$0xff]
          %v4437 = vld [vmem:[%s4 + $0x2c8] sm:$0xff]
          %v4438 = vld [vmem:[%s4 + $0x2d0] sm:$0xff]
          %v4439 = vld [vmem:[%s4 + $0x2d8] sm:$0xff]
          %v4440 = vld [vmem:[%s4 + $0x2e0] sm:$0xff]
          %v4441 = vld [vmem:[%s4 + $0x2e8] sm:$0xff]
          %v4442 = vld [vmem:[%s4 + $0x2f0] sm:$0xff]
          %v4443 = vld [vmem:[%s4 + $0x2f8] sm:$0xff]
          %v4444 = vld [vmem:[%s4 + $0x300] sm:$0xff]
          %v4445 = vld [vmem:[%s4 + $0x308] sm:$0xff]
          %v4446 = vld [vmem:[%s4 + $0x310] sm:$0xff]
          %v4447 = vld [vmem:[%s4 + $0x318] sm:$0xff]
          %v4448 = vld [vmem:[%s4 + $0x320] sm:$0xff]
          %v4449 = vld [vmem:[%s4 + $0x328] sm:$0xff]
          %v4450 = vld [vmem:[%s4 + $0x330] sm:$0xff]
          %v4451 = vld [vmem:[%s4 + $0x338] sm:$0xff]
          %v4452 = vld [vmem:[%s4 + $0x340] sm:$0xff]
          %v4453 = vld [vmem:[%s4 + $0x348] sm:$0xff]
          %v4454 = vld [vmem:[%s4 + $0x350] sm:$0xff]
          %v4455 = vld [vmem:[%s4 + $0x358] sm:$0xff]
          %v4456 = vld [vmem:[%s4 + $0x360] sm:$0xff]
          %v4457 = vld [vmem:[%s4 + $0x368] sm:$0xff]
          %v4458 = vld [vmem:[%s4 + $0x370] sm:$0xff]
          %v4459 = vld [vmem:[%s4 + $0x378] sm:$0xff]
          %v4460 = vld [vmem:[%s4 + $0x380] sm:$0xff]
          %v4461 = vld [vmem:[%s4 + $0x388] sm:$0xff]
          %v4462 = vld [vmem:[%s4 + $0x390] sm:$0xff]
          %v4463 = vld [vmem:[%s4 + $0x398] sm:$0xff]
          %v4464 = vld [vmem:[%s4 + $0x3a0] sm:$0xff]
          %v4465 = vld [vmem:[%s4 + $0x3a8] sm:$0xff]
          %v4466 = vld [vmem:[%s4 + $0x3b0] sm:$0xff]
          %v4467 = vld [vmem:[%s4 + $0x3b8] sm:$0xff]
          %v4468 = vld [vmem:[%s4 + $0x3c0] sm:$0xff]
          %v4469 = vld [vmem:[%s4 + $0x3c8] sm:$0xff]
          %v4470 = vld [vmem:[%s4 + $0x3d0] sm:$0xff]
          %v4471 = vld [vmem:[%s4 + $0x3d8] sm:$0xff]
          %v4472 = vld [vmem:[%s4 + $0x3e0] sm:$0xff]
          %v4473 = vld [vmem:[%s4 + $0x3e8] sm:$0xff]
          %v4474 = vld [vmem:[%s4 + $0x3f0] sm:$0xff]
          %v4475 = vld [vmem:[%s4 + $0x3f8] sm:$0xff]
          %v4476 = vld [vmem:[%s4 + $0x400] sm:$0xff]
          %v4477 = vld [vmem:[%s4 + $0x408] sm:$0xff]
          %v4478 = vld [vmem:[%s4 + $0x410] sm:$0xff]
          %v4479 = vld [vmem:[%s4 + $0x418] sm:$0xff]
          %v4480 = vld [vmem:[%s4 + $0x420] sm:$0xff]
          %v4481 = vld [vmem:[%s4 + $0x428] sm:$0xff]
          %v4482 = vld [vmem:[%s4 + $0x430] sm:$0xff]
          %v4483 = vld [vmem:[%s4 + $0x438] sm:$0xff]
          %v4484 = vld [vmem:[%s4 + $0x440] sm:$0xff]
          %v4485 = vld [vmem:[%s4 + $0x448] sm:$0xff]
          %v4486 = vld [vmem:[%s4 + $0x450] sm:$0xff]
          %v4487 = vld [vmem:[%s4 + $0x458] sm:$0xff]
          %v4488 = vld [vmem:[%s4 + $0x460] sm:$0xff]
          %v4489 = vld [vmem:[%s4 + $0x468] sm:$0xff]
          %v4490 = vld [vmem:[%s4 + $0x470] sm:$0xff]
          %v4491 = vld [vmem:[%s4 + $0x478] sm:$0xff]
          %v4492 = vld [vmem:[%s4 + $0x480] sm:$0xff]
          %v4493 = vld [vmem:[%s4 + $0x488] sm:$0xff]
          %v4494 = vld [vmem:[%s4 + $0x490] sm:$0xff]
          %v4495 = vld [vmem:[%s4 + $0x498] sm:$0xff]
          %v4496 = vld [vmem:[%s4 + $0x4a0] sm:$0xff]
          %v4497 = vld [vmem:[%s4 + $0x4a8] sm:$0xff]
          %v4498 = vld [vmem:[%s4 + $0x4b0] sm:$0xff]
          %v4499 = vld [vmem:[%s4 + $0x4b8] sm:$0xff]
          %v4500 = vld [vmem:[%s4 + $0x4c0] sm:$0xff]
          %v4501 = vld [vmem:[%s4 + $0x4c8] sm:$0xff]
          %v4502 = vld [vmem:[%s4 + $0x4d0] sm:$0xff]
          %v4503 = vld [vmem:[%s4 + $0x4d8] sm:$0xff]
          %v4504 = vld [vmem:[%s4 + $0x4e0] sm:$0xff]
          %v4505 = vld [vmem:[%s4 + $0x4e8] sm:$0xff]
          %v4506 = vld [vmem:[%s4 + $0x4f0] sm:$0xff]
          %v4507 = vld [vmem:[%s4 + $0x4f8] sm:$0xff]
          %v4508 = vld [vmem:[%s5] sm:$0x1]
          %v4511 = vlaneseq
          %v4512 = vshrl.u32 %v4511, 7
          %v4513 = vsub.s32 0, %v4512
          %v4514 = vrot.slane %v4346, %v4513
          %v4515 = vlaneseq
          %v4516 = vshrl.u32 %v4515, 7
          %v4517 = vsub.s32 1, %v4516
          %v4518 = vrot.slane %v4346, %v4517
          %v4519 = vlaneseq
          %v4520 = vshrl.u32 %v4519, 7
          %v4521 = vsub.s32 2, %v4520
          %v4522 = vrot.slane %v4346, %v4521
          %v4523 = vlaneseq
          %v4524 = vshrl.u32 %v4523, 7
          %v4525 = vsub.s32 3, %v4524
          %v4526 = vrot.slane %v4346, %v4525
          %v4527 = vlaneseq
          %v4528 = vshrl.u32 %v4527, 7
          %v4529 = vsub.s32 4, %v4528
          %v4530 = vrot.slane %v4346, %v4529
          %v4531 = vlaneseq
          %v4532 = vshrl.u32 %v4531, 7
          %v4533 = vsub.s32 5, %v4532
          %v4534 = vrot.slane %v4346, %v4533
          %v4535 = vlaneseq
          %v4536 = vshrl.u32 %v4535, 7
          %v4537 = vsub.s32 6, %v4536
          %v4538 = vrot.slane %v4346, %v4537
          %v4539 = vlaneseq
          %v4540 = vshrl.u32 %v4539, 7
          %v4541 = vsub.s32 7, %v4540
          %v4542 = vrot.slane %v4346, %v4541
          %v4543 = vlaneseq
          %v4544 = vshrl.u32 %v4543, 7
          %v4545 = vsub.s32 0, %v4544
          %v4546 = vrot.slane %v4347, %v4545
          %v4547 = vlaneseq
          %v4548 = vshrl.u32 %v4547, 7
          %v4549 = vsub.s32 1, %v4548
          %v4550 = vrot.slane %v4347, %v4549
          %4561 = vmatprep.subr.mxu0 0.0
          %4562 = vmatpush1.msra.mxu0 %v4348
          %4563 = vmatprep.subr.mxu0 0.0
          %4564 = vmatpush1.msra.mxu0 %v4349
          %4565 = vmatprep.subr.mxu0 0.0
          %4566 = vmatpush1.msra.mxu0 %v4350
          %4567 = vmatprep.subr.mxu0 0.0
          %4568 = vmatpush1.msra.mxu0 %v4351
          %4569 = vmatprep.subr.mxu0 0.0
          %4570 = vmatpush1.msra.mxu0 %v4352
          %4571 = vmatprep.subr.mxu0 0.0
          %4572 = vmatpush1.msra.mxu0 %v4353
          %4573 = vmatprep.subr.mxu0 0.0
          %4574 = vmatpush1.msra.mxu0 %v4354
          %4575 = vmatprep.subr.mxu0 0.0
          %4576 = vmatpush1.msra.mxu0 %v4355
          %4577 = vmatprep.subr.mxu0 0.0
          %4578 = vmatpush1.msra.mxu0 %v4356
          %4579 = vmatprep.subr.mxu0 0.0
          %4580 = vmatpush1.msra.mxu0 %v4357
          %4581 = vmatprep.subr.mxu0 0.0
          %4582 = vmatpush1.msra.mxu0 %v4358
          %4583 = vmatprep.subr.mxu0 0.0
          %4584 = vmatpush1.msra.mxu0 %v4359
          %4585 = vmatprep.subr.mxu0 0.0
          %4586 = vmatpush1.msra.mxu0 %v4360
          %4587 = vmatprep.subr.mxu0 0.0
          %4588 = vmatpush1.msra.mxu0 %v4361
          %4589 = vmatprep.subr.mxu0 0.0
          %4590 = vmatpush1.msra.mxu0 %v4362
          %4591 = vmatprep.subr.mxu0 0.0
          %4592 = vmatpush1.msra.mxu0 %v4363
          %4593 = vmatprep.subr.mxu0 0.0
          %4594 = vmatpush1.msra.mxu0 %v4364
          %4595 = vmatprep.subr.mxu0 0.0
          %4596 = vmatpush1.msra.mxu0 %v4365
          %4597 = vmatprep.subr.mxu0 0.0
          %4598 = vmatpush1.msra.mxu0 %v4366
          %4599 = vmatprep.subr.mxu0 0.0
          %4600 = vmatpush1.msra.mxu0 %v4367
          %4601 = vmatprep.subr.mxu0 0.0
          %4602 = vmatpush1.msra.mxu0 %v4368
          %4603 = vmatprep.subr.mxu0 0.0
          %4604 = vmatpush1.msra.mxu0 %v4369
          %4605 = vmatprep.subr.mxu0 0.0
          %4606 = vmatpush1.msra.mxu0 %v4370
          %4607 = vmatprep.subr.mxu0 0.0
          %4608 = vmatpush1.msra.mxu0 %v4371
          %4609 = vmatprep.subr.mxu0 0.0
          %4610 = vmatpush1.msra.mxu0 %v4372
          %4611 = vmatprep.subr.mxu0 0.0
          %4612 = vmatpush1.msra.mxu0 %v4373
          %4613 = vmatprep.subr.mxu0 0.0
          %4614 = vmatpush1.msra.mxu0 %v4374
          %4615 = vmatprep.subr.mxu0 0.0
          %4616 = vmatpush1.msra.mxu0 %v4375
          %4617 = vmatprep.subr.mxu0 0.0
          %4618 = vmatpush1.msra.mxu0 %v4376
          %4619 = vmatprep.subr.mxu0 0.0
          %4620 = vmatpush1.msra.mxu0 %v4377
          %4621 = vmatprep.subr.mxu0 0.0
          %4622 = vmatpush1.msra.mxu0 %v4378
          %4623 = vmatprep.subr.mxu0 0.0
          %4624 = vmatpush1.msra.mxu0 %v4379
          %4625 = vmatprep.mubr.f32.mxu0 %v4518
          %4626 = vmatmul.mubr.f32.gmra.mrb[0].mxu0 %v4514
          %v4627 = vpop.f32.mrb[0].mxu0
          %v4628 = vadd.f32 %v4508, %v4627
          %v4629 = vpop.f32.mrb[0].mxu0
          %4630 = vdwg.mxu0
          %4631 = vmatprep.subr.mxu0 0.0
          %4632 = vmatpush1.msra.mxu0 %v4380
          %4633 = vmatprep.subr.mxu0 0.0
          %4634 = vmatpush1.msra.mxu0 %v4381
          %4635 = vmatprep.subr.mxu0 0.0
          %4636 = vmatpush1.msra.mxu0 %v4382
          %4637 = vmatprep.subr.mxu0 0.0
          %4638 = vmatpush1.msra.mxu0 %v4383
          %4639 = vmatprep.subr.mxu0 0.0
          %4640 = vmatpush1.msra.mxu0 %v4384
          %4641 = vmatprep.subr.mxu0 0.0
          %4642 = vmatpush1.msra.mxu0 %v4385
          %4643 = vmatprep.subr.mxu0 0.0
          %4644 = vmatpush1.msra.mxu0 %v4386
          %4645 = vmatprep.subr.mxu0 0.0
          %4646 = vmatpush1.msra.mxu0 %v4387
          %4647 = vmatprep.subr.mxu0 0.0
          %4648 = vmatpush1.msra.mxu0 %v4388
          %4649 = vmatprep.subr.mxu0 0.0
          %4650 = vmatpush1.msra.mxu0 %v4389
          %4651 = vmatprep.subr.mxu0 0.0
          %4652 = vmatpush1.msra.mxu0 %v4390
          %4653 = vmatprep.subr.mxu0 0.0
          %4654 = vmatpush1.msra.mxu0 %v4391
          %4655 = vmatprep.subr.mxu0 0.0
          %4656 = vmatpush1.msra.mxu0 %v4392
          %4657 = vmatprep.subr.mxu0 0.0
          %4658 = vmatpush1.msra.mxu0 %v4393
          %4659 = vmatprep.subr.mxu0 0.0
          %4660 = vmatpush1.msra.mxu0 %v4394
          %4661 = vmatprep.subr.mxu0 0.0
          %4662 = vmatpush1.msra.mxu0 %v4395
          %4663 = vmatprep.subr.mxu0 0.0
          %4664 = vmatpush1.msra.mxu0 %v4396
          %4665 = vmatprep.subr.mxu0 0.0
          %4666 = vmatpush1.msra.mxu0 %v4397
          %4667 = vmatprep.subr.mxu0 0.0
          %4668 = vmatpush1.msra.mxu0 %v4398
          %4669 = vmatprep.subr.mxu0 0.0
          %4670 = vmatpush1.msra.mxu0 %v4399
          %4671 = vmatprep.subr.mxu0 0.0
          %4672 = vmatpush1.msra.mxu0 %v4400
          %4673 = vmatprep.subr.mxu0 0.0
          %4674 = vmatpush1.msra.mxu0 %v4401
          %4675 = vmatprep.subr.mxu0 0.0
          %4676 = vmatpush1.msra.mxu0 %v4402
          %4677 = vmatprep.subr.mxu0 0.0
          %4678 = vmatpush1.msra.mxu0 %v4403
          %4679 = vmatprep.subr.mxu0 0.0
          %4680 = vmatpush1.msra.mxu0 %v4404
          %4681 = vmatprep.subr.mxu0 0.0
          %4682 = vmatpush1.msra.mxu0 %v4405
          %4683 = vmatprep.subr.mxu0 0.0
          %4684 = vmatpush1.msra.mxu0 %v4406
          %4685 = vmatprep.subr.mxu0 0.0
          %4686 = vmatpush1.msra.mxu0 %v4407
          %4687 = vmatprep.subr.mxu0 0.0
          %4688 = vmatpush1.msra.mxu0 %v4408
          %4689 = vmatprep.subr.mxu0 0.0
          %4690 = vmatpush1.msra.mxu0 %v4409
          %4691 = vmatprep.subr.mxu0 0.0
          %4692 = vmatpush1.msra.mxu0 %v4410
          %4693 = vmatprep.subr.mxu0 0.0
          %4694 = vmatpush1.msra.mxu0 %v4411
          %4695 = vmatprep.mubr.f32.mxu0 %v4526
          %4696 = vmatmul.mubr.f32.gmra.mrb[0].mxu0 %v4522
          %v4697 = vpop.f32.mrb[0].mxu0
          %v4698 = vadd.f32 %v4628, %v4697
          %v4699 = vpop.f32.mrb[0].mxu0
          %4700 = vdwg.mxu0
          %4701 = vmatprep.subr.mxu0 0.0
          %4702 = vmatpush1.msra.mxu0 %v4412
          %4703 = vmatprep.subr.mxu0 0.0
          %4704 = vmatpush1.msra.mxu0 %v4413
          %4705 = vmatprep.subr.mxu0 0.0
          %4706 = vmatpush1.msra.mxu0 %v4414
          %4707 = vmatprep.subr.mxu0 0.0
          %4708 = vmatpush1.msra.mxu0 %v4415
          %4709 = vmatprep.subr.mxu0 0.0
          %4710 = vmatpush1.msra.mxu0 %v4416
          %4711 = vmatprep.subr.mxu0 0.0
          %4712 = vmatpush1.msra.mxu0 %v4417
          %4713 = vmatprep.subr.mxu0 0.0
          %4714 = vmatpush1.msra.mxu0 %v4418
          %4715 = vmatprep.subr.mxu0 0.0
          %4716 = vmatpush1.msra.mxu0 %v4419
          %4717 = vmatprep.subr.mxu0 0.0
          %4718 = vmatpush1.msra.mxu0 %v4420
          %4719 = vmatprep.subr.mxu0 0.0
          %4720 = vmatpush1.msra.mxu0 %v4421
          %4721 = vmatprep.subr.mxu0 0.0
          %4722 = vmatpush1.msra.mxu0 %v4422
          %4723 = vmatprep.subr.mxu0 0.0
          %4724 = vmatpush1.msra.mxu0 %v4423
          %4725 = vmatprep.subr.mxu0 0.0
          %4726 = vmatpush1.msra.mxu0 %v4424
          %4727 = vmatprep.subr.mxu0 0.0
          %4728 = vmatpush1.msra.mxu0 %v4425
          %4729 = vmatprep.subr.mxu0 0.0
          %4730 = vmatpush1.msra.mxu0 %v4426
          %4731 = vmatprep.subr.mxu0 0.0
          %4732 = vmatpush1.msra.mxu0 %v4427
          %4733 = vmatprep.subr.mxu0 0.0
          %4734 = vmatpush1.msra.mxu0 %v4428
          %4735 = vmatprep.subr.mxu0 0.0
          %4736 = vmatpush1.msra.mxu0 %v4429
          %4737 = vmatprep.subr.mxu0 0.0
          %4738 = vmatpush1.msra.mxu0 %v4430
          %4739 = vmatprep.subr.mxu0 0.0
          %4740 = vmatpush1.msra.mxu0 %v4431
          %4741 = vmatprep.subr.mxu0 0.0
          %4742 = vmatpush1.msra.mxu0 %v4432
          %4743 = vmatprep.subr.mxu0 0.0
          %4744 = vmatpush1.msra.mxu0 %v4433
          %4745 = vmatprep.subr.mxu0 0.0
          %4746 = vmatpush1.msra.mxu0 %v4434
          %4747 = vmatprep.subr.mxu0 0.0
          %4748 = vmatpush1.msra.mxu0 %v4435
          %4749 = vmatprep.subr.mxu0 0.0
          %4750 = vmatpush1.msra.mxu0 %v4436
          %4751 = vmatprep.subr.mxu0 0.0
          %4752 = vmatpush1.msra.mxu0 %v4437
          %4753 = vmatprep.subr.mxu0 0.0
          %4754 = vmatpush1.msra.mxu0 %v4438
          %4755 = vmatprep.subr.mxu0 0.0
          %4756 = vmatpush1.msra.mxu0 %v4439
          %4757 = vmatprep.subr.mxu0 0.0
          %4758 = vmatpush1.msra.mxu0 %v4440
          %4759 = vmatprep.subr.mxu0 0.0
          %4760 = vmatpush1.msra.mxu0 %v4441
          %4761 = vmatprep.subr.mxu0 0.0
          %4762 = vmatpush1.msra.mxu0 %v4442
          %4763 = vmatprep.subr.mxu0 0.0
          %4764 = vmatpush1.msra.mxu0 %v4443
          %4765 = vmatprep.mubr.f32.mxu0 %v4534
          %4766 = vmatmul.mubr.f32.gmra.mrb[0].mxu0 %v4530
          %v4767 = vpop.f32.mrb[0].mxu0
          %v4768 = vadd.f32 %v4698, %v4767
          %v4769 = vpop.f32.mrb[0].mxu0
          %4770 = vdwg.mxu0
          %4771 = vmatprep.subr.mxu0 0.0
          %4772 = vmatpush1.msra.mxu0 %v4444
          %4773 = vmatprep.subr.mxu0 0.0
          %4774 = vmatpush1.msra.mxu0 %v4445
          %4775 = vmatprep.subr.mxu0 0.0
          %4776 = vmatpush1.msra.mxu0 %v4446
          %4777 = vmatprep.subr.mxu0 0.0
          %4778 = vmatpush1.msra.mxu0 %v4447
          %4779 = vmatprep.subr.mxu0 0.0
          %4780 = vmatpush1.msra.mxu0 %v4448
          %4781 = vmatprep.subr.mxu0 0.0
          %4782 = vmatpush1.msra.mxu0 %v4449
          %4783 = vmatprep.subr.mxu0 0.0
          %4784 = vmatpush1.msra.mxu0 %v4450
          %4785 = vmatprep.subr.mxu0 0.0
          %4786 = vmatpush1.msra.mxu0 %v4451
          %4787 = vmatprep.subr.mxu0 0.0
          %4788 = vmatpush1.msra.mxu0 %v4452
          %4789 = vmatprep.subr.mxu0 0.0
          %4790 = vmatpush1.msra.mxu0 %v4453
          %4791 = vmatprep.subr.mxu0 0.0
          %4792 = vmatpush1.msra.mxu0 %v4454
          %4793 = vmatprep.subr.mxu0 0.0
          %4794 = vmatpush1.msra.mxu0 %v4455
          %4795 = vmatprep.subr.mxu0 0.0
          %4796 = vmatpush1.msra.mxu0 %v4456
          %4797 = vmatprep.subr.mxu0 0.0
          %4798 = vmatpush1.msra.mxu0 %v4457
          %4799 = vmatprep.subr.mxu0 0.0
          %4800 = vmatpush1.msra.mxu0 %v4458
          %4801 = vmatprep.subr.mxu0 0.0
          %4802 = vmatpush1.msra.mxu0 %v4459
          %4803 = vmatprep.subr.mxu0 0.0
          %4804 = vmatpush1.msra.mxu0 %v4460
          %4805 = vmatprep.subr.mxu0 0.0
          %4806 = vmatpush1.msra.mxu0 %v4461
          %4807 = vmatprep.subr.mxu0 0.0
          %4808 = vmatpush1.msra.mxu0 %v4462
          %4809 = vmatprep.subr.mxu0 0.0
          %4810 = vmatpush1.msra.mxu0 %v4463
          %4811 = vmatprep.subr.mxu0 0.0
          %4812 = vmatpush1.msra.mxu0 %v4464
          %4813 = vmatprep.subr.mxu0 0.0
          %4814 = vmatpush1.msra.mxu0 %v4465
          %4815 = vmatprep.subr.mxu0 0.0
          %4816 = vmatpush1.msra.mxu0 %v4466
          %4817 = vmatprep.subr.mxu0 0.0
          %4818 = vmatpush1.msra.mxu0 %v4467
          %4819 = vmatprep.subr.mxu0 0.0
          %4820 = vmatpush1.msra.mxu0 %v4468
          %4821 = vmatprep.subr.mxu0 0.0
          %4822 = vmatpush1.msra.mxu0 %v4469
          %4823 = vmatprep.subr.mxu0 0.0
          %4824 = vmatpush1.msra.mxu0 %v4470
          %4825 = vmatprep.subr.mxu0 0.0
          %4826 = vmatpush1.msra.mxu0 %v4471
          %4827 = vmatprep.subr.mxu0 0.0
          %4828 = vmatpush1.msra.mxu0 %v4472
          %4829 = vmatprep.subr.mxu0 0.0
          %4830 = vmatpush1.msra.mxu0 %v4473
          %4831 = vmatprep.subr.mxu0 0.0
          %4832 = vmatpush1.msra.mxu0 %v4474
          %4833 = vmatprep.subr.mxu0 0.0
          %4834 = vmatpush1.msra.mxu0 %v4475
          %4835 = vmatprep.mubr.f32.mxu0 %v4542
          %4836 = vmatmul.mubr.f32.gmra.mrb[0].mxu0 %v4538
          %v4837 = vpop.f32.mrb[0].mxu0
          %v4838 = vadd.f32 %v4768, %v4837
          %v4839 = vpop.f32.mrb[0].mxu0
          %4840 = vdwg.mxu0
          %4841 = vmatprep.subr.mxu0 0.0
          %4842 = vmatpush1.msra.mxu0 %v4476
          %4843 = vmatprep.subr.mxu0 0.0
          %4844 = vmatpush1.msra.mxu0 %v4477
          %4845 = vmatprep.subr.mxu0 0.0
          %4846 = vmatpush1.msra.mxu0 %v4478
          %4847 = vmatprep.subr.mxu0 0.0
          %4848 = vmatpush1.msra.mxu0 %v4479
          %4849 = vmatprep.subr.mxu0 0.0
          %4850 = vmatpush1.msra.mxu0 %v4480
          %4851 = vmatprep.subr.mxu0 0.0
          %4852 = vmatpush1.msra.mxu0 %v4481
          %4853 = vmatprep.subr.mxu0 0.0
          %4854 = vmatpush1.msra.mxu0 %v4482
          %4855 = vmatprep.subr.mxu0 0.0
          %4856 = vmatpush1.msra.mxu0 %v4483
          %4857 = vmatprep.subr.mxu0 0.0
          %4858 = vmatpush1.msra.mxu0 %v4484
          %4859 = vmatprep.subr.mxu0 0.0
          %4860 = vmatpush1.msra.mxu0 %v4485
          %4861 = vmatprep.subr.mxu0 0.0
          %4862 = vmatpush1.msra.mxu0 %v4486
          %4863 = vmatprep.subr.mxu0 0.0
          %4864 = vmatpush1.msra.mxu0 %v4487
          %4865 = vmatprep.subr.mxu0 0.0
          %4866 = vmatpush1.msra.mxu0 %v4488
          %4867 = vmatprep.subr.mxu0 0.0
          %4868 = vmatpush1.msra.mxu0 %v4489
          %4869 = vmatprep.subr.mxu0 0.0
          %4870 = vmatpush1.msra.mxu0 %v4490
          %4871 = vmatprep.subr.mxu0 0.0
          %4872 = vmatpush1.msra.mxu0 %v4491
          %4873 = vmatprep.subr.mxu0 0.0
          %4874 = vmatpush1.msra.mxu0 %v4492
          %4875 = vmatprep.subr.mxu0 0.0
          %4876 = vmatpush1.msra.mxu0 %v4493
          %4877 = vmatprep.subr.mxu0 0.0
          %4878 = vmatpush1.msra.mxu0 %v4494
          %4879 = vmatprep.subr.mxu0 0.0
          %4880 = vmatpush1.msra.mxu0 %v4495
          %4881 = vmatprep.subr.mxu0 0.0
          %4882 = vmatpush1.msra.mxu0 %v4496
          %4883 = vmatprep.subr.mxu0 0.0
          %4884 = vmatpush1.msra.mxu0 %v4497
          %4885 = vmatprep.subr.mxu0 0.0
          %4886 = vmatpush1.msra.mxu0 %v4498
          %4887 = vmatprep.subr.mxu0 0.0
          %4888 = vmatpush1.msra.mxu0 %v4499
          %4889 = vmatprep.subr.mxu0 0.0
          %4890 = vmatpush1.msra.mxu0 %v4500
          %4891 = vmatprep.subr.mxu0 0.0
          %4892 = vmatpush1.msra.mxu0 %v4501
          %4893 = vmatprep.subr.mxu0 0.0
          %4894 = vmatpush1.msra.mxu0 %v4502
          %4895 = vmatprep.subr.mxu0 0.0
          %4896 = vmatpush1.msra.mxu0 %v4503
          %4897 = vmatprep.subr.mxu0 0.0
          %4898 = vmatpush1.msra.mxu0 %v4504
          %4899 = vmatprep.subr.mxu0 0.0
          %4900 = vmatpush1.msra.mxu0 %v4505
          %4901 = vmatprep.subr.mxu0 0.0
          %4902 = vmatpush1.msra.mxu0 %v4506
          %4903 = vmatprep.subr.mxu0 0.0
          %4904 = vmatpush1.msra.mxu0 %v4507
          %4905 = vmatprep.mubr.f32.mxu0 %v4550
          %4906 = vmatmul.mubr.f32.gmra.mrb[0].mxu0 %v4546
          %v4907 = vpop.f32.mrb[0].mxu0
          %v4908 = vadd.f32 %v4838, %v4907
          %v4909 = vpop.f32.mrb[0].mxu0
          %4910 = vdwg.mxu0
          %vm4911 = vcmask 40960
          %4912 = vst.msk [vmem:[%s266] sm:$0x1] %vm4911, %v4908
        $region52: #{birdclef_forward.5} parent=43 // pred_fallthru
          _
        %s4913 = sand.u32 %s173, 1
        %s4914 = scalar_lea.sflag [#allocation4], %s4913
        %s4915 = sand.u32 %s173, 1
        %s4916 = scalar_lea.vmem [#allocation3], %s4915
        // Predicated region
        $region53: #{birdclef_forward.5} parent=43 // pred_check
          %p4917 = pneg %p183
        $region54: #{birdclef_forward.5} parent=43 // pred_check_branch
          %4919 = sbr.rel (%p4917) target = $region56
        $region55: #{birdclef_forward.5} parent=43 // pred_region
          %s4921 = ssub.s32 16, 16
          %4922 = vsyncadd %s4914, %s4921
          %s4923 = smul.addr %s24, 16
          %s4924 = scalar_lea.hbm %s6, %s4923
          %s4926 = sshll.u32 %s4916, 4
          %s4927 = int_to_ptr.vmem [resolvable:$true] %s4926
          %4929 = dma.vmem_to_hbm [thread:$0]  %s4927, 16, %s4924, %s4914
        $region56: #{birdclef_forward.5} parent=43 // pred_fallthru
          _
      $region44: #{birdclef_forward.5} parent=5 // pred_fallthru
        _
      %p4930 = scmp.le.s32.totalorder 2, %s15
      // Predicated region
      $region57: #{birdclef_forward.5} parent=5 // pred_check
        %p4931 = pneg %p4930
      $region58: #{birdclef_forward.5} parent=5 // pred_check_branch
        %4933 = sbr.rel (%p4931) target = $region60
      $region59: #{birdclef_forward.5} parent=5 // pred_region
        %s4934 = ssub.s32 %s15, 2
        // Predicated region
        $region61: #{birdclef_forward.5} parent=59 // pred_check
          %p4935 = pneg %p189
        $region62: #{birdclef_forward.5} parent=59 // pred_check_branch
          %4937 = sbr.rel (%p4935) target = $region64
        $region63: #{birdclef_forward.5} parent=59 // pred_region
          %s4938 = sand.u32 %s174, 1
          %s4939 = scalar_lea.sflag [#allocation4], %s4938
          %s4940 = sand.u32 %s174, 1
          %s4941 = scalar_lea.vmem [#allocation3], %s4940
          %4942 = dma.done %s4939, 16
        $region64: #{birdclef_forward.5} parent=59 // pred_fallthru
          _
      $region60: #{birdclef_forward.5} parent=5 // pred_fallthru
        _
    $region6: #{birdclef_forward.5} parent=1 // loop_footer
      %s19 = sadd.s32 1, %s15
    $region7: #{birdclef_forward.5} parent=1 // loop_footer_branch
      %14 = sbr.rel target = $region3
    $region8: #{birdclef_forward.5} parent=1 // loop_exit
      _
    %4943 = vsyncpa [#allocation4], 1
    %s4944 = scalar_lea.sflag [#allocation4], 1
    %4945 = vsyncpa %s4944, 1

</llo_original>
